<compile_context>
chip_gen: v7x
topology: tpu7x:2x2x1
jax: 0.10.0
libtpu: 0.0.40
codegen_flags: <defaults>
</compile_context>

<pallas_src>
import functools

import jax
import jax.numpy as jnp
from jax.experimental import pallas as pl
from jax.experimental.pallas import tpu as pltpu


# ----------------------------------------------------------------------------
# Fused SHViTBlock kernel (one batch sample per grid step).
# ----------------------------------------------------------------------------
def _full_mean(x):
    """Mean over all elements of a 2-D array, returned as (1, 1)."""
    s = jnp.sum(x, axis=1, keepdims=True)
    s = jnp.sum(s, axis=0, keepdims=True)
    return s / float(x.shape[0] * x.shape[1])


def shvit_block_kernel(xpad_ref, wdw_ref, bdw_ref, gnw_ref, gnb_ref,
                       wq_ref, bq_ref, wk_ref, bk_ref, wv_ref, bv_ref,
                       wpa_ref, wpb_ref, bp_ref, w1_ref, b1_ref, w2_ref, b2_ref,
                       o_ref, *, H, W, dim, qk_dim, pdim, gn_eps):
    npix = H * W
    xp = xpad_ref[0]                                   # (H+2, W+2, dim)
    wdw = wdw_ref[...]                                 # (9, dim), tap t = di*3 + dj

    # ---- conv: residual depthwise 3x3 (stride 1, pad 1) + folded BN ----
    acc = xp[1:1 + H, 1:1 + W, :] + bdw_ref[...].reshape(1, 1, dim)   # residual + bias
    for di in range(3):
        for dj in range(3):
            t = di * 3 + dj
            acc = acc + xp[di:di + H, dj:dj + W, :] * wdw[t:t + 1, :].reshape(1, 1, dim)
    y1 = acc.reshape(npix, dim)                        # channels-last pixel rows

    # ---- mixer: SHSA ----
    x1 = y1[:, :pdim]
    x2 = y1[:, pdim:]

    # GroupNorm(1 group) over all pdim*H*W elements, per-channel affine.
    m = _full_mean(x1)
    var = _full_mean((x1 - m) * (x1 - m))
    x1n = (x1 - m) * jax.lax.rsqrt(var + gn_eps)
    x1n = x1n * gnw_ref[...] + gnb_ref[...]

    q = jnp.dot(x1n, wq_ref[...], preferred_element_type=jnp.float32) + bq_ref[...]
    k = jnp.dot(x1n, wk_ref[...], preferred_element_type=jnp.float32) + bk_ref[...]
    v = jnp.dot(x1n, wv_ref[...], preferred_element_type=jnp.float32) + bv_ref[...]

    s = jax.lax.dot_general(q, k, (((1,), (1,)), ((), ())),
                            preferred_element_type=jnp.float32)
    s = s * (float(qk_dim) ** -0.5)
    s = s - jnp.max(s, axis=-1, keepdims=True)
    e = jnp.exp(s)
    attn = e / jnp.sum(e, axis=-1, keepdims=True)                     # (npix, npix)
    att = jnp.dot(attn, v, preferred_element_type=jnp.float32)        # (npix, pdim)

    # proj = Conv1x1(ReLU(concat([att, x2])))  — concat split into two matmuls.
    proj = (jnp.dot(jnp.maximum(att, 0.0), wpa_ref[...],
                    preferred_element_type=jnp.float32)
            + jnp.dot(jnp.maximum(x2, 0.0), wpb_ref[...],
                      preferred_element_type=jnp.float32)
            + bp_ref[...])
    y2 = y1 + proj                                                     # mixer residual

    # ---- ffn: 1x1 expand + ReLU + 1x1 project, residual ----
    h = jnp.maximum(jnp.dot(y2, w1_ref[...], preferred_element_type=jnp.float32)
                    + b1_ref[...], 0.0)
    f = jnp.dot(h, w2_ref[...], preferred_element_type=jnp.float32) + b2_ref[...]
    o_ref[0] = y2 + f


# ----------------------------------------------------------------------------
# Forward wrapper (layout glue only: NCHW<->NHWC transpose, spatial pad).
# ----------------------------------------------------------------------------
def shvit_block_forward(x_nchw, p, qk_dim, pdim):
    N, dim, H, W = x_nchw.shape
    hid = 2 * dim
    npix = H * W

    x = jnp.transpose(x_nchw, (0, 2, 3, 1))                  # NHWC
    xpad = jnp.pad(x, ((0, 0), (1, 1), (1, 1), (0, 0)))      # pad=1 for 3x3 dw conv

    kernel = functools.partial(shvit_block_kernel, H=H, W=W, dim=dim,
                               qk_dim=qk_dim, pdim=pdim, gn_eps=1e-5)

    const = lambda n: (0, 0)                                  # weights: same block every step
    out = pl.pallas_call(
        kernel,
        out_shape=jax.ShapeDtypeStruct((N, npix, dim), jnp.float32),
        grid=(N,),
        in_specs=[
            pl.BlockSpec((1, H + 2, W + 2, dim), lambda n: (n, 0, 0, 0)),
            pl.BlockSpec((9, dim), const),
            pl.BlockSpec((1, dim), const),
            pl.BlockSpec((1, pdim), const),
            pl.BlockSpec((1, pdim), const),
            pl.BlockSpec((pdim, qk_dim), const),
            pl.BlockSpec((1, qk_dim), const),
            pl.BlockSpec((pdim, qk_dim), const),
            pl.BlockSpec((1, qk_dim), const),
            pl.BlockSpec((pdim, pdim), const),
            pl.BlockSpec((1, pdim), const),
            pl.BlockSpec((pdim, dim), const),
            pl.BlockSpec((dim - pdim, dim), const),
            pl.BlockSpec((1, dim), const),
            pl.BlockSpec((dim, hid), const),
            pl.BlockSpec((1, hid), const),
            pl.BlockSpec((hid, dim), const),
            pl.BlockSpec((1, dim), const),
        ],
        out_specs=pl.BlockSpec((1, npix, dim), lambda n: (n, 0, 0)),
        compiler_params=pltpu.CompilerParams(
            dimension_semantics=("parallel",),
            vmem_limit_bytes=64 * 1024 * 1024),
    )(xpad,
      p["w_dw"], p["b_dw"].reshape(1, dim),
      p["gn_w"].reshape(1, pdim), p["gn_b"].reshape(1, pdim),
      p["w_q"], p["b_q"].reshape(1, qk_dim),
      p["w_k"], p["b_k"].reshape(1, qk_dim),
      p["w_v"], p["b_v"].reshape(1, pdim),
      p["w_proj_a"], p["w_proj_b"], p["b_proj"].reshape(1, dim),
      p["w_pw1"], p["b_pw1"].reshape(1, hid),
      p["w_pw2"], p["b_pw2"].reshape(1, dim))

    out = out.reshape(N, H, W, dim)
    return jnp.transpose(out, (0, 3, 1, 2))                  # back to NCHW


# ----------------------------------------------------------------------------
# Deterministic parameter construction (BN folded into conv; no checkpoints).
# NOTE: the real module initializes some BN gammas to 0 (bn_weight_init=0),
# which would zero those branches; synthetic nonzero BN stats are used here so
# every branch is numerically exercised. Forward semantics are unchanged.
# ----------------------------------------------------------------------------
def _conv_bn_fold(key, cin, cout, ks, groups=1, eps=1e-5):
    kw, kg, kb, km, kv = jax.random.split(key, 5)
    fan_in = (cin // groups) * ks * ks
    w = jax.random.normal(kw, (cout, cin // groups, ks, ks), jnp.float32) / jnp.sqrt(float(fan_in))
    gamma = 1.0 + 0.1 * jax.random.normal(kg, (cout,), jnp.float32)
    beta = 0.05 * jax.random.normal(kb, (cout,), jnp.float32)
    mean = 0.1 * jax.random.normal(km, (cout,), jnp.float32)
    var = 1.0 + 0.1 * jnp.abs(jax.random.normal(kv, (cout,), jnp.float32))
    scale = gamma / jnp.sqrt(var + eps)
    return w * scale[:, None, None, None], beta - mean * scale


def make_params(dim, qk_dim, pdim, key):
    assert dim > pdim
    k1, k2, k3, k4, k5, k6 = jax.random.split(key, 6)

    w_dw4, b_dw = _conv_bn_fold(k1, dim, dim, 3, groups=dim)          # (dim,1,3,3)
    w_qkv4, b_qkv = _conv_bn_fold(k2, pdim, 2 * qk_dim + pdim, 1)     # (2qk+pdim,pdim,1,1)
    w_pr4, b_pr = _conv_bn_fold(k3, dim, dim, 1)                      # (dim,dim,1,1)
    w_p14, b_p1 = _conv_bn_fold(k4, dim, 2 * dim, 1)
    w_p24, b_p2 = _conv_bn_fold(k5, 2 * dim, dim, 1)

    kg, kb = jax.random.split(k6)
    gn_w = 1.0 + 0.1 * jax.random.normal(kg, (pdim,), jnp.float32)
    gn_b = 0.05 * jax.random.normal(kb, (pdim,), jnp.float32)

    w_qkv = w_qkv4.reshape(2 * qk_dim + pdim, pdim).T                 # (pdim, 2qk+pdim)
    w_pr = w_pr4.reshape(dim, dim).T                                  # (dim_in, dim_out)

    return {
        "w_dw": w_dw4.reshape(dim, 9).T,                              # (9, dim), t=di*3+dj
        "b_dw": b_dw,
        "gn_w": gn_w, "gn_b": gn_b,
        "w_q": w_qkv[:, :qk_dim], "b_q": b_qkv[:qk_dim],
        "w_k": w_qkv[:, qk_dim:2 * qk_dim], "b_k": b_qkv[qk_dim:2 * qk_dim],
        "w_v": w_qkv[:, 2 * qk_dim:], "b_v": b_qkv[2 * qk_dim:],
        "w_proj_a": w_pr[:pdim, :], "w_proj_b": w_pr[pdim:, :], "b_proj": b_pr,
        "w_pw1": w_p14.reshape(2 * dim, dim).T, "b_pw1": b_p1,        # (dim, 2dim)
        "w_pw2": w_p24.reshape(dim, 2 * dim).T, "b_pw2": b_p2,        # (2dim, dim)
    }


# ----------------------------------------------------------------------------
# Pure-JAX reference (mirrors the PyTorch forward) for correctness checking.
# ----------------------------------------------------------------------------
def reference_forward(x_nchw, p, qk_dim, pdim, gn_eps=1e-5):
    N, dim, H, W = x_nchw.shape
    hp = jax.lax.Precision.HIGHEST
    x = jnp.transpose(x_nchw, (0, 2, 3, 1))                           # NHWC
    xpad = jnp.pad(x, ((0, 0), (1, 1), (1, 1), (0, 0)))

    acc = x + p["b_dw"]
    for di in range(3):
        for dj in range(3):
            acc = acc + xpad[:, di:di + H, dj:dj + W, :] * p["w_dw"][di * 3 + dj]
    y1 = acc

    x1, x2 = y1[..., :pdim], y1[..., pdim:]
    m = jnp.mean(x1, axis=(1, 2, 3), keepdims=True)
    v = jnp.mean((x1 - m) ** 2, axis=(1, 2, 3), keepdims=True)
    x1n = (x1 - m) / jnp.sqrt(v + gn_eps) * p["gn_w"] + p["gn_b"]

    q = jnp.einsum("nhwc,cd->nhwd", x1n, p["w_q"], precision=hp) + p["b_q"]
    k = jnp.einsum("nhwc,cd->nhwd", x1n, p["w_k"], precision=hp) + p["b_k"]
    vv = jnp.einsum("nhwc,cd->nhwd", x1n, p["w_v"], precision=hp) + p["b_v"]
    npix = H * W
    qf, kf, vf = (q.reshape(N, npix, qk_dim), k.reshape(N, npix, qk_dim),
                  vv.reshape(N, npix, pdim))
    attn = jnp.einsum("nik,njk->nij", qf, kf, precision=hp) * (float(qk_dim) ** -0.5)
    attn = jax.nn.softmax(attn, axis=-1)
    att = jnp.einsum("nij,njc->nic", attn, vf, precision=hp).reshape(N, H, W, pdim)

    cat = jnp.maximum(jnp.concatenate([att, x2], axis=-1), 0.0)
    w_proj = jnp.concatenate([p["w_proj_a"], p["w_proj_b"]], axis=0)
    proj = jnp.einsum("nhwc,cd->nhwd", cat, w_proj, precision=hp) + p["b_proj"]
    y2 = y1 + proj

    h = jnp.maximum(jnp.einsum("nhwc,cd->nhwd", y2, p["w_pw1"], precision=hp) + p["b_pw1"], 0.0)
    f = jnp.einsum("nhwc,cd->nhwd", h, p["w_pw2"], precision=hp) + p["b_pw2"]
    return jnp.transpose(y2 + f, (0, 3, 1, 2))


if __name__ == "__main__":
    dim, qk_dim, pdim = 64, 16, 32          # module defaults: qk_dim=16, pdim=32
    N, H, W = 2, 16, 16

    key = jax.random.PRNGKey(0)
    kx, kp = jax.random.split(key)
    x = jax.random.normal(kx, (N, dim, H, W), jnp.float32)            # NCHW input
    params = make_params(dim, qk_dim, pdim, kp)

    out = shvit_block_forward(x, params, qk_dim, pdim)
    out = jax.block_until_ready(out)

    assert out.shape == (N, dim, H, W), out.shape
    ref = reference_forward(x, params, qk_dim, pdim)
    assert bool(jnp.allclose(out, ref, rtol=2e-2, atol=2e-2)), "mismatch vs reference"

    print("KERNEL_OK")
</pallas_src>

<mosaic_0001>
module attributes {stable_mosaic.version = 11 : i64} {
  func.func @shvit_block_kernel(%arg0: i32, %arg1: memref<1x18x18x64xf32, #tpu.memory_space<vmem>>, %arg2: memref<9x64xf32, #tpu.memory_space<vmem>>, %arg3: memref<1x64xf32, #tpu.memory_space<vmem>>, %arg4: memref<1x32xf32, #tpu.memory_space<vmem>>, %arg5: memref<1x32xf32, #tpu.memory_space<vmem>>, %arg6: memref<32x16xf32, #tpu.memory_space<vmem>>, %arg7: memref<1x16xf32, #tpu.memory_space<vmem>>, %arg8: memref<32x16xf32, #tpu.memory_space<vmem>>, %arg9: memref<1x16xf32, #tpu.memory_space<vmem>>, %arg10: memref<32x32xf32, #tpu.memory_space<vmem>>, %arg11: memref<1x32xf32, #tpu.memory_space<vmem>>, %arg12: memref<32x64xf32, #tpu.memory_space<vmem>>, %arg13: memref<32x64xf32, #tpu.memory_space<vmem>>, %arg14: memref<1x64xf32, #tpu.memory_space<vmem>>, %arg15: memref<64x128xf32, #tpu.memory_space<vmem>>, %arg16: memref<1x128xf32, #tpu.memory_space<vmem>>, %arg17: memref<128x64xf32, #tpu.memory_space<vmem>>, %arg18: memref<1x64xf32, #tpu.memory_space<vmem>>, %arg19: memref<1x256x64xf32, #tpu.memory_space<vmem>>) attributes {dimension_semantics = [#tpu.dimension_semantics<parallel>], iteration_bounds = array<i64: 2>, scalar_prefetch = 0 : i64, scratch_operands = 0 : i64, tpu.core_type = #tpu.core_type<tc>, window_params = [{transform_indices = @transform_0, window_bounds = array<i64: 1, 18, 18, 64>}, {pipeline_mode = #tpu.pipeline_mode<synchronous>, transform_indices = @transform_1, window_bounds = array<i64: 9, 64>}, {pipeline_mode = #tpu.pipeline_mode<synchronous>, transform_indices = @transform_2, window_bounds = array<i64: 1, 64>}, {pipeline_mode = #tpu.pipeline_mode<synchronous>, transform_indices = @transform_3, window_bounds = array<i64: 1, 32>}, {pipeline_mode = #tpu.pipeline_mode<synchronous>, transform_indices = @transform_4, window_bounds = array<i64: 1, 32>}, {pipeline_mode = #tpu.pipeline_mode<synchronous>, transform_indices = @transform_5, window_bounds = array<i64: 32, 16>}, {pipeline_mode = #tpu.pipeline_mode<synchronous>, transform_indices = @transform_6, window_bounds = array<i64: 1, 16>}, {pipeline_mode = #tpu.pipeline_mode<synchronous>, transform_indices = @transform_7, window_bounds = array<i64: 32, 16>}, {pipeline_mode = #tpu.pipeline_mode<synchronous>, transform_indices = @transform_8, window_bounds = array<i64: 1, 16>}, {pipeline_mode = #tpu.pipeline_mode<synchronous>, transform_indices = @transform_9, window_bounds = array<i64: 32, 32>}, {pipeline_mode = #tpu.pipeline_mode<synchronous>, transform_indices = @transform_10, window_bounds = array<i64: 1, 32>}, {pipeline_mode = #tpu.pipeline_mode<synchronous>, transform_indices = @transform_11, window_bounds = array<i64: 32, 64>}, {pipeline_mode = #tpu.pipeline_mode<synchronous>, transform_indices = @transform_12, window_bounds = array<i64: 32, 64>}, {pipeline_mode = #tpu.pipeline_mode<synchronous>, transform_indices = @transform_13, window_bounds = array<i64: 1, 64>}, {pipeline_mode = #tpu.pipeline_mode<synchronous>, transform_indices = @transform_14, window_bounds = array<i64: 64, 128>}, {pipeline_mode = #tpu.pipeline_mode<synchronous>, transform_indices = @transform_15, window_bounds = array<i64: 1, 128>}, {pipeline_mode = #tpu.pipeline_mode<synchronous>, transform_indices = @transform_16, window_bounds = array<i64: 128, 64>}, {pipeline_mode = #tpu.pipeline_mode<synchronous>, transform_indices = @transform_17, window_bounds = array<i64: 1, 64>}, {transform_indices = @transform_18, window_bounds = array<i64: 1, 256, 64>}]} {
    %c0 = arith.constant 0 : index
    %c0_0 = arith.constant 0 : index
    %c0_1 = arith.constant 0 : index
    %c0_2 = arith.constant 0 : index
    %0 = vector.load %arg1[%c0, %c0_0, %c0_1, %c0_2] : memref<1x18x18x64xf32, #tpu.memory_space<vmem>>, vector<1x18x18x64xf32>
    %1 = vector.shape_cast %0 : vector<1x18x18x64xf32> to vector<18x18x64xf32>
    %c0_3 = arith.constant 0 : index
    %c0_4 = arith.constant 0 : index
    %2 = vector.load %arg2[%c0_3, %c0_4] : memref<9x64xf32, #tpu.memory_space<vmem>>, vector<9x64xf32>
    %3 = vector.extract_strided_slice %1 {offsets = [1, 1, 0], sizes = [16, 16, 64], strides = [1, 1, 1]} : vector<18x18x64xf32> to vector<16x16x64xf32>
    %c0_5 = arith.constant 0 : index
    %c0_6 = arith.constant 0 : index
    %4 = vector.load %arg3[%c0_5, %c0_6] : memref<1x64xf32, #tpu.memory_space<vmem>>, vector<1x64xf32>
    %5 = vector.shape_cast %4 : vector<1x64xf32> to vector<1x1x64xf32>
    %6 = vector.broadcast %5 : vector<1x1x64xf32> to vector<16x16x64xf32>
    %7 = arith.addf %3, %6 : vector<16x16x64xf32>
    %8 = vector.extract_strided_slice %1 {offsets = [0, 0, 0], sizes = [16, 16, 64], strides = [1, 1, 1]} : vector<18x18x64xf32> to vector<16x16x64xf32>
    %9 = vector.extract_strided_slice %2 {offsets = [0, 0], sizes = [1, 64], strides = [1, 1]} : vector<9x64xf32> to vector<1x64xf32>
    %10 = vector.shape_cast %9 : vector<1x64xf32> to vector<1x1x64xf32>
    %11 = vector.broadcast %10 : vector<1x1x64xf32> to vector<16x16x64xf32>
    %12 = arith.mulf %8, %11 : vector<16x16x64xf32>
    %13 = arith.addf %7, %12 : vector<16x16x64xf32>
    %14 = vector.extract_strided_slice %1 {offsets = [0, 1, 0], sizes = [16, 16, 64], strides = [1, 1, 1]} : vector<18x18x64xf32> to vector<16x16x64xf32>
    %15 = vector.extract_strided_slice %2 {offsets = [1, 0], sizes = [1, 64], strides = [1, 1]} : vector<9x64xf32> to vector<1x64xf32>
    %16 = vector.shape_cast %15 : vector<1x64xf32> to vector<1x1x64xf32>
    %17 = vector.broadcast %16 : vector<1x1x64xf32> to vector<16x16x64xf32>
    %18 = arith.mulf %14, %17 : vector<16x16x64xf32>
    %19 = arith.addf %13, %18 : vector<16x16x64xf32>
    %20 = vector.extract_strided_slice %1 {offsets = [0, 2, 0], sizes = [16, 16, 64], strides = [1, 1, 1]} : vector<18x18x64xf32> to vector<16x16x64xf32>
    %21 = vector.extract_strided_slice %2 {offsets = [2, 0], sizes = [1, 64], strides = [1, 1]} : vector<9x64xf32> to vector<1x64xf32>
    %22 = vector.shape_cast %21 : vector<1x64xf32> to vector<1x1x64xf32>
    %23 = vector.broadcast %22 : vector<1x1x64xf32> to vector<16x16x64xf32>
    %24 = arith.mulf %20, %23 : vector<16x16x64xf32>
    %25 = arith.addf %19, %24 : vector<16x16x64xf32>
    %26 = vector.extract_strided_slice %1 {offsets = [1, 0, 0], sizes = [16, 16, 64], strides = [1, 1, 1]} : vector<18x18x64xf32> to vector<16x16x64xf32>
    %27 = vector.extract_strided_slice %2 {offsets = [3, 0], sizes = [1, 64], strides = [1, 1]} : vector<9x64xf32> to vector<1x64xf32>
    %28 = vector.shape_cast %27 : vector<1x64xf32> to vector<1x1x64xf32>
    %29 = vector.broadcast %28 : vector<1x1x64xf32> to vector<16x16x64xf32>
    %30 = arith.mulf %26, %29 : vector<16x16x64xf32>
    %31 = arith.addf %25, %30 : vector<16x16x64xf32>
    %32 = vector.extract_strided_slice %1 {offsets = [1, 1, 0], sizes = [16, 16, 64], strides = [1, 1, 1]} : vector<18x18x64xf32> to vector<16x16x64xf32>
    %33 = vector.extract_strided_slice %2 {offsets = [4, 0], sizes = [1, 64], strides = [1, 1]} : vector<9x64xf32> to vector<1x64xf32>
    %34 = vector.shape_cast %33 : vector<1x64xf32> to vector<1x1x64xf32>
    %35 = vector.broadcast %34 : vector<1x1x64xf32> to vector<16x16x64xf32>
    %36 = arith.mulf %32, %35 : vector<16x16x64xf32>
    %37 = arith.addf %31, %36 : vector<16x16x64xf32>
    %38 = vector.extract_strided_slice %1 {offsets = [1, 2, 0], sizes = [16, 16, 64], strides = [1, 1, 1]} : vector<18x18x64xf32> to vector<16x16x64xf32>
    %39 = vector.extract_strided_slice %2 {offsets = [5, 0], sizes = [1, 64], strides = [1, 1]} : vector<9x64xf32> to vector<1x64xf32>
    %40 = vector.shape_cast %39 : vector<1x64xf32> to vector<1x1x64xf32>
    %41 = vector.broadcast %40 : vector<1x1x64xf32> to vector<16x16x64xf32>
    %42 = arith.mulf %38, %41 : vector<16x16x64xf32>
    %43 = arith.addf %37, %42 : vector<16x16x64xf32>
    %44 = vector.extract_strided_slice %1 {offsets = [2, 0, 0], sizes = [16, 16, 64], strides = [1, 1, 1]} : vector<18x18x64xf32> to vector<16x16x64xf32>
    %45 = vector.extract_strided_slice %2 {offsets = [6, 0], sizes = [1, 64], strides = [1, 1]} : vector<9x64xf32> to vector<1x64xf32>
    %46 = vector.shape_cast %45 : vector<1x64xf32> to vector<1x1x64xf32>
    %47 = vector.broadcast %46 : vector<1x1x64xf32> to vector<16x16x64xf32>
    %48 = arith.mulf %44, %47 : vector<16x16x64xf32>
    %49 = arith.addf %43, %48 : vector<16x16x64xf32>
    %50 = vector.extract_strided_slice %1 {offsets = [2, 1, 0], sizes = [16, 16, 64], strides = [1, 1, 1]} : vector<18x18x64xf32> to vector<16x16x64xf32>
    %51 = vector.extract_strided_slice %2 {offsets = [7, 0], sizes = [1, 64], strides = [1, 1]} : vector<9x64xf32> to vector<1x64xf32>
    %52 = vector.shape_cast %51 : vector<1x64xf32> to vector<1x1x64xf32>
    %53 = vector.broadcast %52 : vector<1x1x64xf32> to vector<16x16x64xf32>
    %54 = arith.mulf %50, %53 : vector<16x16x64xf32>
    %55 = arith.addf %49, %54 : vector<16x16x64xf32>
    %56 = vector.extract_strided_slice %1 {offsets = [2, 2, 0], sizes = [16, 16, 64], strides = [1, 1, 1]} : vector<18x18x64xf32> to vector<16x16x64xf32>
    %57 = vector.extract_strided_slice %2 {offsets = [8, 0], sizes = [1, 64], strides = [1, 1]} : vector<9x64xf32> to vector<1x64xf32>
    %58 = vector.shape_cast %57 : vector<1x64xf32> to vector<1x1x64xf32>
    %59 = vector.broadcast %58 : vector<1x1x64xf32> to vector<16x16x64xf32>
    %60 = arith.mulf %56, %59 : vector<16x16x64xf32>
    %61 = arith.addf %55, %60 : vector<16x16x64xf32>
    %62 = vector.shape_cast %61 : vector<16x16x64xf32> to vector<256x64xf32>
    %63 = vector.extract_strided_slice %62 {offsets = [0, 0], sizes = [256, 32], strides = [1, 1]} : vector<256x64xf32> to vector<256x32xf32>
    %64 = vector.extract_strided_slice %62 {offsets = [0, 32], sizes = [256, 32], strides = [1, 1]} : vector<256x64xf32> to vector<256x32xf32>
    %cst = arith.constant dense<0.000000e+00> : vector<256xf32>
    %65 = vector.multi_reduction <add>, %63, %cst [1] : vector<256x32xf32> to vector<256xf32>
    %66 = vector.shape_cast %65 : vector<256xf32> to vector<256x1xf32>
    %cst_7 = arith.constant dense<0.000000e+00> : vector<1xf32>
    %67 = vector.multi_reduction <add>, %66, %cst_7 [0] : vector<256x1xf32> to vector<1xf32>
    %68 = vector.shape_cast %67 : vector<1xf32> to vector<1x1xf32>
    %cst_8 = arith.constant 8.192000e+03 : f32
    %69 = vector.broadcast %cst_8 : f32 to vector<1x1xf32>
    %70 = arith.divf %68, %69 : vector<1x1xf32>
    %71 = vector.broadcast %70 : vector<1x1xf32> to vector<256x32xf32>
    %72 = arith.subf %63, %71 : vector<256x32xf32>
    %73 = vector.broadcast %70 : vector<1x1xf32> to vector<256x32xf32>
    %74 = arith.subf %63, %73 : vector<256x32xf32>
    %75 = arith.mulf %72, %74 : vector<256x32xf32>
    %cst_9 = arith.constant dense<0.000000e+00> : vector<256xf32>
    %76 = vector.multi_reduction <add>, %75, %cst_9 [1] : vector<256x32xf32> to vector<256xf32>
    %77 = vector.shape_cast %76 : vector<256xf32> to vector<256x1xf32>
    %cst_10 = arith.constant dense<0.000000e+00> : vector<1xf32>
    %78 = vector.multi_reduction <add>, %77, %cst_10 [0] : vector<256x1xf32> to vector<1xf32>
    %79 = vector.shape_cast %78 : vector<1xf32> to vector<1x1xf32>
    %cst_11 = arith.constant 8.192000e+03 : f32
    %80 = vector.broadcast %cst_11 : f32 to vector<1x1xf32>
    %81 = arith.divf %79, %80 : vector<1x1xf32>
    %82 = vector.broadcast %70 : vector<1x1xf32> to vector<256x32xf32>
    %83 = arith.subf %63, %82 : vector<256x32xf32>
    %cst_12 = arith.constant 9.99999974E-6 : f32
    %84 = vector.broadcast %cst_12 : f32 to vector<1x1xf32>
    %85 = arith.addf %81, %84 : vector<1x1xf32>
    %86 = math.rsqrt %85 : vector<1x1xf32>
    %87 = vector.broadcast %86 : vector<1x1xf32> to vector<256x32xf32>
    %88 = arith.mulf %83, %87 : vector<256x32xf32>
    %c0_13 = arith.constant 0 : index
    %c0_14 = arith.constant 0 : index
    %89 = vector.load %arg4[%c0_13, %c0_14] : memref<1x32xf32, #tpu.memory_space<vmem>>, vector<1x32xf32>
    %90 = vector.broadcast %89 : vector<1x32xf32> to vector<256x32xf32>
    %91 = arith.mulf %88, %90 : vector<256x32xf32>
    %c0_15 = arith.constant 0 : index
    %c0_16 = arith.constant 0 : index
    %92 = vector.load %arg5[%c0_15, %c0_16] : memref<1x32xf32, #tpu.memory_space<vmem>>, vector<1x32xf32>
    %93 = vector.broadcast %92 : vector<1x32xf32> to vector<256x32xf32>
    %94 = arith.addf %91, %93 : vector<256x32xf32>
    %c0_17 = arith.constant 0 : index
    %c0_18 = arith.constant 0 : index
    %95 = vector.load %arg6[%c0_17, %c0_18] : memref<32x16xf32, #tpu.memory_space<vmem>>, vector<32x16xf32>
    %cst_19 = arith.constant dense<0.000000e+00> : vector<256x16xf32>
    %96 = tpu.matmul %94, %95, %cst_19 {dimension_numbers = #tpu.dot_dimension_numbers<[1], [0], [0], [1], [0, 0, 1, 1], [], []>} : vector<256x32xf32>, vector<32x16xf32>, vector<256x16xf32> -> vector<256x16xf32>
    %c0_20 = arith.constant 0 : index
    %c0_21 = arith.constant 0 : index
    %97 = vector.load %arg7[%c0_20, %c0_21] : memref<1x16xf32, #tpu.memory_space<vmem>>, vector<1x16xf32>
    %98 = vector.broadcast %97 : vector<1x16xf32> to vector<256x16xf32>
    %99 = arith.addf %96, %98 : vector<256x16xf32>
    %c0_22 = arith.constant 0 : index
    %c0_23 = arith.constant 0 : index
    %100 = vector.load %arg8[%c0_22, %c0_23] : memref<32x16xf32, #tpu.memory_space<vmem>>, vector<32x16xf32>
    %cst_24 = arith.constant dense<0.000000e+00> : vector<256x16xf32>
    %101 = tpu.matmul %94, %100, %cst_24 {dimension_numbers = #tpu.dot_dimension_numbers<[1], [0], [0], [1], [0, 0, 1, 1], [], []>} : vector<256x32xf32>, vector<32x16xf32>, vector<256x16xf32> -> vector<256x16xf32>
    %c0_25 = arith.constant 0 : index
    %c0_26 = arith.constant 0 : index
    %102 = vector.load %arg9[%c0_25, %c0_26] : memref<1x16xf32, #tpu.memory_space<vmem>>, vector<1x16xf32>
    %103 = vector.broadcast %102 : vector<1x16xf32> to vector<256x16xf32>
    %104 = arith.addf %101, %103 : vector<256x16xf32>
    %c0_27 = arith.constant 0 : index
    %c0_28 = arith.constant 0 : index
    %105 = vector.load %arg10[%c0_27, %c0_28] : memref<32x32xf32, #tpu.memory_space<vmem>>, vector<32x32xf32>
    %cst_29 = arith.constant dense<0.000000e+00> : vector<256x32xf32>
    %106 = tpu.matmul %94, %105, %cst_29 {dimension_numbers = #tpu.dot_dimension_numbers<[1], [0], [0], [1], [0, 0, 1, 1], [], []>} : vector<256x32xf32>, vector<32x32xf32>, vector<256x32xf32> -> vector<256x32xf32>
    %c0_30 = arith.constant 0 : index
    %c0_31 = arith.constant 0 : index
    %107 = vector.load %arg11[%c0_30, %c0_31] : memref<1x32xf32, #tpu.memory_space<vmem>>, vector<1x32xf32>
    %108 = vector.broadcast %107 : vector<1x32xf32> to vector<256x32xf32>
    %109 = arith.addf %106, %108 : vector<256x32xf32>
    %cst_32 = arith.constant dense<0.000000e+00> : vector<256x256xf32>
    %110 = tpu.matmul %99, %104, %cst_32 {dimension_numbers = #tpu.dot_dimension_numbers<[1], [1], [0], [0], [0, 0, 1, 0], [], []>} : vector<256x16xf32>, vector<256x16xf32>, vector<256x256xf32> -> vector<256x256xf32>
    %cst_33 = arith.constant 2.500000e-01 : f32
    %111 = vector.broadcast %cst_33 : f32 to vector<256x256xf32>
    %112 = arith.mulf %110, %111 : vector<256x256xf32>
    %cst_34 = arith.constant dense<0xFF800000> : vector<256xf32>
    %113 = vector.multi_reduction <maximumf>, %112, %cst_34 [1] : vector<256x256xf32> to vector<256xf32>
    %114 = vector.shape_cast %113 : vector<256xf32> to vector<256x1xf32>
    %115 = vector.broadcast %114 : vector<256x1xf32> to vector<256x256xf32>
    %116 = arith.subf %112, %115 : vector<256x256xf32>
    %117 = math.exp %116 : vector<256x256xf32>
    %cst_35 = arith.constant dense<0.000000e+00> : vector<256xf32>
    %118 = vector.multi_reduction <add>, %117, %cst_35 [1] : vector<256x256xf32> to vector<256xf32>
    %119 = vector.shape_cast %118 : vector<256xf32> to vector<256x1xf32>
    %120 = vector.broadcast %119 : vector<256x1xf32> to vector<256x256xf32>
    %121 = arith.divf %117, %120 : vector<256x256xf32>
    %cst_36 = arith.constant dense<0.000000e+00> : vector<256x32xf32>
    %122 = tpu.matmul %121, %109, %cst_36 {dimension_numbers = #tpu.dot_dimension_numbers<[1], [0], [0], [1], [0, 0, 1, 1], [], []>} : vector<256x256xf32>, vector<256x32xf32>, vector<256x32xf32> -> vector<256x32xf32>
    %cst_37 = arith.constant 0.000000e+00 : f32
    %123 = vector.broadcast %cst_37 : f32 to vector<256x32xf32>
    %124 = arith.maximumf %122, %123 : vector<256x32xf32>
    %c0_38 = arith.constant 0 : index
    %c0_39 = arith.constant 0 : index
    %125 = vector.load %arg12[%c0_38, %c0_39] : memref<32x64xf32, #tpu.memory_space<vmem>>, vector<32x64xf32>
    %cst_40 = arith.constant dense<0.000000e+00> : vector<256x64xf32>
    %126 = tpu.matmul %124, %125, %cst_40 {dimension_numbers = #tpu.dot_dimension_numbers<[1], [0], [0], [1], [0, 0, 1, 1], [], []>} : vector<256x32xf32>, vector<32x64xf32>, vector<256x64xf32> -> vector<256x64xf32>
    %cst_41 = arith.constant 0.000000e+00 : f32
    %127 = vector.broadcast %cst_41 : f32 to vector<256x32xf32>
    %128 = arith.maximumf %64, %127 : vector<256x32xf32>
    %c0_42 = arith.constant 0 : index
    %c0_43 = arith.constant 0 : index
    %129 = vector.load %arg13[%c0_42, %c0_43] : memref<32x64xf32, #tpu.memory_space<vmem>>, vector<32x64xf32>
    %cst_44 = arith.constant dense<0.000000e+00> : vector<256x64xf32>
    %130 = tpu.matmul %128, %129, %cst_44 {dimension_numbers = #tpu.dot_dimension_numbers<[1], [0], [0], [1], [0, 0, 1, 1], [], []>} : vector<256x32xf32>, vector<32x64xf32>, vector<256x64xf32> -> vector<256x64xf32>
    %131 = arith.addf %126, %130 : vector<256x64xf32>
    %c0_45 = arith.constant 0 : index
    %c0_46 = arith.constant 0 : index
    %132 = vector.load %arg14[%c0_45, %c0_46] : memref<1x64xf32, #tpu.memory_space<vmem>>, vector<1x64xf32>
    %133 = vector.broadcast %132 : vector<1x64xf32> to vector<256x64xf32>
    %134 = arith.addf %131, %133 : vector<256x64xf32>
    %135 = arith.addf %62, %134 : vector<256x64xf32>
    %c0_47 = arith.constant 0 : index
    %c0_48 = arith.constant 0 : index
    %136 = vector.load %arg15[%c0_47, %c0_48] : memref<64x128xf32, #tpu.memory_space<vmem>>, vector<64x128xf32>
    %cst_49 = arith.constant dense<0.000000e+00> : vector<256x128xf32>
    %137 = tpu.matmul %135, %136, %cst_49 {dimension_numbers = #tpu.dot_dimension_numbers<[1], [0], [0], [1], [0, 0, 1, 1], [], []>} : vector<256x64xf32>, vector<64x128xf32>, vector<256x128xf32> -> vector<256x128xf32>
    %c0_50 = arith.constant 0 : index
    %c0_51 = arith.constant 0 : index
    %138 = vector.load %arg16[%c0_50, %c0_51] : memref<1x128xf32, #tpu.memory_space<vmem>>, vector<1x128xf32>
    %139 = vector.broadcast %138 : vector<1x128xf32> to vector<256x128xf32>
    %140 = arith.addf %137, %139 : vector<256x128xf32>
    %cst_52 = arith.constant 0.000000e+00 : f32
    %141 = vector.broadcast %cst_52 : f32 to vector<256x128xf32>
    %142 = arith.maximumf %140, %141 : vector<256x128xf32>
    %c0_53 = arith.constant 0 : index
    %c0_54 = arith.constant 0 : index
    %143 = vector.load %arg17[%c0_53, %c0_54] : memref<128x64xf32, #tpu.memory_space<vmem>>, vector<128x64xf32>
    %cst_55 = arith.constant dense<0.000000e+00> : vector<256x64xf32>
    %144 = tpu.matmul %142, %143, %cst_55 {dimension_numbers = #tpu.dot_dimension_numbers<[1], [0], [0], [1], [0, 0, 1, 1], [], []>} : vector<256x128xf32>, vector<128x64xf32>, vector<256x64xf32> -> vector<256x64xf32>
    %c0_56 = arith.constant 0 : index
    %c0_57 = arith.constant 0 : index
    %145 = vector.load %arg18[%c0_56, %c0_57] : memref<1x64xf32, #tpu.memory_space<vmem>>, vector<1x64xf32>
    %146 = vector.broadcast %145 : vector<1x64xf32> to vector<256x64xf32>
    %147 = arith.addf %144, %146 : vector<256x64xf32>
    %148 = arith.addf %135, %147 : vector<256x64xf32>
    %c0_58 = arith.constant 0 : index
    %c0_59 = arith.constant 0 : index
    %c0_60 = arith.constant 0 : index
    %149 = vector.load %arg19[%c0_58, %c0_59, %c0_60] : memref<1x256x64xf32, #tpu.memory_space<vmem>>, vector<1x256x64xf32>
    %150 = vector.shape_cast %149 : vector<1x256x64xf32> to vector<256x64xf32>
    %151 = vector.shape_cast %148 : vector<256x64xf32> to vector<1x256x64xf32>
    tpu.vector_store %arg19[%c0_58, %c0_59, %c0_60], %151 {strides = array<i32>} : memref<1x256x64xf32, #tpu.memory_space<vmem>>, vector<1x256x64xf32>,
    return
  }
  func.func @transform_0(%arg0: i32) -> (i32, i32, i32, i32) {
    %c0_i32 = arith.constant 0 : i32
    %c0_i32_0 = arith.constant 0 : i32
    %c0_i32_1 = arith.constant 0 : i32
    %c0_i32_2 = arith.constant 0 : i32
    return %arg0, %c0_i32, %c0_i32_0, %c0_i32_1 : i32, i32, i32, i32
  }
  func.func @transform_1(%arg0: i32) -> (i32, i32) {
    %c0_i32 = arith.constant 0 : i32
    %c0_i32_0 = arith.constant 0 : i32
    %c0_i32_1 = arith.constant 0 : i32
    return %c0_i32, %c0_i32_0 : i32, i32
  }
  func.func @transform_2(%arg0: i32) -> (i32, i32) {
    %c0_i32 = arith.constant 0 : i32
    %c0_i32_0 = arith.constant 0 : i32
    %c0_i32_1 = arith.constant 0 : i32
    return %c0_i32, %c0_i32_0 : i32, i32
  }
  func.func @transform_3(%arg0: i32) -> (i32, i32) {
    %c0_i32 = arith.constant 0 : i32
    %c0_i32_0 = arith.constant 0 : i32
    %c0_i32_1 = arith.constant 0 : i32
    return %c0_i32, %c0_i32_0 : i32, i32
  }
  func.func @transform_4(%arg0: i32) -> (i32, i32) {
    %c0_i32 = arith.constant 0 : i32
    %c0_i32_0 = arith.constant 0 : i32
    %c0_i32_1 = arith.constant 0 : i32
    return %c0_i32, %c0_i32_0 : i32, i32
  }
  func.func @transform_5(%arg0: i32) -> (i32, i32) {
    %c0_i32 = arith.constant 0 : i32
    %c0_i32_0 = arith.constant 0 : i32
    %c0_i32_1 = arith.constant 0 : i32
    return %c0_i32, %c0_i32_0 : i32, i32
  }
  func.func @transform_6(%arg0: i32) -> (i32, i32) {
    %c0_i32 = arith.constant 0 : i32
    %c0_i32_0 = arith.constant 0 : i32
    %c0_i32_1 = arith.constant 0 : i32
    return %c0_i32, %c0_i32_0 : i32, i32
  }
  func.func @transform_7(%arg0: i32) -> (i32, i32) {
    %c0_i32 = arith.constant 0 : i32
    %c0_i32_0 = arith.constant 0 : i32
    %c0_i32_1 = arith.constant 0 : i32
    return %c0_i32, %c0_i32_0 : i32, i32
  }
  func.func @transform_8(%arg0: i32) -> (i32, i32) {
    %c0_i32 = arith.constant 0 : i32
    %c0_i32_0 = arith.constant 0 : i32
    %c0_i32_1 = arith.constant 0 : i32
    return %c0_i32, %c0_i32_0 : i32, i32
  }
  func.func @transform_9(%arg0: i32) -> (i32, i32) {
    %c0_i32 = arith.constant 0 : i32
    %c0_i32_0 = arith.constant 0 : i32
    %c0_i32_1 = arith.constant 0 : i32
    return %c0_i32, %c0_i32_0 : i32, i32
  }
  func.func @transform_10(%arg0: i32) -> (i32, i32) {
    %c0_i32 = arith.constant 0 : i32
    %c0_i32_0 = arith.constant 0 : i32
    %c0_i32_1 = arith.constant 0 : i32
    return %c0_i32, %c0_i32_0 : i32, i32
  }
  func.func @transform_11(%arg0: i32) -> (i32, i32) {
    %c0_i32 = arith.constant 0 : i32
    %c0_i32_0 = arith.constant 0 : i32
    %c0_i32_1 = arith.constant 0 : i32
    return %c0_i32, %c0_i32_0 : i32, i32
  }
  func.func @transform_12(%arg0: i32) -> (i32, i32) {
    %c0_i32 = arith.constant 0 : i32
    %c0_i32_0 = arith.constant 0 : i32
    %c0_i32_1 = arith.constant 0 : i32
    return %c0_i32, %c0_i32_0 : i32, i32
  }
  func.func @transform_13(%arg0: i32) -> (i32, i32) {
    %c0_i32 = arith.constant 0 : i32
    %c0_i32_0 = arith.constant 0 : i32
    %c0_i32_1 = arith.constant 0 : i32
    return %c0_i32, %c0_i32_0 : i32, i32
  }
  func.func @transform_14(%arg0: i32) -> (i32, i32) {
    %c0_i32 = arith.constant 0 : i32
    %c0_i32_0 = arith.constant 0 : i32
    %c0_i32_1 = arith.constant 0 : i32
    return %c0_i32, %c0_i32_0 : i32, i32
  }
  func.func @transform_15(%arg0: i32) -> (i32, i32) {
    %c0_i32 = arith.constant 0 : i32
    %c0_i32_0 = arith.constant 0 : i32
    %c0_i32_1 = arith.constant 0 : i32
    return %c0_i32, %c0_i32_0 : i32, i32
  }
  func.func @transform_16(%arg0: i32) -> (i32, i32) {
    %c0_i32 = arith.constant 0 : i32
    %c0_i32_0 = arith.constant 0 : i32
    %c0_i32_1 = arith.constant 0 : i32
    return %c0_i32, %c0_i32_0 : i32, i32
  }
  func.func @transform_17(%arg0: i32) -> (i32, i32) {
    %c0_i32 = arith.constant 0 : i32
    %c0_i32_0 = arith.constant 0 : i32
    %c0_i32_1 = arith.constant 0 : i32
    return %c0_i32, %c0_i32_0 : i32, i32
  }
  func.func @transform_18(%arg0: i32) -> (i32, i32, i32) {
    %c0_i32 = arith.constant 0 : i32
    %c0_i32_0 = arith.constant 0 : i32
    %c0_i32_1 = arith.constant 0 : i32
    return %arg0, %c0_i32, %c0_i32_0 : i32, i32, i32
  }
}

</mosaic_0001>

<llo_original>
// kernel: tpu_custom_call.1
$region0: #{tpu_custom_call.1}
  #allocation0 [shape = 'u32[]', space=smem, size = 0x4, offset = 0x4, fixed_abs, tag = 'smem constant byte address 0x4 - core index']
  #allocation1 [shape = 'u32[144,128]{1,0:T(1,128)}', space=vmem, size = 0x12000, scoped, tag = 'internal scratch']
  %s0 = inlined_call_operand.hbm [shape: f32[2,18,18,64], index: 0, kind: input, shape index: {}]
  %s1 = inlined_call_operand.hbm [shape: f32[9,64], index: 1, kind: input, shape index: {}]
  %s2 = inlined_call_operand.hbm [shape: f32[1,64], index: 2, kind: input, shape index: {}]
  %s3 = inlined_call_operand.hbm [shape: f32[1,32], index: 3, kind: input, shape index: {}]
  %s4 = inlined_call_operand.hbm [shape: f32[1,32], index: 4, kind: input, shape index: {}]
  %s5 = inlined_call_operand.hbm [shape: f32[32,16], index: 5, kind: input, shape index: {}]
  %s6 = inlined_call_operand.hbm [shape: f32[1,16], index: 6, kind: input, shape index: {}]
  %s7 = inlined_call_operand.hbm [shape: f32[32,16], index: 7, kind: input, shape index: {}]
  %s8 = inlined_call_operand.hbm [shape: f32[1,16], index: 8, kind: input, shape index: {}]
  %s9 = inlined_call_operand.hbm [shape: f32[32,32], index: 9, kind: input, shape index: {}]
  %s10 = inlined_call_operand.hbm [shape: f32[1,32], index: 10, kind: input, shape index: {}]
  %s11 = inlined_call_operand.hbm [shape: f32[32,64], index: 11, kind: input, shape index: {}]
  %s12 = inlined_call_operand.hbm [shape: f32[32,64], index: 12, kind: input, shape index: {}]
  %s13 = inlined_call_operand.hbm [shape: f32[1,64], index: 13, kind: input, shape index: {}]
  %s14 = inlined_call_operand.hbm [shape: f32[64,128], index: 14, kind: input, shape index: {}]
  %s15 = inlined_call_operand.hbm [shape: f32[1,128], index: 15, kind: input, shape index: {}]
  %s16 = inlined_call_operand.hbm [shape: f32[128,64], index: 16, kind: input, shape index: {}]
  %s17 = inlined_call_operand.hbm [shape: f32[1,64], index: 17, kind: input, shape index: {}]
  %s18 = inlined_call_operand.hbm [shape: f32[2,256,64], index: 18, kind: output, shape index: {}]
  %s19 = sld [smem:[#allocation0]]
  $region177: #{tpu_custom_call.1} parent=0
    _
  %s21 = ssub.s32 1, %s19
  %s22 = scalar_select 0, %s21, %s19
  $region1: #{tpu_custom_call.1} parent=0
    #allocation2 [shape = 'u8[442368]{0}', space=vmem, size = 0x6c000, scoped, tag = 'input window, operand 0']
    #allocation3 [shape = 's32[2]{0}', space=sflag, size = 0x8, scoped, tag = 'scoped memory for tpu_custom_call.1']
    #allocation4 [shape = 's32[2]{0}', space=sflag, size = 0x8, scoped, tag = 'scoped memory for tpu_custom_call.1']
    #allocation5 [shape = 'u8[8192]{0}', space=vmem, size = 0x2000, scoped, tag = 'input window, operand 1, single buffered']
    #allocation6 [shape = 's32[1]{0}', space=sflag, size = 0x4, scoped, tag = 'scoped memory for tpu_custom_call.1']
    #allocation7 [shape = 'u8[512]{0}', space=vmem, size = 0x400, scoped, tag = 'input window, operand 2, single buffered']
    #allocation8 [shape = 'u8[512]{0}', space=vmem, size = 0x400, scoped, tag = 'input window, operand 3, single buffered']
    #allocation9 [shape = 's32[1]{0}', space=sflag, size = 0x4, scoped, tag = 'scoped memory for tpu_custom_call.1']
    #allocation10 [shape = 'u8[512]{0}', space=vmem, size = 0x400, scoped, tag = 'input window, operand 4, single buffered']
    #allocation11 [shape = 'u8[16384]{0}', space=vmem, size = 0x4000, scoped, tag = 'input window, operand 5, single buffered']
    #allocation12 [shape = 's32[1]{0}', space=sflag, size = 0x4, scoped, tag = 'scoped memory for tpu_custom_call.1']
    #allocation13 [shape = 'u8[512]{0}', space=vmem, size = 0x400, scoped, tag = 'input window, operand 6, single buffered']
    #allocation14 [shape = 'u8[16384]{0}', space=vmem, size = 0x4000, scoped, tag = 'input window, operand 7, single buffered']
    #allocation15 [shape = 's32[1]{0}', space=sflag, size = 0x4, scoped, tag = 'scoped memory for tpu_custom_call.1']
    #allocation16 [shape = 'u8[512]{0}', space=vmem, size = 0x400, scoped, tag = 'input window, operand 8, single buffered']
    #allocation17 [shape = 'u8[16384]{0}', space=vmem, size = 0x4000, scoped, tag = 'input window, operand 9, single buffered']
    #allocation18 [shape = 's32[1]{0}', space=sflag, size = 0x4, scoped, tag = 'scoped memory for tpu_custom_call.1']
    #allocation19 [shape = 'u8[512]{0}', space=vmem, size = 0x400, scoped, tag = 'input window, operand 10, single buffered']
    #allocation20 [shape = 'u8[16384]{0}', space=vmem, size = 0x4000, scoped, tag = 'input window, operand 11, single buffered']
    #allocation21 [shape = 's32[1]{0}', space=sflag, size = 0x4, scoped, tag = 'scoped memory for tpu_custom_call.1']
    #allocation22 [shape = 'u8[16384]{0}', space=vmem, size = 0x4000, scoped, tag = 'input window, operand 12, single buffered']
    #allocation23 [shape = 'u8[512]{0}', space=vmem, size = 0x400, scoped, tag = 'input window, operand 13, single buffered']
    #allocation24 [shape = 's32[1]{0}', space=sflag, size = 0x4, scoped, tag = 'scoped memory for tpu_custom_call.1']
    #allocation25 [shape = 'u8[32768]{0}', space=vmem, size = 0x8000, scoped, tag = 'input window, operand 14, single buffered']
    #allocation26 [shape = 'u8[512]{0}', space=vmem, size = 0x400, scoped, tag = 'input window, operand 15, single buffered']
    #allocation27 [shape = 's32[1]{0}', space=sflag, size = 0x4, scoped, tag = 'scoped memory for tpu_custom_call.1']
    #allocation28 [shape = 'u8[65536]{0}', space=vmem, size = 0x10000, scoped, tag = 'input window, operand 16, single buffered']
    #allocation29 [shape = 'u8[512]{0}', space=vmem, size = 0x400, scoped, tag = 'input window, operand 17, single buffered']
    #allocation30 [shape = 's32[1]{0}', space=sflag, size = 0x4, scoped, tag = 'scoped memory for tpu_custom_call.1']
    #allocation31 [shape = 'u8[262144]{0}', space=vmem, size = 0x40000, scoped, tag = 'output window, operand 0']
    %23 = vsyncpa [#allocation3], 0
    %s24 = scalar_lea.sflag [#allocation3], 1
    %25 = vsyncpa %s24, 0
    %26 = vsyncpa [#allocation6], 0
    %27 = vsyncpa [#allocation9], 0
    %28 = vsyncpa [#allocation12], 0
    %29 = vsyncpa [#allocation15], 0
    %30 = vsyncpa [#allocation18], 0
    %31 = vsyncpa [#allocation21], 0
    %32 = vsyncpa [#allocation24], 0
    %33 = vsyncpa [#allocation27], 0
    %34 = vsyncpa [#allocation30], 0
    %35 = vsyncpa [#allocation4], 0
    %s36 = scalar_lea.sflag [#allocation4], 1
    %37 = vsyncpa %s36, 0
    loop: start=0, step=1, limit=4
    $region2: #{tpu_custom_call.1} parent=1 // loop_pre_header
      _
    $region3: #{tpu_custom_call.1} parent=1 // loop_header
      %s39 = sphi 0, %s43
      %p40 = scmp.ge.s32.totalorder %s39, 4
      %s49 = sphi 0, %s51
      %s52 = sphi 0, %s49
      %s53 = sphi 0, %s52
      %s69 = sphi 0, %s53
      %s73 = sphi 0, %s73
      %s75 = sphi 0, %s73
      %s76 = sphi 0, %s75
      %s90 = sphi 0, %s76
      %s94 = sphi 0, %s94
      %s96 = sphi 0, %s94
      %s97 = sphi 0, %s96
      %s111 = sphi 0, %s97
      %s115 = sphi 0, %s115
      %s117 = sphi 0, %s115
      %s118 = sphi 0, %s117
      %s132 = sphi 0, %s118
      %s136 = sphi 0, %s136
      %s138 = sphi 0, %s136
      %s139 = sphi 0, %s138
      %s153 = sphi 0, %s139
      %s157 = sphi 0, %s157
      %s159 = sphi 0, %s157
      %s160 = sphi 0, %s159
      %s174 = sphi 0, %s160
      %s178 = sphi 0, %s178
      %s180 = sphi 0, %s178
      %s181 = sphi 0, %s180
      %s195 = sphi 0, %s181
      %s199 = sphi 0, %s199
      %s201 = sphi 0, %s199
      %s202 = sphi 0, %s201
      %s216 = sphi 0, %s202
      %s220 = sphi 0, %s220
      %s222 = sphi 0, %s220
      %s223 = sphi 0, %s222
      %s237 = sphi 0, %s223
      %s241 = sphi 0, %s241
      %s243 = sphi 0, %s241
      %s244 = sphi 0, %s243
      %s258 = sphi 0, %s244
      %s262 = sphi 0, %s262
      %s264 = sphi 0, %s262
      %s265 = sphi 0, %s264
      %s279 = sphi 0, %s265
      %s283 = sphi 0, %s283
      %s285 = sphi 0, %s283
      %s286 = sphi 0, %s285
      %s300 = sphi 0, %s286
      %s304 = sphi 0, %s304
      %s306 = sphi 0, %s304
      %s307 = sphi 0, %s306
      %s321 = sphi 0, %s307
      %s325 = sphi 0, %s325
      %s327 = sphi 0, %s325
      %s328 = sphi 0, %s327
      %s342 = sphi 0, %s328
      %s346 = sphi 0, %s346
      %s348 = sphi 0, %s346
      %s349 = sphi 0, %s348
      %s363 = sphi 0, %s349
      %s367 = sphi 0, %s367
      %s369 = sphi 0, %s367
      %s370 = sphi 0, %s369
      %s384 = sphi 0, %s370
      %s388 = sphi 0, %s388
      %s390 = sphi 0, %s388
      %s391 = sphi 0, %s390
      %s405 = sphi 0, %s391
      %s409 = sphi 0, %s409
      %s411 = sphi 0, %s409
      %s412 = sphi 0, %s411
      %s426 = sphi 0, %s412
      %s432 = sphi 0, %s434
      %s435 = sphi 0, %s432
      %s436 = sphi 0, %s435
      %s452 = sphi 0, %s436
    $region4: #{tpu_custom_call.1} parent=1 // loop_header_branch
      %42 = sbr.rel (%p40) target = $region8
    $region5: #{tpu_custom_call.1} parent=1 // loop_body
      %s44 = ssub.s32 %s39, 1
      %s45 = ssub.s32 %s39, 2
      %s46 = sadd.s32 %s39, 1
      %s47 = ssub.s32 %s39, %s46
      %p48 = scmp.eq.s32.totalorder %s47, 0
      %s50 = sadd.s32 %s49, 1
      %s51 = scalar_select %p48, %s49, %s50
      %p54 = pneg %p48
      %p55 = scmp.eq.s32.totalorder %s39, 1
      %p56 = por %p54, %p55
      %p57 = scmp.ne.s32.totalorder %s49, %s52
      %p58 = scmp.eq.s32.totalorder %s39, 0
      %p59 = por %p57, %p58
      %p60 = scmp.ne.s32.totalorder %s49, %s52
      %p61 = scmp.eq.s32.totalorder %s44, 1
      %p62 = por %p60, %p61
      %p63 = scmp.ne.s32.totalorder %s52, %s53
      %p64 = scmp.eq.s32.totalorder %s44, 0
      %p65 = por %p63, %p64
      %p66 = scmp.ne.s32.totalorder %s52, %s53
      %p67 = scmp.eq.s32.totalorder %s45, 1
      %p68 = por %p66, %p67
      %p70 = scmp.ne.s32.totalorder %s53, %s69
      %p71 = scmp.eq.s32.totalorder %s45, 0
      %p72 = por %p70, %p71
      %s74 = sadd.s32 %s73, 1
      %p77 = scmp.eq.s32.totalorder %s39, 1
      %p78 = scmp.ne.s32.totalorder %s73, %s75
      %p79 = scmp.eq.s32.totalorder %s39, 0
      %p80 = por %p78, %p79
      %p81 = scmp.ne.s32.totalorder %s73, %s75
      %p82 = scmp.eq.s32.totalorder %s44, 1
      %p83 = por %p81, %p82
      %p84 = scmp.ne.s32.totalorder %s75, %s76
      %p85 = scmp.eq.s32.totalorder %s44, 0
      %p86 = por %p84, %p85
      %p87 = scmp.ne.s32.totalorder %s75, %s76
      %p88 = scmp.eq.s32.totalorder %s45, 1
      %p89 = por %p87, %p88
      %p91 = scmp.ne.s32.totalorder %s76, %s90
      %p92 = scmp.eq.s32.totalorder %s45, 0
      %p93 = por %p91, %p92
      %s95 = sadd.s32 %s94, 1
      %p98 = scmp.eq.s32.totalorder %s39, 1
      %p99 = scmp.ne.s32.totalorder %s94, %s96
      %p100 = scmp.eq.s32.totalorder %s39, 0
      %p101 = por %p99, %p100
      %p102 = scmp.ne.s32.totalorder %s94, %s96
      %p103 = scmp.eq.s32.totalorder %s44, 1
      %p104 = por %p102, %p103
      %p105 = scmp.ne.s32.totalorder %s96, %s97
      %p106 = scmp.eq.s32.totalorder %s44, 0
      %p107 = por %p105, %p106
      %p108 = scmp.ne.s32.totalorder %s96, %s97
      %p109 = scmp.eq.s32.totalorder %s45, 1
      %p110 = por %p108, %p109
      %p112 = scmp.ne.s32.totalorder %s97, %s111
      %p113 = scmp.eq.s32.totalorder %s45, 0
      %p114 = por %p112, %p113
      %s116 = sadd.s32 %s115, 1
      %p119 = scmp.eq.s32.totalorder %s39, 1
      %p120 = scmp.ne.s32.totalorder %s115, %s117
      %p121 = scmp.eq.s32.totalorder %s39, 0
      %p122 = por %p120, %p121
      %p123 = scmp.ne.s32.totalorder %s115, %s117
      %p124 = scmp.eq.s32.totalorder %s44, 1
      %p125 = por %p123, %p124
      %p126 = scmp.ne.s32.totalorder %s117, %s118
      %p127 = scmp.eq.s32.totalorder %s44, 0
      %p128 = por %p126, %p127
      %p129 = scmp.ne.s32.totalorder %s117, %s118
      %p130 = scmp.eq.s32.totalorder %s45, 1
      %p131 = por %p129, %p130
      %p133 = scmp.ne.s32.totalorder %s118, %s132
      %p134 = scmp.eq.s32.totalorder %s45, 0
      %p135 = por %p133, %p134
      %s137 = sadd.s32 %s136, 1
      %p140 = scmp.eq.s32.totalorder %s39, 1
      %p141 = scmp.ne.s32.totalorder %s136, %s138
      %p142 = scmp.eq.s32.totalorder %s39, 0
      %p143 = por %p141, %p142
      %p144 = scmp.ne.s32.totalorder %s136, %s138
      %p145 = scmp.eq.s32.totalorder %s44, 1
      %p146 = por %p144, %p145
      %p147 = scmp.ne.s32.totalorder %s138, %s139
      %p148 = scmp.eq.s32.totalorder %s44, 0
      %p149 = por %p147, %p148
      %p150 = scmp.ne.s32.totalorder %s138, %s139
      %p151 = scmp.eq.s32.totalorder %s45, 1
      %p152 = por %p150, %p151
      %p154 = scmp.ne.s32.totalorder %s139, %s153
      %p155 = scmp.eq.s32.totalorder %s45, 0
      %p156 = por %p154, %p155
      %s158 = sadd.s32 %s157, 1
      %p161 = scmp.eq.s32.totalorder %s39, 1
      %p162 = scmp.ne.s32.totalorder %s157, %s159
      %p163 = scmp.eq.s32.totalorder %s39, 0
      %p164 = por %p162, %p163
      %p165 = scmp.ne.s32.totalorder %s157, %s159
      %p166 = scmp.eq.s32.totalorder %s44, 1
      %p167 = por %p165, %p166
      %p168 = scmp.ne.s32.totalorder %s159, %s160
      %p169 = scmp.eq.s32.totalorder %s44, 0
      %p170 = por %p168, %p169
      %p171 = scmp.ne.s32.totalorder %s159, %s160
      %p172 = scmp.eq.s32.totalorder %s45, 1
      %p173 = por %p171, %p172
      %p175 = scmp.ne.s32.totalorder %s160, %s174
      %p176 = scmp.eq.s32.totalorder %s45, 0
      %p177 = por %p175, %p176
      %s179 = sadd.s32 %s178, 1
      %p182 = scmp.eq.s32.totalorder %s39, 1
      %p183 = scmp.ne.s32.totalorder %s178, %s180
      %p184 = scmp.eq.s32.totalorder %s39, 0
      %p185 = por %p183, %p184
      %p186 = scmp.ne.s32.totalorder %s178, %s180
      %p187 = scmp.eq.s32.totalorder %s44, 1
      %p188 = por %p186, %p187
      %p189 = scmp.ne.s32.totalorder %s180, %s181
      %p190 = scmp.eq.s32.totalorder %s44, 0
      %p191 = por %p189, %p190
      %p192 = scmp.ne.s32.totalorder %s180, %s181
      %p193 = scmp.eq.s32.totalorder %s45, 1
      %p194 = por %p192, %p193
      %p196 = scmp.ne.s32.totalorder %s181, %s195
      %p197 = scmp.eq.s32.totalorder %s45, 0
      %p198 = por %p196, %p197
      %s200 = sadd.s32 %s199, 1
      %p203 = scmp.eq.s32.totalorder %s39, 1
      %p204 = scmp.ne.s32.totalorder %s199, %s201
      %p205 = scmp.eq.s32.totalorder %s39, 0
      %p206 = por %p204, %p205
      %p207 = scmp.ne.s32.totalorder %s199, %s201
      %p208 = scmp.eq.s32.totalorder %s44, 1
      %p209 = por %p207, %p208
      %p210 = scmp.ne.s32.totalorder %s201, %s202
      %p211 = scmp.eq.s32.totalorder %s44, 0
      %p212 = por %p210, %p211
      %p213 = scmp.ne.s32.totalorder %s201, %s202
      %p214 = scmp.eq.s32.totalorder %s45, 1
      %p215 = por %p213, %p214
      %p217 = scmp.ne.s32.totalorder %s202, %s216
      %p218 = scmp.eq.s32.totalorder %s45, 0
      %p219 = por %p217, %p218
      %s221 = sadd.s32 %s220, 1
      %p224 = scmp.eq.s32.totalorder %s39, 1
      %p225 = scmp.ne.s32.totalorder %s220, %s222
      %p226 = scmp.eq.s32.totalorder %s39, 0
      %p227 = por %p225, %p226
      %p228 = scmp.ne.s32.totalorder %s220, %s222
      %p229 = scmp.eq.s32.totalorder %s44, 1
      %p230 = por %p228, %p229
      %p231 = scmp.ne.s32.totalorder %s222, %s223
      %p232 = scmp.eq.s32.totalorder %s44, 0
      %p233 = por %p231, %p232
      %p234 = scmp.ne.s32.totalorder %s222, %s223
      %p235 = scmp.eq.s32.totalorder %s45, 1
      %p236 = por %p234, %p235
      %p238 = scmp.ne.s32.totalorder %s223, %s237
      %p239 = scmp.eq.s32.totalorder %s45, 0
      %p240 = por %p238, %p239
      %s242 = sadd.s32 %s241, 1
      %p245 = scmp.eq.s32.totalorder %s39, 1
      %p246 = scmp.ne.s32.totalorder %s241, %s243
      %p247 = scmp.eq.s32.totalorder %s39, 0
      %p248 = por %p246, %p247
      %p249 = scmp.ne.s32.totalorder %s241, %s243
      %p250 = scmp.eq.s32.totalorder %s44, 1
      %p251 = por %p249, %p250
      %p252 = scmp.ne.s32.totalorder %s243, %s244
      %p253 = scmp.eq.s32.totalorder %s44, 0
      %p254 = por %p252, %p253
      %p255 = scmp.ne.s32.totalorder %s243, %s244
      %p256 = scmp.eq.s32.totalorder %s45, 1
      %p257 = por %p255, %p256
      %p259 = scmp.ne.s32.totalorder %s244, %s258
      %p260 = scmp.eq.s32.totalorder %s45, 0
      %p261 = por %p259, %p260
      %s263 = sadd.s32 %s262, 1
      %p266 = scmp.eq.s32.totalorder %s39, 1
      %p267 = scmp.ne.s32.totalorder %s262, %s264
      %p268 = scmp.eq.s32.totalorder %s39, 0
      %p269 = por %p267, %p268
      %p270 = scmp.ne.s32.totalorder %s262, %s264
      %p271 = scmp.eq.s32.totalorder %s44, 1
      %p272 = por %p270, %p271
      %p273 = scmp.ne.s32.totalorder %s264, %s265
      %p274 = scmp.eq.s32.totalorder %s44, 0
      %p275 = por %p273, %p274
      %p276 = scmp.ne.s32.totalorder %s264, %s265
      %p277 = scmp.eq.s32.totalorder %s45, 1
      %p278 = por %p276, %p277
      %p280 = scmp.ne.s32.totalorder %s265, %s279
      %p281 = scmp.eq.s32.totalorder %s45, 0
      %p282 = por %p280, %p281
      %s284 = sadd.s32 %s283, 1
      %p287 = scmp.eq.s32.totalorder %s39, 1
      %p288 = scmp.ne.s32.totalorder %s283, %s285
      %p289 = scmp.eq.s32.totalorder %s39, 0
      %p290 = por %p288, %p289
      %p291 = scmp.ne.s32.totalorder %s283, %s285
      %p292 = scmp.eq.s32.totalorder %s44, 1
      %p293 = por %p291, %p292
      %p294 = scmp.ne.s32.totalorder %s285, %s286
      %p295 = scmp.eq.s32.totalorder %s44, 0
      %p296 = por %p294, %p295
      %p297 = scmp.ne.s32.totalorder %s285, %s286
      %p298 = scmp.eq.s32.totalorder %s45, 1
      %p299 = por %p297, %p298
      %p301 = scmp.ne.s32.totalorder %s286, %s300
      %p302 = scmp.eq.s32.totalorder %s45, 0
      %p303 = por %p301, %p302
      %s305 = sadd.s32 %s304, 1
      %p308 = scmp.eq.s32.totalorder %s39, 1
      %p309 = scmp.ne.s32.totalorder %s304, %s306
      %p310 = scmp.eq.s32.totalorder %s39, 0
      %p311 = por %p309, %p310
      %p312 = scmp.ne.s32.totalorder %s304, %s306
      %p313 = scmp.eq.s32.totalorder %s44, 1
      %p314 = por %p312, %p313
      %p315 = scmp.ne.s32.totalorder %s306, %s307
      %p316 = scmp.eq.s32.totalorder %s44, 0
      %p317 = por %p315, %p316
      %p318 = scmp.ne.s32.totalorder %s306, %s307
      %p319 = scmp.eq.s32.totalorder %s45, 1
      %p320 = por %p318, %p319
      %p322 = scmp.ne.s32.totalorder %s307, %s321
      %p323 = scmp.eq.s32.totalorder %s45, 0
      %p324 = por %p322, %p323
      %s326 = sadd.s32 %s325, 1
      %p329 = scmp.eq.s32.totalorder %s39, 1
      %p330 = scmp.ne.s32.totalorder %s325, %s327
      %p331 = scmp.eq.s32.totalorder %s39, 0
      %p332 = por %p330, %p331
      %p333 = scmp.ne.s32.totalorder %s325, %s327
      %p334 = scmp.eq.s32.totalorder %s44, 1
      %p335 = por %p333, %p334
      %p336 = scmp.ne.s32.totalorder %s327, %s328
      %p337 = scmp.eq.s32.totalorder %s44, 0
      %p338 = por %p336, %p337
      %p339 = scmp.ne.s32.totalorder %s327, %s328
      %p340 = scmp.eq.s32.totalorder %s45, 1
      %p341 = por %p339, %p340
      %p343 = scmp.ne.s32.totalorder %s328, %s342
      %p344 = scmp.eq.s32.totalorder %s45, 0
      %p345 = por %p343, %p344
      %s347 = sadd.s32 %s346, 1
      %p350 = scmp.eq.s32.totalorder %s39, 1
      %p351 = scmp.ne.s32.totalorder %s346, %s348
      %p352 = scmp.eq.s32.totalorder %s39, 0
      %p353 = por %p351, %p352
      %p354 = scmp.ne.s32.totalorder %s346, %s348
      %p355 = scmp.eq.s32.totalorder %s44, 1
      %p356 = por %p354, %p355
      %p357 = scmp.ne.s32.totalorder %s348, %s349
      %p358 = scmp.eq.s32.totalorder %s44, 0
      %p359 = por %p357, %p358
      %p360 = scmp.ne.s32.totalorder %s348, %s349
      %p361 = scmp.eq.s32.totalorder %s45, 1
      %p362 = por %p360, %p361
      %p364 = scmp.ne.s32.totalorder %s349, %s363
      %p365 = scmp.eq.s32.totalorder %s45, 0
      %p366 = por %p364, %p365
      %s368 = sadd.s32 %s367, 1
      %p371 = scmp.eq.s32.totalorder %s39, 1
      %p372 = scmp.ne.s32.totalorder %s367, %s369
      %p373 = scmp.eq.s32.totalorder %s39, 0
      %p374 = por %p372, %p373
      %p375 = scmp.ne.s32.totalorder %s367, %s369
      %p376 = scmp.eq.s32.totalorder %s44, 1
      %p377 = por %p375, %p376
      %p378 = scmp.ne.s32.totalorder %s369, %s370
      %p379 = scmp.eq.s32.totalorder %s44, 0
      %p380 = por %p378, %p379
      %p381 = scmp.ne.s32.totalorder %s369, %s370
      %p382 = scmp.eq.s32.totalorder %s45, 1
      %p383 = por %p381, %p382
      %p385 = scmp.ne.s32.totalorder %s370, %s384
      %p386 = scmp.eq.s32.totalorder %s45, 0
      %p387 = por %p385, %p386
      %s389 = sadd.s32 %s388, 1
      %p392 = scmp.eq.s32.totalorder %s39, 1
      %p393 = scmp.ne.s32.totalorder %s388, %s390
      %p394 = scmp.eq.s32.totalorder %s39, 0
      %p395 = por %p393, %p394
      %p396 = scmp.ne.s32.totalorder %s388, %s390
      %p397 = scmp.eq.s32.totalorder %s44, 1
      %p398 = por %p396, %p397
      %p399 = scmp.ne.s32.totalorder %s390, %s391
      %p400 = scmp.eq.s32.totalorder %s44, 0
      %p401 = por %p399, %p400
      %p402 = scmp.ne.s32.totalorder %s390, %s391
      %p403 = scmp.eq.s32.totalorder %s45, 1
      %p404 = por %p402, %p403
      %p406 = scmp.ne.s32.totalorder %s391, %s405
      %p407 = scmp.eq.s32.totalorder %s45, 0
      %p408 = por %p406, %p407
      %s410 = sadd.s32 %s409, 1
      %p413 = scmp.eq.s32.totalorder %s39, 1
      %p414 = scmp.ne.s32.totalorder %s409, %s411
      %p415 = scmp.eq.s32.totalorder %s39, 0
      %p416 = por %p414, %p415
      %p417 = scmp.ne.s32.totalorder %s409, %s411
      %p418 = scmp.eq.s32.totalorder %s44, 1
      %p419 = por %p417, %p418
      %p420 = scmp.ne.s32.totalorder %s411, %s412
      %p421 = scmp.eq.s32.totalorder %s44, 0
      %p422 = por %p420, %p421
      %p423 = scmp.ne.s32.totalorder %s411, %s412
      %p424 = scmp.eq.s32.totalorder %s45, 1
      %p425 = por %p423, %p424
      %p427 = scmp.ne.s32.totalorder %s412, %s426
      %p428 = scmp.eq.s32.totalorder %s45, 0
      %p429 = por %p427, %p428
      %s430 = ssub.s32 %s39, %s46
      %p431 = scmp.eq.s32.totalorder %s430, 0
      %s433 = sadd.s32 %s432, 1
      %s434 = scalar_select %p431, %s432, %s433
      %p437 = pneg %p431
      %p438 = scmp.eq.s32.totalorder %s39, 1
      %p439 = por %p437, %p438
      %p440 = scmp.ne.s32.totalorder %s432, %s435
      %p441 = scmp.eq.s32.totalorder %s39, 0
      %p442 = por %p440, %p441
      %p443 = scmp.ne.s32.totalorder %s432, %s435
      %p444 = scmp.eq.s32.totalorder %s44, 1
      %p445 = por %p443, %p444
      %p446 = scmp.ne.s32.totalorder %s435, %s436
      %p447 = scmp.eq.s32.totalorder %s44, 0
      %p448 = por %p446, %p447
      %p449 = scmp.ne.s32.totalorder %s435, %s436
      %p450 = scmp.eq.s32.totalorder %s45, 1
      %p451 = por %p449, %p450
      %p453 = scmp.ne.s32.totalorder %s436, %s452
      %p454 = scmp.eq.s32.totalorder %s45, 0
      %p455 = por %p453, %p454
      %p456 = scmp.le.s32.totalorder 1, %s39
      %p457 = scmp.lt.s32.totalorder %s39, 3
      %p458 = pnand %p456, %p457
      %p459 = pneg %p458
      // Predicated region
      $region9: #{tpu_custom_call.1} parent=5 // pred_check
        _
      $region10: #{tpu_custom_call.1} parent=5 // pred_check_branch
        %461 = sbr.rel (%p458) target = $region12
      $region11: #{tpu_custom_call.1} parent=5 // pred_region
        %s462 = ssub.s32 %s39, 1
        // Predicated region
        $region13: #{tpu_custom_call.1} parent=11 // pred_check
          %p463 = pneg %p86
        $region14: #{tpu_custom_call.1} parent=11 // pred_check_branch
          %465 = sbr.rel (%p463) target = $region16
        $region15: #{tpu_custom_call.1} parent=11 // pred_region
          %s467 = ssub.s32 256, 256
          %468 = vsyncadd [#allocation6], %s467
          %s469 = sshll.u32 [#allocation5], 4
          %s470 = int_to_ptr.vmem [resolvable:$true] %s469
          %475 = dma.hbm_to_vmem [thread:$0]  %s1, 256, %s470, [#allocation6], 128, 128, 8
        $region16: #{tpu_custom_call.1} parent=11 // pred_fallthru
          _
        // Predicated region
        $region17: #{tpu_custom_call.1} parent=11 // pred_check
          %p476 = pneg %p107
        $region18: #{tpu_custom_call.1} parent=11 // pred_check_branch
          %478 = sbr.rel (%p476) target = $region20
        $region19: #{tpu_custom_call.1} parent=11 // pred_region
          %s480 = ssub.s32 16, 16
          %481 = vsyncadd [#allocation6], %s480
          %s483 = sshll.u32 [#allocation7], 4
          %s484 = int_to_ptr.vmem [resolvable:$true] %s483
          %486 = dma.hbm_to_vmem [thread:$0]  %s2, 16, %s484, [#allocation6]
        $region20: #{tpu_custom_call.1} parent=11 // pred_fallthru
          _
        // Predicated region
        $region21: #{tpu_custom_call.1} parent=11 // pred_check
          %p487 = pneg %p128
        $region22: #{tpu_custom_call.1} parent=11 // pred_check_branch
          %489 = sbr.rel (%p487) target = $region24
        $region23: #{tpu_custom_call.1} parent=11 // pred_region
          %s491 = ssub.s32 16, 16
          %492 = vsyncadd [#allocation9], %s491
          %s494 = sshll.u32 [#allocation8], 4
          %s495 = int_to_ptr.vmem [resolvable:$true] %s494
          %497 = dma.hbm_to_vmem [thread:$0]  %s3, 16, %s495, [#allocation9]
        $region24: #{tpu_custom_call.1} parent=11 // pred_fallthru
          _
        // Predicated region
        $region25: #{tpu_custom_call.1} parent=11 // pred_check
          %p498 = pneg %p149
        $region26: #{tpu_custom_call.1} parent=11 // pred_check_branch
          %500 = sbr.rel (%p498) target = $region28
        $region27: #{tpu_custom_call.1} parent=11 // pred_region
          %s502 = ssub.s32 16, 16
          %503 = vsyncadd [#allocation9], %s502
          %s505 = sshll.u32 [#allocation10], 4
          %s506 = int_to_ptr.vmem [resolvable:$true] %s505
          %508 = dma.hbm_to_vmem [thread:$0]  %s4, 16, %s506, [#allocation9]
        $region28: #{tpu_custom_call.1} parent=11 // pred_fallthru
          _
        // Predicated region
        $region29: #{tpu_custom_call.1} parent=11 // pred_check
          %p509 = pneg %p170
        $region30: #{tpu_custom_call.1} parent=11 // pred_check_branch
          %511 = sbr.rel (%p509) target = $region32
        $region31: #{tpu_custom_call.1} parent=11 // pred_region
          %s513 = ssub.s32 512, 512
          %514 = vsyncadd [#allocation12], %s513
          %s515 = sshll.u32 [#allocation11], 4
          %s516 = int_to_ptr.vmem [resolvable:$true] %s515
          %521 = dma.hbm_to_vmem [thread:$0]  %s5, 512, %s516, [#allocation12], 128, 128, 8
        $region32: #{tpu_custom_call.1} parent=11 // pred_fallthru
          _
        // Predicated region
        $region33: #{tpu_custom_call.1} parent=11 // pred_check
          %p522 = pneg %p191
        $region34: #{tpu_custom_call.1} parent=11 // pred_check_branch
          %524 = sbr.rel (%p522) target = $region36
        $region35: #{tpu_custom_call.1} parent=11 // pred_region
          %s526 = ssub.s32 16, 16
          %527 = vsyncadd [#allocation12], %s526
          %s529 = sshll.u32 [#allocation13], 4
          %s530 = int_to_ptr.vmem [resolvable:$true] %s529
          %532 = dma.hbm_to_vmem [thread:$0]  %s6, 16, %s530, [#allocation12]
        $region36: #{tpu_custom_call.1} parent=11 // pred_fallthru
          _
        // Predicated region
        $region37: #{tpu_custom_call.1} parent=11 // pred_check
          %p533 = pneg %p212
        $region38: #{tpu_custom_call.1} parent=11 // pred_check_branch
          %535 = sbr.rel (%p533) target = $region40
        $region39: #{tpu_custom_call.1} parent=11 // pred_region
          %s537 = ssub.s32 512, 512
          %538 = vsyncadd [#allocation15], %s537
          %s539 = sshll.u32 [#allocation14], 4
          %s540 = int_to_ptr.vmem [resolvable:$true] %s539
          %545 = dma.hbm_to_vmem [thread:$0]  %s7, 512, %s540, [#allocation15], 128, 128, 8
        $region40: #{tpu_custom_call.1} parent=11 // pred_fallthru
          _
        // Predicated region
        $region41: #{tpu_custom_call.1} parent=11 // pred_check
          %p546 = pneg %p233
        $region42: #{tpu_custom_call.1} parent=11 // pred_check_branch
          %548 = sbr.rel (%p546) target = $region44
        $region43: #{tpu_custom_call.1} parent=11 // pred_region
          %s550 = ssub.s32 16, 16
          %551 = vsyncadd [#allocation15], %s550
          %s553 = sshll.u32 [#allocation16], 4
          %s554 = int_to_ptr.vmem [resolvable:$true] %s553
          %556 = dma.hbm_to_vmem [thread:$0]  %s8, 16, %s554, [#allocation15]
        $region44: #{tpu_custom_call.1} parent=11 // pred_fallthru
          _
        // Predicated region
        $region45: #{tpu_custom_call.1} parent=11 // pred_check
          %p557 = pneg %p254
        $region46: #{tpu_custom_call.1} parent=11 // pred_check_branch
          %559 = sbr.rel (%p557) target = $region48
        $region47: #{tpu_custom_call.1} parent=11 // pred_region
          %s561 = ssub.s32 512, 512
          %562 = vsyncadd [#allocation18], %s561
          %s563 = sshll.u32 [#allocation17], 4
          %s564 = int_to_ptr.vmem [resolvable:$true] %s563
          %569 = dma.hbm_to_vmem [thread:$0]  %s9, 512, %s564, [#allocation18], 128, 128, 8
        $region48: #{tpu_custom_call.1} parent=11 // pred_fallthru
          _
        // Predicated region
        $region49: #{tpu_custom_call.1} parent=11 // pred_check
          %p570 = pneg %p275
        $region50: #{tpu_custom_call.1} parent=11 // pred_check_branch
          %572 = sbr.rel (%p570) target = $region52
        $region51: #{tpu_custom_call.1} parent=11 // pred_region
          %s574 = ssub.s32 16, 16
          %575 = vsyncadd [#allocation18], %s574
          %s577 = sshll.u32 [#allocation19], 4
          %s578 = int_to_ptr.vmem [resolvable:$true] %s577
          %580 = dma.hbm_to_vmem [thread:$0]  %s10, 16, %s578, [#allocation18]
        $region52: #{tpu_custom_call.1} parent=11 // pred_fallthru
          _
        // Predicated region
        $region53: #{tpu_custom_call.1} parent=11 // pred_check
          %p581 = pneg %p296
        $region54: #{tpu_custom_call.1} parent=11 // pred_check_branch
          %583 = sbr.rel (%p581) target = $region56
        $region55: #{tpu_custom_call.1} parent=11 // pred_region
          %s585 = ssub.s32 512, 512
          %586 = vsyncadd [#allocation21], %s585
          %s587 = sshll.u32 [#allocation20], 4
          %s588 = int_to_ptr.vmem [resolvable:$true] %s587
          %593 = dma.hbm_to_vmem [thread:$0]  %s11, 512, %s588, [#allocation21], 128, 128, 8
        $region56: #{tpu_custom_call.1} parent=11 // pred_fallthru
          _
        // Predicated region
        $region57: #{tpu_custom_call.1} parent=11 // pred_check
          %p594 = pneg %p317
        $region58: #{tpu_custom_call.1} parent=11 // pred_check_branch
          %596 = sbr.rel (%p594) target = $region60
        $region59: #{tpu_custom_call.1} parent=11 // pred_region
          %s598 = ssub.s32 512, 512
          %599 = vsyncadd [#allocation21], %s598
          %s600 = sshll.u32 [#allocation22], 4
          %s601 = int_to_ptr.vmem [resolvable:$true] %s600
          %606 = dma.hbm_to_vmem [thread:$0]  %s12, 512, %s601, [#allocation21], 128, 128, 8
        $region60: #{tpu_custom_call.1} parent=11 // pred_fallthru
          _
        // Predicated region
        $region61: #{tpu_custom_call.1} parent=11 // pred_check
          %p607 = pneg %p338
        $region62: #{tpu_custom_call.1} parent=11 // pred_check_branch
          %609 = sbr.rel (%p607) target = $region64
        $region63: #{tpu_custom_call.1} parent=11 // pred_region
          %s611 = ssub.s32 16, 16
          %612 = vsyncadd [#allocation24], %s611
          %s614 = sshll.u32 [#allocation23], 4
          %s615 = int_to_ptr.vmem [resolvable:$true] %s614
          %617 = dma.hbm_to_vmem [thread:$0]  %s13, 16, %s615, [#allocation24]
        $region64: #{tpu_custom_call.1} parent=11 // pred_fallthru
          _
        // Predicated region
        $region65: #{tpu_custom_call.1} parent=11 // pred_check
          %p618 = pneg %p359
        $region66: #{tpu_custom_call.1} parent=11 // pred_check_branch
          %620 = sbr.rel (%p618) target = $region68
        $region67: #{tpu_custom_call.1} parent=11 // pred_region
          %s622 = ssub.s32 1024, 1024
          %623 = vsyncadd [#allocation24], %s622
          %s624 = sshll.u32 [#allocation25], 4
          %s625 = int_to_ptr.vmem [resolvable:$true] %s624
          %630 = dma.hbm_to_vmem [thread:$0]  %s14, 1024, %s625, [#allocation24], 128, 128, 8
        $region68: #{tpu_custom_call.1} parent=11 // pred_fallthru
          _
        // Predicated region
        $region69: #{tpu_custom_call.1} parent=11 // pred_check
          %p631 = pneg %p380
        $region70: #{tpu_custom_call.1} parent=11 // pred_check_branch
          %633 = sbr.rel (%p631) target = $region72
        $region71: #{tpu_custom_call.1} parent=11 // pred_region
          %s635 = ssub.s32 16, 16
          %636 = vsyncadd [#allocation27], %s635
          %s638 = sshll.u32 [#allocation26], 4
          %s639 = int_to_ptr.vmem [resolvable:$true] %s638
          %641 = dma.hbm_to_vmem [thread:$0]  %s15, 16, %s639, [#allocation27]
        $region72: #{tpu_custom_call.1} parent=11 // pred_fallthru
          _
        // Predicated region
        $region73: #{tpu_custom_call.1} parent=11 // pred_check
          %p642 = pneg %p401
        $region74: #{tpu_custom_call.1} parent=11 // pred_check_branch
          %644 = sbr.rel (%p642) target = $region76
        $region75: #{tpu_custom_call.1} parent=11 // pred_region
          %s646 = ssub.s32 2048, 2048
          %647 = vsyncadd [#allocation27], %s646
          %s648 = sshll.u32 [#allocation28], 4
          %s649 = int_to_ptr.vmem [resolvable:$true] %s648
          %654 = dma.hbm_to_vmem [thread:$0]  %s16, 2048, %s649, [#allocation27], 128, 128, 8
        $region76: #{tpu_custom_call.1} parent=11 // pred_fallthru
          _
        // Predicated region
        $region77: #{tpu_custom_call.1} parent=11 // pred_check
          %p655 = pneg %p422
        $region78: #{tpu_custom_call.1} parent=11 // pred_check_branch
          %657 = sbr.rel (%p655) target = $region80
        $region79: #{tpu_custom_call.1} parent=11 // pred_region
          %s659 = ssub.s32 16, 16
          %660 = vsyncadd [#allocation30], %s659
          %s662 = sshll.u32 [#allocation29], 4
          %s663 = int_to_ptr.vmem [resolvable:$true] %s662
          %665 = dma.hbm_to_vmem [thread:$0]  %s17, 16, %s663, [#allocation30]
        $region80: #{tpu_custom_call.1} parent=11 // pred_fallthru
          _
      $region12: #{tpu_custom_call.1} parent=5 // pred_fallthru
        _
      %p666 = scmp.lt.s32.totalorder %s39, 2
      // Predicated region
      $region81: #{tpu_custom_call.1} parent=5 // pred_check
        %p667 = pneg %p666
      $region82: #{tpu_custom_call.1} parent=5 // pred_check_branch
        %669 = sbr.rel (%p667) target = $region84
      $region83: #{tpu_custom_call.1} parent=5 // pred_region
        // Predicated region
        $region85: #{tpu_custom_call.1} parent=83 // pred_check
          %p670 = pneg %p59
        $region86: #{tpu_custom_call.1} parent=83 // pred_check_branch
          %672 = sbr.rel (%p670) target = $region88
        $region87: #{tpu_custom_call.1} parent=83 // pred_region
          %s673 = sand.u32 %s49, 1
          %s674 = scalar_lea.sflag [#allocation3], %s673
          %s675 = sand.u32 %s49, 1
          %s676 = smul.addr %s675, 432
          %s677 = scalar_lea.vmem [#allocation2], %s676
          %s679 = ssub.s32 6912, 6912
          %680 = vsyncadd %s674, %s679
          %s681 = smul.addr %s39, 54
          %s682 = smul.addr %s681, 128
          %s683 = scalar_lea.hbm %s0, %s682
          %s684 = sshll.u32 %s677, 4
          %s685 = int_to_ptr.vmem [resolvable:$true] %s684
          %690 = dma.hbm_to_vmem [thread:$0]  %s683, 6912, %s685, %s674, 128, 128, 8
        $region88: #{tpu_custom_call.1} parent=83 // pred_fallthru
          _
      $region84: #{tpu_custom_call.1} parent=5 // pred_fallthru
        _
      %p691 = scmp.le.s32.totalorder 1, %s39
      %p692 = scmp.lt.s32.totalorder %s39, 3
      %p693 = pnand %p691, %p692
      %p694 = pneg %p693
      // Predicated region
      $region89: #{tpu_custom_call.1} parent=5 // pred_check
        _
      $region90: #{tpu_custom_call.1} parent=5 // pred_check_branch
        %696 = sbr.rel (%p693) target = $region92
      $region91: #{tpu_custom_call.1} parent=5 // pred_region
        %s697 = ssub.s32 %s39, 1
        %s698 = sand.u32 %s52, 1
        %s699 = scalar_lea.sflag [#allocation3], %s698
        %s700 = sand.u32 %s52, 1
        %s701 = smul.addr %s700, 432
        %s702 = scalar_lea.vmem [#allocation2], %s701
        // Predicated region
        $region93: #{tpu_custom_call.1} parent=91 // pred_check
          %p703 = pneg %p65
        $region94: #{tpu_custom_call.1} parent=91 // pred_check_branch
          %705 = sbr.rel (%p703) target = $region96
        $region95: #{tpu_custom_call.1} parent=91 // pred_region
          %706 = dma.done %s699, 6912
        $region96: #{tpu_custom_call.1} parent=91 // pred_fallthru
          _
        // Predicated region
        $region97: #{tpu_custom_call.1} parent=91 // pred_check
          %p707 = pneg %p86
        $region98: #{tpu_custom_call.1} parent=91 // pred_check_branch
          %709 = sbr.rel (%p707) target = $region100
        $region99: #{tpu_custom_call.1} parent=91 // pred_region
          %710 = dma.done [#allocation6], 256
        $region100: #{tpu_custom_call.1} parent=91 // pred_fallthru
          _
        // Predicated region
        $region101: #{tpu_custom_call.1} parent=91 // pred_check
          %p711 = pneg %p107
        $region102: #{tpu_custom_call.1} parent=91 // pred_check_branch
          %713 = sbr.rel (%p711) target = $region104
        $region103: #{tpu_custom_call.1} parent=91 // pred_region
          %714 = dma.done [#allocation6], 16
        $region104: #{tpu_custom_call.1} parent=91 // pred_fallthru
          _
        // Predicated region
        $region105: #{tpu_custom_call.1} parent=91 // pred_check
          %p715 = pneg %p128
        $region106: #{tpu_custom_call.1} parent=91 // pred_check_branch
          %717 = sbr.rel (%p715) target = $region108
        $region107: #{tpu_custom_call.1} parent=91 // pred_region
          %718 = dma.done [#allocation9], 16
        $region108: #{tpu_custom_call.1} parent=91 // pred_fallthru
          _
        // Predicated region
        $region109: #{tpu_custom_call.1} parent=91 // pred_check
          %p719 = pneg %p149
        $region110: #{tpu_custom_call.1} parent=91 // pred_check_branch
          %721 = sbr.rel (%p719) target = $region112
        $region111: #{tpu_custom_call.1} parent=91 // pred_region
          %722 = dma.done [#allocation9], 16
        $region112: #{tpu_custom_call.1} parent=91 // pred_fallthru
          _
        // Predicated region
        $region113: #{tpu_custom_call.1} parent=91 // pred_check
          %p723 = pneg %p170
        $region114: #{tpu_custom_call.1} parent=91 // pred_check_branch
          %725 = sbr.rel (%p723) target = $region116
        $region115: #{tpu_custom_call.1} parent=91 // pred_region
          %726 = dma.done [#allocation12], 512
        $region116: #{tpu_custom_call.1} parent=91 // pred_fallthru
          _
        // Predicated region
        $region117: #{tpu_custom_call.1} parent=91 // pred_check
          %p727 = pneg %p191
        $region118: #{tpu_custom_call.1} parent=91 // pred_check_branch
          %729 = sbr.rel (%p727) target = $region120
        $region119: #{tpu_custom_call.1} parent=91 // pred_region
          %730 = dma.done [#allocation12], 16
        $region120: #{tpu_custom_call.1} parent=91 // pred_fallthru
          _
        // Predicated region
        $region121: #{tpu_custom_call.1} parent=91 // pred_check
          %p731 = pneg %p212
        $region122: #{tpu_custom_call.1} parent=91 // pred_check_branch
          %733 = sbr.rel (%p731) target = $region124
        $region123: #{tpu_custom_call.1} parent=91 // pred_region
          %734 = dma.done [#allocation15], 512
        $region124: #{tpu_custom_call.1} parent=91 // pred_fallthru
          _
        // Predicated region
        $region125: #{tpu_custom_call.1} parent=91 // pred_check
          %p735 = pneg %p233
        $region126: #{tpu_custom_call.1} parent=91 // pred_check_branch
          %737 = sbr.rel (%p735) target = $region128
        $region127: #{tpu_custom_call.1} parent=91 // pred_region
          %738 = dma.done [#allocation15], 16
        $region128: #{tpu_custom_call.1} parent=91 // pred_fallthru
          _
        // Predicated region
        $region129: #{tpu_custom_call.1} parent=91 // pred_check
          %p739 = pneg %p254
        $region130: #{tpu_custom_call.1} parent=91 // pred_check_branch
          %741 = sbr.rel (%p739) target = $region132
        $region131: #{tpu_custom_call.1} parent=91 // pred_region
          %742 = dma.done [#allocation18], 512
        $region132: #{tpu_custom_call.1} parent=91 // pred_fallthru
          _
        // Predicated region
        $region133: #{tpu_custom_call.1} parent=91 // pred_check
          %p743 = pneg %p275
        $region134: #{tpu_custom_call.1} parent=91 // pred_check_branch
          %745 = sbr.rel (%p743) target = $region136
        $region135: #{tpu_custom_call.1} parent=91 // pred_region
          %746 = dma.done [#allocation18], 16
        $region136: #{tpu_custom_call.1} parent=91 // pred_fallthru
          _
        // Predicated region
        $region137: #{tpu_custom_call.1} parent=91 // pred_check
          %p747 = pneg %p296
        $region138: #{tpu_custom_call.1} parent=91 // pred_check_branch
          %749 = sbr.rel (%p747) target = $region140
        $region139: #{tpu_custom_call.1} parent=91 // pred_region
          %750 = dma.done [#allocation21], 512
        $region140: #{tpu_custom_call.1} parent=91 // pred_fallthru
          _
        // Predicated region
        $region141: #{tpu_custom_call.1} parent=91 // pred_check
          %p751 = pneg %p317
        $region142: #{tpu_custom_call.1} parent=91 // pred_check_branch
          %753 = sbr.rel (%p751) target = $region144
        $region143: #{tpu_custom_call.1} parent=91 // pred_region
          %754 = dma.done [#allocation21], 512
        $region144: #{tpu_custom_call.1} parent=91 // pred_fallthru
          _
        // Predicated region
        $region145: #{tpu_custom_call.1} parent=91 // pred_check
          %p755 = pneg %p338
        $region146: #{tpu_custom_call.1} parent=91 // pred_check_branch
          %757 = sbr.rel (%p755) target = $region148
        $region147: #{tpu_custom_call.1} parent=91 // pred_region
          %758 = dma.done [#allocation24], 16
        $region148: #{tpu_custom_call.1} parent=91 // pred_fallthru
          _
        // Predicated region
        $region149: #{tpu_custom_call.1} parent=91 // pred_check
          %p759 = pneg %p359
        $region150: #{tpu_custom_call.1} parent=91 // pred_check_branch
          %761 = sbr.rel (%p759) target = $region152
        $region151: #{tpu_custom_call.1} parent=91 // pred_region
          %762 = dma.done [#allocation24], 1024
        $region152: #{tpu_custom_call.1} parent=91 // pred_fallthru
          _
        // Predicated region
        $region153: #{tpu_custom_call.1} parent=91 // pred_check
          %p763 = pneg %p380
        $region154: #{tpu_custom_call.1} parent=91 // pred_check_branch
          %765 = sbr.rel (%p763) target = $region156
        $region155: #{tpu_custom_call.1} parent=91 // pred_region
          %766 = dma.done [#allocation27], 16
        $region156: #{tpu_custom_call.1} parent=91 // pred_fallthru
          _
        // Predicated region
        $region157: #{tpu_custom_call.1} parent=91 // pred_check
          %p767 = pneg %p401
        $region158: #{tpu_custom_call.1} parent=91 // pred_check_branch
          %769 = sbr.rel (%p767) target = $region160
        $region159: #{tpu_custom_call.1} parent=91 // pred_region
          %770 = dma.done [#allocation27], 2048
        $region160: #{tpu_custom_call.1} parent=91 // pred_fallthru
          _
        // Predicated region
        $region161: #{tpu_custom_call.1} parent=91 // pred_check
          %p771 = pneg %p422
        $region162: #{tpu_custom_call.1} parent=91 // pred_check_branch
          %773 = sbr.rel (%p771) target = $region164
        $region163: #{tpu_custom_call.1} parent=91 // pred_region
          %774 = dma.done [#allocation30], 16
        $region164: #{tpu_custom_call.1} parent=91 // pred_fallthru
          _
        %s775 = sand.u32 %s52, 1
        %s776 = scalar_lea.sflag [#allocation3], %s775
        %s777 = sand.u32 %s52, 1
        %s778 = smul.addr %s777, 432
        %s779 = scalar_lea.vmem [#allocation2], %s778
        %p780 = pneg %p65
        %p781 = pneg %p62
        %p782 = pneg %p86
        %p783 = pneg %p83
        %p784 = pneg %p107
        %p785 = pneg %p104
        %p786 = pneg %p128
        %p787 = pneg %p125
        %p788 = pneg %p149
        %p789 = pneg %p146
        %p790 = pneg %p170
        %p791 = pneg %p167
        %p792 = pneg %p191
        %p793 = pneg %p188
        %p794 = pneg %p212
        %p795 = pneg %p209
        %p796 = pneg %p233
        %p797 = pneg %p230
        %p798 = pneg %p254
        %p799 = pneg %p251
        %p800 = pneg %p275
        %p801 = pneg %p272
        %p802 = pneg %p296
        %p803 = pneg %p293
        %p804 = pneg %p317
        %p805 = pneg %p314
        %p806 = pneg %p338
        %p807 = pneg %p335
        %p808 = pneg %p359
        %p809 = pneg %p356
        %p810 = pneg %p380
        %p811 = pneg %p377
        %p812 = pneg %p401
        %p813 = pneg %p398
        %p814 = pneg %p422
        %p815 = pneg %p419
        %p816 = pneg %p448
        %p817 = pneg %p445
        %s818 = sand.u32 %s435, 1
        %s819 = scalar_lea.sflag [#allocation4], %s818
        %s820 = sand.u32 %s435, 1
        %s821 = smul.addr %s820, 256
        %s822 = scalar_lea.vmem [#allocation31], %s821
        %v823 = vld [vmem:[%s702] sm:$0xff]
        %v824 = vld [vmem:[%s702 + $0x8] sm:$0xff]
        %v825 = vld [vmem:[%s702 + $0x10] sm:$0x3]
        %v826 = vld [vmem:[%s702 + $0x18] sm:$0xff]
        %v827 = vld [vmem:[%s702 + $0x20] sm:$0xff]
        %v828 = vld [vmem:[%s702 + $0x28] sm:$0x3]
        %v829 = vld [vmem:[%s702 + $0x30] sm:$0xff]
        %v830 = vld [vmem:[%s702 + $0x38] sm:$0xff]
        %v831 = vld [vmem:[%s702 + $0x40] sm:$0x3]
        %v832 = vld [vmem:[%s702 + $0x48] sm:$0xff]
        %v833 = vld [vmem:[%s702 + $0x50] sm:$0xff]
        %v834 = vld [vmem:[%s702 + $0x58] sm:$0x3]
        %v835 = vld [vmem:[%s702 + $0x60] sm:$0xff]
        %v836 = vld [vmem:[%s702 + $0x68] sm:$0xff]
        %v837 = vld [vmem:[%s702 + $0x70] sm:$0x3]
        %v838 = vld [vmem:[%s702 + $0x78] sm:$0xff]
        %v839 = vld [vmem:[%s702 + $0x80] sm:$0xff]
        %v840 = vld [vmem:[%s702 + $0x88] sm:$0x3]
        %v841 = vld [vmem:[%s702 + $0x90] sm:$0xff]
        %v842 = vld [vmem:[%s702 + $0x98] sm:$0xff]
        %v843 = vld [vmem:[%s702 + $0xa0] sm:$0x3]
        %v844 = vld [vmem:[%s702 + $0xa8] sm:$0xff]
        %v845 = vld [vmem:[%s702 + $0xb0] sm:$0xff]
        %v846 = vld [vmem:[%s702 + $0xb8] sm:$0x3]
        %v847 = vld [vmem:[%s702 + $0xc0] sm:$0xff]
        %v848 = vld [vmem:[%s702 + $0xc8] sm:$0xff]
        %v849 = vld [vmem:[%s702 + $0xd0] sm:$0x3]
        %v850 = vld [vmem:[%s702 + $0xd8] sm:$0xff]
        %v851 = vld [vmem:[%s702 + $0xe0] sm:$0xff]
        %v852 = vld [vmem:[%s702 + $0xe8] sm:$0x3]
        %v853 = vld [vmem:[%s702 + $0xf0] sm:$0xff]
        %v854 = vld [vmem:[%s702 + $0xf8] sm:$0xff]
        %v855 = vld [vmem:[%s702 + $0x100] sm:$0x3]
        %v856 = vld [vmem:[%s702 + $0x108] sm:$0xff]
        %v857 = vld [vmem:[%s702 + $0x110] sm:$0xff]
        %v858 = vld [vmem:[%s702 + $0x118] sm:$0x3]
        %v859 = vld [vmem:[%s702 + $0x120] sm:$0xff]
        %v860 = vld [vmem:[%s702 + $0x128] sm:$0xff]
        %v861 = vld [vmem:[%s702 + $0x130] sm:$0x3]
        %v862 = vld [vmem:[%s702 + $0x138] sm:$0xff]
        %v863 = vld [vmem:[%s702 + $0x140] sm:$0xff]
        %v864 = vld [vmem:[%s702 + $0x148] sm:$0x3]
        %v865 = vld [vmem:[%s702 + $0x150] sm:$0xff]
        %v866 = vld [vmem:[%s702 + $0x158] sm:$0xff]
        %v867 = vld [vmem:[%s702 + $0x160] sm:$0x3]
        %v868 = vld [vmem:[%s702 + $0x168] sm:$0xff]
        %v869 = vld [vmem:[%s702 + $0x170] sm:$0xff]
        %v870 = vld [vmem:[%s702 + $0x178] sm:$0x3]
        %v871 = vld [vmem:[%s702 + $0x180] sm:$0xff]
        %v872 = vld [vmem:[%s702 + $0x188] sm:$0xff]
        %v873 = vld [vmem:[%s702 + $0x190] sm:$0x3]
        %v874 = vld [vmem:[%s702 + $0x198] sm:$0xff]
        %v875 = vld [vmem:[%s702 + $0x1a0] sm:$0xff]
        %v876 = vld [vmem:[%s702 + $0x1a8] sm:$0x3]
        %v877 = vld [vmem:[#allocation5] sm:$0xff]
        %v878 = vld [vmem:[#allocation5 + $0x8] sm:$0x1]
        %v879 = vld [vmem:[#allocation7] sm:$0x1]
        %v881 = vlaneseq
        %v882 = vshrl.u32 %v881, 7
        %v883 = vsub.s32 0, %v882
        %v884 = vrot.slane %v879, %v883
        %v886 = vadd.f32 %v826, %v884
        %v887 = vadd.f32 %v827, %v884
        %v888 = vadd.f32 %v828, %v884
        %v889 = vadd.f32 %v829, %v884
        %v890 = vadd.f32 %v830, %v884
        %v891 = vadd.f32 %v831, %v884
        %v892 = vadd.f32 %v832, %v884
        %v893 = vadd.f32 %v833, %v884
        %v894 = vadd.f32 %v834, %v884
        %v895 = vadd.f32 %v835, %v884
        %v896 = vadd.f32 %v836, %v884
        %v897 = vadd.f32 %v837, %v884
        %v898 = vadd.f32 %v838, %v884
        %v899 = vadd.f32 %v839, %v884
        %v900 = vadd.f32 %v840, %v884
        %v901 = vadd.f32 %v841, %v884
        %v902 = vadd.f32 %v842, %v884
        %v903 = vadd.f32 %v843, %v884
        %v904 = vadd.f32 %v844, %v884
        %v905 = vadd.f32 %v845, %v884
        %v906 = vadd.f32 %v846, %v884
        %v907 = vadd.f32 %v847, %v884
        %v908 = vadd.f32 %v848, %v884
        %v909 = vadd.f32 %v849, %v884
        %v910 = vadd.f32 %v850, %v884
        %v911 = vadd.f32 %v851, %v884
        %v912 = vadd.f32 %v852, %v884
        %v913 = vadd.f32 %v853, %v884
        %v914 = vadd.f32 %v854, %v884
        %v915 = vadd.f32 %v855, %v884
        %v916 = vadd.f32 %v856, %v884
        %v917 = vadd.f32 %v857, %v884
        %v918 = vadd.f32 %v858, %v884
        %v919 = vadd.f32 %v859, %v884
        %v920 = vadd.f32 %v860, %v884
        %v921 = vadd.f32 %v861, %v884
        %v922 = vadd.f32 %v862, %v884
        %v923 = vadd.f32 %v863, %v884
        %v924 = vadd.f32 %v864, %v884
        %v925 = vadd.f32 %v865, %v884
        %v926 = vadd.f32 %v866, %v884
        %v927 = vadd.f32 %v867, %v884
        %v928 = vadd.f32 %v868, %v884
        %v929 = vadd.f32 %v869, %v884
        %v930 = vadd.f32 %v870, %v884
        %v931 = vadd.f32 %v871, %v884
        %v932 = vadd.f32 %v872, %v884
        %v933 = vadd.f32 %v873, %v884
        %v934 = vlaneseq
        %v935 = vshrl.u32 %v934, 7
        %v936 = vsub.s32 0, %v935
        %v937 = vrot.slane %v877, %v936
        %v938 = vmul.f32 %v823, %v937
        %v939 = vmul.f32 %v824, %v937
        %v940 = vmul.f32 %v826, %v937
        %v941 = vmul.f32 %v827, %v937
        %v942 = vmul.f32 %v829, %v937
        %v943 = vmul.f32 %v830, %v937
        %v944 = vmul.f32 %v832, %v937
        %v945 = vmul.f32 %v833, %v937
        %v946 = vmul.f32 %v835, %v937
        %v947 = vmul.f32 %v836, %v937
        %v948 = vmul.f32 %v838, %v937
        %v949 = vmul.f32 %v839, %v937
        %v950 = vmul.f32 %v841, %v937
        %v951 = vmul.f32 %v842, %v937
        %v952 = vmul.f32 %v844, %v937
        %v953 = vmul.f32 %v845, %v937
        %v954 = vmul.f32 %v847, %v937
        %v955 = vmul.f32 %v848, %v937
        %v956 = vmul.f32 %v850, %v937
        %v957 = vmul.f32 %v851, %v937
        %v958 = vmul.f32 %v853, %v937
        %v959 = vmul.f32 %v854, %v937
        %v960 = vmul.f32 %v856, %v937
        %v961 = vmul.f32 %v857, %v937
        %v962 = vmul.f32 %v859, %v937
        %v963 = vmul.f32 %v860, %v937
        %v964 = vmul.f32 %v862, %v937
        %v965 = vmul.f32 %v863, %v937
        %v966 = vmul.f32 %v865, %v937
        %v967 = vmul.f32 %v866, %v937
        %v968 = vmul.f32 %v868, %v937
        %v969 = vmul.f32 %v869, %v937
        %vm1002 = vcmask 1040384
        %v1003 = vrot.slane %v938, 7
        %v1004 = vrot.slane %v939, 7
        %v1005 = vsel %vm1002, %v1003, %v1004
        %v1006 = vrot.slane %v940, 7
        %v1007 = vrot.slane %v941, 7
        %v1008 = vsel %vm1002, %v1006, %v1007
        %v1009 = vrot.slane %v942, 7
        %v1010 = vrot.slane %v943, 7
        %v1011 = vsel %vm1002, %v1009, %v1010
        %v1012 = vrot.slane %v944, 7
        %v1013 = vrot.slane %v945, 7
        %v1014 = vsel %vm1002, %v1012, %v1013
        %v1015 = vrot.slane %v946, 7
        %v1016 = vrot.slane %v947, 7
        %v1017 = vsel %vm1002, %v1015, %v1016
        %v1018 = vrot.slane %v948, 7
        %v1019 = vrot.slane %v949, 7
        %v1020 = vsel %vm1002, %v1018, %v1019
        %v1021 = vrot.slane %v950, 7
        %v1022 = vrot.slane %v951, 7
        %v1023 = vsel %vm1002, %v1021, %v1022
        %v1024 = vrot.slane %v952, 7
        %v1025 = vrot.slane %v953, 7
        %v1026 = vsel %vm1002, %v1024, %v1025
        %v1027 = vrot.slane %v954, 7
        %v1028 = vrot.slane %v955, 7
        %v1029 = vsel %vm1002, %v1027, %v1028
        %v1030 = vrot.slane %v956, 7
        %v1031 = vrot.slane %v957, 7
        %v1032 = vsel %vm1002, %v1030, %v1031
        %v1033 = vrot.slane %v958, 7
        %v1034 = vrot.slane %v959, 7
        %v1035 = vsel %vm1002, %v1033, %v1034
        %v1036 = vrot.slane %v960, 7
        %v1037 = vrot.slane %v961, 7
        %v1038 = vsel %vm1002, %v1036, %v1037
        %v1039 = vrot.slane %v962, 7
        %v1040 = vrot.slane %v963, 7
        %v1041 = vsel %vm1002, %v1039, %v1040
        %v1042 = vrot.slane %v964, 7
        %v1043 = vrot.slane %v965, 7
        %v1044 = vsel %vm1002, %v1042, %v1043
        %v1045 = vrot.slane %v966, 7
        %v1046 = vrot.slane %v967, 7
        %v1047 = vsel %vm1002, %v1045, %v1046
        %v1048 = vrot.slane %v968, 7
        %v1049 = vrot.slane %v969, 7
        %v1050 = vsel %vm1002, %v1048, %v1049
        %v1099 = vadd.f32 %v886, %v1003
        %v1100 = vadd.f32 %v887, %v1005
        %v1101 = vadd.f32 %v888, %v1004
        %v1102 = vadd.f32 %v889, %v1006
        %v1103 = vadd.f32 %v890, %v1008
        %v1104 = vadd.f32 %v891, %v1007
        %v1105 = vadd.f32 %v892, %v1009
        %v1106 = vadd.f32 %v893, %v1011
        %v1107 = vadd.f32 %v894, %v1010
        %v1108 = vadd.f32 %v895, %v1012
        %v1109 = vadd.f32 %v896, %v1014
        %v1110 = vadd.f32 %v897, %v1013
        %v1111 = vadd.f32 %v898, %v1015
        %v1112 = vadd.f32 %v899, %v1017
        %v1113 = vadd.f32 %v900, %v1016
        %v1114 = vadd.f32 %v901, %v1018
        %v1115 = vadd.f32 %v902, %v1020
        %v1116 = vadd.f32 %v903, %v1019
        %v1117 = vadd.f32 %v904, %v1021
        %v1118 = vadd.f32 %v905, %v1023
        %v1119 = vadd.f32 %v906, %v1022
        %v1120 = vadd.f32 %v907, %v1024
        %v1121 = vadd.f32 %v908, %v1026
        %v1122 = vadd.f32 %v909, %v1025
        %v1123 = vadd.f32 %v910, %v1027
        %v1124 = vadd.f32 %v911, %v1029
        %v1125 = vadd.f32 %v912, %v1028
        %v1126 = vadd.f32 %v913, %v1030
        %v1127 = vadd.f32 %v914, %v1032
        %v1128 = vadd.f32 %v915, %v1031
        %v1129 = vadd.f32 %v916, %v1033
        %v1130 = vadd.f32 %v917, %v1035
        %v1131 = vadd.f32 %v918, %v1034
        %v1132 = vadd.f32 %v919, %v1036
        %v1133 = vadd.f32 %v920, %v1038
        %v1134 = vadd.f32 %v921, %v1037
        %v1135 = vadd.f32 %v922, %v1039
        %v1136 = vadd.f32 %v923, %v1041
        %v1137 = vadd.f32 %v924, %v1040
        %v1138 = vadd.f32 %v925, %v1042
        %v1139 = vadd.f32 %v926, %v1044
        %v1140 = vadd.f32 %v927, %v1043
        %v1141 = vadd.f32 %v928, %v1045
        %v1142 = vadd.f32 %v929, %v1047
        %v1143 = vadd.f32 %v930, %v1046
        %v1144 = vadd.f32 %v931, %v1048
        %v1145 = vadd.f32 %v932, %v1050
        %v1146 = vadd.f32 %v933, %v1049
        %v1147 = vlaneseq
        %v1148 = vshrl.u32 %v1147, 7
        %v1149 = vsub.s32 1, %v1148
        %v1150 = vrot.slane %v877, %v1149
        %v1151 = vmul.f32 %v823, %v1150
        %v1152 = vmul.f32 %v824, %v1150
        %v1153 = vmul.f32 %v825, %v1150
        %v1154 = vmul.f32 %v826, %v1150
        %v1155 = vmul.f32 %v827, %v1150
        %v1156 = vmul.f32 %v828, %v1150
        %v1157 = vmul.f32 %v829, %v1150
        %v1158 = vmul.f32 %v830, %v1150
        %v1159 = vmul.f32 %v831, %v1150
        %v1160 = vmul.f32 %v832, %v1150
        %v1161 = vmul.f32 %v833, %v1150
        %v1162 = vmul.f32 %v834, %v1150
        %v1163 = vmul.f32 %v835, %v1150
        %v1164 = vmul.f32 %v836, %v1150
        %v1165 = vmul.f32 %v837, %v1150
        %v1166 = vmul.f32 %v838, %v1150
        %v1167 = vmul.f32 %v839, %v1150
        %v1168 = vmul.f32 %v840, %v1150
        %v1169 = vmul.f32 %v841, %v1150
        %v1170 = vmul.f32 %v842, %v1150
        %v1171 = vmul.f32 %v843, %v1150
        %v1172 = vmul.f32 %v844, %v1150
        %v1173 = vmul.f32 %v845, %v1150
        %v1174 = vmul.f32 %v846, %v1150
        %v1175 = vmul.f32 %v847, %v1150
        %v1176 = vmul.f32 %v848, %v1150
        %v1177 = vmul.f32 %v849, %v1150
        %v1178 = vmul.f32 %v850, %v1150
        %v1179 = vmul.f32 %v851, %v1150
        %v1180 = vmul.f32 %v852, %v1150
        %v1181 = vmul.f32 %v853, %v1150
        %v1182 = vmul.f32 %v854, %v1150
        %v1183 = vmul.f32 %v855, %v1150
        %v1184 = vmul.f32 %v856, %v1150
        %v1185 = vmul.f32 %v857, %v1150
        %v1186 = vmul.f32 %v858, %v1150
        %v1187 = vmul.f32 %v859, %v1150
        %v1188 = vmul.f32 %v860, %v1150
        %v1189 = vmul.f32 %v861, %v1150
        %v1190 = vmul.f32 %v862, %v1150
        %v1191 = vmul.f32 %v863, %v1150
        %v1192 = vmul.f32 %v864, %v1150
        %v1193 = vmul.f32 %v865, %v1150
        %v1194 = vmul.f32 %v866, %v1150
        %v1195 = vmul.f32 %v867, %v1150
        %v1196 = vmul.f32 %v868, %v1150
        %v1197 = vmul.f32 %v869, %v1150
        %v1198 = vmul.f32 %v870, %v1150
        %v1199 = vadd.f32 %v1099, %v1151
        %v1200 = vadd.f32 %v1100, %v1152
        %v1201 = vadd.f32 %v1101, %v1153
        %v1202 = vadd.f32 %v1102, %v1154
        %v1203 = vadd.f32 %v1103, %v1155
        %v1204 = vadd.f32 %v1104, %v1156
        %v1205 = vadd.f32 %v1105, %v1157
        %v1206 = vadd.f32 %v1106, %v1158
        %v1207 = vadd.f32 %v1107, %v1159
        %v1208 = vadd.f32 %v1108, %v1160
        %v1209 = vadd.f32 %v1109, %v1161
        %v1210 = vadd.f32 %v1110, %v1162
        %v1211 = vadd.f32 %v1111, %v1163
        %v1212 = vadd.f32 %v1112, %v1164
        %v1213 = vadd.f32 %v1113, %v1165
        %v1214 = vadd.f32 %v1114, %v1166
        %v1215 = vadd.f32 %v1115, %v1167
        %v1216 = vadd.f32 %v1116, %v1168
        %v1217 = vadd.f32 %v1117, %v1169
        %v1218 = vadd.f32 %v1118, %v1170
        %v1219 = vadd.f32 %v1119, %v1171
        %v1220 = vadd.f32 %v1120, %v1172
        %v1221 = vadd.f32 %v1121, %v1173
        %v1222 = vadd.f32 %v1122, %v1174
        %v1223 = vadd.f32 %v1123, %v1175
        %v1224 = vadd.f32 %v1124, %v1176
        %v1225 = vadd.f32 %v1125, %v1177
        %v1226 = vadd.f32 %v1126, %v1178
        %v1227 = vadd.f32 %v1127, %v1179
        %v1228 = vadd.f32 %v1128, %v1180
        %v1229 = vadd.f32 %v1129, %v1181
        %v1230 = vadd.f32 %v1130, %v1182
        %v1231 = vadd.f32 %v1131, %v1183
        %v1232 = vadd.f32 %v1132, %v1184
        %v1233 = vadd.f32 %v1133, %v1185
        %v1234 = vadd.f32 %v1134, %v1186
        %v1235 = vadd.f32 %v1135, %v1187
        %v1236 = vadd.f32 %v1136, %v1188
        %v1237 = vadd.f32 %v1137, %v1189
        %v1238 = vadd.f32 %v1138, %v1190
        %v1239 = vadd.f32 %v1139, %v1191
        %v1240 = vadd.f32 %v1140, %v1192
        %v1241 = vadd.f32 %v1141, %v1193
        %v1242 = vadd.f32 %v1142, %v1194
        %v1243 = vadd.f32 %v1143, %v1195
        %v1244 = vadd.f32 %v1144, %v1196
        %v1245 = vadd.f32 %v1145, %v1197
        %v1246 = vadd.f32 %v1146, %v1198
        %v1247 = vlaneseq
        %v1248 = vshrl.u32 %v1247, 7
        %v1249 = vsub.s32 2, %v1248
        %v1250 = vrot.slane %v877, %v1249
        %v1251 = vmul.f32 %v823, %v1250
        %v1252 = vmul.f32 %v824, %v1250
        %v1253 = vmul.f32 %v825, %v1250
        %v1254 = vmul.f32 %v826, %v1250
        %v1255 = vmul.f32 %v827, %v1250
        %v1256 = vmul.f32 %v828, %v1250
        %v1257 = vmul.f32 %v829, %v1250
        %v1258 = vmul.f32 %v830, %v1250
        %v1259 = vmul.f32 %v831, %v1250
        %v1260 = vmul.f32 %v832, %v1250
        %v1261 = vmul.f32 %v833, %v1250
        %v1262 = vmul.f32 %v834, %v1250
        %v1263 = vmul.f32 %v835, %v1250
        %v1264 = vmul.f32 %v836, %v1250
        %v1265 = vmul.f32 %v837, %v1250
        %v1266 = vmul.f32 %v838, %v1250
        %v1267 = vmul.f32 %v839, %v1250
        %v1268 = vmul.f32 %v840, %v1250
        %v1269 = vmul.f32 %v841, %v1250
        %v1270 = vmul.f32 %v842, %v1250
        %v1271 = vmul.f32 %v843, %v1250
        %v1272 = vmul.f32 %v844, %v1250
        %v1273 = vmul.f32 %v845, %v1250
        %v1274 = vmul.f32 %v846, %v1250
        %v1275 = vmul.f32 %v847, %v1250
        %v1276 = vmul.f32 %v848, %v1250
        %v1277 = vmul.f32 %v849, %v1250
        %v1278 = vmul.f32 %v850, %v1250
        %v1279 = vmul.f32 %v851, %v1250
        %v1280 = vmul.f32 %v852, %v1250
        %v1281 = vmul.f32 %v853, %v1250
        %v1282 = vmul.f32 %v854, %v1250
        %v1283 = vmul.f32 %v855, %v1250
        %v1284 = vmul.f32 %v856, %v1250
        %v1285 = vmul.f32 %v857, %v1250
        %v1286 = vmul.f32 %v858, %v1250
        %v1287 = vmul.f32 %v859, %v1250
        %v1288 = vmul.f32 %v860, %v1250
        %v1289 = vmul.f32 %v861, %v1250
        %v1290 = vmul.f32 %v862, %v1250
        %v1291 = vmul.f32 %v863, %v1250
        %v1292 = vmul.f32 %v864, %v1250
        %v1293 = vmul.f32 %v865, %v1250
        %v1294 = vmul.f32 %v866, %v1250
        %v1295 = vmul.f32 %v867, %v1250
        %v1296 = vmul.f32 %v868, %v1250
        %v1297 = vmul.f32 %v869, %v1250
        %v1298 = vmul.f32 %v870, %v1250
        %vm1347 = vcmask 1046528
        %v1348 = vrot.slane %v1251, 1
        %v1349 = vrot.slane %v1252, 1
        %v1350 = vsel %vm1347, %v1348, %v1349
        %v1351 = vrot.slane %v1253, 1
        %v1352 = vsel %vm1347, %v1349, %v1351
        %v1353 = vrot.slane %v1254, 1
        %v1354 = vrot.slane %v1255, 1
        %v1355 = vsel %vm1347, %v1353, %v1354
        %v1356 = vrot.slane %v1256, 1
        %v1357 = vsel %vm1347, %v1354, %v1356
        %v1358 = vrot.slane %v1257, 1
        %v1359 = vrot.slane %v1258, 1
        %v1360 = vsel %vm1347, %v1358, %v1359
        %v1361 = vrot.slane %v1259, 1
        %v1362 = vsel %vm1347, %v1359, %v1361
        %v1363 = vrot.slane %v1260, 1
        %v1364 = vrot.slane %v1261, 1
        %v1365 = vsel %vm1347, %v1363, %v1364
        %v1366 = vrot.slane %v1262, 1
        %v1367 = vsel %vm1347, %v1364, %v1366
        %v1368 = vrot.slane %v1263, 1
        %v1369 = vrot.slane %v1264, 1
        %v1370 = vsel %vm1347, %v1368, %v1369
        %v1371 = vrot.slane %v1265, 1
        %v1372 = vsel %vm1347, %v1369, %v1371
        %v1373 = vrot.slane %v1266, 1
        %v1374 = vrot.slane %v1267, 1
        %v1375 = vsel %vm1347, %v1373, %v1374
        %v1376 = vrot.slane %v1268, 1
        %v1377 = vsel %vm1347, %v1374, %v1376
        %v1378 = vrot.slane %v1269, 1
        %v1379 = vrot.slane %v1270, 1
        %v1380 = vsel %vm1347, %v1378, %v1379
        %v1381 = vrot.slane %v1271, 1
        %v1382 = vsel %vm1347, %v1379, %v1381
        %v1383 = vrot.slane %v1272, 1
        %v1384 = vrot.slane %v1273, 1
        %v1385 = vsel %vm1347, %v1383, %v1384
        %v1386 = vrot.slane %v1274, 1
        %v1387 = vsel %vm1347, %v1384, %v1386
        %v1388 = vrot.slane %v1275, 1
        %v1389 = vrot.slane %v1276, 1
        %v1390 = vsel %vm1347, %v1388, %v1389
        %v1391 = vrot.slane %v1277, 1
        %v1392 = vsel %vm1347, %v1389, %v1391
        %v1393 = vrot.slane %v1278, 1
        %v1394 = vrot.slane %v1279, 1
        %v1395 = vsel %vm1347, %v1393, %v1394
        %v1396 = vrot.slane %v1280, 1
        %v1397 = vsel %vm1347, %v1394, %v1396
        %v1398 = vrot.slane %v1281, 1
        %v1399 = vrot.slane %v1282, 1
        %v1400 = vsel %vm1347, %v1398, %v1399
        %v1401 = vrot.slane %v1283, 1
        %v1402 = vsel %vm1347, %v1399, %v1401
        %v1403 = vrot.slane %v1284, 1
        %v1404 = vrot.slane %v1285, 1
        %v1405 = vsel %vm1347, %v1403, %v1404
        %v1406 = vrot.slane %v1286, 1
        %v1407 = vsel %vm1347, %v1404, %v1406
        %v1408 = vrot.slane %v1287, 1
        %v1409 = vrot.slane %v1288, 1
        %v1410 = vsel %vm1347, %v1408, %v1409
        %v1411 = vrot.slane %v1289, 1
        %v1412 = vsel %vm1347, %v1409, %v1411
        %v1413 = vrot.slane %v1290, 1
        %v1414 = vrot.slane %v1291, 1
        %v1415 = vsel %vm1347, %v1413, %v1414
        %v1416 = vrot.slane %v1292, 1
        %v1417 = vsel %vm1347, %v1414, %v1416
        %v1418 = vrot.slane %v1293, 1
        %v1419 = vrot.slane %v1294, 1
        %v1420 = vsel %vm1347, %v1418, %v1419
        %v1421 = vrot.slane %v1295, 1
        %v1422 = vsel %vm1347, %v1419, %v1421
        %v1423 = vrot.slane %v1296, 1
        %v1424 = vrot.slane %v1297, 1
        %v1425 = vsel %vm1347, %v1423, %v1424
        %v1426 = vrot.slane %v1298, 1
        %v1427 = vsel %vm1347, %v1424, %v1426
        %v1476 = vadd.f32 %v1199, %v1350
        %v1477 = vadd.f32 %v1200, %v1352
        %v1478 = vadd.f32 %v1201, %v1351
        %v1479 = vadd.f32 %v1202, %v1355
        %v1480 = vadd.f32 %v1203, %v1357
        %v1481 = vadd.f32 %v1204, %v1356
        %v1482 = vadd.f32 %v1205, %v1360
        %v1483 = vadd.f32 %v1206, %v1362
        %v1484 = vadd.f32 %v1207, %v1361
        %v1485 = vadd.f32 %v1208, %v1365
        %v1486 = vadd.f32 %v1209, %v1367
        %v1487 = vadd.f32 %v1210, %v1366
        %v1488 = vadd.f32 %v1211, %v1370
        %v1489 = vadd.f32 %v1212, %v1372
        %v1490 = vadd.f32 %v1213, %v1371
        %v1491 = vadd.f32 %v1214, %v1375
        %v1492 = vadd.f32 %v1215, %v1377
        %v1493 = vadd.f32 %v1216, %v1376
        %v1494 = vadd.f32 %v1217, %v1380
        %v1495 = vadd.f32 %v1218, %v1382
        %v1496 = vadd.f32 %v1219, %v1381
        %v1497 = vadd.f32 %v1220, %v1385
        %v1498 = vadd.f32 %v1221, %v1387
        %v1499 = vadd.f32 %v1222, %v1386
        %v1500 = vadd.f32 %v1223, %v1390
        %v1501 = vadd.f32 %v1224, %v1392
        %v1502 = vadd.f32 %v1225, %v1391
        %v1503 = vadd.f32 %v1226, %v1395
        %v1504 = vadd.f32 %v1227, %v1397
        %v1505 = vadd.f32 %v1228, %v1396
        %v1506 = vadd.f32 %v1229, %v1400
        %v1507 = vadd.f32 %v1230, %v1402
        %v1508 = vadd.f32 %v1231, %v1401
        %v1509 = vadd.f32 %v1232, %v1405
        %v1510 = vadd.f32 %v1233, %v1407
        %v1511 = vadd.f32 %v1234, %v1406
        %v1512 = vadd.f32 %v1235, %v1410
        %v1513 = vadd.f32 %v1236, %v1412
        %v1514 = vadd.f32 %v1237, %v1411
        %v1515 = vadd.f32 %v1238, %v1415
        %v1516 = vadd.f32 %v1239, %v1417
        %v1517 = vadd.f32 %v1240, %v1416
        %v1518 = vadd.f32 %v1241, %v1420
        %v1519 = vadd.f32 %v1242, %v1422
        %v1520 = vadd.f32 %v1243, %v1421
        %v1521 = vadd.f32 %v1244, %v1425
        %v1522 = vadd.f32 %v1245, %v1427
        %v1523 = vadd.f32 %v1246, %v1426
        %v1524 = vlaneseq
        %v1525 = vshrl.u32 %v1524, 7
        %v1526 = vsub.s32 3, %v1525
        %v1527 = vrot.slane %v877, %v1526
        %v1528 = vmul.f32 %v826, %v1527
        %v1529 = vmul.f32 %v827, %v1527
        %v1530 = vmul.f32 %v829, %v1527
        %v1531 = vmul.f32 %v830, %v1527
        %v1532 = vmul.f32 %v832, %v1527
        %v1533 = vmul.f32 %v833, %v1527
        %v1534 = vmul.f32 %v835, %v1527
        %v1535 = vmul.f32 %v836, %v1527
        %v1536 = vmul.f32 %v838, %v1527
        %v1537 = vmul.f32 %v839, %v1527
        %v1538 = vmul.f32 %v841, %v1527
        %v1539 = vmul.f32 %v842, %v1527
        %v1540 = vmul.f32 %v844, %v1527
        %v1541 = vmul.f32 %v845, %v1527
        %v1542 = vmul.f32 %v847, %v1527
        %v1543 = vmul.f32 %v848, %v1527
        %v1544 = vmul.f32 %v850, %v1527
        %v1545 = vmul.f32 %v851, %v1527
        %v1546 = vmul.f32 %v853, %v1527
        %v1547 = vmul.f32 %v854, %v1527
        %v1548 = vmul.f32 %v856, %v1527
        %v1549 = vmul.f32 %v857, %v1527
        %v1550 = vmul.f32 %v859, %v1527
        %v1551 = vmul.f32 %v860, %v1527
        %v1552 = vmul.f32 %v862, %v1527
        %v1553 = vmul.f32 %v863, %v1527
        %v1554 = vmul.f32 %v865, %v1527
        %v1555 = vmul.f32 %v866, %v1527
        %v1556 = vmul.f32 %v868, %v1527
        %v1557 = vmul.f32 %v869, %v1527
        %v1558 = vmul.f32 %v871, %v1527
        %v1559 = vmul.f32 %v872, %v1527
        %v1592 = vrot.slane %v1528, 7
        %v1593 = vrot.slane %v1529, 7
        %v1594 = vsel %vm1002, %v1592, %v1593
        %v1595 = vrot.slane %v1530, 7
        %v1596 = vrot.slane %v1531, 7
        %v1597 = vsel %vm1002, %v1595, %v1596
        %v1598 = vrot.slane %v1532, 7
        %v1599 = vrot.slane %v1533, 7
        %v1600 = vsel %vm1002, %v1598, %v1599
        %v1601 = vrot.slane %v1534, 7
        %v1602 = vrot.slane %v1535, 7
        %v1603 = vsel %vm1002, %v1601, %v1602
        %v1604 = vrot.slane %v1536, 7
        %v1605 = vrot.slane %v1537, 7
        %v1606 = vsel %vm1002, %v1604, %v1605
        %v1607 = vrot.slane %v1538, 7
        %v1608 = vrot.slane %v1539, 7
        %v1609 = vsel %vm1002, %v1607, %v1608
        %v1610 = vrot.slane %v1540, 7
        %v1611 = vrot.slane %v1541, 7
        %v1612 = vsel %vm1002, %v1610, %v1611
        %v1613 = vrot.slane %v1542, 7
        %v1614 = vrot.slane %v1543, 7
        %v1615 = vsel %vm1002, %v1613, %v1614
        %v1616 = vrot.slane %v1544, 7
        %v1617 = vrot.slane %v1545, 7
        %v1618 = vsel %vm1002, %v1616, %v1617
        %v1619 = vrot.slane %v1546, 7
        %v1620 = vrot.slane %v1547, 7
        %v1621 = vsel %vm1002, %v1619, %v1620
        %v1622 = vrot.slane %v1548, 7
        %v1623 = vrot.slane %v1549, 7
        %v1624 = vsel %vm1002, %v1622, %v1623
        %v1625 = vrot.slane %v1550, 7
        %v1626 = vrot.slane %v1551, 7
        %v1627 = vsel %vm1002, %v1625, %v1626
        %v1628 = vrot.slane %v1552, 7
        %v1629 = vrot.slane %v1553, 7
        %v1630 = vsel %vm1002, %v1628, %v1629
        %v1631 = vrot.slane %v1554, 7
        %v1632 = vrot.slane %v1555, 7
        %v1633 = vsel %vm1002, %v1631, %v1632
        %v1634 = vrot.slane %v1556, 7
        %v1635 = vrot.slane %v1557, 7
        %v1636 = vsel %vm1002, %v1634, %v1635
        %v1637 = vrot.slane %v1558, 7
        %v1638 = vrot.slane %v1559, 7
        %v1639 = vsel %vm1002, %v1637, %v1638
        %v1688 = vadd.f32 %v1476, %v1592
        %v1689 = vadd.f32 %v1477, %v1594
        %v1690 = vadd.f32 %v1478, %v1593
        %v1691 = vadd.f32 %v1479, %v1595
        %v1692 = vadd.f32 %v1480, %v1597
        %v1693 = vadd.f32 %v1481, %v1596
        %v1694 = vadd.f32 %v1482, %v1598
        %v1695 = vadd.f32 %v1483, %v1600
        %v1696 = vadd.f32 %v1484, %v1599
        %v1697 = vadd.f32 %v1485, %v1601
        %v1698 = vadd.f32 %v1486, %v1603
        %v1699 = vadd.f32 %v1487, %v1602
        %v1700 = vadd.f32 %v1488, %v1604
        %v1701 = vadd.f32 %v1489, %v1606
        %v1702 = vadd.f32 %v1490, %v1605
        %v1703 = vadd.f32 %v1491, %v1607
        %v1704 = vadd.f32 %v1492, %v1609
        %v1705 = vadd.f32 %v1493, %v1608
        %v1706 = vadd.f32 %v1494, %v1610
        %v1707 = vadd.f32 %v1495, %v1612
        %v1708 = vadd.f32 %v1496, %v1611
        %v1709 = vadd.f32 %v1497, %v1613
        %v1710 = vadd.f32 %v1498, %v1615
        %v1711 = vadd.f32 %v1499, %v1614
        %v1712 = vadd.f32 %v1500, %v1616
        %v1713 = vadd.f32 %v1501, %v1618
        %v1714 = vadd.f32 %v1502, %v1617
        %v1715 = vadd.f32 %v1503, %v1619
        %v1716 = vadd.f32 %v1504, %v1621
        %v1717 = vadd.f32 %v1505, %v1620
        %v1718 = vadd.f32 %v1506, %v1622
        %v1719 = vadd.f32 %v1507, %v1624
        %v1720 = vadd.f32 %v1508, %v1623
        %v1721 = vadd.f32 %v1509, %v1625
        %v1722 = vadd.f32 %v1510, %v1627
        %v1723 = vadd.f32 %v1511, %v1626
        %v1724 = vadd.f32 %v1512, %v1628
        %v1725 = vadd.f32 %v1513, %v1630
        %v1726 = vadd.f32 %v1514, %v1629
        %v1727 = vadd.f32 %v1515, %v1631
        %v1728 = vadd.f32 %v1516, %v1633
        %v1729 = vadd.f32 %v1517, %v1632
        %v1730 = vadd.f32 %v1518, %v1634
        %v1731 = vadd.f32 %v1519, %v1636
        %v1732 = vadd.f32 %v1520, %v1635
        %v1733 = vadd.f32 %v1521, %v1637
        %v1734 = vadd.f32 %v1522, %v1639
        %v1735 = vadd.f32 %v1523, %v1638
        %v1736 = vlaneseq
        %v1737 = vshrl.u32 %v1736, 7
        %v1738 = vsub.s32 4, %v1737
        %v1739 = vrot.slane %v877, %v1738
        %v1740 = vmul.f32 %v826, %v1739
        %v1741 = vmul.f32 %v827, %v1739
        %v1742 = vmul.f32 %v828, %v1739
        %v1743 = vmul.f32 %v829, %v1739
        %v1744 = vmul.f32 %v830, %v1739
        %v1745 = vmul.f32 %v831, %v1739
        %v1746 = vmul.f32 %v832, %v1739
        %v1747 = vmul.f32 %v833, %v1739
        %v1748 = vmul.f32 %v834, %v1739
        %v1749 = vmul.f32 %v835, %v1739
        %v1750 = vmul.f32 %v836, %v1739
        %v1751 = vmul.f32 %v837, %v1739
        %v1752 = vmul.f32 %v838, %v1739
        %v1753 = vmul.f32 %v839, %v1739
        %v1754 = vmul.f32 %v840, %v1739
        %v1755 = vmul.f32 %v841, %v1739
        %v1756 = vmul.f32 %v842, %v1739
        %v1757 = vmul.f32 %v843, %v1739
        %v1758 = vmul.f32 %v844, %v1739
        %v1759 = vmul.f32 %v845, %v1739
        %v1760 = vmul.f32 %v846, %v1739
        %v1761 = vmul.f32 %v847, %v1739
        %v1762 = vmul.f32 %v848, %v1739
        %v1763 = vmul.f32 %v849, %v1739
        %v1764 = vmul.f32 %v850, %v1739
        %v1765 = vmul.f32 %v851, %v1739
        %v1766 = vmul.f32 %v852, %v1739
        %v1767 = vmul.f32 %v853, %v1739
        %v1768 = vmul.f32 %v854, %v1739
        %v1769 = vmul.f32 %v855, %v1739
        %v1770 = vmul.f32 %v856, %v1739
        %v1771 = vmul.f32 %v857, %v1739
        %v1772 = vmul.f32 %v858, %v1739
        %v1773 = vmul.f32 %v859, %v1739
        %v1774 = vmul.f32 %v860, %v1739
        %v1775 = vmul.f32 %v861, %v1739
        %v1776 = vmul.f32 %v862, %v1739
        %v1777 = vmul.f32 %v863, %v1739
        %v1778 = vmul.f32 %v864, %v1739
        %v1779 = vmul.f32 %v865, %v1739
        %v1780 = vmul.f32 %v866, %v1739
        %v1781 = vmul.f32 %v867, %v1739
        %v1782 = vmul.f32 %v868, %v1739
        %v1783 = vmul.f32 %v869, %v1739
        %v1784 = vmul.f32 %v870, %v1739
        %v1785 = vmul.f32 %v871, %v1739
        %v1786 = vmul.f32 %v872, %v1739
        %v1787 = vmul.f32 %v873, %v1739
        %v1788 = vadd.f32 %v1688, %v1740
        %v1789 = vadd.f32 %v1689, %v1741
        %v1790 = vadd.f32 %v1690, %v1742
        %v1791 = vadd.f32 %v1691, %v1743
        %v1792 = vadd.f32 %v1692, %v1744
        %v1793 = vadd.f32 %v1693, %v1745
        %v1794 = vadd.f32 %v1694, %v1746
        %v1795 = vadd.f32 %v1695, %v1747
        %v1796 = vadd.f32 %v1696, %v1748
        %v1797 = vadd.f32 %v1697, %v1749
        %v1798 = vadd.f32 %v1698, %v1750
        %v1799 = vadd.f32 %v1699, %v1751
        %v1800 = vadd.f32 %v1700, %v1752
        %v1801 = vadd.f32 %v1701, %v1753
        %v1802 = vadd.f32 %v1702, %v1754
        %v1803 = vadd.f32 %v1703, %v1755
        %v1804 = vadd.f32 %v1704, %v1756
        %v1805 = vadd.f32 %v1705, %v1757
        %v1806 = vadd.f32 %v1706, %v1758
        %v1807 = vadd.f32 %v1707, %v1759
        %v1808 = vadd.f32 %v1708, %v1760
        %v1809 = vadd.f32 %v1709, %v1761
        %v1810 = vadd.f32 %v1710, %v1762
        %v1811 = vadd.f32 %v1711, %v1763
        %v1812 = vadd.f32 %v1712, %v1764
        %v1813 = vadd.f32 %v1713, %v1765
        %v1814 = vadd.f32 %v1714, %v1766
        %v1815 = vadd.f32 %v1715, %v1767
        %v1816 = vadd.f32 %v1716, %v1768
        %v1817 = vadd.f32 %v1717, %v1769
        %v1818 = vadd.f32 %v1718, %v1770
        %v1819 = vadd.f32 %v1719, %v1771
        %v1820 = vadd.f32 %v1720, %v1772
        %v1821 = vadd.f32 %v1721, %v1773
        %v1822 = vadd.f32 %v1722, %v1774
        %v1823 = vadd.f32 %v1723, %v1775
        %v1824 = vadd.f32 %v1724, %v1776
        %v1825 = vadd.f32 %v1725, %v1777
        %v1826 = vadd.f32 %v1726, %v1778
        %v1827 = vadd.f32 %v1727, %v1779
        %v1828 = vadd.f32 %v1728, %v1780
        %v1829 = vadd.f32 %v1729, %v1781
        %v1830 = vadd.f32 %v1730, %v1782
        %v1831 = vadd.f32 %v1731, %v1783
        %v1832 = vadd.f32 %v1732, %v1784
        %v1833 = vadd.f32 %v1733, %v1785
        %v1834 = vadd.f32 %v1734, %v1786
        %v1835 = vadd.f32 %v1735, %v1787
        %v1836 = vlaneseq
        %v1837 = vshrl.u32 %v1836, 7
        %v1838 = vsub.s32 5, %v1837
        %v1839 = vrot.slane %v877, %v1838
        %v1840 = vmul.f32 %v826, %v1839
        %v1841 = vmul.f32 %v827, %v1839
        %v1842 = vmul.f32 %v828, %v1839
        %v1843 = vmul.f32 %v829, %v1839
        %v1844 = vmul.f32 %v830, %v1839
        %v1845 = vmul.f32 %v831, %v1839
        %v1846 = vmul.f32 %v832, %v1839
        %v1847 = vmul.f32 %v833, %v1839
        %v1848 = vmul.f32 %v834, %v1839
        %v1849 = vmul.f32 %v835, %v1839
        %v1850 = vmul.f32 %v836, %v1839
        %v1851 = vmul.f32 %v837, %v1839
        %v1852 = vmul.f32 %v838, %v1839
        %v1853 = vmul.f32 %v839, %v1839
        %v1854 = vmul.f32 %v840, %v1839
        %v1855 = vmul.f32 %v841, %v1839
        %v1856 = vmul.f32 %v842, %v1839
        %v1857 = vmul.f32 %v843, %v1839
        %v1858 = vmul.f32 %v844, %v1839
        %v1859 = vmul.f32 %v845, %v1839
        %v1860 = vmul.f32 %v846, %v1839
        %v1861 = vmul.f32 %v847, %v1839
        %v1862 = vmul.f32 %v848, %v1839
        %v1863 = vmul.f32 %v849, %v1839
        %v1864 = vmul.f32 %v850, %v1839
        %v1865 = vmul.f32 %v851, %v1839
        %v1866 = vmul.f32 %v852, %v1839
        %v1867 = vmul.f32 %v853, %v1839
        %v1868 = vmul.f32 %v854, %v1839
        %v1869 = vmul.f32 %v855, %v1839
        %v1870 = vmul.f32 %v856, %v1839
        %v1871 = vmul.f32 %v857, %v1839
        %v1872 = vmul.f32 %v858, %v1839
        %v1873 = vmul.f32 %v859, %v1839
        %v1874 = vmul.f32 %v860, %v1839
        %v1875 = vmul.f32 %v861, %v1839
        %v1876 = vmul.f32 %v862, %v1839
        %v1877 = vmul.f32 %v863, %v1839
        %v1878 = vmul.f32 %v864, %v1839
        %v1879 = vmul.f32 %v865, %v1839
        %v1880 = vmul.f32 %v866, %v1839
        %v1881 = vmul.f32 %v867, %v1839
        %v1882 = vmul.f32 %v868, %v1839
        %v1883 = vmul.f32 %v869, %v1839
        %v1884 = vmul.f32 %v870, %v1839
        %v1885 = vmul.f32 %v871, %v1839
        %v1886 = vmul.f32 %v872, %v1839
        %v1887 = vmul.f32 %v873, %v1839
        %v1936 = vrot.slane %v1840, 1
        %v1937 = vrot.slane %v1841, 1
        %v1938 = vsel %vm1347, %v1936, %v1937
        %v1939 = vrot.slane %v1842, 1
        %v1940 = vsel %vm1347, %v1937, %v1939
        %v1941 = vrot.slane %v1843, 1
        %v1942 = vrot.slane %v1844, 1
        %v1943 = vsel %vm1347, %v1941, %v1942
        %v1944 = vrot.slane %v1845, 1
        %v1945 = vsel %vm1347, %v1942, %v1944
        %v1946 = vrot.slane %v1846, 1
        %v1947 = vrot.slane %v1847, 1
        %v1948 = vsel %vm1347, %v1946, %v1947
        %v1949 = vrot.slane %v1848, 1
        %v1950 = vsel %vm1347, %v1947, %v1949
        %v1951 = vrot.slane %v1849, 1
        %v1952 = vrot.slane %v1850, 1
        %v1953 = vsel %vm1347, %v1951, %v1952
        %v1954 = vrot.slane %v1851, 1
        %v1955 = vsel %vm1347, %v1952, %v1954
        %v1956 = vrot.slane %v1852, 1
        %v1957 = vrot.slane %v1853, 1
        %v1958 = vsel %vm1347, %v1956, %v1957
        %v1959 = vrot.slane %v1854, 1
        %v1960 = vsel %vm1347, %v1957, %v1959
        %v1961 = vrot.slane %v1855, 1
        %v1962 = vrot.slane %v1856, 1
        %v1963 = vsel %vm1347, %v1961, %v1962
        %v1964 = vrot.slane %v1857, 1
        %v1965 = vsel %vm1347, %v1962, %v1964
        %v1966 = vrot.slane %v1858, 1
        %v1967 = vrot.slane %v1859, 1
        %v1968 = vsel %vm1347, %v1966, %v1967
        %v1969 = vrot.slane %v1860, 1
        %v1970 = vsel %vm1347, %v1967, %v1969
        %v1971 = vrot.slane %v1861, 1
        %v1972 = vrot.slane %v1862, 1
        %v1973 = vsel %vm1347, %v1971, %v1972
        %v1974 = vrot.slane %v1863, 1
        %v1975 = vsel %vm1347, %v1972, %v1974
        %v1976 = vrot.slane %v1864, 1
        %v1977 = vrot.slane %v1865, 1
        %v1978 = vsel %vm1347, %v1976, %v1977
        %v1979 = vrot.slane %v1866, 1
        %v1980 = vsel %vm1347, %v1977, %v1979
        %v1981 = vrot.slane %v1867, 1
        %v1982 = vrot.slane %v1868, 1
        %v1983 = vsel %vm1347, %v1981, %v1982
        %v1984 = vrot.slane %v1869, 1
        %v1985 = vsel %vm1347, %v1982, %v1984
        %v1986 = vrot.slane %v1870, 1
        %v1987 = vrot.slane %v1871, 1
        %v1988 = vsel %vm1347, %v1986, %v1987
        %v1989 = vrot.slane %v1872, 1
        %v1990 = vsel %vm1347, %v1987, %v1989
        %v1991 = vrot.slane %v1873, 1
        %v1992 = vrot.slane %v1874, 1
        %v1993 = vsel %vm1347, %v1991, %v1992
        %v1994 = vrot.slane %v1875, 1
        %v1995 = vsel %vm1347, %v1992, %v1994
        %v1996 = vrot.slane %v1876, 1
        %v1997 = vrot.slane %v1877, 1
        %v1998 = vsel %vm1347, %v1996, %v1997
        %v1999 = vrot.slane %v1878, 1
        %v2000 = vsel %vm1347, %v1997, %v1999
        %v2001 = vrot.slane %v1879, 1
        %v2002 = vrot.slane %v1880, 1
        %v2003 = vsel %vm1347, %v2001, %v2002
        %v2004 = vrot.slane %v1881, 1
        %v2005 = vsel %vm1347, %v2002, %v2004
        %v2006 = vrot.slane %v1882, 1
        %v2007 = vrot.slane %v1883, 1
        %v2008 = vsel %vm1347, %v2006, %v2007
        %v2009 = vrot.slane %v1884, 1
        %v2010 = vsel %vm1347, %v2007, %v2009
        %v2011 = vrot.slane %v1885, 1
        %v2012 = vrot.slane %v1886, 1
        %v2013 = vsel %vm1347, %v2011, %v2012
        %v2014 = vrot.slane %v1887, 1
        %v2015 = vsel %vm1347, %v2012, %v2014
        %v2064 = vadd.f32 %v1788, %v1938
        %v2065 = vadd.f32 %v1789, %v1940
        %v2066 = vadd.f32 %v1790, %v1939
        %v2067 = vadd.f32 %v1791, %v1943
        %v2068 = vadd.f32 %v1792, %v1945
        %v2069 = vadd.f32 %v1793, %v1944
        %v2070 = vadd.f32 %v1794, %v1948
        %v2071 = vadd.f32 %v1795, %v1950
        %v2072 = vadd.f32 %v1796, %v1949
        %v2073 = vadd.f32 %v1797, %v1953
        %v2074 = vadd.f32 %v1798, %v1955
        %v2075 = vadd.f32 %v1799, %v1954
        %v2076 = vadd.f32 %v1800, %v1958
        %v2077 = vadd.f32 %v1801, %v1960
        %v2078 = vadd.f32 %v1802, %v1959
        %v2079 = vadd.f32 %v1803, %v1963
        %v2080 = vadd.f32 %v1804, %v1965
        %v2081 = vadd.f32 %v1805, %v1964
        %v2082 = vadd.f32 %v1806, %v1968
        %v2083 = vadd.f32 %v1807, %v1970
        %v2084 = vadd.f32 %v1808, %v1969
        %v2085 = vadd.f32 %v1809, %v1973
        %v2086 = vadd.f32 %v1810, %v1975
        %v2087 = vadd.f32 %v1811, %v1974
        %v2088 = vadd.f32 %v1812, %v1978
        %v2089 = vadd.f32 %v1813, %v1980
        %v2090 = vadd.f32 %v1814, %v1979
        %v2091 = vadd.f32 %v1815, %v1983
        %v2092 = vadd.f32 %v1816, %v1985
        %v2093 = vadd.f32 %v1817, %v1984
        %v2094 = vadd.f32 %v1818, %v1988
        %v2095 = vadd.f32 %v1819, %v1990
        %v2096 = vadd.f32 %v1820, %v1989
        %v2097 = vadd.f32 %v1821, %v1993
        %v2098 = vadd.f32 %v1822, %v1995
        %v2099 = vadd.f32 %v1823, %v1994
        %v2100 = vadd.f32 %v1824, %v1998
        %v2101 = vadd.f32 %v1825, %v2000
        %v2102 = vadd.f32 %v1826, %v1999
        %v2103 = vadd.f32 %v1827, %v2003
        %v2104 = vadd.f32 %v1828, %v2005
        %v2105 = vadd.f32 %v1829, %v2004
        %v2106 = vadd.f32 %v1830, %v2008
        %v2107 = vadd.f32 %v1831, %v2010
        %v2108 = vadd.f32 %v1832, %v2009
        %v2109 = vadd.f32 %v1833, %v2013
        %v2110 = vadd.f32 %v1834, %v2015
        %v2111 = vadd.f32 %v1835, %v2014
        %v2112 = vlaneseq
        %v2113 = vshrl.u32 %v2112, 7
        %v2114 = vsub.s32 6, %v2113
        %v2115 = vrot.slane %v877, %v2114
        %v2116 = vmul.f32 %v829, %v2115
        %v2117 = vmul.f32 %v830, %v2115
        %v2118 = vmul.f32 %v832, %v2115
        %v2119 = vmul.f32 %v833, %v2115
        %v2120 = vmul.f32 %v835, %v2115
        %v2121 = vmul.f32 %v836, %v2115
        %v2122 = vmul.f32 %v838, %v2115
        %v2123 = vmul.f32 %v839, %v2115
        %v2124 = vmul.f32 %v841, %v2115
        %v2125 = vmul.f32 %v842, %v2115
        %v2126 = vmul.f32 %v844, %v2115
        %v2127 = vmul.f32 %v845, %v2115
        %v2128 = vmul.f32 %v847, %v2115
        %v2129 = vmul.f32 %v848, %v2115
        %v2130 = vmul.f32 %v850, %v2115
        %v2131 = vmul.f32 %v851, %v2115
        %v2132 = vmul.f32 %v853, %v2115
        %v2133 = vmul.f32 %v854, %v2115
        %v2134 = vmul.f32 %v856, %v2115
        %v2135 = vmul.f32 %v857, %v2115
        %v2136 = vmul.f32 %v859, %v2115
        %v2137 = vmul.f32 %v860, %v2115
        %v2138 = vmul.f32 %v862, %v2115
        %v2139 = vmul.f32 %v863, %v2115
        %v2140 = vmul.f32 %v865, %v2115
        %v2141 = vmul.f32 %v866, %v2115
        %v2142 = vmul.f32 %v868, %v2115
        %v2143 = vmul.f32 %v869, %v2115
        %v2144 = vmul.f32 %v871, %v2115
        %v2145 = vmul.f32 %v872, %v2115
        %v2146 = vmul.f32 %v874, %v2115
        %v2147 = vmul.f32 %v875, %v2115
        %v2180 = vrot.slane %v2116, 7
        %v2181 = vrot.slane %v2117, 7
        %v2182 = vsel %vm1002, %v2180, %v2181
        %v2183 = vrot.slane %v2118, 7
        %v2184 = vrot.slane %v2119, 7
        %v2185 = vsel %vm1002, %v2183, %v2184
        %v2186 = vrot.slane %v2120, 7
        %v2187 = vrot.slane %v2121, 7
        %v2188 = vsel %vm1002, %v2186, %v2187
        %v2189 = vrot.slane %v2122, 7
        %v2190 = vrot.slane %v2123, 7
        %v2191 = vsel %vm1002, %v2189, %v2190
        %v2192 = vrot.slane %v2124, 7
        %v2193 = vrot.slane %v2125, 7
        %v2194 = vsel %vm1002, %v2192, %v2193
        %v2195 = vrot.slane %v2126, 7
        %v2196 = vrot.slane %v2127, 7
        %v2197 = vsel %vm1002, %v2195, %v2196
        %v2198 = vrot.slane %v2128, 7
        %v2199 = vrot.slane %v2129, 7
        %v2200 = vsel %vm1002, %v2198, %v2199
        %v2201 = vrot.slane %v2130, 7
        %v2202 = vrot.slane %v2131, 7
        %v2203 = vsel %vm1002, %v2201, %v2202
        %v2204 = vrot.slane %v2132, 7
        %v2205 = vrot.slane %v2133, 7
        %v2206 = vsel %vm1002, %v2204, %v2205
        %v2207 = vrot.slane %v2134, 7
        %v2208 = vrot.slane %v2135, 7
        %v2209 = vsel %vm1002, %v2207, %v2208
        %v2210 = vrot.slane %v2136, 7
        %v2211 = vrot.slane %v2137, 7
        %v2212 = vsel %vm1002, %v2210, %v2211
        %v2213 = vrot.slane %v2138, 7
        %v2214 = vrot.slane %v2139, 7
        %v2215 = vsel %vm1002, %v2213, %v2214
        %v2216 = vrot.slane %v2140, 7
        %v2217 = vrot.slane %v2141, 7
        %v2218 = vsel %vm1002, %v2216, %v2217
        %v2219 = vrot.slane %v2142, 7
        %v2220 = vrot.slane %v2143, 7
        %v2221 = vsel %vm1002, %v2219, %v2220
        %v2222 = vrot.slane %v2144, 7
        %v2223 = vrot.slane %v2145, 7
        %v2224 = vsel %vm1002, %v2222, %v2223
        %v2225 = vrot.slane %v2146, 7
        %v2226 = vrot.slane %v2147, 7
        %v2227 = vsel %vm1002, %v2225, %v2226
        %v2276 = vadd.f32 %v2064, %v2180
        %v2277 = vadd.f32 %v2065, %v2182
        %v2278 = vadd.f32 %v2066, %v2181
        %v2279 = vadd.f32 %v2067, %v2183
        %v2280 = vadd.f32 %v2068, %v2185
        %v2281 = vadd.f32 %v2069, %v2184
        %v2282 = vadd.f32 %v2070, %v2186
        %v2283 = vadd.f32 %v2071, %v2188
        %v2284 = vadd.f32 %v2072, %v2187
        %v2285 = vadd.f32 %v2073, %v2189
        %v2286 = vadd.f32 %v2074, %v2191
        %v2287 = vadd.f32 %v2075, %v2190
        %v2288 = vadd.f32 %v2076, %v2192
        %v2289 = vadd.f32 %v2077, %v2194
        %v2290 = vadd.f32 %v2078, %v2193
        %v2291 = vadd.f32 %v2079, %v2195
        %v2292 = vadd.f32 %v2080, %v2197
        %v2293 = vadd.f32 %v2081, %v2196
        %v2294 = vadd.f32 %v2082, %v2198
        %v2295 = vadd.f32 %v2083, %v2200
        %v2296 = vadd.f32 %v2084, %v2199
        %v2297 = vadd.f32 %v2085, %v2201
        %v2298 = vadd.f32 %v2086, %v2203
        %v2299 = vadd.f32 %v2087, %v2202
        %v2300 = vadd.f32 %v2088, %v2204
        %v2301 = vadd.f32 %v2089, %v2206
        %v2302 = vadd.f32 %v2090, %v2205
        %v2303 = vadd.f32 %v2091, %v2207
        %v2304 = vadd.f32 %v2092, %v2209
        %v2305 = vadd.f32 %v2093, %v2208
        %v2306 = vadd.f32 %v2094, %v2210
        %v2307 = vadd.f32 %v2095, %v2212
        %v2308 = vadd.f32 %v2096, %v2211
        %v2309 = vadd.f32 %v2097, %v2213
        %v2310 = vadd.f32 %v2098, %v2215
        %v2311 = vadd.f32 %v2099, %v2214
        %v2312 = vadd.f32 %v2100, %v2216
        %v2313 = vadd.f32 %v2101, %v2218
        %v2314 = vadd.f32 %v2102, %v2217
        %v2315 = vadd.f32 %v2103, %v2219
        %v2316 = vadd.f32 %v2104, %v2221
        %v2317 = vadd.f32 %v2105, %v2220
        %v2318 = vadd.f32 %v2106, %v2222
        %v2319 = vadd.f32 %v2107, %v2224
        %v2320 = vadd.f32 %v2108, %v2223
        %v2321 = vadd.f32 %v2109, %v2225
        %v2322 = vadd.f32 %v2110, %v2227
        %v2323 = vadd.f32 %v2111, %v2226
        %v2324 = vlaneseq
        %v2325 = vshrl.u32 %v2324, 7
        %v2326 = vsub.s32 7, %v2325
        %v2327 = vrot.slane %v877, %v2326
        %v2328 = vmul.f32 %v829, %v2327
        %v2329 = vmul.f32 %v830, %v2327
        %v2330 = vmul.f32 %v831, %v2327
        %v2331 = vmul.f32 %v832, %v2327
        %v2332 = vmul.f32 %v833, %v2327
        %v2333 = vmul.f32 %v834, %v2327
        %v2334 = vmul.f32 %v835, %v2327
        %v2335 = vmul.f32 %v836, %v2327
        %v2336 = vmul.f32 %v837, %v2327
        %v2337 = vmul.f32 %v838, %v2327
        %v2338 = vmul.f32 %v839, %v2327
        %v2339 = vmul.f32 %v840, %v2327
        %v2340 = vmul.f32 %v841, %v2327
        %v2341 = vmul.f32 %v842, %v2327
        %v2342 = vmul.f32 %v843, %v2327
        %v2343 = vmul.f32 %v844, %v2327
        %v2344 = vmul.f32 %v845, %v2327
        %v2345 = vmul.f32 %v846, %v2327
        %v2346 = vmul.f32 %v847, %v2327
        %v2347 = vmul.f32 %v848, %v2327
        %v2348 = vmul.f32 %v849, %v2327
        %v2349 = vmul.f32 %v850, %v2327
        %v2350 = vmul.f32 %v851, %v2327
        %v2351 = vmul.f32 %v852, %v2327
        %v2352 = vmul.f32 %v853, %v2327
        %v2353 = vmul.f32 %v854, %v2327
        %v2354 = vmul.f32 %v855, %v2327
        %v2355 = vmul.f32 %v856, %v2327
        %v2356 = vmul.f32 %v857, %v2327
        %v2357 = vmul.f32 %v858, %v2327
        %v2358 = vmul.f32 %v859, %v2327
        %v2359 = vmul.f32 %v860, %v2327
        %v2360 = vmul.f32 %v861, %v2327
        %v2361 = vmul.f32 %v862, %v2327
        %v2362 = vmul.f32 %v863, %v2327
        %v2363 = vmul.f32 %v864, %v2327
        %v2364 = vmul.f32 %v865, %v2327
        %v2365 = vmul.f32 %v866, %v2327
        %v2366 = vmul.f32 %v867, %v2327
        %v2367 = vmul.f32 %v868, %v2327
        %v2368 = vmul.f32 %v869, %v2327
        %v2369 = vmul.f32 %v870, %v2327
        %v2370 = vmul.f32 %v871, %v2327
        %v2371 = vmul.f32 %v872, %v2327
        %v2372 = vmul.f32 %v873, %v2327
        %v2373 = vmul.f32 %v874, %v2327
        %v2374 = vmul.f32 %v875, %v2327
        %v2375 = vmul.f32 %v876, %v2327
        %v2376 = vadd.f32 %v2276, %v2328
        %v2377 = vadd.f32 %v2277, %v2329
        %v2378 = vadd.f32 %v2278, %v2330
        %v2379 = vadd.f32 %v2279, %v2331
        %v2380 = vadd.f32 %v2280, %v2332
        %v2381 = vadd.f32 %v2281, %v2333
        %v2382 = vadd.f32 %v2282, %v2334
        %v2383 = vadd.f32 %v2283, %v2335
        %v2384 = vadd.f32 %v2284, %v2336
        %v2385 = vadd.f32 %v2285, %v2337
        %v2386 = vadd.f32 %v2286, %v2338
        %v2387 = vadd.f32 %v2287, %v2339
        %v2388 = vadd.f32 %v2288, %v2340
        %v2389 = vadd.f32 %v2289, %v2341
        %v2390 = vadd.f32 %v2290, %v2342
        %v2391 = vadd.f32 %v2291, %v2343
        %v2392 = vadd.f32 %v2292, %v2344
        %v2393 = vadd.f32 %v2293, %v2345
        %v2394 = vadd.f32 %v2294, %v2346
        %v2395 = vadd.f32 %v2295, %v2347
        %v2396 = vadd.f32 %v2296, %v2348
        %v2397 = vadd.f32 %v2297, %v2349
        %v2398 = vadd.f32 %v2298, %v2350
        %v2399 = vadd.f32 %v2299, %v2351
        %v2400 = vadd.f32 %v2300, %v2352
        %v2401 = vadd.f32 %v2301, %v2353
        %v2402 = vadd.f32 %v2302, %v2354
        %v2403 = vadd.f32 %v2303, %v2355
        %v2404 = vadd.f32 %v2304, %v2356
        %v2405 = vadd.f32 %v2305, %v2357
        %v2406 = vadd.f32 %v2306, %v2358
        %v2407 = vadd.f32 %v2307, %v2359
        %v2408 = vadd.f32 %v2308, %v2360
        %v2409 = vadd.f32 %v2309, %v2361
        %v2410 = vadd.f32 %v2310, %v2362
        %v2411 = vadd.f32 %v2311, %v2363
        %v2412 = vadd.f32 %v2312, %v2364
        %v2413 = vadd.f32 %v2313, %v2365
        %v2414 = vadd.f32 %v2314, %v2366
        %v2415 = vadd.f32 %v2315, %v2367
        %v2416 = vadd.f32 %v2316, %v2368
        %v2417 = vadd.f32 %v2317, %v2369
        %v2418 = vadd.f32 %v2318, %v2370
        %v2419 = vadd.f32 %v2319, %v2371
        %v2420 = vadd.f32 %v2320, %v2372
        %v2421 = vadd.f32 %v2321, %v2373
        %v2422 = vadd.f32 %v2322, %v2374
        %v2423 = vadd.f32 %v2323, %v2375
        %v2424 = vlaneseq
        %v2425 = vshrl.u32 %v2424, 7
        %v2426 = vsub.s32 0, %v2425
        %v2427 = vrot.slane %v878, %v2426
        %v2428 = vmul.f32 %v829, %v2427
        %v2429 = vmul.f32 %v830, %v2427
        %v2430 = vmul.f32 %v831, %v2427
        %v2431 = vmul.f32 %v832, %v2427
        %v2432 = vmul.f32 %v833, %v2427
        %v2433 = vmul.f32 %v834, %v2427
        %v2434 = vmul.f32 %v835, %v2427
        %v2435 = vmul.f32 %v836, %v2427
        %v2436 = vmul.f32 %v837, %v2427
        %v2437 = vmul.f32 %v838, %v2427
        %v2438 = vmul.f32 %v839, %v2427
        %v2439 = vmul.f32 %v840, %v2427
        %v2440 = vmul.f32 %v841, %v2427
        %v2441 = vmul.f32 %v842, %v2427
        %v2442 = vmul.f32 %v843, %v2427
        %v2443 = vmul.f32 %v844, %v2427
        %v2444 = vmul.f32 %v845, %v2427
        %v2445 = vmul.f32 %v846, %v2427
        %v2446 = vmul.f32 %v847, %v2427
        %v2447 = vmul.f32 %v848, %v2427
        %v2448 = vmul.f32 %v849, %v2427
        %v2449 = vmul.f32 %v850, %v2427
        %v2450 = vmul.f32 %v851, %v2427
        %v2451 = vmul.f32 %v852, %v2427
        %v2452 = vmul.f32 %v853, %v2427
        %v2453 = vmul.f32 %v854, %v2427
        %v2454 = vmul.f32 %v855, %v2427
        %v2455 = vmul.f32 %v856, %v2427
        %v2456 = vmul.f32 %v857, %v2427
        %v2457 = vmul.f32 %v858, %v2427
        %v2458 = vmul.f32 %v859, %v2427
        %v2459 = vmul.f32 %v860, %v2427
        %v2460 = vmul.f32 %v861, %v2427
        %v2461 = vmul.f32 %v862, %v2427
        %v2462 = vmul.f32 %v863, %v2427
        %v2463 = vmul.f32 %v864, %v2427
        %v2464 = vmul.f32 %v865, %v2427
        %v2465 = vmul.f32 %v866, %v2427
        %v2466 = vmul.f32 %v867, %v2427
        %v2467 = vmul.f32 %v868, %v2427
        %v2468 = vmul.f32 %v869, %v2427
        %v2469 = vmul.f32 %v870, %v2427
        %v2470 = vmul.f32 %v871, %v2427
        %v2471 = vmul.f32 %v872, %v2427
        %v2472 = vmul.f32 %v873, %v2427
        %v2473 = vmul.f32 %v874, %v2427
        %v2474 = vmul.f32 %v875, %v2427
        %v2475 = vmul.f32 %v876, %v2427
        %v2524 = vrot.slane %v2428, 1
        %v2525 = vrot.slane %v2429, 1
        %v2526 = vsel %vm1347, %v2524, %v2525
        %v2527 = vrot.slane %v2430, 1
        %v2528 = vsel %vm1347, %v2525, %v2527
        %v2529 = vrot.slane %v2431, 1
        %v2530 = vrot.slane %v2432, 1
        %v2531 = vsel %vm1347, %v2529, %v2530
        %v2532 = vrot.slane %v2433, 1
        %v2533 = vsel %vm1347, %v2530, %v2532
        %v2534 = vrot.slane %v2434, 1
        %v2535 = vrot.slane %v2435, 1
        %v2536 = vsel %vm1347, %v2534, %v2535
        %v2537 = vrot.slane %v2436, 1
        %v2538 = vsel %vm1347, %v2535, %v2537
        %v2539 = vrot.slane %v2437, 1
        %v2540 = vrot.slane %v2438, 1
        %v2541 = vsel %vm1347, %v2539, %v2540
        %v2542 = vrot.slane %v2439, 1
        %v2543 = vsel %vm1347, %v2540, %v2542
        %v2544 = vrot.slane %v2440, 1
        %v2545 = vrot.slane %v2441, 1
        %v2546 = vsel %vm1347, %v2544, %v2545
        %v2547 = vrot.slane %v2442, 1
        %v2548 = vsel %vm1347, %v2545, %v2547
        %v2549 = vrot.slane %v2443, 1
        %v2550 = vrot.slane %v2444, 1
        %v2551 = vsel %vm1347, %v2549, %v2550
        %v2552 = vrot.slane %v2445, 1
        %v2553 = vsel %vm1347, %v2550, %v2552
        %v2554 = vrot.slane %v2446, 1
        %v2555 = vrot.slane %v2447, 1
        %v2556 = vsel %vm1347, %v2554, %v2555
        %v2557 = vrot.slane %v2448, 1
        %v2558 = vsel %vm1347, %v2555, %v2557
        %v2559 = vrot.slane %v2449, 1
        %v2560 = vrot.slane %v2450, 1
        %v2561 = vsel %vm1347, %v2559, %v2560
        %v2562 = vrot.slane %v2451, 1
        %v2563 = vsel %vm1347, %v2560, %v2562
        %v2564 = vrot.slane %v2452, 1
        %v2565 = vrot.slane %v2453, 1
        %v2566 = vsel %vm1347, %v2564, %v2565
        %v2567 = vrot.slane %v2454, 1
        %v2568 = vsel %vm1347, %v2565, %v2567
        %v2569 = vrot.slane %v2455, 1
        %v2570 = vrot.slane %v2456, 1
        %v2571 = vsel %vm1347, %v2569, %v2570
        %v2572 = vrot.slane %v2457, 1
        %v2573 = vsel %vm1347, %v2570, %v2572
        %v2574 = vrot.slane %v2458, 1
        %v2575 = vrot.slane %v2459, 1
        %v2576 = vsel %vm1347, %v2574, %v2575
        %v2577 = vrot.slane %v2460, 1
        %v2578 = vsel %vm1347, %v2575, %v2577
        %v2579 = vrot.slane %v2461, 1
        %v2580 = vrot.slane %v2462, 1
        %v2581 = vsel %vm1347, %v2579, %v2580
        %v2582 = vrot.slane %v2463, 1
        %v2583 = vsel %vm1347, %v2580, %v2582
        %v2584 = vrot.slane %v2464, 1
        %v2585 = vrot.slane %v2465, 1
        %v2586 = vsel %vm1347, %v2584, %v2585
        %v2587 = vrot.slane %v2466, 1
        %v2588 = vsel %vm1347, %v2585, %v2587
        %v2589 = vrot.slane %v2467, 1
        %v2590 = vrot.slane %v2468, 1
        %v2591 = vsel %vm1347, %v2589, %v2590
        %v2592 = vrot.slane %v2469, 1
        %v2593 = vsel %vm1347, %v2590, %v2592
        %v2594 = vrot.slane %v2470, 1
        %v2595 = vrot.slane %v2471, 1
        %v2596 = vsel %vm1347, %v2594, %v2595
        %v2597 = vrot.slane %v2472, 1
        %v2598 = vsel %vm1347, %v2595, %v2597
        %v2599 = vrot.slane %v2473, 1
        %v2600 = vrot.slane %v2474, 1
        %v2601 = vsel %vm1347, %v2599, %v2600
        %v2602 = vrot.slane %v2475, 1
        %v2603 = vsel %vm1347, %v2600, %v2602
        %v2652 = vadd.f32 %v2376, %v2526
        %v2653 = vadd.f32 %v2377, %v2528
        %v2654 = vadd.f32 %v2378, %v2527
        %v2655 = vadd.f32 %v2379, %v2531
        %v2656 = vadd.f32 %v2380, %v2533
        %v2657 = vadd.f32 %v2381, %v2532
        %v2658 = vadd.f32 %v2382, %v2536
        %v2659 = vadd.f32 %v2383, %v2538
        %v2660 = vadd.f32 %v2384, %v2537
        %v2661 = vadd.f32 %v2385, %v2541
        %v2662 = vadd.f32 %v2386, %v2543
        %v2663 = vadd.f32 %v2387, %v2542
        %v2664 = vadd.f32 %v2388, %v2546
        %v2665 = vadd.f32 %v2389, %v2548
        %v2666 = vadd.f32 %v2390, %v2547
        %v2667 = vadd.f32 %v2391, %v2551
        %v2668 = vadd.f32 %v2392, %v2553
        %v2669 = vadd.f32 %v2393, %v2552
        %v2670 = vadd.f32 %v2394, %v2556
        %v2671 = vadd.f32 %v2395, %v2558
        %v2672 = vadd.f32 %v2396, %v2557
        %v2673 = vadd.f32 %v2397, %v2561
        %v2674 = vadd.f32 %v2398, %v2563
        %v2675 = vadd.f32 %v2399, %v2562
        %v2676 = vadd.f32 %v2400, %v2566
        %v2677 = vadd.f32 %v2401, %v2568
        %v2678 = vadd.f32 %v2402, %v2567
        %v2679 = vadd.f32 %v2403, %v2571
        %v2680 = vadd.f32 %v2404, %v2573
        %v2681 = vadd.f32 %v2405, %v2572
        %v2682 = vadd.f32 %v2406, %v2576
        %v2683 = vadd.f32 %v2407, %v2578
        %v2684 = vadd.f32 %v2408, %v2577
        %v2685 = vadd.f32 %v2409, %v2581
        %v2686 = vadd.f32 %v2410, %v2583
        %v2687 = vadd.f32 %v2411, %v2582
        %v2688 = vadd.f32 %v2412, %v2586
        %v2689 = vadd.f32 %v2413, %v2588
        %v2690 = vadd.f32 %v2414, %v2587
        %v2691 = vadd.f32 %v2415, %v2591
        %v2692 = vadd.f32 %v2416, %v2593
        %v2693 = vadd.f32 %v2417, %v2592
        %v2694 = vadd.f32 %v2418, %v2596
        %v2695 = vadd.f32 %v2419, %v2598
        %v2696 = vadd.f32 %v2420, %v2597
        %v2697 = vadd.f32 %v2421, %v2601
        %v2698 = vadd.f32 %v2422, %v2603
        %v2699 = vadd.f32 %v2423, %v2602
        %v2748 = vrot.slane %v2652, 1
        %v2749 = vrot.slane %v2653, 1
        %v2750 = vsel %vm1347, %v2748, %v2749
        %v2751 = vrot.slane %v2654, 1
        %v2752 = vsel %vm1347, %v2749, %v2751
        %v2753 = vrot.slane %v2655, 1
        %v2754 = vrot.slane %v2656, 1
        %v2755 = vsel %vm1347, %v2753, %v2754
        %v2756 = vrot.slane %v2657, 1
        %v2757 = vsel %vm1347, %v2754, %v2756
        %v2758 = vrot.slane %v2658, 1
        %v2759 = vrot.slane %v2659, 1
        %v2760 = vsel %vm1347, %v2758, %v2759
        %v2761 = vrot.slane %v2660, 1
        %v2762 = vsel %vm1347, %v2759, %v2761
        %v2763 = vrot.slane %v2661, 1
        %v2764 = vrot.slane %v2662, 1
        %v2765 = vsel %vm1347, %v2763, %v2764
        %v2766 = vrot.slane %v2663, 1
        %v2767 = vsel %vm1347, %v2764, %v2766
        %v2768 = vrot.slane %v2664, 1
        %v2769 = vrot.slane %v2665, 1
        %v2770 = vsel %vm1347, %v2768, %v2769
        %v2771 = vrot.slane %v2666, 1
        %v2772 = vsel %vm1347, %v2769, %v2771
        %v2773 = vrot.slane %v2667, 1
        %v2774 = vrot.slane %v2668, 1
        %v2775 = vsel %vm1347, %v2773, %v2774
        %v2776 = vrot.slane %v2669, 1
        %v2777 = vsel %vm1347, %v2774, %v2776
        %v2778 = vrot.slane %v2670, 1
        %v2779 = vrot.slane %v2671, 1
        %v2780 = vsel %vm1347, %v2778, %v2779
        %v2781 = vrot.slane %v2672, 1
        %v2782 = vsel %vm1347, %v2779, %v2781
        %v2783 = vrot.slane %v2673, 1
        %v2784 = vrot.slane %v2674, 1
        %v2785 = vsel %vm1347, %v2783, %v2784
        %v2786 = vrot.slane %v2675, 1
        %v2787 = vsel %vm1347, %v2784, %v2786
        %v2788 = vrot.slane %v2676, 1
        %v2789 = vrot.slane %v2677, 1
        %v2790 = vsel %vm1347, %v2788, %v2789
        %v2791 = vrot.slane %v2678, 1
        %v2792 = vsel %vm1347, %v2789, %v2791
        %v2793 = vrot.slane %v2679, 1
        %v2794 = vrot.slane %v2680, 1
        %v2795 = vsel %vm1347, %v2793, %v2794
        %v2796 = vrot.slane %v2681, 1
        %v2797 = vsel %vm1347, %v2794, %v2796
        %v2798 = vrot.slane %v2682, 1
        %v2799 = vrot.slane %v2683, 1
        %v2800 = vsel %vm1347, %v2798, %v2799
        %v2801 = vrot.slane %v2684, 1
        %v2802 = vsel %vm1347, %v2799, %v2801
        %v2803 = vrot.slane %v2685, 1
        %v2804 = vrot.slane %v2686, 1
        %v2805 = vsel %vm1347, %v2803, %v2804
        %v2806 = vrot.slane %v2687, 1
        %v2807 = vsel %vm1347, %v2804, %v2806
        %v2808 = vrot.slane %v2688, 1
        %v2809 = vrot.slane %v2689, 1
        %v2810 = vsel %vm1347, %v2808, %v2809
        %v2811 = vrot.slane %v2690, 1
        %v2812 = vsel %vm1347, %v2809, %v2811
        %v2813 = vrot.slane %v2691, 1
        %v2814 = vrot.slane %v2692, 1
        %v2815 = vsel %vm1347, %v2813, %v2814
        %v2816 = vrot.slane %v2693, 1
        %v2817 = vsel %vm1347, %v2814, %v2816
        %v2818 = vrot.slane %v2694, 1
        %v2819 = vrot.slane %v2695, 1
        %v2820 = vsel %vm1347, %v2818, %v2819
        %v2821 = vrot.slane %v2696, 1
        %v2822 = vsel %vm1347, %v2819, %v2821
        %v2823 = vrot.slane %v2697, 1
        %v2824 = vrot.slane %v2698, 1
        %v2825 = vsel %vm1347, %v2823, %v2824
        %v2826 = vrot.slane %v2699, 1
        %v2827 = vsel %vm1347, %v2824, %v2826
        %vm2860 = vcmask 261120
        %v2861 = vsel %vm2860, %v2750, 0.0
        %2862 = vadd.xlane.f32.xlu0 %v2861
        %v2863 = vpop.xlane.xlu0 %2862
        %v2864 = vsel %vm2860, %v2752, 0.0
        %2865 = vadd.xlane.f32.xlu0 %v2864
        %v2866 = vpop.xlane.xlu0 %2865
        %v2867 = vsel %vm2860, %v2755, 0.0
        %2868 = vadd.xlane.f32.xlu0 %v2867
        %v2869 = vpop.xlane.xlu0 %2868
        %v2870 = vsel %vm2860, %v2757, 0.0
        %2871 = vadd.xlane.f32.xlu0 %v2870
        %v2872 = vpop.xlane.xlu0 %2871
        %v2873 = vsel %vm2860, %v2760, 0.0
        %2874 = vadd.xlane.f32.xlu0 %v2873
        %v2875 = vpop.xlane.xlu0 %2874
        %v2876 = vsel %vm2860, %v2762, 0.0
        %2877 = vadd.xlane.f32.xlu0 %v2876
        %v2878 = vpop.xlane.xlu0 %2877
        %v2879 = vsel %vm2860, %v2765, 0.0
        %2880 = vadd.xlane.f32.xlu0 %v2879
        %v2881 = vpop.xlane.xlu0 %2880
        %v2882 = vsel %vm2860, %v2767, 0.0
        %2883 = vadd.xlane.f32.xlu0 %v2882
        %v2884 = vpop.xlane.xlu0 %2883
        %v2885 = vsel %vm2860, %v2770, 0.0
        %2886 = vadd.xlane.f32.xlu0 %v2885
        %v2887 = vpop.xlane.xlu0 %2886
        %v2888 = vsel %vm2860, %v2772, 0.0
        %2889 = vadd.xlane.f32.xlu0 %v2888
        %v2890 = vpop.xlane.xlu0 %2889
        %v2891 = vsel %vm2860, %v2775, 0.0
        %2892 = vadd.xlane.f32.xlu0 %v2891
        %v2893 = vpop.xlane.xlu0 %2892
        %v2894 = vsel %vm2860, %v2777, 0.0
        %2895 = vadd.xlane.f32.xlu0 %v2894
        %v2896 = vpop.xlane.xlu0 %2895
        %v2897 = vsel %vm2860, %v2780, 0.0
        %2898 = vadd.xlane.f32.xlu0 %v2897
        %v2899 = vpop.xlane.xlu0 %2898
        %v2900 = vsel %vm2860, %v2782, 0.0
        %2901 = vadd.xlane.f32.xlu0 %v2900
        %v2902 = vpop.xlane.xlu0 %2901
        %v2903 = vsel %vm2860, %v2785, 0.0
        %2904 = vadd.xlane.f32.xlu0 %v2903
        %v2905 = vpop.xlane.xlu0 %2904
        %v2906 = vsel %vm2860, %v2787, 0.0
        %2907 = vadd.xlane.f32.xlu0 %v2906
        %v2908 = vpop.xlane.xlu0 %2907
        %v2909 = vsel %vm2860, %v2790, 0.0
        %2910 = vadd.xlane.f32.xlu0 %v2909
        %v2911 = vpop.xlane.xlu0 %2910
        %v2912 = vsel %vm2860, %v2792, 0.0
        %2913 = vadd.xlane.f32.xlu0 %v2912
        %v2914 = vpop.xlane.xlu0 %2913
        %v2915 = vsel %vm2860, %v2795, 0.0
        %2916 = vadd.xlane.f32.xlu0 %v2915
        %v2917 = vpop.xlane.xlu0 %2916
        %v2918 = vsel %vm2860, %v2797, 0.0
        %2919 = vadd.xlane.f32.xlu0 %v2918
        %v2920 = vpop.xlane.xlu0 %2919
        %v2921 = vsel %vm2860, %v2800, 0.0
        %2922 = vadd.xlane.f32.xlu0 %v2921
        %v2923 = vpop.xlane.xlu0 %2922
        %v2924 = vsel %vm2860, %v2802, 0.0
        %2925 = vadd.xlane.f32.xlu0 %v2924
        %v2926 = vpop.xlane.xlu0 %2925
        %v2927 = vsel %vm2860, %v2805, 0.0
        %2928 = vadd.xlane.f32.xlu0 %v2927
        %v2929 = vpop.xlane.xlu0 %2928
        %v2930 = vsel %vm2860, %v2807, 0.0
        %2931 = vadd.xlane.f32.xlu0 %v2930
        %v2932 = vpop.xlane.xlu0 %2931
        %v2933 = vsel %vm2860, %v2810, 0.0
        %2934 = vadd.xlane.f32.xlu0 %v2933
        %v2935 = vpop.xlane.xlu0 %2934
        %v2936 = vsel %vm2860, %v2812, 0.0
        %2937 = vadd.xlane.f32.xlu0 %v2936
        %v2938 = vpop.xlane.xlu0 %2937
        %v2939 = vsel %vm2860, %v2815, 0.0
        %2940 = vadd.xlane.f32.xlu0 %v2939
        %v2941 = vpop.xlane.xlu0 %2940
        %v2942 = vsel %vm2860, %v2817, 0.0
        %2943 = vadd.xlane.f32.xlu0 %v2942
        %v2944 = vpop.xlane.xlu0 %2943
        %v2945 = vsel %vm2860, %v2820, 0.0
        %2946 = vadd.xlane.f32.xlu0 %v2945
        %v2947 = vpop.xlane.xlu0 %2946
        %v2948 = vsel %vm2860, %v2822, 0.0
        %2949 = vadd.xlane.f32.xlu0 %v2948
        %v2950 = vpop.xlane.xlu0 %2949
        %v2951 = vsel %vm2860, %v2825, 0.0
        %2952 = vadd.xlane.f32.xlu0 %v2951
        %v2953 = vpop.xlane.xlu0 %2952
        %v2954 = vsel %vm2860, %v2827, 0.0
        %2955 = vadd.xlane.f32.xlu0 %v2954
        %v2956 = vpop.xlane.xlu0 %2955
        %v2957 = vadd.f32 %v2863, %v2866
        %v2958 = vadd.f32 %v2957, %v2869
        %v2959 = vadd.f32 %v2958, %v2872
        %v2960 = vadd.f32 %v2959, %v2875
        %v2961 = vadd.f32 %v2960, %v2878
        %v2962 = vadd.f32 %v2961, %v2881
        %v2963 = vadd.f32 %v2962, %v2884
        %v2964 = vadd.f32 %v2963, %v2887
        %v2965 = vadd.f32 %v2964, %v2890
        %v2966 = vadd.f32 %v2965, %v2893
        %v2967 = vadd.f32 %v2966, %v2896
        %v2968 = vadd.f32 %v2967, %v2899
        %v2969 = vadd.f32 %v2968, %v2902
        %v2970 = vadd.f32 %v2969, %v2905
        %v2971 = vadd.f32 %v2970, %v2908
        %v2972 = vadd.f32 %v2971, %v2911
        %v2973 = vadd.f32 %v2972, %v2914
        %v2974 = vadd.f32 %v2973, %v2917
        %v2975 = vadd.f32 %v2974, %v2920
        %v2976 = vadd.f32 %v2975, %v2923
        %v2977 = vadd.f32 %v2976, %v2926
        %v2978 = vadd.f32 %v2977, %v2929
        %v2979 = vadd.f32 %v2978, %v2932
        %v2980 = vadd.f32 %v2979, %v2935
        %v2981 = vadd.f32 %v2980, %v2938
        %v2982 = vadd.f32 %v2981, %v2941
        %v2983 = vadd.f32 %v2982, %v2944
        %v2984 = vadd.f32 %v2983, %v2947
        %v2985 = vadd.f32 %v2984, %v2950
        %v2986 = vadd.f32 %v2985, %v2953
        %v2987 = vadd.f32 %v2986, %v2956
        %v2988 = vrot.slane %v2987, 4
        %v2989 = vadd.f32 %v2987, %v2988
        %v2990 = vrot.slane %v2989, 2
        %v2991 = vadd.f32 %v2989, %v2990
        %v2992 = vrot.slane %v2991, 1
        %v2993 = vadd.f32 %v2991, %v2992
        %v2994 = vrcp.pop 8192.0
        %v2995 = vmul.f32 %v2993, %v2994
        %v2996 = vsub.f32 %v2750, %v2995
        %v2997 = vsub.f32 %v2752, %v2995
        %v2998 = vsub.f32 %v2755, %v2995
        %v2999 = vsub.f32 %v2757, %v2995
        %v3000 = vsub.f32 %v2760, %v2995
        %v3001 = vsub.f32 %v2762, %v2995
        %v3002 = vsub.f32 %v2765, %v2995
        %v3003 = vsub.f32 %v2767, %v2995
        %v3004 = vsub.f32 %v2770, %v2995
        %v3005 = vsub.f32 %v2772, %v2995
        %v3006 = vsub.f32 %v2775, %v2995
        %v3007 = vsub.f32 %v2777, %v2995
        %v3008 = vsub.f32 %v2780, %v2995
        %v3009 = vsub.f32 %v2782, %v2995
        %v3010 = vsub.f32 %v2785, %v2995
        %v3011 = vsub.f32 %v2787, %v2995
        %v3012 = vsub.f32 %v2790, %v2995
        %v3013 = vsub.f32 %v2792, %v2995
        %v3014 = vsub.f32 %v2795, %v2995
        %v3015 = vsub.f32 %v2797, %v2995
        %v3016 = vsub.f32 %v2800, %v2995
        %v3017 = vsub.f32 %v2802, %v2995
        %v3018 = vsub.f32 %v2805, %v2995
        %v3019 = vsub.f32 %v2807, %v2995
        %v3020 = vsub.f32 %v2810, %v2995
        %v3021 = vsub.f32 %v2812, %v2995
        %v3022 = vsub.f32 %v2815, %v2995
        %v3023 = vsub.f32 %v2817, %v2995
        %v3024 = vsub.f32 %v2820, %v2995
        %v3025 = vsub.f32 %v2822, %v2995
        %v3026 = vsub.f32 %v2825, %v2995
        %v3027 = vsub.f32 %v2827, %v2995
        %v3028 = vmul.f32 %v2996, %v2996
        %v3029 = vmul.f32 %v2997, %v2997
        %v3030 = vmul.f32 %v2998, %v2998
        %v3031 = vmul.f32 %v2999, %v2999
        %v3032 = vmul.f32 %v3000, %v3000
        %v3033 = vmul.f32 %v3001, %v3001
        %v3034 = vmul.f32 %v3002, %v3002
        %v3035 = vmul.f32 %v3003, %v3003
        %v3036 = vmul.f32 %v3004, %v3004
        %v3037 = vmul.f32 %v3005, %v3005
        %v3038 = vmul.f32 %v3006, %v3006
        %v3039 = vmul.f32 %v3007, %v3007
        %v3040 = vmul.f32 %v3008, %v3008
        %v3041 = vmul.f32 %v3009, %v3009
        %v3042 = vmul.f32 %v3010, %v3010
        %v3043 = vmul.f32 %v3011, %v3011
        %v3044 = vmul.f32 %v3012, %v3012
        %v3045 = vmul.f32 %v3013, %v3013
        %v3046 = vmul.f32 %v3014, %v3014
        %v3047 = vmul.f32 %v3015, %v3015
        %v3048 = vmul.f32 %v3016, %v3016
        %v3049 = vmul.f32 %v3017, %v3017
        %v3050 = vmul.f32 %v3018, %v3018
        %v3051 = vmul.f32 %v3019, %v3019
        %v3052 = vmul.f32 %v3020, %v3020
        %v3053 = vmul.f32 %v3021, %v3021
        %v3054 = vmul.f32 %v3022, %v3022
        %v3055 = vmul.f32 %v3023, %v3023
        %v3056 = vmul.f32 %v3024, %v3024
        %v3057 = vmul.f32 %v3025, %v3025
        %v3058 = vmul.f32 %v3026, %v3026
        %v3059 = vmul.f32 %v3027, %v3027
        %v3060 = vsel %vm2860, %v3028, 0.0
        %3061 = vadd.xlane.f32.xlu0 %v3060
        %v3062 = vpop.xlane.xlu0 %3061
        %v3063 = vsel %vm2860, %v3029, 0.0
        %3064 = vadd.xlane.f32.xlu0 %v3063
        %v3065 = vpop.xlane.xlu0 %3064
        %v3066 = vsel %vm2860, %v3030, 0.0
        %3067 = vadd.xlane.f32.xlu0 %v3066
        %v3068 = vpop.xlane.xlu0 %3067
        %v3069 = vsel %vm2860, %v3031, 0.0
        %3070 = vadd.xlane.f32.xlu0 %v3069
        %v3071 = vpop.xlane.xlu0 %3070
        %v3072 = vsel %vm2860, %v3032, 0.0
        %3073 = vadd.xlane.f32.xlu0 %v3072
        %v3074 = vpop.xlane.xlu0 %3073
        %v3075 = vsel %vm2860, %v3033, 0.0
        %3076 = vadd.xlane.f32.xlu0 %v3075
        %v3077 = vpop.xlane.xlu0 %3076
        %v3078 = vsel %vm2860, %v3034, 0.0
        %3079 = vadd.xlane.f32.xlu0 %v3078
        %v3080 = vpop.xlane.xlu0 %3079
        %v3081 = vsel %vm2860, %v3035, 0.0
        %3082 = vadd.xlane.f32.xlu0 %v3081
        %v3083 = vpop.xlane.xlu0 %3082
        %v3084 = vsel %vm2860, %v3036, 0.0
        %3085 = vadd.xlane.f32.xlu0 %v3084
        %v3086 = vpop.xlane.xlu0 %3085
        %v3087 = vsel %vm2860, %v3037, 0.0
        %3088 = vadd.xlane.f32.xlu0 %v3087
        %v3089 = vpop.xlane.xlu0 %3088
        %v3090 = vsel %vm2860, %v3038, 0.0
        %3091 = vadd.xlane.f32.xlu0 %v3090
        %v3092 = vpop.xlane.xlu0 %3091
        %v3093 = vsel %vm2860, %v3039, 0.0
        %3094 = vadd.xlane.f32.xlu0 %v3093
        %v3095 = vpop.xlane.xlu0 %3094
        %v3096 = vsel %vm2860, %v3040, 0.0
        %3097 = vadd.xlane.f32.xlu0 %v3096
        %v3098 = vpop.xlane.xlu0 %3097
        %v3099 = vsel %vm2860, %v3041, 0.0
        %3100 = vadd.xlane.f32.xlu0 %v3099
        %v3101 = vpop.xlane.xlu0 %3100
        %v3102 = vsel %vm2860, %v3042, 0.0
        %3103 = vadd.xlane.f32.xlu0 %v3102
        %v3104 = vpop.xlane.xlu0 %3103
        %v3105 = vsel %vm2860, %v3043, 0.0
        %3106 = vadd.xlane.f32.xlu0 %v3105
        %v3107 = vpop.xlane.xlu0 %3106
        %v3108 = vsel %vm2860, %v3044, 0.0
        %3109 = vadd.xlane.f32.xlu0 %v3108
        %v3110 = vpop.xlane.xlu0 %3109
        %v3111 = vsel %vm2860, %v3045, 0.0
        %3112 = vadd.xlane.f32.xlu0 %v3111
        %v3113 = vpop.xlane.xlu0 %3112
        %v3114 = vsel %vm2860, %v3046, 0.0
        %3115 = vadd.xlane.f32.xlu0 %v3114
        %v3116 = vpop.xlane.xlu0 %3115
        %v3117 = vsel %vm2860, %v3047, 0.0
        %3118 = vadd.xlane.f32.xlu0 %v3117
        %v3119 = vpop.xlane.xlu0 %3118
        %v3120 = vsel %vm2860, %v3048, 0.0
        %3121 = vadd.xlane.f32.xlu0 %v3120
        %v3122 = vpop.xlane.xlu0 %3121
        %v3123 = vsel %vm2860, %v3049, 0.0
        %3124 = vadd.xlane.f32.xlu0 %v3123
        %v3125 = vpop.xlane.xlu0 %3124
        %v3126 = vsel %vm2860, %v3050, 0.0
        %3127 = vadd.xlane.f32.xlu0 %v3126
        %v3128 = vpop.xlane.xlu0 %3127
        %v3129 = vsel %vm2860, %v3051, 0.0
        %3130 = vadd.xlane.f32.xlu0 %v3129
        %v3131 = vpop.xlane.xlu0 %3130
        %v3132 = vsel %vm2860, %v3052, 0.0
        %3133 = vadd.xlane.f32.xlu0 %v3132
        %v3134 = vpop.xlane.xlu0 %3133
        %v3135 = vsel %vm2860, %v3053, 0.0
        %3136 = vadd.xlane.f32.xlu0 %v3135
        %v3137 = vpop.xlane.xlu0 %3136
        %v3138 = vsel %vm2860, %v3054, 0.0
        %3139 = vadd.xlane.f32.xlu0 %v3138
        %v3140 = vpop.xlane.xlu0 %3139
        %v3141 = vsel %vm2860, %v3055, 0.0
        %3142 = vadd.xlane.f32.xlu0 %v3141
        %v3143 = vpop.xlane.xlu0 %3142
        %v3144 = vsel %vm2860, %v3056, 0.0
        %3145 = vadd.xlane.f32.xlu0 %v3144
        %v3146 = vpop.xlane.xlu0 %3145
        %v3147 = vsel %vm2860, %v3057, 0.0
        %3148 = vadd.xlane.f32.xlu0 %v3147
        %v3149 = vpop.xlane.xlu0 %3148
        %v3150 = vsel %vm2860, %v3058, 0.0
        %3151 = vadd.xlane.f32.xlu0 %v3150
        %v3152 = vpop.xlane.xlu0 %3151
        %v3153 = vsel %vm2860, %v3059, 0.0
        %3154 = vadd.xlane.f32.xlu0 %v3153
        %v3155 = vpop.xlane.xlu0 %3154
        %v3156 = vadd.f32 %v3062, %v3065
        %v3157 = vadd.f32 %v3156, %v3068
        %v3158 = vadd.f32 %v3157, %v3071
        %v3159 = vadd.f32 %v3158, %v3074
        %v3160 = vadd.f32 %v3159, %v3077
        %v3161 = vadd.f32 %v3160, %v3080
        %v3162 = vadd.f32 %v3161, %v3083
        %v3163 = vadd.f32 %v3162, %v3086
        %v3164 = vadd.f32 %v3163, %v3089
        %v3165 = vadd.f32 %v3164, %v3092
        %v3166 = vadd.f32 %v3165, %v3095
        %v3167 = vadd.f32 %v3166, %v3098
        %v3168 = vadd.f32 %v3167, %v3101
        %v3169 = vadd.f32 %v3168, %v3104
        %v3170 = vadd.f32 %v3169, %v3107
        %v3171 = vadd.f32 %v3170, %v3110
        %v3172 = vadd.f32 %v3171, %v3113
        %v3173 = vadd.f32 %v3172, %v3116
        %v3174 = vadd.f32 %v3173, %v3119
        %v3175 = vadd.f32 %v3174, %v3122
        %v3176 = vadd.f32 %v3175, %v3125
        %v3177 = vadd.f32 %v3176, %v3128
        %v3178 = vadd.f32 %v3177, %v3131
        %v3179 = vadd.f32 %v3178, %v3134
        %v3180 = vadd.f32 %v3179, %v3137
        %v3181 = vadd.f32 %v3180, %v3140
        %v3182 = vadd.f32 %v3181, %v3143
        %v3183 = vadd.f32 %v3182, %v3146
        %v3184 = vadd.f32 %v3183, %v3149
        %v3185 = vadd.f32 %v3184, %v3152
        %v3186 = vadd.f32 %v3185, %v3155
        %v3187 = vrot.slane %v3186, 4
        %v3188 = vadd.f32 %v3186, %v3187
        %v3189 = vrot.slane %v3188, 2
        %v3190 = vadd.f32 %v3188, %v3189
        %v3191 = vrot.slane %v3190, 1
        %v3192 = vadd.f32 %v3190, %v3191
        %v3193 = vmul.f32 %v3192, %v2994
        %v3194 = vadd.f32 %v3193, 1e-05
        %v3195 = vrsqrt.pop %v3194
        %v3196 = vmul.f32 %v2996, %v3195
        %v3197 = vmul.f32 %v2997, %v3195
        %v3198 = vmul.f32 %v2998, %v3195
        %v3199 = vmul.f32 %v2999, %v3195
        %v3200 = vmul.f32 %v3000, %v3195
        %v3201 = vmul.f32 %v3001, %v3195
        %v3202 = vmul.f32 %v3002, %v3195
        %v3203 = vmul.f32 %v3003, %v3195
        %v3204 = vmul.f32 %v3004, %v3195
        %v3205 = vmul.f32 %v3005, %v3195
        %v3206 = vmul.f32 %v3006, %v3195
        %v3207 = vmul.f32 %v3007, %v3195
        %v3208 = vmul.f32 %v3008, %v3195
        %v3209 = vmul.f32 %v3009, %v3195
        %v3210 = vmul.f32 %v3010, %v3195
        %v3211 = vmul.f32 %v3011, %v3195
        %v3212 = vmul.f32 %v3012, %v3195
        %v3213 = vmul.f32 %v3013, %v3195
        %v3214 = vmul.f32 %v3014, %v3195
        %v3215 = vmul.f32 %v3015, %v3195
        %v3216 = vmul.f32 %v3016, %v3195
        %v3217 = vmul.f32 %v3017, %v3195
        %v3218 = vmul.f32 %v3018, %v3195
        %v3219 = vmul.f32 %v3019, %v3195
        %v3220 = vmul.f32 %v3020, %v3195
        %v3221 = vmul.f32 %v3021, %v3195
        %v3222 = vmul.f32 %v3022, %v3195
        %v3223 = vmul.f32 %v3023, %v3195
        %v3224 = vmul.f32 %v3024, %v3195
        %v3225 = vmul.f32 %v3025, %v3195
        %v3226 = vmul.f32 %v3026, %v3195
        %v3227 = vmul.f32 %v3027, %v3195
        %v3228 = vld [vmem:[#allocation8] sm:$0x1]
        %v3230 = vlaneseq
        %v3231 = vshrl.u32 %v3230, 7
        %v3232 = vsub.s32 0, %v3231
        %v3233 = vrot.slane %v3228, %v3232
        %v3235 = vmul.f32 %v3196, %v3233
        %v3236 = vmul.f32 %v3197, %v3233
        %v3237 = vmul.f32 %v3198, %v3233
        %v3238 = vmul.f32 %v3199, %v3233
        %v3239 = vmul.f32 %v3200, %v3233
        %v3240 = vmul.f32 %v3201, %v3233
        %v3241 = vmul.f32 %v3202, %v3233
        %v3242 = vmul.f32 %v3203, %v3233
        %v3243 = vmul.f32 %v3204, %v3233
        %v3244 = vmul.f32 %v3205, %v3233
        %v3245 = vmul.f32 %v3206, %v3233
        %v3246 = vmul.f32 %v3207, %v3233
        %v3247 = vmul.f32 %v3208, %v3233
        %v3248 = vmul.f32 %v3209, %v3233
        %v3249 = vmul.f32 %v3210, %v3233
        %v3250 = vmul.f32 %v3211, %v3233
        %v3251 = vmul.f32 %v3212, %v3233
        %v3252 = vmul.f32 %v3213, %v3233
        %v3253 = vmul.f32 %v3214, %v3233
        %v3254 = vmul.f32 %v3215, %v3233
        %v3255 = vmul.f32 %v3216, %v3233
        %v3256 = vmul.f32 %v3217, %v3233
        %v3257 = vmul.f32 %v3218, %v3233
        %v3258 = vmul.f32 %v3219, %v3233
        %v3259 = vmul.f32 %v3220, %v3233
        %v3260 = vmul.f32 %v3221, %v3233
        %v3261 = vmul.f32 %v3222, %v3233
        %v3262 = vmul.f32 %v3223, %v3233
        %v3263 = vmul.f32 %v3224, %v3233
        %v3264 = vmul.f32 %v3225, %v3233
        %v3265 = vmul.f32 %v3226, %v3233
        %v3266 = vmul.f32 %v3227, %v3233
        %v3267 = vld [vmem:[#allocation10] sm:$0x1]
        %v3269 = vlaneseq
        %v3270 = vshrl.u32 %v3269, 7
        %v3271 = vsub.s32 0, %v3270
        %v3272 = vrot.slane %v3267, %v3271
        %v3274 = vadd.f32 %v3235, %v3272
        %v3275 = vadd.f32 %v3236, %v3272
        %v3276 = vadd.f32 %v3237, %v3272
        %v3277 = vadd.f32 %v3238, %v3272
        %v3278 = vadd.f32 %v3239, %v3272
        %v3279 = vadd.f32 %v3240, %v3272
        %v3280 = vadd.f32 %v3241, %v3272
        %v3281 = vadd.f32 %v3242, %v3272
        %v3282 = vadd.f32 %v3243, %v3272
        %v3283 = vadd.f32 %v3244, %v3272
        %v3284 = vadd.f32 %v3245, %v3272
        %v3285 = vadd.f32 %v3246, %v3272
        %v3286 = vadd.f32 %v3247, %v3272
        %v3287 = vadd.f32 %v3248, %v3272
        %v3288 = vadd.f32 %v3249, %v3272
        %v3289 = vadd.f32 %v3250, %v3272
        %v3290 = vadd.f32 %v3251, %v3272
        %v3291 = vadd.f32 %v3252, %v3272
        %v3292 = vadd.f32 %v3253, %v3272
        %v3293 = vadd.f32 %v3254, %v3272
        %v3294 = vadd.f32 %v3255, %v3272
        %v3295 = vadd.f32 %v3256, %v3272
        %v3296 = vadd.f32 %v3257, %v3272
        %v3297 = vadd.f32 %v3258, %v3272
        %v3298 = vadd.f32 %v3259, %v3272
        %v3299 = vadd.f32 %v3260, %v3272
        %v3300 = vadd.f32 %v3261, %v3272
        %v3301 = vadd.f32 %v3262, %v3272
        %v3302 = vadd.f32 %v3263, %v3272
        %v3303 = vadd.f32 %v3264, %v3272
        %v3304 = vadd.f32 %v3265, %v3272
        %v3305 = vadd.f32 %v3266, %v3272
        %v3306 = vld [vmem:[#allocation11] sm:$0xff]
        %v3307 = vld [vmem:[#allocation11 + $0x8] sm:$0xff]
        %v3308 = vld [vmem:[#allocation11 + $0x10] sm:$0xff]
        %v3309 = vld [vmem:[#allocation11 + $0x18] sm:$0xff]
        %v3310 = vld [vmem:[#allocation13] sm:$0x1]
        %v3312 = vlaneseq
        %v3313 = vshrl.u32 %v3312, 7
        %v3314 = vsub.s32 0, %v3313
        %v3315 = vrot.slane %v3310, %v3314
        %v3318 = vsel %vm2860, %v3274, 0
        %v3321 = vsel %vm2860, %v3275, 0
        %v3324 = vsel %vm2860, %v3276, 0
        %v3327 = vsel %vm2860, %v3277, 0
        %v3330 = vsel %vm2860, %v3278, 0
        %v3333 = vsel %vm2860, %v3279, 0
        %v3336 = vsel %vm2860, %v3280, 0
        %v3339 = vsel %vm2860, %v3281, 0
        %v3342 = vsel %vm2860, %v3282, 0
        %v3345 = vsel %vm2860, %v3283, 0
        %v3348 = vsel %vm2860, %v3284, 0
        %v3351 = vsel %vm2860, %v3285, 0
        %v3354 = vsel %vm2860, %v3286, 0
        %v3357 = vsel %vm2860, %v3287, 0
        %v3360 = vsel %vm2860, %v3288, 0
        %v3363 = vsel %vm2860, %v3289, 0
        %v3366 = vsel %vm2860, %v3290, 0
        %v3369 = vsel %vm2860, %v3291, 0
        %v3372 = vsel %vm2860, %v3292, 0
        %v3375 = vsel %vm2860, %v3293, 0
        %v3378 = vsel %vm2860, %v3294, 0
        %v3381 = vsel %vm2860, %v3295, 0
        %v3384 = vsel %vm2860, %v3296, 0
        %v3387 = vsel %vm2860, %v3297, 0
        %v3390 = vsel %vm2860, %v3298, 0
        %v3393 = vsel %vm2860, %v3299, 0
        %v3396 = vsel %vm2860, %v3300, 0
        %v3399 = vsel %vm2860, %v3301, 0
        %v3402 = vsel %vm2860, %v3302, 0
        %v3405 = vsel %vm2860, %v3303, 0
        %v3408 = vsel %vm2860, %v3304, 0
        %v3411 = vsel %vm2860, %v3305, 0
        %3413 = vmatprep.subr.mxu0 0.0
        %3414 = vmatpush1.msra.mxu0 %v3306
        %3415 = vmatprep.subr.mxu0 0.0
        %3416 = vmatpush1.msra.mxu0 %v3307
        %3417 = vmatprep.subr.mxu0 0.0
        %3418 = vmatpush1.msra.mxu0 %v3308
        %3419 = vmatprep.subr.mxu0 0.0
        %3420 = vmatpush1.msra.mxu0 %v3309
        %3421 = vmatprep.subr.mxu0 0.0
        %3422 = vmatpush1.msra.mxu0 0.0
        %3423 = vmatprep.subr.mxu0 0.0
        %3424 = vmatpush1.msra.mxu0 0.0
        %3425 = vmatprep.subr.mxu0 0.0
        %3426 = vmatpush1.msra.mxu0 0.0
        %3427 = vmatprep.subr.mxu0 0.0
        %3428 = vmatpush1.msra.mxu0 0.0
        %3429 = vmatprep.subr.mxu0 0.0
        %3430 = vmatpush1.msra.mxu0 0.0
        %3431 = vmatprep.subr.mxu0 0.0
        %3432 = vmatpush1.msra.mxu0 0.0
        %3433 = vmatprep.subr.mxu0 0.0
        %3434 = vmatpush1.msra.mxu0 0.0
        %3435 = vmatprep.subr.mxu0 0.0
        %3436 = vmatpush1.msra.mxu0 0.0
        %3437 = vmatprep.subr.mxu0 0.0
        %3438 = vmatpush1.msra.mxu0 0.0
        %3439 = vmatprep.subr.mxu0 0.0
        %3440 = vmatpush1.msra.mxu0 0.0
        %3441 = vmatprep.subr.mxu0 0.0
        %3442 = vmatpush1.msra.mxu0 0.0
        %3443 = vmatprep.subr.mxu0 0.0
        %3444 = vmatpush1.msra.mxu0 0.0
        %3445 = vmatprep.subr.mxu0 0.0
        %3446 = vmatpush1.msra.mxu0 0.0
        %3447 = vmatprep.subr.mxu0 0.0
        %3448 = vmatpush1.msra.mxu0 0.0
        %3449 = vmatprep.subr.mxu0 0.0
        %3450 = vmatpush1.msra.mxu0 0.0
        %3451 = vmatprep.subr.mxu0 0.0
        %3452 = vmatpush1.msra.mxu0 0.0
        %3453 = vmatprep.subr.mxu0 0.0
        %3454 = vmatpush1.msra.mxu0 0.0
        %3455 = vmatprep.subr.mxu0 0.0
        %3456 = vmatpush1.msra.mxu0 0.0
        %3457 = vmatprep.subr.mxu0 0.0
        %3458 = vmatpush1.msra.mxu0 0.0
        %3459 = vmatprep.subr.mxu0 0.0
        %3460 = vmatpush1.msra.mxu0 0.0
        %3461 = vmatprep.subr.mxu0 0.0
        %3462 = vmatpush1.msra.mxu0 0.0
        %3463 = vmatprep.subr.mxu0 0.0
        %3464 = vmatpush1.msra.mxu0 0.0
        %3465 = vmatprep.subr.mxu0 0.0
        %3466 = vmatpush1.msra.mxu0 0.0
        %3467 = vmatprep.subr.mxu0 0.0
        %3468 = vmatpush1.msra.mxu0 0.0
        %3469 = vmatprep.subr.mxu0 0.0
        %3470 = vmatpush1.msra.mxu0 0.0
        %3471 = vmatprep.subr.mxu0 0.0
        %3472 = vmatpush1.msra.mxu0 0.0
        %3473 = vmatprep.subr.mxu0 0.0
        %3474 = vmatpush1.msra.mxu0 0.0
        %3475 = vmatprep.subr.mxu0 0.0
        %3476 = vmatpush1.msra.mxu0 0.0
        %3477 = vmatprep.mubr.f32.mxu0 0.0
        %3478 = vmatmul.mubr.f32.gmra.mrb[0].mxu0 %v3318
        %v3479 = vpop.f32.mrb[0].mxu0
        %v3480 = vadd.f32 %v3315, %v3479
        %v3481 = vpop.f32.mrb[0].mxu0
        %3482 = vmatprep.mubr.f32.mxu0 0.0
        %3483 = vmatmul.mubr.f32.gmra.mrb[0].mxu0 %v3321
        %v3484 = vpop.f32.mrb[0].mxu0
        %v3485 = vadd.f32 %v3315, %v3484
        %v3486 = vpop.f32.mrb[0].mxu0
        %3487 = vmatprep.mubr.f32.mxu0 0.0
        %3488 = vmatmul.mubr.f32.gmra.mrb[0].mxu0 %v3324
        %v3489 = vpop.f32.mrb[0].mxu0
        %v3490 = vadd.f32 %v3315, %v3489
        %v3491 = vpop.f32.mrb[0].mxu0
        %3492 = vmatprep.mubr.f32.mxu0 0.0
        %3493 = vmatmul.mubr.f32.gmra.mrb[0].mxu0 %v3327
        %v3494 = vpop.f32.mrb[0].mxu0
        %v3495 = vadd.f32 %v3315, %v3494
        %v3496 = vpop.f32.mrb[0].mxu0
        %3497 = vmatprep.mubr.f32.mxu0 0.0
        %3498 = vmatmul.mubr.f32.gmra.mrb[0].mxu0 %v3330
        %v3499 = vpop.f32.mrb[0].mxu0
        %v3500 = vadd.f32 %v3315, %v3499
        %v3501 = vpop.f32.mrb[0].mxu0
        %3502 = vmatprep.mubr.f32.mxu0 0.0
        %3503 = vmatmul.mubr.f32.gmra.mrb[0].mxu0 %v3333
        %v3504 = vpop.f32.mrb[0].mxu0
        %v3505 = vadd.f32 %v3315, %v3504
        %v3506 = vpop.f32.mrb[0].mxu0
        %3507 = vmatprep.mubr.f32.mxu0 0.0
        %3508 = vmatmul.mubr.f32.gmra.mrb[0].mxu0 %v3336
        %v3509 = vpop.f32.mrb[0].mxu0
        %v3510 = vadd.f32 %v3315, %v3509
        %v3511 = vpop.f32.mrb[0].mxu0
        %3512 = vmatprep.mubr.f32.mxu0 0.0
        %3513 = vmatmul.mubr.f32.gmra.mrb[0].mxu0 %v3339
        %v3514 = vpop.f32.mrb[0].mxu0
        %v3515 = vadd.f32 %v3315, %v3514
        %v3516 = vpop.f32.mrb[0].mxu0
        %3517 = vmatprep.mubr.f32.mxu0 0.0
        %3518 = vmatmul.mubr.f32.gmra.mrb[0].mxu0 %v3342
        %v3519 = vpop.f32.mrb[0].mxu0
        %v3520 = vadd.f32 %v3315, %v3519
        %v3521 = vpop.f32.mrb[0].mxu0
        %3522 = vmatprep.mubr.f32.mxu0 0.0
        %3523 = vmatmul.mubr.f32.gmra.mrb[0].mxu0 %v3345
        %v3524 = vpop.f32.mrb[0].mxu0
        %v3525 = vadd.f32 %v3315, %v3524
        %v3526 = vpop.f32.mrb[0].mxu0
        %3527 = vmatprep.mubr.f32.mxu0 0.0
        %3528 = vmatmul.mubr.f32.gmra.mrb[0].mxu0 %v3348
        %v3529 = vpop.f32.mrb[0].mxu0
        %v3530 = vadd.f32 %v3315, %v3529
        %v3531 = vpop.f32.mrb[0].mxu0
        %3532 = vmatprep.mubr.f32.mxu0 0.0
        %3533 = vmatmul.mubr.f32.gmra.mrb[0].mxu0 %v3351
        %v3534 = vpop.f32.mrb[0].mxu0
        %v3535 = vadd.f32 %v3315, %v3534
        %v3536 = vpop.f32.mrb[0].mxu0
        %3537 = vmatprep.mubr.f32.mxu0 0.0
        %3538 = vmatmul.mubr.f32.gmra.mrb[0].mxu0 %v3354
        %v3539 = vpop.f32.mrb[0].mxu0
        %v3540 = vadd.f32 %v3315, %v3539
        %v3541 = vpop.f32.mrb[0].mxu0
        %3542 = vmatprep.mubr.f32.mxu0 0.0
        %3543 = vmatmul.mubr.f32.gmra.mrb[0].mxu0 %v3357
        %v3544 = vpop.f32.mrb[0].mxu0
        %v3545 = vadd.f32 %v3315, %v3544
        %v3546 = vpop.f32.mrb[0].mxu0
        %3547 = vmatprep.mubr.f32.mxu0 0.0
        %3548 = vmatmul.mubr.f32.gmra.mrb[0].mxu0 %v3360
        %v3549 = vpop.f32.mrb[0].mxu0
        %v3550 = vadd.f32 %v3315, %v3549
        %v3551 = vpop.f32.mrb[0].mxu0
        %3552 = vmatprep.mubr.f32.mxu0 0.0
        %3553 = vmatmul.mubr.f32.gmra.mrb[0].mxu0 %v3363
        %v3554 = vpop.f32.mrb[0].mxu0
        %v3555 = vadd.f32 %v3315, %v3554
        %v3556 = vpop.f32.mrb[0].mxu0
        %3557 = vmatprep.mubr.f32.mxu0 0.0
        %3558 = vmatmul.mubr.f32.gmra.mrb[0].mxu0 %v3366
        %v3559 = vpop.f32.mrb[0].mxu0
        %v3560 = vadd.f32 %v3315, %v3559
        %v3561 = vpop.f32.mrb[0].mxu0
        %3562 = vmatprep.mubr.f32.mxu0 0.0
        %3563 = vmatmul.mubr.f32.gmra.mrb[0].mxu0 %v3369
        %v3564 = vpop.f32.mrb[0].mxu0
        %v3565 = vadd.f32 %v3315, %v3564
        %v3566 = vpop.f32.mrb[0].mxu0
        %3567 = vmatprep.mubr.f32.mxu0 0.0
        %3568 = vmatmul.mubr.f32.gmra.mrb[0].mxu0 %v3372
        %v3569 = vpop.f32.mrb[0].mxu0
        %v3570 = vadd.f32 %v3315, %v3569
        %v3571 = vpop.f32.mrb[0].mxu0
        %3572 = vmatprep.mubr.f32.mxu0 0.0
        %3573 = vmatmul.mubr.f32.gmra.mrb[0].mxu0 %v3375
        %v3574 = vpop.f32.mrb[0].mxu0
        %v3575 = vadd.f32 %v3315, %v3574
        %v3576 = vpop.f32.mrb[0].mxu0
        %3577 = vmatprep.mubr.f32.mxu0 0.0
        %3578 = vmatmul.mubr.f32.gmra.mrb[0].mxu0 %v3378
        %v3579 = vpop.f32.mrb[0].mxu0
        %v3580 = vadd.f32 %v3315, %v3579
        %v3581 = vpop.f32.mrb[0].mxu0
        %3582 = vmatprep.mubr.f32.mxu0 0.0
        %3583 = vmatmul.mubr.f32.gmra.mrb[0].mxu0 %v3381
        %v3584 = vpop.f32.mrb[0].mxu0
        %v3585 = vadd.f32 %v3315, %v3584
        %v3586 = vpop.f32.mrb[0].mxu0
        %3587 = vmatprep.mubr.f32.mxu0 0.0
        %3588 = vmatmul.mubr.f32.gmra.mrb[0].mxu0 %v3384
        %v3589 = vpop.f32.mrb[0].mxu0
        %v3590 = vadd.f32 %v3315, %v3589
        %v3591 = vpop.f32.mrb[0].mxu0
        %3592 = vmatprep.mubr.f32.mxu0 0.0
        %3593 = vmatmul.mubr.f32.gmra.mrb[0].mxu0 %v3387
        %v3594 = vpop.f32.mrb[0].mxu0
        %v3595 = vadd.f32 %v3315, %v3594
        %v3596 = vpop.f32.mrb[0].mxu0
        %3597 = vmatprep.mubr.f32.mxu0 0.0
        %3598 = vmatmul.mubr.f32.gmra.mrb[0].mxu0 %v3390
        %v3599 = vpop.f32.mrb[0].mxu0
        %v3600 = vadd.f32 %v3315, %v3599
        %v3601 = vpop.f32.mrb[0].mxu0
        %3602 = vmatprep.mubr.f32.mxu0 0.0
        %3603 = vmatmul.mubr.f32.gmra.mrb[0].mxu0 %v3393
        %v3604 = vpop.f32.mrb[0].mxu0
        %v3605 = vadd.f32 %v3315, %v3604
        %v3606 = vpop.f32.mrb[0].mxu0
        %3607 = vmatprep.mubr.f32.mxu0 0.0
        %3608 = vmatmul.mubr.f32.gmra.mrb[0].mxu0 %v3396
        %v3609 = vpop.f32.mrb[0].mxu0
        %v3610 = vadd.f32 %v3315, %v3609
        %v3611 = vpop.f32.mrb[0].mxu0
        %3612 = vmatprep.mubr.f32.mxu0 0.0
        %3613 = vmatmul.mubr.f32.gmra.mrb[0].mxu0 %v3399
        %v3614 = vpop.f32.mrb[0].mxu0
        %v3615 = vadd.f32 %v3315, %v3614
        %v3616 = vpop.f32.mrb[0].mxu0
        %3617 = vmatprep.mubr.f32.mxu0 0.0
        %3618 = vmatmul.mubr.f32.gmra.mrb[0].mxu0 %v3402
        %v3619 = vpop.f32.mrb[0].mxu0
        %v3620 = vadd.f32 %v3315, %v3619
        %v3621 = vpop.f32.mrb[0].mxu0
        %3622 = vmatprep.mubr.f32.mxu0 0.0
        %3623 = vmatmul.mubr.f32.gmra.mrb[0].mxu0 %v3405
        %v3624 = vpop.f32.mrb[0].mxu0
        %v3625 = vadd.f32 %v3315, %v3624
        %v3626 = vpop.f32.mrb[0].mxu0
        %3627 = vmatprep.mubr.f32.mxu0 0.0
        %3628 = vmatmul.mubr.f32.gmra.mrb[0].mxu0 %v3408
        %v3629 = vpop.f32.mrb[0].mxu0
        %v3630 = vadd.f32 %v3315, %v3629
        %v3631 = vpop.f32.mrb[0].mxu0
        %3632 = vmatprep.mubr.f32.mxu0 0.0
        %3633 = vmatmul.mubr.f32.gmra.mrb[0].mxu0 %v3411
        %v3634 = vpop.f32.mrb[0].mxu0
        %v3635 = vadd.f32 %v3315, %v3634
        %v3636 = vpop.f32.mrb[0].mxu0
        %3637 = vdwg.mxu0
        %v3638 = vld [vmem:[#allocation14] sm:$0xff]
        %v3639 = vld [vmem:[#allocation14 + $0x8] sm:$0xff]
        %v3640 = vld [vmem:[#allocation14 + $0x10] sm:$0xff]
        %v3641 = vld [vmem:[#allocation14 + $0x18] sm:$0xff]
        %v3642 = vld [vmem:[#allocation16] sm:$0x1]
        %v3644 = vlaneseq
        %v3645 = vshrl.u32 %v3644, 7
        %v3646 = vsub.s32 0, %v3645
        %v3647 = vrot.slane %v3642, %v3646
        %3649 = vmatprep.subr.mxu0 0.0
        %3650 = vmatpush1.msra.mxu0 %v3638
        %3651 = vmatprep.subr.mxu0 0.0
        %3652 = vmatpush1.msra.mxu0 %v3639
        %3653 = vmatprep.subr.mxu0 0.0
        %3654 = vmatpush1.msra.mxu0 %v3640
        %3655 = vmatprep.subr.mxu0 0.0
        %3656 = vmatpush1.msra.mxu0 %v3641
        %3657 = vmatprep.subr.mxu0 0.0
        %3658 = vmatpush1.msra.mxu0 0.0
        %3659 = vmatprep.subr.mxu0 0.0
        %3660 = vmatpush1.msra.mxu0 0.0
        %3661 = vmatprep.subr.mxu0 0.0
        %3662 = vmatpush1.msra.mxu0 0.0
        %3663 = vmatprep.subr.mxu0 0.0
        %3664 = vmatpush1.msra.mxu0 0.0
        %3665 = vmatprep.subr.mxu0 0.0
        %3666 = vmatpush1.msra.mxu0 0.0
        %3667 = vmatprep.subr.mxu0 0.0
        %3668 = vmatpush1.msra.mxu0 0.0
        %3669 = vmatprep.subr.mxu0 0.0
        %3670 = vmatpush1.msra.mxu0 0.0
        %3671 = vmatprep.subr.mxu0 0.0
        %3672 = vmatpush1.msra.mxu0 0.0
        %3673 = vmatprep.subr.mxu0 0.0
        %3674 = vmatpush1.msra.mxu0 0.0
        %3675 = vmatprep.subr.mxu0 0.0
        %3676 = vmatpush1.msra.mxu0 0.0
        %3677 = vmatprep.subr.mxu0 0.0
        %3678 = vmatpush1.msra.mxu0 0.0
        %3679 = vmatprep.subr.mxu0 0.0
        %3680 = vmatpush1.msra.mxu0 0.0
        %3681 = vmatprep.subr.mxu0 0.0
        %3682 = vmatpush1.msra.mxu0 0.0
        %3683 = vmatprep.subr.mxu0 0.0
        %3684 = vmatpush1.msra.mxu0 0.0
        %3685 = vmatprep.subr.mxu0 0.0
        %3686 = vmatpush1.msra.mxu0 0.0
        %3687 = vmatprep.subr.mxu0 0.0
        %3688 = vmatpush1.msra.mxu0 0.0
        %3689 = vmatprep.subr.mxu0 0.0
        %3690 = vmatpush1.msra.mxu0 0.0
        %3691 = vmatprep.subr.mxu0 0.0
        %3692 = vmatpush1.msra.mxu0 0.0
        %3693 = vmatprep.subr.mxu0 0.0
        %3694 = vmatpush1.msra.mxu0 0.0
        %3695 = vmatprep.subr.mxu0 0.0
        %3696 = vmatpush1.msra.mxu0 0.0
        %3697 = vmatprep.subr.mxu0 0.0
        %3698 = vmatpush1.msra.mxu0 0.0
        %3699 = vmatprep.subr.mxu0 0.0
        %3700 = vmatpush1.msra.mxu0 0.0
        %3701 = vmatprep.subr.mxu0 0.0
        %3702 = vmatpush1.msra.mxu0 0.0
        %3703 = vmatprep.subr.mxu0 0.0
        %3704 = vmatpush1.msra.mxu0 0.0
        %3705 = vmatprep.subr.mxu0 0.0
        %3706 = vmatpush1.msra.mxu0 0.0
        %3707 = vmatprep.subr.mxu0 0.0
        %3708 = vmatpush1.msra.mxu0 0.0
        %3709 = vmatprep.subr.mxu0 0.0
        %3710 = vmatpush1.msra.mxu0 0.0
        %3711 = vmatprep.subr.mxu0 0.0
        %3712 = vmatpush1.msra.mxu0 0.0
        %3713 = vmatprep.mubr.f32.mxu0 0.0
        %3714 = vmatmul.mubr.f32.gmra.mrb[0].mxu0 %v3318
        %v3715 = vpop.f32.mrb[0].mxu0
        %v3716 = vadd.f32 %v3647, %v3715
        %v3717 = vpop.f32.mrb[0].mxu0
        %3718 = vmatprep.mubr.f32.mxu0 0.0
        %3719 = vmatmul.mubr.f32.gmra.mrb[0].mxu0 %v3321
        %v3720 = vpop.f32.mrb[0].mxu0
        %v3721 = vadd.f32 %v3647, %v3720
        %v3722 = vpop.f32.mrb[0].mxu0
        %3723 = vmatprep.mubr.f32.mxu0 0.0
        %3724 = vmatmul.mubr.f32.gmra.mrb[0].mxu0 %v3324
        %v3725 = vpop.f32.mrb[0].mxu0
        %v3726 = vadd.f32 %v3647, %v3725
        %v3727 = vpop.f32.mrb[0].mxu0
        %3728 = vmatprep.mubr.f32.mxu0 0.0
        %3729 = vmatmul.mubr.f32.gmra.mrb[0].mxu0 %v3327
        %v3730 = vpop.f32.mrb[0].mxu0
        %v3731 = vadd.f32 %v3647, %v3730
        %v3732 = vpop.f32.mrb[0].mxu0
        %3733 = vmatprep.mubr.f32.mxu0 0.0
        %3734 = vmatmul.mubr.f32.gmra.mrb[0].mxu0 %v3330
        %v3735 = vpop.f32.mrb[0].mxu0
        %v3736 = vadd.f32 %v3647, %v3735
        %v3737 = vpop.f32.mrb[0].mxu0
        %3738 = vmatprep.mubr.f32.mxu0 0.0
        %3739 = vmatmul.mubr.f32.gmra.mrb[0].mxu0 %v3333
        %v3740 = vpop.f32.mrb[0].mxu0
        %v3741 = vadd.f32 %v3647, %v3740
        %v3742 = vpop.f32.mrb[0].mxu0
        %3743 = vmatprep.mubr.f32.mxu0 0.0
        %3744 = vmatmul.mubr.f32.gmra.mrb[0].mxu0 %v3336
        %v3745 = vpop.f32.mrb[0].mxu0
        %v3746 = vadd.f32 %v3647, %v3745
        %v3747 = vpop.f32.mrb[0].mxu0
        %3748 = vmatprep.mubr.f32.mxu0 0.0
        %3749 = vmatmul.mubr.f32.gmra.mrb[0].mxu0 %v3339
        %v3750 = vpop.f32.mrb[0].mxu0
        %v3751 = vadd.f32 %v3647, %v3750
        %v3752 = vpop.f32.mrb[0].mxu0
        %3753 = vmatprep.mubr.f32.mxu0 0.0
        %3754 = vmatmul.mubr.f32.gmra.mrb[0].mxu0 %v3342
        %v3755 = vpop.f32.mrb[0].mxu0
        %v3756 = vadd.f32 %v3647, %v3755
        %v3757 = vpop.f32.mrb[0].mxu0
        %3758 = vmatprep.mubr.f32.mxu0 0.0
        %3759 = vmatmul.mubr.f32.gmra.mrb[0].mxu0 %v3345
        %v3760 = vpop.f32.mrb[0].mxu0
        %v3761 = vadd.f32 %v3647, %v3760
        %v3762 = vpop.f32.mrb[0].mxu0
        %3763 = vmatprep.mubr.f32.mxu0 0.0
        %3764 = vmatmul.mubr.f32.gmra.mrb[0].mxu0 %v3348
        %v3765 = vpop.f32.mrb[0].mxu0
        %v3766 = vadd.f32 %v3647, %v3765
        %v3767 = vpop.f32.mrb[0].mxu0
        %3768 = vmatprep.mubr.f32.mxu0 0.0
        %3769 = vmatmul.mubr.f32.gmra.mrb[0].mxu0 %v3351
        %v3770 = vpop.f32.mrb[0].mxu0
        %v3771 = vadd.f32 %v3647, %v3770
        %v3772 = vpop.f32.mrb[0].mxu0
        %3773 = vmatprep.mubr.f32.mxu0 0.0
        %3774 = vmatmul.mubr.f32.gmra.mrb[0].mxu0 %v3354
        %v3775 = vpop.f32.mrb[0].mxu0
        %v3776 = vadd.f32 %v3647, %v3775
        %v3777 = vpop.f32.mrb[0].mxu0
        %3778 = vmatprep.mubr.f32.mxu0 0.0
        %3779 = vmatmul.mubr.f32.gmra.mrb[0].mxu0 %v3357
        %v3780 = vpop.f32.mrb[0].mxu0
        %v3781 = vadd.f32 %v3647, %v3780
        %v3782 = vpop.f32.mrb[0].mxu0
        %3783 = vmatprep.mubr.f32.mxu0 0.0
        %3784 = vmatmul.mubr.f32.gmra.mrb[0].mxu0 %v3360
        %v3785 = vpop.f32.mrb[0].mxu0
        %v3786 = vadd.f32 %v3647, %v3785
        %v3787 = vpop.f32.mrb[0].mxu0
        %3788 = vmatprep.mubr.f32.mxu0 0.0
        %3789 = vmatmul.mubr.f32.gmra.mrb[0].mxu0 %v3363
        %v3790 = vpop.f32.mrb[0].mxu0
        %v3791 = vadd.f32 %v3647, %v3790
        %v3792 = vpop.f32.mrb[0].mxu0
        %3793 = vmatprep.mubr.f32.mxu0 0.0
        %3794 = vmatmul.mubr.f32.gmra.mrb[0].mxu0 %v3366
        %v3795 = vpop.f32.mrb[0].mxu0
        %v3796 = vadd.f32 %v3647, %v3795
        %v3797 = vpop.f32.mrb[0].mxu0
        %3798 = vmatprep.mubr.f32.mxu0 0.0
        %3799 = vmatmul.mubr.f32.gmra.mrb[0].mxu0 %v3369
        %v3800 = vpop.f32.mrb[0].mxu0
        %v3801 = vadd.f32 %v3647, %v3800
        %v3802 = vpop.f32.mrb[0].mxu0
        %3803 = vmatprep.mubr.f32.mxu0 0.0
        %3804 = vmatmul.mubr.f32.gmra.mrb[0].mxu0 %v3372
        %v3805 = vpop.f32.mrb[0].mxu0
        %v3806 = vadd.f32 %v3647, %v3805
        %v3807 = vpop.f32.mrb[0].mxu0
        %3808 = vmatprep.mubr.f32.mxu0 0.0
        %3809 = vmatmul.mubr.f32.gmra.mrb[0].mxu0 %v3375
        %v3810 = vpop.f32.mrb[0].mxu0
        %v3811 = vadd.f32 %v3647, %v3810
        %v3812 = vpop.f32.mrb[0].mxu0
        %3813 = vmatprep.mubr.f32.mxu0 0.0
        %3814 = vmatmul.mubr.f32.gmra.mrb[0].mxu0 %v3378
        %v3815 = vpop.f32.mrb[0].mxu0
        %v3816 = vadd.f32 %v3647, %v3815
        %v3817 = vpop.f32.mrb[0].mxu0
        %3818 = vmatprep.mubr.f32.mxu0 0.0
        %3819 = vmatmul.mubr.f32.gmra.mrb[0].mxu0 %v3381
        %v3820 = vpop.f32.mrb[0].mxu0
        %v3821 = vadd.f32 %v3647, %v3820
        %v3822 = vpop.f32.mrb[0].mxu0
        %3823 = vmatprep.mubr.f32.mxu0 0.0
        %3824 = vmatmul.mubr.f32.gmra.mrb[0].mxu0 %v3384
        %v3825 = vpop.f32.mrb[0].mxu0
        %v3826 = vadd.f32 %v3647, %v3825
        %v3827 = vpop.f32.mrb[0].mxu0
        %3828 = vmatprep.mubr.f32.mxu0 0.0
        %3829 = vmatmul.mubr.f32.gmra.mrb[0].mxu0 %v3387
        %v3830 = vpop.f32.mrb[0].mxu0
        %v3831 = vadd.f32 %v3647, %v3830
        %v3832 = vpop.f32.mrb[0].mxu0
        %3833 = vmatprep.mubr.f32.mxu0 0.0
        %3834 = vmatmul.mubr.f32.gmra.mrb[0].mxu0 %v3390
        %v3835 = vpop.f32.mrb[0].mxu0
        %v3836 = vadd.f32 %v3647, %v3835
        %v3837 = vpop.f32.mrb[0].mxu0
        %3838 = vmatprep.mubr.f32.mxu0 0.0
        %3839 = vmatmul.mubr.f32.gmra.mrb[0].mxu0 %v3393
        %v3840 = vpop.f32.mrb[0].mxu0
        %v3841 = vadd.f32 %v3647, %v3840
        %v3842 = vpop.f32.mrb[0].mxu0
        %3843 = vmatprep.mubr.f32.mxu0 0.0
        %3844 = vmatmul.mubr.f32.gmra.mrb[0].mxu0 %v3396
        %v3845 = vpop.f32.mrb[0].mxu0
        %v3846 = vadd.f32 %v3647, %v3845
        %v3847 = vpop.f32.mrb[0].mxu0
        %3848 = vmatprep.mubr.f32.mxu0 0.0
        %3849 = vmatmul.mubr.f32.gmra.mrb[0].mxu0 %v3399
        %v3850 = vpop.f32.mrb[0].mxu0
        %v3851 = vadd.f32 %v3647, %v3850
        %v3852 = vpop.f32.mrb[0].mxu0
        %3853 = vmatprep.mubr.f32.mxu0 0.0
        %3854 = vmatmul.mubr.f32.gmra.mrb[0].mxu0 %v3402
        %v3855 = vpop.f32.mrb[0].mxu0
        %v3856 = vadd.f32 %v3647, %v3855
        %v3857 = vpop.f32.mrb[0].mxu0
        %3858 = vmatprep.mubr.f32.mxu0 0.0
        %3859 = vmatmul.mubr.f32.gmra.mrb[0].mxu0 %v3405
        %v3860 = vpop.f32.mrb[0].mxu0
        %v3861 = vadd.f32 %v3647, %v3860
        %v3862 = vpop.f32.mrb[0].mxu0
        %3863 = vmatprep.mubr.f32.mxu0 0.0
        %3864 = vmatmul.mubr.f32.gmra.mrb[0].mxu0 %v3408
        %v3865 = vpop.f32.mrb[0].mxu0
        %v3866 = vadd.f32 %v3647, %v3865
        %v3867 = vpop.f32.mrb[0].mxu0
        %3868 = vmatprep.mubr.f32.mxu0 0.0
        %3869 = vmatmul.mubr.f32.gmra.mrb[0].mxu0 %v3411
        %v3870 = vpop.f32.mrb[0].mxu0
        %v3871 = vadd.f32 %v3647, %v3870
        %v3872 = vpop.f32.mrb[0].mxu0
        %3873 = vdwg.mxu0
        %v3874 = vld [vmem:[#allocation17] sm:$0xff]
        %v3875 = vld [vmem:[#allocation17 + $0x8] sm:$0xff]
        %v3876 = vld [vmem:[#allocation17 + $0x10] sm:$0xff]
        %v3877 = vld [vmem:[#allocation17 + $0x18] sm:$0xff]
        %v3878 = vld [vmem:[#allocation19] sm:$0x1]
        %v3880 = vlaneseq
        %v3881 = vshrl.u32 %v3880, 7
        %v3882 = vsub.s32 0, %v3881
        %v3883 = vrot.slane %v3878, %v3882
        %3885 = vmatprep.subr.mxu0 0.0
        %3886 = vmatpush1.msra.mxu0 %v3874
        %3887 = vmatprep.subr.mxu0 0.0
        %3888 = vmatpush1.msra.mxu0 %v3875
        %3889 = vmatprep.subr.mxu0 0.0
        %3890 = vmatpush1.msra.mxu0 %v3876
        %3891 = vmatprep.subr.mxu0 0.0
        %3892 = vmatpush1.msra.mxu0 %v3877
        %3893 = vmatprep.subr.mxu0 0.0
        %3894 = vmatpush1.msra.mxu0 0.0
        %3895 = vmatprep.subr.mxu0 0.0
        %3896 = vmatpush1.msra.mxu0 0.0
        %3897 = vmatprep.subr.mxu0 0.0
        %3898 = vmatpush1.msra.mxu0 0.0
        %3899 = vmatprep.subr.mxu0 0.0
        %3900 = vmatpush1.msra.mxu0 0.0
        %3901 = vmatprep.subr.mxu0 0.0
        %3902 = vmatpush1.msra.mxu0 0.0
        %3903 = vmatprep.subr.mxu0 0.0
        %3904 = vmatpush1.msra.mxu0 0.0
        %3905 = vmatprep.subr.mxu0 0.0
        %3906 = vmatpush1.msra.mxu0 0.0
        %3907 = vmatprep.subr.mxu0 0.0
        %3908 = vmatpush1.msra.mxu0 0.0
        %3909 = vmatprep.subr.mxu0 0.0
        %3910 = vmatpush1.msra.mxu0 0.0
        %3911 = vmatprep.subr.mxu0 0.0
        %3912 = vmatpush1.msra.mxu0 0.0
        %3913 = vmatprep.subr.mxu0 0.0
        %3914 = vmatpush1.msra.mxu0 0.0
        %3915 = vmatprep.subr.mxu0 0.0
        %3916 = vmatpush1.msra.mxu0 0.0
        %3917 = vmatprep.subr.mxu0 0.0
        %3918 = vmatpush1.msra.mxu0 0.0
        %3919 = vmatprep.subr.mxu0 0.0
        %3920 = vmatpush1.msra.mxu0 0.0
        %3921 = vmatprep.subr.mxu0 0.0
        %3922 = vmatpush1.msra.mxu0 0.0
        %3923 = vmatprep.subr.mxu0 0.0
        %3924 = vmatpush1.msra.mxu0 0.0
        %3925 = vmatprep.subr.mxu0 0.0
        %3926 = vmatpush1.msra.mxu0 0.0
        %3927 = vmatprep.subr.mxu0 0.0
        %3928 = vmatpush1.msra.mxu0 0.0
        %3929 = vmatprep.subr.mxu0 0.0
        %3930 = vmatpush1.msra.mxu0 0.0
        %3931 = vmatprep.subr.mxu0 0.0
        %3932 = vmatpush1.msra.mxu0 0.0
        %3933 = vmatprep.subr.mxu0 0.0
        %3934 = vmatpush1.msra.mxu0 0.0
        %3935 = vmatprep.subr.mxu0 0.0
        %3936 = vmatpush1.msra.mxu0 0.0
        %3937 = vmatprep.subr.mxu0 0.0
        %3938 = vmatpush1.msra.mxu0 0.0
        %3939 = vmatprep.subr.mxu0 0.0
        %3940 = vmatpush1.msra.mxu0 0.0
        %3941 = vmatprep.subr.mxu0 0.0
        %3942 = vmatpush1.msra.mxu0 0.0
        %3943 = vmatprep.subr.mxu0 0.0
        %3944 = vmatpush1.msra.mxu0 0.0
        %3945 = vmatprep.subr.mxu0 0.0
        %3946 = vmatpush1.msra.mxu0 0.0
        %3947 = vmatprep.subr.mxu0 0.0
        %3948 = vmatpush1.msra.mxu0 0.0
        %3949 = vmatprep.mubr.f32.mxu0 0.0
        %3950 = vmatmul.mubr.f32.gmra.mrb[0].mxu0 %v3318
        %v3951 = vpop.f32.mrb[0].mxu0
        %v3952 = vadd.f32 %v3883, %v3951
        %v3953 = vpop.f32.mrb[0].mxu0
        %3954 = vmatprep.mubr.f32.mxu0 0.0
        %3955 = vmatmul.mubr.f32.gmra.mrb[0].mxu0 %v3321
        %v3956 = vpop.f32.mrb[0].mxu0
        %v3957 = vadd.f32 %v3883, %v3956
        %v3958 = vpop.f32.mrb[0].mxu0
        %3959 = vmatprep.mubr.f32.mxu0 0.0
        %3960 = vmatmul.mubr.f32.gmra.mrb[0].mxu0 %v3324
        %v3961 = vpop.f32.mrb[0].mxu0
        %v3962 = vadd.f32 %v3883, %v3961
        %v3963 = vpop.f32.mrb[0].mxu0
        %3964 = vmatprep.mubr.f32.mxu0 0.0
        %3965 = vmatmul.mubr.f32.gmra.mrb[0].mxu0 %v3327
        %v3966 = vpop.f32.mrb[0].mxu0
        %v3967 = vadd.f32 %v3883, %v3966
        %v3968 = vpop.f32.mrb[0].mxu0
        %3969 = vmatprep.mubr.f32.mxu0 0.0
        %3970 = vmatmul.mubr.f32.gmra.mrb[0].mxu0 %v3330
        %v3971 = vpop.f32.mrb[0].mxu0
        %v3972 = vadd.f32 %v3883, %v3971
        %v3973 = vpop.f32.mrb[0].mxu0
        %3974 = vmatprep.mubr.f32.mxu0 0.0
        %3975 = vmatmul.mubr.f32.gmra.mrb[0].mxu0 %v3333
        %v3976 = vpop.f32.mrb[0].mxu0
        %v3977 = vadd.f32 %v3883, %v3976
        %v3978 = vpop.f32.mrb[0].mxu0
        %3979 = vmatprep.mubr.f32.mxu0 0.0
        %3980 = vmatmul.mubr.f32.gmra.mrb[0].mxu0 %v3336
        %v3981 = vpop.f32.mrb[0].mxu0
        %v3982 = vadd.f32 %v3883, %v3981
        %v3983 = vpop.f32.mrb[0].mxu0
        %3984 = vmatprep.mubr.f32.mxu0 0.0
        %3985 = vmatmul.mubr.f32.gmra.mrb[0].mxu0 %v3339
        %v3986 = vpop.f32.mrb[0].mxu0
        %v3987 = vadd.f32 %v3883, %v3986
        %v3988 = vpop.f32.mrb[0].mxu0
        %3989 = vmatprep.mubr.f32.mxu0 0.0
        %3990 = vmatmul.mubr.f32.gmra.mrb[0].mxu0 %v3342
        %v3991 = vpop.f32.mrb[0].mxu0
        %v3992 = vadd.f32 %v3883, %v3991
        %v3993 = vpop.f32.mrb[0].mxu0
        %3994 = vmatprep.mubr.f32.mxu0 0.0
        %3995 = vmatmul.mubr.f32.gmra.mrb[0].mxu0 %v3345
        %v3996 = vpop.f32.mrb[0].mxu0
        %v3997 = vadd.f32 %v3883, %v3996
        %v3998 = vpop.f32.mrb[0].mxu0
        %3999 = vmatprep.mubr.f32.mxu0 0.0
        %4000 = vmatmul.mubr.f32.gmra.mrb[0].mxu0 %v3348
        %v4001 = vpop.f32.mrb[0].mxu0
        %v4002 = vadd.f32 %v3883, %v4001
        %v4003 = vpop.f32.mrb[0].mxu0
        %4004 = vmatprep.mubr.f32.mxu0 0.0
        %4005 = vmatmul.mubr.f32.gmra.mrb[0].mxu0 %v3351
        %v4006 = vpop.f32.mrb[0].mxu0
        %v4007 = vadd.f32 %v3883, %v4006
        %v4008 = vpop.f32.mrb[0].mxu0
        %4009 = vmatprep.mubr.f32.mxu0 0.0
        %4010 = vmatmul.mubr.f32.gmra.mrb[0].mxu0 %v3354
        %v4011 = vpop.f32.mrb[0].mxu0
        %v4012 = vadd.f32 %v3883, %v4011
        %v4013 = vpop.f32.mrb[0].mxu0
        %4014 = vmatprep.mubr.f32.mxu0 0.0
        %4015 = vmatmul.mubr.f32.gmra.mrb[0].mxu0 %v3357
        %v4016 = vpop.f32.mrb[0].mxu0
        %v4017 = vadd.f32 %v3883, %v4016
        %v4018 = vpop.f32.mrb[0].mxu0
        %4019 = vmatprep.mubr.f32.mxu0 0.0
        %4020 = vmatmul.mubr.f32.gmra.mrb[0].mxu0 %v3360
        %v4021 = vpop.f32.mrb[0].mxu0
        %v4022 = vadd.f32 %v3883, %v4021
        %v4023 = vpop.f32.mrb[0].mxu0
        %4024 = vmatprep.mubr.f32.mxu0 0.0
        %4025 = vmatmul.mubr.f32.gmra.mrb[0].mxu0 %v3363
        %v4026 = vpop.f32.mrb[0].mxu0
        %v4027 = vadd.f32 %v3883, %v4026
        %v4028 = vpop.f32.mrb[0].mxu0
        %4029 = vmatprep.mubr.f32.mxu0 0.0
        %4030 = vmatmul.mubr.f32.gmra.mrb[0].mxu0 %v3366
        %v4031 = vpop.f32.mrb[0].mxu0
        %v4032 = vadd.f32 %v3883, %v4031
        %v4033 = vpop.f32.mrb[0].mxu0
        %4034 = vmatprep.mubr.f32.mxu0 0.0
        %4035 = vmatmul.mubr.f32.gmra.mrb[0].mxu0 %v3369
        %v4036 = vpop.f32.mrb[0].mxu0
        %v4037 = vadd.f32 %v3883, %v4036
        %v4038 = vpop.f32.mrb[0].mxu0
        %4039 = vmatprep.mubr.f32.mxu0 0.0
        %4040 = vmatmul.mubr.f32.gmra.mrb[0].mxu0 %v3372
        %v4041 = vpop.f32.mrb[0].mxu0
        %v4042 = vadd.f32 %v3883, %v4041
        %v4043 = vpop.f32.mrb[0].mxu0
        %4044 = vmatprep.mubr.f32.mxu0 0.0
        %4045 = vmatmul.mubr.f32.gmra.mrb[0].mxu0 %v3375
        %v4046 = vpop.f32.mrb[0].mxu0
        %v4047 = vadd.f32 %v3883, %v4046
        %v4048 = vpop.f32.mrb[0].mxu0
        %4049 = vmatprep.mubr.f32.mxu0 0.0
        %4050 = vmatmul.mubr.f32.gmra.mrb[0].mxu0 %v3378
        %v4051 = vpop.f32.mrb[0].mxu0
        %v4052 = vadd.f32 %v3883, %v4051
        %v4053 = vpop.f32.mrb[0].mxu0
        %4054 = vmatprep.mubr.f32.mxu0 0.0
        %4055 = vmatmul.mubr.f32.gmra.mrb[0].mxu0 %v3381
        %v4056 = vpop.f32.mrb[0].mxu0
        %v4057 = vadd.f32 %v3883, %v4056
        %v4058 = vpop.f32.mrb[0].mxu0
        %4059 = vmatprep.mubr.f32.mxu0 0.0
        %4060 = vmatmul.mubr.f32.gmra.mrb[0].mxu0 %v3384
        %v4061 = vpop.f32.mrb[0].mxu0
        %v4062 = vadd.f32 %v3883, %v4061
        %v4063 = vpop.f32.mrb[0].mxu0
        %4064 = vmatprep.mubr.f32.mxu0 0.0
        %4065 = vmatmul.mubr.f32.gmra.mrb[0].mxu0 %v3387
        %v4066 = vpop.f32.mrb[0].mxu0
        %v4067 = vadd.f32 %v3883, %v4066
        %v4068 = vpop.f32.mrb[0].mxu0
        %4069 = vmatprep.mubr.f32.mxu0 0.0
        %4070 = vmatmul.mubr.f32.gmra.mrb[0].mxu0 %v3390
        %v4071 = vpop.f32.mrb[0].mxu0
        %v4072 = vadd.f32 %v3883, %v4071
        %v4073 = vpop.f32.mrb[0].mxu0
        %4074 = vmatprep.mubr.f32.mxu0 0.0
        %4075 = vmatmul.mubr.f32.gmra.mrb[0].mxu0 %v3393
        %v4076 = vpop.f32.mrb[0].mxu0
        %v4077 = vadd.f32 %v3883, %v4076
        %v4078 = vpop.f32.mrb[0].mxu0
        %4079 = vmatprep.mubr.f32.mxu0 0.0
        %4080 = vmatmul.mubr.f32.gmra.mrb[0].mxu0 %v3396
        %v4081 = vpop.f32.mrb[0].mxu0
        %v4082 = vadd.f32 %v3883, %v4081
        %v4083 = vpop.f32.mrb[0].mxu0
        %4084 = vmatprep.mubr.f32.mxu0 0.0
        %4085 = vmatmul.mubr.f32.gmra.mrb[0].mxu0 %v3399
        %v4086 = vpop.f32.mrb[0].mxu0
        %v4087 = vadd.f32 %v3883, %v4086
        %v4088 = vpop.f32.mrb[0].mxu0
        %4089 = vmatprep.mubr.f32.mxu0 0.0
        %4090 = vmatmul.mubr.f32.gmra.mrb[0].mxu0 %v3402
        %v4091 = vpop.f32.mrb[0].mxu0
        %v4092 = vadd.f32 %v3883, %v4091
        %v4093 = vpop.f32.mrb[0].mxu0
        %4094 = vmatprep.mubr.f32.mxu0 0.0
        %4095 = vmatmul.mubr.f32.gmra.mrb[0].mxu0 %v3405
        %v4096 = vpop.f32.mrb[0].mxu0
        %v4097 = vadd.f32 %v3883, %v4096
        %v4098 = vpop.f32.mrb[0].mxu0
        %4099 = vmatprep.mubr.f32.mxu0 0.0
        %4100 = vmatmul.mubr.f32.gmra.mrb[0].mxu0 %v3408
        %v4101 = vpop.f32.mrb[0].mxu0
        %v4102 = vadd.f32 %v3883, %v4101
        %v4103 = vpop.f32.mrb[0].mxu0
        %4104 = vmatprep.mubr.f32.mxu0 0.0
        %4105 = vmatmul.mubr.f32.gmra.mrb[0].mxu0 %v3411
        %v4106 = vpop.f32.mrb[0].mxu0
        %v4107 = vadd.f32 %v3883, %v4106
        %v4108 = vpop.f32.mrb[0].mxu0
        %4109 = vdwg.mxu0
        %vm4110 = vcmask 130048
        %v4112 = vsel %vm4110, %v3480, 0
        %v4115 = vsel %vm4110, %v3485, 0
        %v4118 = vsel %vm4110, %v3490, 0
        %v4121 = vsel %vm4110, %v3495, 0
        %v4124 = vsel %vm4110, %v3500, 0
        %v4127 = vsel %vm4110, %v3505, 0
        %v4130 = vsel %vm4110, %v3510, 0
        %v4133 = vsel %vm4110, %v3515, 0
        %v4136 = vsel %vm4110, %v3520, 0
        %v4139 = vsel %vm4110, %v3525, 0
        %v4142 = vsel %vm4110, %v3530, 0
        %v4145 = vsel %vm4110, %v3535, 0
        %v4148 = vsel %vm4110, %v3540, 0
        %v4151 = vsel %vm4110, %v3545, 0
        %v4154 = vsel %vm4110, %v3550, 0
        %v4157 = vsel %vm4110, %v3555, 0
        %v4160 = vsel %vm4110, %v3560, 0
        %v4163 = vsel %vm4110, %v3565, 0
        %v4166 = vsel %vm4110, %v3570, 0
        %v4169 = vsel %vm4110, %v3575, 0
        %v4172 = vsel %vm4110, %v3580, 0
        %v4175 = vsel %vm4110, %v3585, 0
        %v4178 = vsel %vm4110, %v3590, 0
        %v4181 = vsel %vm4110, %v3595, 0
        %v4184 = vsel %vm4110, %v3600, 0
        %v4187 = vsel %vm4110, %v3605, 0
        %v4190 = vsel %vm4110, %v3610, 0
        %v4193 = vsel %vm4110, %v3615, 0
        %v4196 = vsel %vm4110, %v3620, 0
        %v4199 = vsel %vm4110, %v3625, 0
        %v4202 = vsel %vm4110, %v3630, 0
        %v4205 = vsel %vm4110, %v3635, 0
        %v4208 = vsel %vm4110, %v3716, 0
        %v4211 = vsel %vm4110, %v3721, 0
        %v4214 = vsel %vm4110, %v3726, 0
        %v4217 = vsel %vm4110, %v3731, 0
        %v4220 = vsel %vm4110, %v3736, 0
        %v4223 = vsel %vm4110, %v3741, 0
        %v4226 = vsel %vm4110, %v3746, 0
        %v4229 = vsel %vm4110, %v3751, 0
        %v4232 = vsel %vm4110, %v3756, 0
        %v4235 = vsel %vm4110, %v3761, 0
        %v4238 = vsel %vm4110, %v3766, 0
        %v4241 = vsel %vm4110, %v3771, 0
        %v4244 = vsel %vm4110, %v3776, 0
        %v4247 = vsel %vm4110, %v3781, 0
        %v4250 = vsel %vm4110, %v3786, 0
        %v4253 = vsel %vm4110, %v3791, 0
        %v4256 = vsel %vm4110, %v3796, 0
        %v4259 = vsel %vm4110, %v3801, 0
        %v4262 = vsel %vm4110, %v3806, 0
        %v4265 = vsel %vm4110, %v3811, 0
        %v4268 = vsel %vm4110, %v3816, 0
        %v4271 = vsel %vm4110, %v3821, 0
        %v4274 = vsel %vm4110, %v3826, 0
        %v4277 = vsel %vm4110, %v3831, 0
        %v4280 = vsel %vm4110, %v3836, 0
        %v4283 = vsel %vm4110, %v3841, 0
        %v4286 = vsel %vm4110, %v3846, 0
        %v4289 = vsel %vm4110, %v3851, 0
        %v4292 = vsel %vm4110, %v3856, 0
        %v4295 = vsel %vm4110, %v3861, 0
        %v4298 = vsel %vm4110, %v3866, 0
        %v4301 = vsel %vm4110, %v3871, 0
        %4303 = vmatprep.subr.mxu0 0.0
        %4304 = vmatpush1.xpose.msra.mxu0 %v4208
        %4305 = vmatprep.subr.mxu0 0.0
        %4306 = vmatpush1.xpose.msra.mxu0 %v4211
        %4307 = vmatprep.subr.mxu0 0.0
        %4308 = vmatpush1.xpose.msra.mxu0 %v4214
        %4309 = vmatprep.subr.mxu0 0.0
        %4310 = vmatpush1.xpose.msra.mxu0 %v4217
        %4311 = vmatprep.subr.mxu0 0.0
        %4312 = vmatpush1.xpose.msra.mxu0 %v4220
        %4313 = vmatprep.subr.mxu0 0.0
        %4314 = vmatpush1.xpose.msra.mxu0 %v4223
        %4315 = vmatprep.subr.mxu0 0.0
        %4316 = vmatpush1.xpose.msra.mxu0 %v4226
        %4317 = vmatprep.subr.mxu0 0.0
        %4318 = vmatpush1.xpose.msra.mxu0 %v4229
        %4319 = vmatprep.subr.mxu0 0.0
        %4320 = vmatpush1.xpose.msra.mxu0 %v4232
        %4321 = vmatprep.subr.mxu0 0.0
        %4322 = vmatpush1.xpose.msra.mxu0 %v4235
        %4323 = vmatprep.subr.mxu0 0.0
        %4324 = vmatpush1.xpose.msra.mxu0 %v4238
        %4325 = vmatprep.subr.mxu0 0.0
        %4326 = vmatpush1.xpose.msra.mxu0 %v4241
        %4327 = vmatprep.subr.mxu0 0.0
        %4328 = vmatpush1.xpose.msra.mxu0 %v4244
        %4329 = vmatprep.subr.mxu0 0.0
        %4330 = vmatpush1.xpose.msra.mxu0 %v4247
        %4331 = vmatprep.subr.mxu0 0.0
        %4332 = vmatpush1.xpose.msra.mxu0 %v4250
        %4333 = vmatprep.subr.mxu0 0.0
        %4334 = vmatpush1.xpose.msra.mxu0 %v4253
        %4335 = vmatprep.subr.mxu0 0.0
        %4336 = vmatpush1.xpose.msra.mxu0 %v4256
        %4337 = vmatprep.subr.mxu0 0.0
        %4338 = vmatpush1.xpose.msra.mxu0 %v4259
        %4339 = vmatprep.subr.mxu0 0.0
        %4340 = vmatpush1.xpose.msra.mxu0 %v4262
        %4341 = vmatprep.subr.mxu0 0.0
        %4342 = vmatpush1.xpose.msra.mxu0 %v4265
        %4343 = vmatprep.subr.mxu0 0.0
        %4344 = vmatpush1.xpose.msra.mxu0 %v4268
        %4345 = vmatprep.subr.mxu0 0.0
        %4346 = vmatpush1.xpose.msra.mxu0 %v4271
        %4347 = vmatprep.subr.mxu0 0.0
        %4348 = vmatpush1.xpose.msra.mxu0 %v4274
        %4349 = vmatprep.subr.mxu0 0.0
        %4350 = vmatpush1.xpose.msra.mxu0 %v4277
        %4351 = vmatprep.subr.mxu0 0.0
        %4352 = vmatpush1.xpose.msra.mxu0 %v4280
        %4353 = vmatprep.subr.mxu0 0.0
        %4354 = vmatpush1.xpose.msra.mxu0 %v4283
        %4355 = vmatprep.subr.mxu0 0.0
        %4356 = vmatpush1.xpose.msra.mxu0 %v4286
        %4357 = vmatprep.subr.mxu0 0.0
        %4358 = vmatpush1.xpose.msra.mxu0 %v4289
        %4359 = vmatprep.subr.mxu0 0.0
        %4360 = vmatpush1.xpose.msra.mxu0 %v4292
        %4361 = vmatprep.subr.mxu0 0.0
        %4362 = vmatpush1.xpose.msra.mxu0 %v4295
        %4363 = vmatprep.subr.mxu0 0.0
        %4364 = vmatpush1.xpose.msra.mxu0 %v4298
        %4365 = vmatprep.subr.mxu0 0.0
        %4366 = vmatpush1.xpose.msra.mxu0 %v4301
        %4367 = vmatprep.mubr.f32.mxu0 0.0
        %4368 = vmatmul.mubr.f32.gmra.mrb[0].mxu0 %v4112
        %v4369 = vpop.f32.mrb[0].mxu0
        %v4370 = vadd.f32 0.0, %v4369
        %v4371 = vpop.f32.mrb[0].mxu0
        %v4372 = vadd.f32 0.0, %v4371
        %4373 = vmatprep.mubr.f32.mxu0 0.0
        %4374 = vmatmul.mubr.f32.gmra.mrb[0].mxu0 %v4115
        %v4375 = vpop.f32.mrb[0].mxu0
        %v4376 = vadd.f32 0.0, %v4375
        %v4377 = vpop.f32.mrb[0].mxu0
        %v4378 = vadd.f32 0.0, %v4377
        %4379 = vmatprep.mubr.f32.mxu0 0.0
        %4380 = vmatmul.mubr.f32.gmra.mrb[0].mxu0 %v4118
        %v4381 = vpop.f32.mrb[0].mxu0
        %v4382 = vadd.f32 0.0, %v4381
        %v4383 = vpop.f32.mrb[0].mxu0
        %v4384 = vadd.f32 0.0, %v4383
        %4385 = vmatprep.mubr.f32.mxu0 0.0
        %4386 = vmatmul.mubr.f32.gmra.mrb[0].mxu0 %v4121
        %v4387 = vpop.f32.mrb[0].mxu0
        %v4388 = vadd.f32 0.0, %v4387
        %v4389 = vpop.f32.mrb[0].mxu0
        %v4390 = vadd.f32 0.0, %v4389
        %4391 = vmatprep.mubr.f32.mxu0 0.0
        %4392 = vmatmul.mubr.f32.gmra.mrb[0].mxu0 %v4124
        %v4393 = vpop.f32.mrb[0].mxu0
        %v4394 = vadd.f32 0.0, %v4393
        %v4395 = vpop.f32.mrb[0].mxu0
        %v4396 = vadd.f32 0.0, %v4395
        %4397 = vmatprep.mubr.f32.mxu0 0.0
        %4398 = vmatmul.mubr.f32.gmra.mrb[0].mxu0 %v4127
        %v4399 = vpop.f32.mrb[0].mxu0
        %v4400 = vadd.f32 0.0, %v4399
        %v4401 = vpop.f32.mrb[0].mxu0
        %v4402 = vadd.f32 0.0, %v4401
        %4403 = vmatprep.mubr.f32.mxu0 0.0
        %4404 = vmatmul.mubr.f32.gmra.mrb[0].mxu0 %v4130
        %v4405 = vpop.f32.mrb[0].mxu0
        %v4406 = vadd.f32 0.0, %v4405
        %v4407 = vpop.f32.mrb[0].mxu0
        %v4408 = vadd.f32 0.0, %v4407
        %4409 = vmatprep.mubr.f32.mxu0 0.0
        %4410 = vmatmul.mubr.f32.gmra.mrb[0].mxu0 %v4133
        %v4411 = vpop.f32.mrb[0].mxu0
        %v4412 = vadd.f32 0.0, %v4411
        %v4413 = vpop.f32.mrb[0].mxu0
        %v4414 = vadd.f32 0.0, %v4413
        %4415 = vmatprep.mubr.f32.mxu0 0.0
        %4416 = vmatmul.mubr.f32.gmra.mrb[0].mxu0 %v4136
        %v4417 = vpop.f32.mrb[0].mxu0
        %v4418 = vadd.f32 0.0, %v4417
        %v4419 = vpop.f32.mrb[0].mxu0
        %v4420 = vadd.f32 0.0, %v4419
        %4421 = vmatprep.mubr.f32.mxu0 0.0
        %4422 = vmatmul.mubr.f32.gmra.mrb[0].mxu0 %v4139
        %v4423 = vpop.f32.mrb[0].mxu0
        %v4424 = vadd.f32 0.0, %v4423
        %v4425 = vpop.f32.mrb[0].mxu0
        %v4426 = vadd.f32 0.0, %v4425
        %4427 = vmatprep.mubr.f32.mxu0 0.0
        %4428 = vmatmul.mubr.f32.gmra.mrb[0].mxu0 %v4142
        %v4429 = vpop.f32.mrb[0].mxu0
        %v4430 = vadd.f32 0.0, %v4429
        %v4431 = vpop.f32.mrb[0].mxu0
        %v4432 = vadd.f32 0.0, %v4431
        %4433 = vmatprep.mubr.f32.mxu0 0.0
        %4434 = vmatmul.mubr.f32.gmra.mrb[0].mxu0 %v4145
        %v4435 = vpop.f32.mrb[0].mxu0
        %v4436 = vadd.f32 0.0, %v4435
        %v4437 = vpop.f32.mrb[0].mxu0
        %v4438 = vadd.f32 0.0, %v4437
        %4439 = vmatprep.mubr.f32.mxu0 0.0
        %4440 = vmatmul.mubr.f32.gmra.mrb[0].mxu0 %v4148
        %v4441 = vpop.f32.mrb[0].mxu0
        %v4442 = vadd.f32 0.0, %v4441
        %v4443 = vpop.f32.mrb[0].mxu0
        %v4444 = vadd.f32 0.0, %v4443
        %4445 = vmatprep.mubr.f32.mxu0 0.0
        %4446 = vmatmul.mubr.f32.gmra.mrb[0].mxu0 %v4151
        %v4447 = vpop.f32.mrb[0].mxu0
        %v4448 = vadd.f32 0.0, %v4447
        %v4449 = vpop.f32.mrb[0].mxu0
        %v4450 = vadd.f32 0.0, %v4449
        %4451 = vmatprep.mubr.f32.mxu0 0.0
        %4452 = vmatmul.mubr.f32.gmra.mrb[0].mxu0 %v4154
        %v4453 = vpop.f32.mrb[0].mxu0
        %v4454 = vadd.f32 0.0, %v4453
        %v4455 = vpop.f32.mrb[0].mxu0
        %v4456 = vadd.f32 0.0, %v4455
        %4457 = vmatprep.mubr.f32.mxu0 0.0
        %4458 = vmatmul.mubr.f32.gmra.mrb[0].mxu0 %v4157
        %v4459 = vpop.f32.mrb[0].mxu0
        %v4460 = vadd.f32 0.0, %v4459
        %v4461 = vpop.f32.mrb[0].mxu0
        %v4462 = vadd.f32 0.0, %v4461
        %4463 = vmatprep.mubr.f32.mxu0 0.0
        %4464 = vmatmul.mubr.f32.gmra.mrb[0].mxu0 %v4160
        %v4465 = vpop.f32.mrb[0].mxu0
        %v4466 = vadd.f32 0.0, %v4465
        %v4467 = vpop.f32.mrb[0].mxu0
        %v4468 = vadd.f32 0.0, %v4467
        %4469 = vmatprep.mubr.f32.mxu0 0.0
        %4470 = vmatmul.mubr.f32.gmra.mrb[0].mxu0 %v4163
        %v4471 = vpop.f32.mrb[0].mxu0
        %v4472 = vadd.f32 0.0, %v4471
        %v4473 = vpop.f32.mrb[0].mxu0
        %v4474 = vadd.f32 0.0, %v4473
        %4475 = vmatprep.mubr.f32.mxu0 0.0
        %4476 = vmatmul.mubr.f32.gmra.mrb[0].mxu0 %v4166
        %v4477 = vpop.f32.mrb[0].mxu0
        %v4478 = vadd.f32 0.0, %v4477
        %v4479 = vpop.f32.mrb[0].mxu0
        %v4480 = vadd.f32 0.0, %v4479
        %4481 = vmatprep.mubr.f32.mxu0 0.0
        %4482 = vmatmul.mubr.f32.gmra.mrb[0].mxu0 %v4169
        %v4483 = vpop.f32.mrb[0].mxu0
        %v4484 = vadd.f32 0.0, %v4483
        %v4485 = vpop.f32.mrb[0].mxu0
        %v4486 = vadd.f32 0.0, %v4485
        %4487 = vmatprep.mubr.f32.mxu0 0.0
        %4488 = vmatmul.mubr.f32.gmra.mrb[0].mxu0 %v4172
        %v4489 = vpop.f32.mrb[0].mxu0
        %v4490 = vadd.f32 0.0, %v4489
        %v4491 = vpop.f32.mrb[0].mxu0
        %v4492 = vadd.f32 0.0, %v4491
        %4493 = vmatprep.mubr.f32.mxu0 0.0
        %4494 = vmatmul.mubr.f32.gmra.mrb[0].mxu0 %v4175
        %v4495 = vpop.f32.mrb[0].mxu0
        %v4496 = vadd.f32 0.0, %v4495
        %v4497 = vpop.f32.mrb[0].mxu0
        %v4498 = vadd.f32 0.0, %v4497
        %4499 = vmatprep.mubr.f32.mxu0 0.0
        %4500 = vmatmul.mubr.f32.gmra.mrb[0].mxu0 %v4178
        %v4501 = vpop.f32.mrb[0].mxu0
        %v4502 = vadd.f32 0.0, %v4501
        %v4503 = vpop.f32.mrb[0].mxu0
        %v4504 = vadd.f32 0.0, %v4503
        %4505 = vmatprep.mubr.f32.mxu0 0.0
        %4506 = vmatmul.mubr.f32.gmra.mrb[0].mxu0 %v4181
        %v4507 = vpop.f32.mrb[0].mxu0
        %v4508 = vadd.f32 0.0, %v4507
        %v4509 = vpop.f32.mrb[0].mxu0
        %v4510 = vadd.f32 0.0, %v4509
        %4511 = vmatprep.mubr.f32.mxu0 0.0
        %4512 = vmatmul.mubr.f32.gmra.mrb[0].mxu0 %v4184
        %v4513 = vpop.f32.mrb[0].mxu0
        %v4514 = vadd.f32 0.0, %v4513
        %v4515 = vpop.f32.mrb[0].mxu0
        %v4516 = vadd.f32 0.0, %v4515
        %4517 = vmatprep.mubr.f32.mxu0 0.0
        %4518 = vmatmul.mubr.f32.gmra.mrb[0].mxu0 %v4187
        %v4519 = vpop.f32.mrb[0].mxu0
        %v4520 = vadd.f32 0.0, %v4519
        %v4521 = vpop.f32.mrb[0].mxu0
        %v4522 = vadd.f32 0.0, %v4521
        %4523 = vmatprep.mubr.f32.mxu0 0.0
        %4524 = vmatmul.mubr.f32.gmra.mrb[0].mxu0 %v4190
        %v4525 = vpop.f32.mrb[0].mxu0
        %v4526 = vadd.f32 0.0, %v4525
        %v4527 = vpop.f32.mrb[0].mxu0
        %v4528 = vadd.f32 0.0, %v4527
        %4529 = vmatprep.mubr.f32.mxu0 0.0
        %4530 = vmatmul.mubr.f32.gmra.mrb[0].mxu0 %v4193
        %v4531 = vpop.f32.mrb[0].mxu0
        %v4532 = vadd.f32 0.0, %v4531
        %v4533 = vpop.f32.mrb[0].mxu0
        %v4534 = vadd.f32 0.0, %v4533
        %4535 = vmatprep.mubr.f32.mxu0 0.0
        %4536 = vmatmul.mubr.f32.gmra.mrb[0].mxu0 %v4196
        %v4537 = vpop.f32.mrb[0].mxu0
        %v4538 = vadd.f32 0.0, %v4537
        %v4539 = vpop.f32.mrb[0].mxu0
        %v4540 = vadd.f32 0.0, %v4539
        %4541 = vmatprep.mubr.f32.mxu0 0.0
        %4542 = vmatmul.mubr.f32.gmra.mrb[0].mxu0 %v4199
        %v4543 = vpop.f32.mrb[0].mxu0
        %v4544 = vadd.f32 0.0, %v4543
        %v4545 = vpop.f32.mrb[0].mxu0
        %v4546 = vadd.f32 0.0, %v4545
        %4547 = vmatprep.mubr.f32.mxu0 0.0
        %4548 = vmatmul.mubr.f32.gmra.mrb[0].mxu0 %v4202
        %v4549 = vpop.f32.mrb[0].mxu0
        %v4550 = vadd.f32 0.0, %v4549
        %v4551 = vpop.f32.mrb[0].mxu0
        %v4552 = vadd.f32 0.0, %v4551
        %4553 = vmatprep.mubr.f32.mxu0 0.0
        %4554 = vmatmul.mubr.f32.gmra.mrb[0].mxu0 %v4205
        %v4555 = vpop.f32.mrb[0].mxu0
        %v4556 = vadd.f32 0.0, %v4555
        %v4557 = vpop.f32.mrb[0].mxu0
        %v4558 = vadd.f32 0.0, %v4557
        %4559 = vdwg.mxu0
        %v4560 = vmul.f32 %v4370, 0.25
        %v4561 = vmul.f32 %v4372, 0.25
        %v4562 = vmul.f32 %v4376, 0.25
        %v4563 = vmul.f32 %v4378, 0.25
        %v4564 = vmul.f32 %v4382, 0.25
        %v4565 = vmul.f32 %v4384, 0.25
        %v4566 = vmul.f32 %v4388, 0.25
        %v4567 = vmul.f32 %v4390, 0.25
        %v4568 = vmul.f32 %v4394, 0.25
        %v4569 = vmul.f32 %v4396, 0.25
        %v4570 = vmul.f32 %v4400, 0.25
        %v4571 = vmul.f32 %v4402, 0.25
        %v4572 = vmul.f32 %v4406, 0.25
        %v4573 = vmul.f32 %v4408, 0.25
        %v4574 = vmul.f32 %v4412, 0.25
        %v4575 = vmul.f32 %v4414, 0.25
        %v4576 = vmul.f32 %v4418, 0.25
        %v4577 = vmul.f32 %v4420, 0.25
        %v4578 = vmul.f32 %v4424, 0.25
        %v4579 = vmul.f32 %v4426, 0.25
        %v4580 = vmul.f32 %v4430, 0.25
        %v4581 = vmul.f32 %v4432, 0.25
        %v4582 = vmul.f32 %v4436, 0.25
        %v4583 = vmul.f32 %v4438, 0.25
        %v4584 = vmul.f32 %v4442, 0.25
        %v4585 = vmul.f32 %v4444, 0.25
        %v4586 = vmul.f32 %v4448, 0.25
        %v4587 = vmul.f32 %v4450, 0.25
        %v4588 = vmul.f32 %v4454, 0.25
        %v4589 = vmul.f32 %v4456, 0.25
        %v4590 = vmul.f32 %v4460, 0.25
        %v4591 = vmul.f32 %v4462, 0.25
        %v4592 = vmul.f32 %v4466, 0.25
        %v4593 = vmul.f32 %v4468, 0.25
        %v4594 = vmul.f32 %v4472, 0.25
        %v4595 = vmul.f32 %v4474, 0.25
        %v4596 = vmul.f32 %v4478, 0.25
        %v4597 = vmul.f32 %v4480, 0.25
        %v4598 = vmul.f32 %v4484, 0.25
        %v4599 = vmul.f32 %v4486, 0.25
        %v4600 = vmul.f32 %v4490, 0.25
        %v4601 = vmul.f32 %v4492, 0.25
        %v4602 = vmul.f32 %v4496, 0.25
        %v4603 = vmul.f32 %v4498, 0.25
        %v4604 = vmul.f32 %v4502, 0.25
        %v4605 = vmul.f32 %v4504, 0.25
        %v4606 = vmul.f32 %v4508, 0.25
        %v4607 = vmul.f32 %v4510, 0.25
        %v4608 = vmul.f32 %v4514, 0.25
        %v4609 = vmul.f32 %v4516, 0.25
        %v4610 = vmul.f32 %v4520, 0.25
        %v4611 = vmul.f32 %v4522, 0.25
        %v4612 = vmul.f32 %v4526, 0.25
        %v4613 = vmul.f32 %v4528, 0.25
        %v4614 = vmul.f32 %v4532, 0.25
        %v4615 = vmul.f32 %v4534, 0.25
        %v4616 = vmul.f32 %v4538, 0.25
        %v4617 = vmul.f32 %v4540, 0.25
        %v4618 = vmul.f32 %v4544, 0.25
        %v4619 = vmul.f32 %v4546, 0.25
        %v4620 = vmul.f32 %v4550, 0.25
        %v4621 = vmul.f32 %v4552, 0.25
        %v4622 = vmul.f32 %v4556, 0.25
        %v4623 = vmul.f32 %v4558, 0.25
        %v4624 = vmax.f32 %v4560, %v4561
        %4625 = vmax.xlane.f32.xlu0 %v4624
        %v4626 = vpop.xlane.xlu0 %4625
        %v4627 = vmax.f32 %v4562, %v4563
        %4628 = vmax.xlane.f32.xlu0 %v4627
        %v4629 = vpop.xlane.xlu0 %4628
        %v4630 = vmax.f32 %v4564, %v4565
        %4631 = vmax.xlane.f32.xlu0 %v4630
        %v4632 = vpop.xlane.xlu0 %4631
        %v4633 = vmax.f32 %v4566, %v4567
        %4634 = vmax.xlane.f32.xlu0 %v4633
        %v4635 = vpop.xlane.xlu0 %4634
        %v4636 = vmax.f32 %v4568, %v4569
        %4637 = vmax.xlane.f32.xlu0 %v4636
        %v4638 = vpop.xlane.xlu0 %4637
        %v4639 = vmax.f32 %v4570, %v4571
        %4640 = vmax.xlane.f32.xlu0 %v4639
        %v4641 = vpop.xlane.xlu0 %4640
        %v4642 = vmax.f32 %v4572, %v4573
        %4643 = vmax.xlane.f32.xlu0 %v4642
        %v4644 = vpop.xlane.xlu0 %4643
        %v4645 = vmax.f32 %v4574, %v4575
        %4646 = vmax.xlane.f32.xlu0 %v4645
        %v4647 = vpop.xlane.xlu0 %4646
        %v4648 = vmax.f32 %v4576, %v4577
        %4649 = vmax.xlane.f32.xlu0 %v4648
        %v4650 = vpop.xlane.xlu0 %4649
        %v4651 = vmax.f32 %v4578, %v4579
        %4652 = vmax.xlane.f32.xlu0 %v4651
        %v4653 = vpop.xlane.xlu0 %4652
        %v4654 = vmax.f32 %v4580, %v4581
        %4655 = vmax.xlane.f32.xlu0 %v4654
        %v4656 = vpop.xlane.xlu0 %4655
        %v4657 = vmax.f32 %v4582, %v4583
        %4658 = vmax.xlane.f32.xlu0 %v4657
        %v4659 = vpop.xlane.xlu0 %4658
        %v4660 = vmax.f32 %v4584, %v4585
        %4661 = vmax.xlane.f32.xlu0 %v4660
        %v4662 = vpop.xlane.xlu0 %4661
        %v4663 = vmax.f32 %v4586, %v4587
        %4664 = vmax.xlane.f32.xlu0 %v4663
        %v4665 = vpop.xlane.xlu0 %4664
        %v4666 = vmax.f32 %v4588, %v4589
        %4667 = vmax.xlane.f32.xlu0 %v4666
        %v4668 = vpop.xlane.xlu0 %4667
        %v4669 = vmax.f32 %v4590, %v4591
        %4670 = vmax.xlane.f32.xlu0 %v4669
        %v4671 = vpop.xlane.xlu0 %4670
        %v4672 = vmax.f32 %v4592, %v4593
        %4673 = vmax.xlane.f32.xlu0 %v4672
        %v4674 = vpop.xlane.xlu0 %4673
        %v4675 = vmax.f32 %v4594, %v4595
        %4676 = vmax.xlane.f32.xlu0 %v4675
        %v4677 = vpop.xlane.xlu0 %4676
        %v4678 = vmax.f32 %v4596, %v4597
        %4679 = vmax.xlane.f32.xlu0 %v4678
        %v4680 = vpop.xlane.xlu0 %4679
        %v4681 = vmax.f32 %v4598, %v4599
        %4682 = vmax.xlane.f32.xlu0 %v4681
        %v4683 = vpop.xlane.xlu0 %4682
        %v4684 = vmax.f32 %v4600, %v4601
        %4685 = vmax.xlane.f32.xlu0 %v4684
        %v4686 = vpop.xlane.xlu0 %4685
        %v4687 = vmax.f32 %v4602, %v4603
        %4688 = vmax.xlane.f32.xlu0 %v4687
        %v4689 = vpop.xlane.xlu0 %4688
        %v4690 = vmax.f32 %v4604, %v4605
        %4691 = vmax.xlane.f32.xlu0 %v4690
        %v4692 = vpop.xlane.xlu0 %4691
        %v4693 = vmax.f32 %v4606, %v4607
        %4694 = vmax.xlane.f32.xlu0 %v4693
        %v4695 = vpop.xlane.xlu0 %4694
        %v4696 = vmax.f32 %v4608, %v4609
        %4697 = vmax.xlane.f32.xlu0 %v4696
        %v4698 = vpop.xlane.xlu0 %4697
        %v4699 = vmax.f32 %v4610, %v4611
        %4700 = vmax.xlane.f32.xlu0 %v4699
        %v4701 = vpop.xlane.xlu0 %4700
        %v4702 = vmax.f32 %v4612, %v4613
        %4703 = vmax.xlane.f32.xlu0 %v4702
        %v4704 = vpop.xlane.xlu0 %4703
        %v4705 = vmax.f32 %v4614, %v4615
        %4706 = vmax.xlane.f32.xlu0 %v4705
        %v4707 = vpop.xlane.xlu0 %4706
        %v4708 = vmax.f32 %v4616, %v4617
        %4709 = vmax.xlane.f32.xlu0 %v4708
        %v4710 = vpop.xlane.xlu0 %4709
        %v4711 = vmax.f32 %v4618, %v4619
        %4712 = vmax.xlane.f32.xlu0 %v4711
        %v4713 = vpop.xlane.xlu0 %4712
        %v4714 = vmax.f32 %v4620, %v4621
        %4715 = vmax.xlane.f32.xlu0 %v4714
        %v4716 = vpop.xlane.xlu0 %4715
        %v4717 = vmax.f32 %v4622, %v4623
        %4718 = vmax.xlane.f32.xlu0 %v4717
        %v4719 = vpop.xlane.xlu0 %4718
        %v4720 = vsub.f32 %v4560, %v4626
        %v4721 = vsub.f32 %v4561, %v4626
        %v4722 = vsub.f32 %v4562, %v4629
        %v4723 = vsub.f32 %v4563, %v4629
        %v4724 = vsub.f32 %v4564, %v4632
        %v4725 = vsub.f32 %v4565, %v4632
        %v4726 = vsub.f32 %v4566, %v4635
        %v4727 = vsub.f32 %v4567, %v4635
        %v4728 = vsub.f32 %v4568, %v4638
        %v4729 = vsub.f32 %v4569, %v4638
        %v4730 = vsub.f32 %v4570, %v4641
        %v4731 = vsub.f32 %v4571, %v4641
        %v4732 = vsub.f32 %v4572, %v4644
        %v4733 = vsub.f32 %v4573, %v4644
        %v4734 = vsub.f32 %v4574, %v4647
        %v4735 = vsub.f32 %v4575, %v4647
        %v4736 = vsub.f32 %v4576, %v4650
        %v4737 = vsub.f32 %v4577, %v4650
        %v4738 = vsub.f32 %v4578, %v4653
        %v4739 = vsub.f32 %v4579, %v4653
        %v4740 = vsub.f32 %v4580, %v4656
        %v4741 = vsub.f32 %v4581, %v4656
        %v4742 = vsub.f32 %v4582, %v4659
        %v4743 = vsub.f32 %v4583, %v4659
        %v4744 = vsub.f32 %v4584, %v4662
        %v4745 = vsub.f32 %v4585, %v4662
        %v4746 = vsub.f32 %v4586, %v4665
        %v4747 = vsub.f32 %v4587, %v4665
        %v4748 = vsub.f32 %v4588, %v4668
        %v4749 = vsub.f32 %v4589, %v4668
        %v4750 = vsub.f32 %v4590, %v4671
        %v4751 = vsub.f32 %v4591, %v4671
        %v4752 = vsub.f32 %v4592, %v4674
        %v4753 = vsub.f32 %v4593, %v4674
        %v4754 = vsub.f32 %v4594, %v4677
        %v4755 = vsub.f32 %v4595, %v4677
        %v4756 = vsub.f32 %v4596, %v4680
        %v4757 = vsub.f32 %v4597, %v4680
        %v4758 = vsub.f32 %v4598, %v4683
        %v4759 = vsub.f32 %v4599, %v4683
        %v4760 = vsub.f32 %v4600, %v4686
        %v4761 = vsub.f32 %v4601, %v4686
        %v4762 = vsub.f32 %v4602, %v4689
        %v4763 = vsub.f32 %v4603, %v4689
        %v4764 = vsub.f32 %v4604, %v4692
        %v4765 = vsub.f32 %v4605, %v4692
        %v4766 = vsub.f32 %v4606, %v4695
        %v4767 = vsub.f32 %v4607, %v4695
        %v4768 = vsub.f32 %v4608, %v4698
        %v4769 = vsub.f32 %v4609, %v4698
        %v4770 = vsub.f32 %v4610, %v4701
        %v4771 = vsub.f32 %v4611, %v4701
        %v4772 = vsub.f32 %v4612, %v4704
        %v4773 = vsub.f32 %v4613, %v4704
        %v4774 = vsub.f32 %v4614, %v4707
        %v4775 = vsub.f32 %v4615, %v4707
        %v4776 = vsub.f32 %v4616, %v4710
        %v4777 = vsub.f32 %v4617, %v4710
        %v4778 = vsub.f32 %v4618, %v4713
        %v4779 = vsub.f32 %v4619, %v4713
        %v4780 = vsub.f32 %v4620, %v4716
        %v4781 = vsub.f32 %v4621, %v4716
        %v4782 = vsub.f32 %v4622, %v4719
        %v4783 = vsub.f32 %v4623, %v4719
        %v4784 = vmul.f32 %v4720, 1.442695
        %v4785 = vpow.pop %v4784
        %v4786 = vmul.f32 %v4721, 1.442695
        %v4787 = vpow.pop %v4786
        %v4788 = vmul.f32 %v4722, 1.442695
        %v4789 = vpow.pop %v4788
        %v4790 = vmul.f32 %v4723, 1.442695
        %v4791 = vpow.pop %v4790
        %v4792 = vmul.f32 %v4724, 1.442695
        %v4793 = vpow.pop %v4792
        %v4794 = vmul.f32 %v4725, 1.442695
        %v4795 = vpow.pop %v4794
        %v4796 = vmul.f32 %v4726, 1.442695
        %v4797 = vpow.pop %v4796
        %v4798 = vmul.f32 %v4727, 1.442695
        %v4799 = vpow.pop %v4798
        %v4800 = vmul.f32 %v4728, 1.442695
        %v4801 = vpow.pop %v4800
        %v4802 = vmul.f32 %v4729, 1.442695
        %v4803 = vpow.pop %v4802
        %v4804 = vmul.f32 %v4730, 1.442695
        %v4805 = vpow.pop %v4804
        %v4806 = vmul.f32 %v4731, 1.442695
        %v4807 = vpow.pop %v4806
        %v4808 = vmul.f32 %v4732, 1.442695
        %v4809 = vpow.pop %v4808
        %v4810 = vmul.f32 %v4733, 1.442695
        %v4811 = vpow.pop %v4810
        %v4812 = vmul.f32 %v4734, 1.442695
        %v4813 = vpow.pop %v4812
        %v4814 = vmul.f32 %v4735, 1.442695
        %v4815 = vpow.pop %v4814
        %v4816 = vmul.f32 %v4736, 1.442695
        %v4817 = vpow.pop %v4816
        %v4818 = vmul.f32 %v4737, 1.442695
        %v4819 = vpow.pop %v4818
        %v4820 = vmul.f32 %v4738, 1.442695
        %v4821 = vpow.pop %v4820
        %v4822 = vmul.f32 %v4739, 1.442695
        %v4823 = vpow.pop %v4822
        %v4824 = vmul.f32 %v4740, 1.442695
        %v4825 = vpow.pop %v4824
        %v4826 = vmul.f32 %v4741, 1.442695
        %v4827 = vpow.pop %v4826
        %v4828 = vmul.f32 %v4742, 1.442695
        %v4829 = vpow.pop %v4828
        %v4830 = vmul.f32 %v4743, 1.442695
        %v4831 = vpow.pop %v4830
        %v4832 = vmul.f32 %v4744, 1.442695
        %v4833 = vpow.pop %v4832
        %v4834 = vmul.f32 %v4745, 1.442695
        %v4835 = vpow.pop %v4834
        %v4836 = vmul.f32 %v4746, 1.442695
        %v4837 = vpow.pop %v4836
        %v4838 = vmul.f32 %v4747, 1.442695
        %v4839 = vpow.pop %v4838
        %v4840 = vmul.f32 %v4748, 1.442695
        %v4841 = vpow.pop %v4840
        %v4842 = vmul.f32 %v4749, 1.442695
        %v4843 = vpow.pop %v4842
        %v4844 = vmul.f32 %v4750, 1.442695
        %v4845 = vpow.pop %v4844
        %v4846 = vmul.f32 %v4751, 1.442695
        %v4847 = vpow.pop %v4846
        %v4848 = vmul.f32 %v4752, 1.442695
        %v4849 = vpow.pop %v4848
        %v4850 = vmul.f32 %v4753, 1.442695
        %v4851 = vpow.pop %v4850
        %v4852 = vmul.f32 %v4754, 1.442695
        %v4853 = vpow.pop %v4852
        %v4854 = vmul.f32 %v4755, 1.442695
        %v4855 = vpow.pop %v4854
        %v4856 = vmul.f32 %v4756, 1.442695
        %v4857 = vpow.pop %v4856
        %v4858 = vmul.f32 %v4757, 1.442695
        %v4859 = vpow.pop %v4858
        %v4860 = vmul.f32 %v4758, 1.442695
        %v4861 = vpow.pop %v4860
        %v4862 = vmul.f32 %v4759, 1.442695
        %v4863 = vpow.pop %v4862
        %v4864 = vmul.f32 %v4760, 1.442695
        %v4865 = vpow.pop %v4864
        %v4866 = vmul.f32 %v4761, 1.442695
        %v4867 = vpow.pop %v4866
        %v4868 = vmul.f32 %v4762, 1.442695
        %v4869 = vpow.pop %v4868
        %v4870 = vmul.f32 %v4763, 1.442695
        %v4871 = vpow.pop %v4870
        %v4872 = vmul.f32 %v4764, 1.442695
        %v4873 = vpow.pop %v4872
        %v4874 = vmul.f32 %v4765, 1.442695
        %v4875 = vpow.pop %v4874
        %v4876 = vmul.f32 %v4766, 1.442695
        %v4877 = vpow.pop %v4876
        %v4878 = vmul.f32 %v4767, 1.442695
        %v4879 = vpow.pop %v4878
        %v4880 = vmul.f32 %v4768, 1.442695
        %v4881 = vpow.pop %v4880
        %v4882 = vmul.f32 %v4769, 1.442695
        %v4883 = vpow.pop %v4882
        %v4884 = vmul.f32 %v4770, 1.442695
        %v4885 = vpow.pop %v4884
        %v4886 = vmul.f32 %v4771, 1.442695
        %v4887 = vpow.pop %v4886
        %v4888 = vmul.f32 %v4772, 1.442695
        %v4889 = vpow.pop %v4888
        %v4890 = vmul.f32 %v4773, 1.442695
        %v4891 = vpow.pop %v4890
        %v4892 = vmul.f32 %v4774, 1.442695
        %v4893 = vpow.pop %v4892
        %v4894 = vmul.f32 %v4775, 1.442695
        %v4895 = vpow.pop %v4894
        %v4896 = vmul.f32 %v4776, 1.442695
        %v4897 = vpow.pop %v4896
        %v4898 = vmul.f32 %v4777, 1.442695
        %v4899 = vpow.pop %v4898
        %v4900 = vmul.f32 %v4778, 1.442695
        %v4901 = vpow.pop %v4900
        %v4902 = vmul.f32 %v4779, 1.442695
        %v4903 = vpow.pop %v4902
        %v4904 = vmul.f32 %v4780, 1.442695
        %v4905 = vpow.pop %v4904
        %v4906 = vmul.f32 %v4781, 1.442695
        %v4907 = vpow.pop %v4906
        %v4908 = vmul.f32 %v4782, 1.442695
        %v4909 = vpow.pop %v4908
        %v4910 = vmul.f32 %v4783, 1.442695
        %v4911 = vpow.pop %v4910
        %v4912 = vadd.f32 %v4785, %v4787
        %4913 = vadd.xlane.f32.xlu0 %v4912
        %v4914 = vpop.xlane.xlu0 %4913
        %v4915 = vadd.f32 %v4789, %v4791
        %4916 = vadd.xlane.f32.xlu0 %v4915
        %v4917 = vpop.xlane.xlu0 %4916
        %v4918 = vadd.f32 %v4793, %v4795
        %4919 = vadd.xlane.f32.xlu0 %v4918
        %v4920 = vpop.xlane.xlu0 %4919
        %v4921 = vadd.f32 %v4797, %v4799
        %4922 = vadd.xlane.f32.xlu0 %v4921
        %v4923 = vpop.xlane.xlu0 %4922
        %v4924 = vadd.f32 %v4801, %v4803
        %4925 = vadd.xlane.f32.xlu0 %v4924
        %v4926 = vpop.xlane.xlu0 %4925
        %v4927 = vadd.f32 %v4805, %v4807
        %4928 = vadd.xlane.f32.xlu0 %v4927
        %v4929 = vpop.xlane.xlu0 %4928
        %v4930 = vadd.f32 %v4809, %v4811
        %4931 = vadd.xlane.f32.xlu0 %v4930
        %v4932 = vpop.xlane.xlu0 %4931
        %v4933 = vadd.f32 %v4813, %v4815
        %4934 = vadd.xlane.f32.xlu0 %v4933
        %v4935 = vpop.xlane.xlu0 %4934
        %v4936 = vadd.f32 %v4817, %v4819
        %4937 = vadd.xlane.f32.xlu0 %v4936
        %v4938 = vpop.xlane.xlu0 %4937
        %v4939 = vadd.f32 %v4821, %v4823
        %4940 = vadd.xlane.f32.xlu0 %v4939
        %v4941 = vpop.xlane.xlu0 %4940
        %v4942 = vadd.f32 %v4825, %v4827
        %4943 = vadd.xlane.f32.xlu0 %v4942
        %v4944 = vpop.xlane.xlu0 %4943
        %v4945 = vadd.f32 %v4829, %v4831
        %4946 = vadd.xlane.f32.xlu0 %v4945
        %v4947 = vpop.xlane.xlu0 %4946
        %v4948 = vadd.f32 %v4833, %v4835
        %4949 = vadd.xlane.f32.xlu0 %v4948
        %v4950 = vpop.xlane.xlu0 %4949
        %v4951 = vadd.f32 %v4837, %v4839
        %4952 = vadd.xlane.f32.xlu0 %v4951
        %v4953 = vpop.xlane.xlu0 %4952
        %v4954 = vadd.f32 %v4841, %v4843
        %4955 = vadd.xlane.f32.xlu0 %v4954
        %v4956 = vpop.xlane.xlu0 %4955
        %v4957 = vadd.f32 %v4845, %v4847
        %4958 = vadd.xlane.f32.xlu0 %v4957
        %v4959 = vpop.xlane.xlu0 %4958
        %v4960 = vadd.f32 %v4849, %v4851
        %4961 = vadd.xlane.f32.xlu0 %v4960
        %v4962 = vpop.xlane.xlu0 %4961
        %v4963 = vadd.f32 %v4853, %v4855
        %4964 = vadd.xlane.f32.xlu0 %v4963
        %v4965 = vpop.xlane.xlu0 %4964
        %v4966 = vadd.f32 %v4857, %v4859
        %4967 = vadd.xlane.f32.xlu0 %v4966
        %v4968 = vpop.xlane.xlu0 %4967
        %v4969 = vadd.f32 %v4861, %v4863
        %4970 = vadd.xlane.f32.xlu0 %v4969
        %v4971 = vpop.xlane.xlu0 %4970
        %v4972 = vadd.f32 %v4865, %v4867
        %4973 = vadd.xlane.f32.xlu0 %v4972
        %v4974 = vpop.xlane.xlu0 %4973
        %v4975 = vadd.f32 %v4869, %v4871
        %4976 = vadd.xlane.f32.xlu0 %v4975
        %v4977 = vpop.xlane.xlu0 %4976
        %v4978 = vadd.f32 %v4873, %v4875
        %4979 = vadd.xlane.f32.xlu0 %v4978
        %v4980 = vpop.xlane.xlu0 %4979
        %v4981 = vadd.f32 %v4877, %v4879
        %4982 = vadd.xlane.f32.xlu0 %v4981
        %v4983 = vpop.xlane.xlu0 %4982
        %v4984 = vadd.f32 %v4881, %v4883
        %4985 = vadd.xlane.f32.xlu0 %v4984
        %v4986 = vpop.xlane.xlu0 %4985
        %v4987 = vadd.f32 %v4885, %v4887
        %4988 = vadd.xlane.f32.xlu0 %v4987
        %v4989 = vpop.xlane.xlu0 %4988
        %v4990 = vadd.f32 %v4889, %v4891
        %4991 = vadd.xlane.f32.xlu0 %v4990
        %v4992 = vpop.xlane.xlu0 %4991
        %v4993 = vadd.f32 %v4893, %v4895
        %4994 = vadd.xlane.f32.xlu0 %v4993
        %v4995 = vpop.xlane.xlu0 %4994
        %v4996 = vadd.f32 %v4897, %v4899
        %4997 = vadd.xlane.f32.xlu0 %v4996
        %v4998 = vpop.xlane.xlu0 %4997
        %v4999 = vadd.f32 %v4901, %v4903
        %5000 = vadd.xlane.f32.xlu0 %v4999
        %v5001 = vpop.xlane.xlu0 %5000
        %v5002 = vadd.f32 %v4905, %v4907
        %5003 = vadd.xlane.f32.xlu0 %v5002
        %v5004 = vpop.xlane.xlu0 %5003
        %v5005 = vadd.f32 %v4909, %v4911
        %5006 = vadd.xlane.f32.xlu0 %v5005
        %v5007 = vpop.xlane.xlu0 %5006
        %v5008 = vrcp.pop %v4914
        %v5009 = vmul.f32 %v4785, %v5008
        %v5010 = vmul.f32 %v4787, %v5008
        %v5011 = vrcp.pop %v4917
        %v5012 = vmul.f32 %v4789, %v5011
        %v5013 = vmul.f32 %v4791, %v5011
        %v5014 = vrcp.pop %v4920
        %v5015 = vmul.f32 %v4793, %v5014
        %v5016 = vmul.f32 %v4795, %v5014
        %v5017 = vrcp.pop %v4923
        %v5018 = vmul.f32 %v4797, %v5017
        %v5019 = vmul.f32 %v4799, %v5017
        %v5020 = vrcp.pop %v4926
        %v5021 = vmul.f32 %v4801, %v5020
        %v5022 = vmul.f32 %v4803, %v5020
        %v5023 = vrcp.pop %v4929
        %v5024 = vmul.f32 %v4805, %v5023
        %v5025 = vmul.f32 %v4807, %v5023
        %v5026 = vrcp.pop %v4932
        %v5027 = vmul.f32 %v4809, %v5026
        %v5028 = vmul.f32 %v4811, %v5026
        %v5029 = vrcp.pop %v4935
        %v5030 = vmul.f32 %v4813, %v5029
        %v5031 = vmul.f32 %v4815, %v5029
        %v5032 = vrcp.pop %v4938
        %v5033 = vmul.f32 %v4817, %v5032
        %v5034 = vmul.f32 %v4819, %v5032
        %v5035 = vrcp.pop %v4941
        %v5036 = vmul.f32 %v4821, %v5035
        %v5037 = vmul.f32 %v4823, %v5035
        %v5038 = vrcp.pop %v4944
        %v5039 = vmul.f32 %v4825, %v5038
        %v5040 = vmul.f32 %v4827, %v5038
        %v5041 = vrcp.pop %v4947
        %v5042 = vmul.f32 %v4829, %v5041
        %v5043 = vmul.f32 %v4831, %v5041
        %v5044 = vrcp.pop %v4950
        %v5045 = vmul.f32 %v4833, %v5044
        %v5046 = vmul.f32 %v4835, %v5044
        %v5047 = vrcp.pop %v4953
        %v5048 = vmul.f32 %v4837, %v5047
        %v5049 = vmul.f32 %v4839, %v5047
        %v5050 = vrcp.pop %v4956
        %v5051 = vmul.f32 %v4841, %v5050
        %v5052 = vmul.f32 %v4843, %v5050
        %v5053 = vrcp.pop %v4959
        %v5054 = vmul.f32 %v4845, %v5053
        %v5055 = vmul.f32 %v4847, %v5053
        %v5056 = vrcp.pop %v4962
        %v5057 = vmul.f32 %v4849, %v5056
        %v5058 = vmul.f32 %v4851, %v5056
        %v5059 = vrcp.pop %v4965
        %v5060 = vmul.f32 %v4853, %v5059
        %v5061 = vmul.f32 %v4855, %v5059
        %v5062 = vrcp.pop %v4968
        %v5063 = vmul.f32 %v4857, %v5062
        %v5064 = vmul.f32 %v4859, %v5062
        %v5065 = vrcp.pop %v4971
        %v5066 = vmul.f32 %v4861, %v5065
        %v5067 = vmul.f32 %v4863, %v5065
        %v5068 = vrcp.pop %v4974
        %v5069 = vmul.f32 %v4865, %v5068
        %v5070 = vmul.f32 %v4867, %v5068
        %v5071 = vrcp.pop %v4977
        %v5072 = vmul.f32 %v4869, %v5071
        %v5073 = vmul.f32 %v4871, %v5071
        %v5074 = vrcp.pop %v4980
        %v5075 = vmul.f32 %v4873, %v5074
        %v5076 = vmul.f32 %v4875, %v5074
        %v5077 = vrcp.pop %v4983
        %v5078 = vmul.f32 %v4877, %v5077
        %v5079 = vmul.f32 %v4879, %v5077
        %v5080 = vrcp.pop %v4986
        %v5081 = vmul.f32 %v4881, %v5080
        %v5082 = vmul.f32 %v4883, %v5080
        %v5083 = vrcp.pop %v4989
        %v5084 = vmul.f32 %v4885, %v5083
        %v5085 = vmul.f32 %v4887, %v5083
        %v5086 = vrcp.pop %v4992
        %v5087 = vmul.f32 %v4889, %v5086
        %v5088 = vmul.f32 %v4891, %v5086
        %v5089 = vrcp.pop %v4995
        %v5090 = vmul.f32 %v4893, %v5089
        %v5091 = vmul.f32 %v4895, %v5089
        %v5092 = vrcp.pop %v4998
        %v5093 = vmul.f32 %v4897, %v5092
        %v5094 = vmul.f32 %v4899, %v5092
        %v5095 = vrcp.pop %v5001
        %v5096 = vmul.f32 %v4901, %v5095
        %v5097 = vmul.f32 %v4903, %v5095
        %v5098 = vrcp.pop %v5004
        %v5099 = vmul.f32 %v4905, %v5098
        %v5100 = vmul.f32 %v4907, %v5098
        %v5101 = vrcp.pop %v5007
        %v5102 = vmul.f32 %v4909, %v5101
        %v5103 = vmul.f32 %v4911, %v5101
        %5104 = vmatprep.subr.mxu0 0.0
        %5105 = vmatpush1.msra.mxu0 %v3952
        %5106 = vmatprep.subr.mxu0 0.0
        %5107 = vmatpush1.msra.mxu0 %v3957
        %5108 = vmatprep.subr.mxu0 0.0
        %5109 = vmatpush1.msra.mxu0 %v3962
        %5110 = vmatprep.subr.mxu0 0.0
        %5111 = vmatpush1.msra.mxu0 %v3967
        %5112 = vmatprep.subr.mxu0 0.0
        %5113 = vmatpush1.msra.mxu0 %v3972
        %5114 = vmatprep.subr.mxu0 0.0
        %5115 = vmatpush1.msra.mxu0 %v3977
        %5116 = vmatprep.subr.mxu0 0.0
        %5117 = vmatpush1.msra.mxu0 %v3982
        %5118 = vmatprep.subr.mxu0 0.0
        %5119 = vmatpush1.msra.mxu0 %v3987
        %5120 = vmatprep.subr.mxu0 0.0
        %5121 = vmatpush1.msra.mxu0 %v3992
        %5122 = vmatprep.subr.mxu0 0.0
        %5123 = vmatpush1.msra.mxu0 %v3997
        %5124 = vmatprep.subr.mxu0 0.0
        %5125 = vmatpush1.msra.mxu0 %v4002
        %5126 = vmatprep.subr.mxu0 0.0
        %5127 = vmatpush1.msra.mxu0 %v4007
        %5128 = vmatprep.subr.mxu0 0.0
        %5129 = vmatpush1.msra.mxu0 %v4012
        %5130 = vmatprep.subr.mxu0 0.0
        %5131 = vmatpush1.msra.mxu0 %v4017
        %5132 = vmatprep.subr.mxu0 0.0
        %5133 = vmatpush1.msra.mxu0 %v4022
        %5134 = vmatprep.subr.mxu0 0.0
        %5135 = vmatpush1.msra.mxu0 %v4027
        %5136 = vmatprep.subr.mxu0 0.0
        %5137 = vmatpush1.msra.mxu0 %v4032
        %5138 = vmatprep.subr.mxu0 0.0
        %5139 = vmatpush1.msra.mxu0 %v4037
        %5140 = vmatprep.subr.mxu0 0.0
        %5141 = vmatpush1.msra.mxu0 %v4042
        %5142 = vmatprep.subr.mxu0 0.0
        %5143 = vmatpush1.msra.mxu0 %v4047
        %5144 = vmatprep.subr.mxu0 0.0
        %5145 = vmatpush1.msra.mxu0 %v4052
        %5146 = vmatprep.subr.mxu0 0.0
        %5147 = vmatpush1.msra.mxu0 %v4057
        %5148 = vmatprep.subr.mxu0 0.0
        %5149 = vmatpush1.msra.mxu0 %v4062
        %5150 = vmatprep.subr.mxu0 0.0
        %5151 = vmatpush1.msra.mxu0 %v4067
        %5152 = vmatprep.subr.mxu0 0.0
        %5153 = vmatpush1.msra.mxu0 %v4072
        %5154 = vmatprep.subr.mxu0 0.0
        %5155 = vmatpush1.msra.mxu0 %v4077
        %5156 = vmatprep.subr.mxu0 0.0
        %5157 = vmatpush1.msra.mxu0 %v4082
        %5158 = vmatprep.subr.mxu0 0.0
        %5159 = vmatpush1.msra.mxu0 %v4087
        %5160 = vmatprep.subr.mxu0 0.0
        %5161 = vmatpush1.msra.mxu0 %v4092
        %5162 = vmatprep.subr.mxu0 0.0
        %5163 = vmatpush1.msra.mxu0 %v4097
        %5164 = vmatprep.subr.mxu0 0.0
        %5165 = vmatpush1.msra.mxu0 %v4102
        %5166 = vmatprep.subr.mxu0 0.0
        %5167 = vmatpush1.msra.mxu0 %v4107
        %5168 = vmatprep.mubr.f32.mxu0 %v5010
        %5169 = vmatmul.mubr.f32.gmra.mrb[0].mxu0 %v5009
        %v5170 = vpop.f32.mrb[0].mxu0
        %v5171 = vadd.f32 0.0, %v5170
        %v5172 = vpop.f32.mrb[0].mxu0
        %5173 = vmatprep.mubr.f32.mxu0 %v5013
        %5174 = vmatmul.mubr.f32.gmra.mrb[0].mxu0 %v5012
        %v5175 = vpop.f32.mrb[0].mxu0
        %v5176 = vadd.f32 0.0, %v5175
        %v5177 = vpop.f32.mrb[0].mxu0
        %5178 = vmatprep.mubr.f32.mxu0 %v5016
        %5179 = vmatmul.mubr.f32.gmra.mrb[0].mxu0 %v5015
        %v5180 = vpop.f32.mrb[0].mxu0
        %v5181 = vadd.f32 0.0, %v5180
        %v5182 = vpop.f32.mrb[0].mxu0
        %5183 = vmatprep.mubr.f32.mxu0 %v5019
        %5184 = vmatmul.mubr.f32.gmra.mrb[0].mxu0 %v5018
        %v5185 = vpop.f32.mrb[0].mxu0
        %v5186 = vadd.f32 0.0, %v5185
        %v5187 = vpop.f32.mrb[0].mxu0
        %5188 = vmatprep.mubr.f32.mxu0 %v5022
        %5189 = vmatmul.mubr.f32.gmra.mrb[0].mxu0 %v5021
        %v5190 = vpop.f32.mrb[0].mxu0
        %v5191 = vadd.f32 0.0, %v5190
        %v5192 = vpop.f32.mrb[0].mxu0
        %5193 = vmatprep.mubr.f32.mxu0 %v5025
        %5194 = vmatmul.mubr.f32.gmra.mrb[0].mxu0 %v5024
        %v5195 = vpop.f32.mrb[0].mxu0
        %v5196 = vadd.f32 0.0, %v5195
        %v5197 = vpop.f32.mrb[0].mxu0
        %5198 = vmatprep.mubr.f32.mxu0 %v5028
        %5199 = vmatmul.mubr.f32.gmra.mrb[0].mxu0 %v5027
        %v5200 = vpop.f32.mrb[0].mxu0
        %v5201 = vadd.f32 0.0, %v5200
        %v5202 = vpop.f32.mrb[0].mxu0
        %5203 = vmatprep.mubr.f32.mxu0 %v5031
        %5204 = vmatmul.mubr.f32.gmra.mrb[0].mxu0 %v5030
        %v5205 = vpop.f32.mrb[0].mxu0
        %v5206 = vadd.f32 0.0, %v5205
        %v5207 = vpop.f32.mrb[0].mxu0
        %5208 = vmatprep.mubr.f32.mxu0 %v5034
        %5209 = vmatmul.mubr.f32.gmra.mrb[0].mxu0 %v5033
        %v5210 = vpop.f32.mrb[0].mxu0
        %v5211 = vadd.f32 0.0, %v5210
        %v5212 = vpop.f32.mrb[0].mxu0
        %5213 = vmatprep.mubr.f32.mxu0 %v5037
        %5214 = vmatmul.mubr.f32.gmra.mrb[0].mxu0 %v5036
        %v5215 = vpop.f32.mrb[0].mxu0
        %v5216 = vadd.f32 0.0, %v5215
        %v5217 = vpop.f32.mrb[0].mxu0
        %5218 = vmatprep.mubr.f32.mxu0 %v5040
        %5219 = vmatmul.mubr.f32.gmra.mrb[0].mxu0 %v5039
        %v5220 = vpop.f32.mrb[0].mxu0
        %v5221 = vadd.f32 0.0, %v5220
        %v5222 = vpop.f32.mrb[0].mxu0
        %5223 = vmatprep.mubr.f32.mxu0 %v5043
        %5224 = vmatmul.mubr.f32.gmra.mrb[0].mxu0 %v5042
        %v5225 = vpop.f32.mrb[0].mxu0
        %v5226 = vadd.f32 0.0, %v5225
        %v5227 = vpop.f32.mrb[0].mxu0
        %5228 = vmatprep.mubr.f32.mxu0 %v5046
        %5229 = vmatmul.mubr.f32.gmra.mrb[0].mxu0 %v5045
        %v5230 = vpop.f32.mrb[0].mxu0
        %v5231 = vadd.f32 0.0, %v5230
        %v5232 = vpop.f32.mrb[0].mxu0
        %5233 = vmatprep.mubr.f32.mxu0 %v5049
        %5234 = vmatmul.mubr.f32.gmra.mrb[0].mxu0 %v5048
        %v5235 = vpop.f32.mrb[0].mxu0
        %v5236 = vadd.f32 0.0, %v5235
        %v5237 = vpop.f32.mrb[0].mxu0
        %5238 = vmatprep.mubr.f32.mxu0 %v5052
        %5239 = vmatmul.mubr.f32.gmra.mrb[0].mxu0 %v5051
        %v5240 = vpop.f32.mrb[0].mxu0
        %v5241 = vadd.f32 0.0, %v5240
        %v5242 = vpop.f32.mrb[0].mxu0
        %5243 = vmatprep.mubr.f32.mxu0 %v5055
        %5244 = vmatmul.mubr.f32.gmra.mrb[0].mxu0 %v5054
        %v5245 = vpop.f32.mrb[0].mxu0
        %v5246 = vadd.f32 0.0, %v5245
        %v5247 = vpop.f32.mrb[0].mxu0
        %5248 = vmatprep.mubr.f32.mxu0 %v5058
        %5249 = vmatmul.mubr.f32.gmra.mrb[0].mxu0 %v5057
        %v5250 = vpop.f32.mrb[0].mxu0
        %v5251 = vadd.f32 0.0, %v5250
        %v5252 = vpop.f32.mrb[0].mxu0
        %5253 = vmatprep.mubr.f32.mxu0 %v5061
        %5254 = vmatmul.mubr.f32.gmra.mrb[0].mxu0 %v5060
        %v5255 = vpop.f32.mrb[0].mxu0
        %v5256 = vadd.f32 0.0, %v5255
        %v5257 = vpop.f32.mrb[0].mxu0
        %5258 = vmatprep.mubr.f32.mxu0 %v5064
        %5259 = vmatmul.mubr.f32.gmra.mrb[0].mxu0 %v5063
        %v5260 = vpop.f32.mrb[0].mxu0
        %v5261 = vadd.f32 0.0, %v5260
        %v5262 = vpop.f32.mrb[0].mxu0
        %5263 = vmatprep.mubr.f32.mxu0 %v5067
        %5264 = vmatmul.mubr.f32.gmra.mrb[0].mxu0 %v5066
        %v5265 = vpop.f32.mrb[0].mxu0
        %v5266 = vadd.f32 0.0, %v5265
        %v5267 = vpop.f32.mrb[0].mxu0
        %5268 = vmatprep.mubr.f32.mxu0 %v5070
        %5269 = vmatmul.mubr.f32.gmra.mrb[0].mxu0 %v5069
        %v5270 = vpop.f32.mrb[0].mxu0
        %v5271 = vadd.f32 0.0, %v5270
        %v5272 = vpop.f32.mrb[0].mxu0
        %5273 = vmatprep.mubr.f32.mxu0 %v5073
        %5274 = vmatmul.mubr.f32.gmra.mrb[0].mxu0 %v5072
        %v5275 = vpop.f32.mrb[0].mxu0
        %v5276 = vadd.f32 0.0, %v5275
        %v5277 = vpop.f32.mrb[0].mxu0
        %5278 = vmatprep.mubr.f32.mxu0 %v5076
        %5279 = vmatmul.mubr.f32.gmra.mrb[0].mxu0 %v5075
        %v5280 = vpop.f32.mrb[0].mxu0
        %v5281 = vadd.f32 0.0, %v5280
        %v5282 = vpop.f32.mrb[0].mxu0
        %5283 = vmatprep.mubr.f32.mxu0 %v5079
        %5284 = vmatmul.mubr.f32.gmra.mrb[0].mxu0 %v5078
        %v5285 = vpop.f32.mrb[0].mxu0
        %v5286 = vadd.f32 0.0, %v5285
        %v5287 = vpop.f32.mrb[0].mxu0
        %5288 = vmatprep.mubr.f32.mxu0 %v5082
        %5289 = vmatmul.mubr.f32.gmra.mrb[0].mxu0 %v5081
        %v5290 = vpop.f32.mrb[0].mxu0
        %v5291 = vadd.f32 0.0, %v5290
        %v5292 = vpop.f32.mrb[0].mxu0
        %5293 = vmatprep.mubr.f32.mxu0 %v5085
        %5294 = vmatmul.mubr.f32.gmra.mrb[0].mxu0 %v5084
        %v5295 = vpop.f32.mrb[0].mxu0
        %v5296 = vadd.f32 0.0, %v5295
        %v5297 = vpop.f32.mrb[0].mxu0
        %5298 = vmatprep.mubr.f32.mxu0 %v5088
        %5299 = vmatmul.mubr.f32.gmra.mrb[0].mxu0 %v5087
        %v5300 = vpop.f32.mrb[0].mxu0
        %v5301 = vadd.f32 0.0, %v5300
        %v5302 = vpop.f32.mrb[0].mxu0
        %5303 = vmatprep.mubr.f32.mxu0 %v5091
        %5304 = vmatmul.mubr.f32.gmra.mrb[0].mxu0 %v5090
        %v5305 = vpop.f32.mrb[0].mxu0
        %v5306 = vadd.f32 0.0, %v5305
        %v5307 = vpop.f32.mrb[0].mxu0
        %5308 = vmatprep.mubr.f32.mxu0 %v5094
        %5309 = vmatmul.mubr.f32.gmra.mrb[0].mxu0 %v5093
        %v5310 = vpop.f32.mrb[0].mxu0
        %v5311 = vadd.f32 0.0, %v5310
        %v5312 = vpop.f32.mrb[0].mxu0
        %5313 = vmatprep.mubr.f32.mxu0 %v5097
        %5314 = vmatmul.mubr.f32.gmra.mrb[0].mxu0 %v5096
        %v5315 = vpop.f32.mrb[0].mxu0
        %v5316 = vadd.f32 0.0, %v5315
        %v5317 = vpop.f32.mrb[0].mxu0
        %5318 = vmatprep.mubr.f32.mxu0 %v5100
        %5319 = vmatmul.mubr.f32.gmra.mrb[0].mxu0 %v5099
        %v5320 = vpop.f32.mrb[0].mxu0
        %v5321 = vadd.f32 0.0, %v5320
        %v5322 = vpop.f32.mrb[0].mxu0
        %5323 = vmatprep.mubr.f32.mxu0 %v5103
        %5324 = vmatmul.mubr.f32.gmra.mrb[0].mxu0 %v5102
        %v5325 = vpop.f32.mrb[0].mxu0
        %v5326 = vadd.f32 0.0, %v5325
        %v5327 = vpop.f32.mrb[0].mxu0
        %5328 = vdwg.mxu0
        %v5329 = vmax.f32 %v5171, 0.0
        %v5330 = vmax.f32 %v5176, 0.0
        %v5331 = vmax.f32 %v5181, 0.0
        %v5332 = vmax.f32 %v5186, 0.0
        %v5333 = vmax.f32 %v5191, 0.0
        %v5334 = vmax.f32 %v5196, 0.0
        %v5335 = vmax.f32 %v5201, 0.0
        %v5336 = vmax.f32 %v5206, 0.0
        %v5337 = vmax.f32 %v5211, 0.0
        %v5338 = vmax.f32 %v5216, 0.0
        %v5339 = vmax.f32 %v5221, 0.0
        %v5340 = vmax.f32 %v5226, 0.0
        %v5341 = vmax.f32 %v5231, 0.0
        %v5342 = vmax.f32 %v5236, 0.0
        %v5343 = vmax.f32 %v5241, 0.0
        %v5344 = vmax.f32 %v5246, 0.0
        %v5345 = vmax.f32 %v5251, 0.0
        %v5346 = vmax.f32 %v5256, 0.0
        %v5347 = vmax.f32 %v5261, 0.0
        %v5348 = vmax.f32 %v5266, 0.0
        %v5349 = vmax.f32 %v5271, 0.0
        %v5350 = vmax.f32 %v5276, 0.0
        %v5351 = vmax.f32 %v5281, 0.0
        %v5352 = vmax.f32 %v5286, 0.0
        %v5353 = vmax.f32 %v5291, 0.0
        %v5354 = vmax.f32 %v5296, 0.0
        %v5355 = vmax.f32 %v5301, 0.0
        %v5356 = vmax.f32 %v5306, 0.0
        %v5357 = vmax.f32 %v5311, 0.0
        %v5358 = vmax.f32 %v5316, 0.0
        %v5359 = vmax.f32 %v5321, 0.0
        %v5360 = vmax.f32 %v5326, 0.0
        %v5361 = vld [vmem:[#allocation20] sm:$0xff]
        %v5362 = vld [vmem:[#allocation20 + $0x8] sm:$0xff]
        %v5363 = vld [vmem:[#allocation20 + $0x10] sm:$0xff]
        %v5364 = vld [vmem:[#allocation20 + $0x18] sm:$0xff]
        %v5365 = vmax.f32 %v2750, 0.0
        %v5366 = vmax.f32 %v2752, 0.0
        %v5367 = vmax.f32 %v2755, 0.0
        %v5368 = vmax.f32 %v2757, 0.0
        %v5369 = vmax.f32 %v2760, 0.0
        %v5370 = vmax.f32 %v2762, 0.0
        %v5371 = vmax.f32 %v2765, 0.0
        %v5372 = vmax.f32 %v2767, 0.0
        %v5373 = vmax.f32 %v2770, 0.0
        %v5374 = vmax.f32 %v2772, 0.0
        %v5375 = vmax.f32 %v2775, 0.0
        %v5376 = vmax.f32 %v2777, 0.0
        %v5377 = vmax.f32 %v2780, 0.0
        %v5378 = vmax.f32 %v2782, 0.0
        %v5379 = vmax.f32 %v2785, 0.0
        %v5380 = vmax.f32 %v2787, 0.0
        %v5381 = vmax.f32 %v2790, 0.0
        %v5382 = vmax.f32 %v2792, 0.0
        %v5383 = vmax.f32 %v2795, 0.0
        %v5384 = vmax.f32 %v2797, 0.0
        %v5385 = vmax.f32 %v2800, 0.0
        %v5386 = vmax.f32 %v2802, 0.0
        %v5387 = vmax.f32 %v2805, 0.0
        %v5388 = vmax.f32 %v2807, 0.0
        %v5389 = vmax.f32 %v2810, 0.0
        %v5390 = vmax.f32 %v2812, 0.0
        %v5391 = vmax.f32 %v2815, 0.0
        %v5392 = vmax.f32 %v2817, 0.0
        %v5393 = vmax.f32 %v2820, 0.0
        %v5394 = vmax.f32 %v2822, 0.0
        %v5395 = vmax.f32 %v2825, 0.0
        %v5396 = vmax.f32 %v2827, 0.0
        %v5397 = vld [vmem:[#allocation22] sm:$0xff]
        %v5398 = vld [vmem:[#allocation22 + $0x8] sm:$0xff]
        %v5399 = vld [vmem:[#allocation22 + $0x10] sm:$0xff]
        %v5400 = vld [vmem:[#allocation22 + $0x18] sm:$0xff]
        %5433 = vrot.lane.b32.xlu0 %v5365, 96
        %v5434 = vpop.permute.xlu0 %5433
        %5435 = vrot.lane.b32.xlu0 %v5366, 96
        %v5436 = vpop.permute.xlu0 %5435
        %5437 = vrot.lane.b32.xlu0 %v5367, 96
        %v5438 = vpop.permute.xlu0 %5437
        %5439 = vrot.lane.b32.xlu0 %v5368, 96
        %v5440 = vpop.permute.xlu0 %5439
        %5441 = vrot.lane.b32.xlu0 %v5369, 96
        %v5442 = vpop.permute.xlu0 %5441
        %5443 = vrot.lane.b32.xlu0 %v5370, 96
        %v5444 = vpop.permute.xlu0 %5443
        %5445 = vrot.lane.b32.xlu0 %v5371, 96
        %v5446 = vpop.permute.xlu0 %5445
        %5447 = vrot.lane.b32.xlu0 %v5372, 96
        %v5448 = vpop.permute.xlu0 %5447
        %5449 = vrot.lane.b32.xlu0 %v5373, 96
        %v5450 = vpop.permute.xlu0 %5449
        %5451 = vrot.lane.b32.xlu0 %v5374, 96
        %v5452 = vpop.permute.xlu0 %5451
        %5453 = vrot.lane.b32.xlu0 %v5375, 96
        %v5454 = vpop.permute.xlu0 %5453
        %5455 = vrot.lane.b32.xlu0 %v5376, 96
        %v5456 = vpop.permute.xlu0 %5455
        %5457 = vrot.lane.b32.xlu0 %v5377, 96
        %v5458 = vpop.permute.xlu0 %5457
        %5459 = vrot.lane.b32.xlu0 %v5378, 96
        %v5460 = vpop.permute.xlu0 %5459
        %5461 = vrot.lane.b32.xlu0 %v5379, 96
        %v5462 = vpop.permute.xlu0 %5461
        %5463 = vrot.lane.b32.xlu0 %v5380, 96
        %v5464 = vpop.permute.xlu0 %5463
        %5465 = vrot.lane.b32.xlu0 %v5381, 96
        %v5466 = vpop.permute.xlu0 %5465
        %5467 = vrot.lane.b32.xlu0 %v5382, 96
        %v5468 = vpop.permute.xlu0 %5467
        %5469 = vrot.lane.b32.xlu0 %v5383, 96
        %v5470 = vpop.permute.xlu0 %5469
        %5471 = vrot.lane.b32.xlu0 %v5384, 96
        %v5472 = vpop.permute.xlu0 %5471
        %5473 = vrot.lane.b32.xlu0 %v5385, 96
        %v5474 = vpop.permute.xlu0 %5473
        %5475 = vrot.lane.b32.xlu0 %v5386, 96
        %v5476 = vpop.permute.xlu0 %5475
        %5477 = vrot.lane.b32.xlu0 %v5387, 96
        %v5478 = vpop.permute.xlu0 %5477
        %5479 = vrot.lane.b32.xlu0 %v5388, 96
        %v5480 = vpop.permute.xlu0 %5479
        %5481 = vrot.lane.b32.xlu0 %v5389, 96
        %v5482 = vpop.permute.xlu0 %5481
        %5483 = vrot.lane.b32.xlu0 %v5390, 96
        %v5484 = vpop.permute.xlu0 %5483
        %5485 = vrot.lane.b32.xlu0 %v5391, 96
        %v5486 = vpop.permute.xlu0 %5485
        %5487 = vrot.lane.b32.xlu0 %v5392, 96
        %v5488 = vpop.permute.xlu0 %5487
        %5489 = vrot.lane.b32.xlu0 %v5393, 96
        %v5490 = vpop.permute.xlu0 %5489
        %5491 = vrot.lane.b32.xlu0 %v5394, 96
        %v5492 = vpop.permute.xlu0 %5491
        %5493 = vrot.lane.b32.xlu0 %v5395, 96
        %v5494 = vpop.permute.xlu0 %5493
        %5495 = vrot.lane.b32.xlu0 %v5396, 96
        %v5496 = vpop.permute.xlu0 %5495
        %v5497 = vsel %vm2860, %v5434, 0
        %v5499 = vsel %vm2860, %v5436, 0
        %v5501 = vsel %vm2860, %v5438, 0
        %v5503 = vsel %vm2860, %v5440, 0
        %v5505 = vsel %vm2860, %v5442, 0
        %v5507 = vsel %vm2860, %v5444, 0
        %v5509 = vsel %vm2860, %v5446, 0
        %v5511 = vsel %vm2860, %v5448, 0
        %v5513 = vsel %vm2860, %v5450, 0
        %v5515 = vsel %vm2860, %v5452, 0
        %v5517 = vsel %vm2860, %v5454, 0
        %v5519 = vsel %vm2860, %v5456, 0
        %v5521 = vsel %vm2860, %v5458, 0
        %v5523 = vsel %vm2860, %v5460, 0
        %v5525 = vsel %vm2860, %v5462, 0
        %v5527 = vsel %vm2860, %v5464, 0
        %v5529 = vsel %vm2860, %v5466, 0
        %v5531 = vsel %vm2860, %v5468, 0
        %v5533 = vsel %vm2860, %v5470, 0
        %v5535 = vsel %vm2860, %v5472, 0
        %v5537 = vsel %vm2860, %v5474, 0
        %v5539 = vsel %vm2860, %v5476, 0
        %v5541 = vsel %vm2860, %v5478, 0
        %v5543 = vsel %vm2860, %v5480, 0
        %v5545 = vsel %vm2860, %v5482, 0
        %v5547 = vsel %vm2860, %v5484, 0
        %v5549 = vsel %vm2860, %v5486, 0
        %v5551 = vsel %vm2860, %v5488, 0
        %v5553 = vsel %vm2860, %v5490, 0
        %v5555 = vsel %vm2860, %v5492, 0
        %v5557 = vsel %vm2860, %v5494, 0
        %v5559 = vsel %vm2860, %v5496, 0
        %5561 = vmatprep.subr.mxu0 0.0
        %5562 = vmatpush1.msra.mxu0 %v5397
        %5563 = vmatprep.subr.mxu0 0.0
        %5564 = vmatpush1.msra.mxu0 %v5398
        %5565 = vmatprep.subr.mxu0 0.0
        %5566 = vmatpush1.msra.mxu0 %v5399
        %5567 = vmatprep.subr.mxu0 0.0
        %5568 = vmatpush1.msra.mxu0 %v5400
        %5569 = vmatprep.subr.mxu0 0.0
        %5570 = vmatpush1.msra.mxu0 0.0
        %5571 = vmatprep.subr.mxu0 0.0
        %5572 = vmatpush1.msra.mxu0 0.0
        %5573 = vmatprep.subr.mxu0 0.0
        %5574 = vmatpush1.msra.mxu0 0.0
        %5575 = vmatprep.subr.mxu0 0.0
        %5576 = vmatpush1.msra.mxu0 0.0
        %5577 = vmatprep.subr.mxu0 0.0
        %5578 = vmatpush1.msra.mxu0 0.0
        %5579 = vmatprep.subr.mxu0 0.0
        %5580 = vmatpush1.msra.mxu0 0.0
        %5581 = vmatprep.subr.mxu0 0.0
        %5582 = vmatpush1.msra.mxu0 0.0
        %5583 = vmatprep.subr.mxu0 0.0
        %5584 = vmatpush1.msra.mxu0 0.0
        %5585 = vmatprep.subr.mxu0 0.0
        %5586 = vmatpush1.msra.mxu0 0.0
        %5587 = vmatprep.subr.mxu0 0.0
        %5588 = vmatpush1.msra.mxu0 0.0
        %5589 = vmatprep.subr.mxu0 0.0
        %5590 = vmatpush1.msra.mxu0 0.0
        %5591 = vmatprep.subr.mxu0 0.0
        %5592 = vmatpush1.msra.mxu0 0.0
        %5593 = vmatprep.subr.mxu0 0.0
        %5594 = vmatpush1.msra.mxu0 0.0
        %5595 = vmatprep.subr.mxu0 0.0
        %5596 = vmatpush1.msra.mxu0 0.0
        %5597 = vmatprep.subr.mxu0 0.0
        %5598 = vmatpush1.msra.mxu0 0.0
        %5599 = vmatprep.subr.mxu0 0.0
        %5600 = vmatpush1.msra.mxu0 0.0
        %5601 = vmatprep.subr.mxu0 0.0
        %5602 = vmatpush1.msra.mxu0 0.0
        %5603 = vmatprep.subr.mxu0 0.0
        %5604 = vmatpush1.msra.mxu0 0.0
        %5605 = vmatprep.subr.mxu0 0.0
        %5606 = vmatpush1.msra.mxu0 0.0
        %5607 = vmatprep.subr.mxu0 0.0
        %5608 = vmatpush1.msra.mxu0 0.0
        %5609 = vmatprep.subr.mxu0 0.0
        %5610 = vmatpush1.msra.mxu0 0.0
        %5611 = vmatprep.subr.mxu0 0.0
        %5612 = vmatpush1.msra.mxu0 0.0
        %5613 = vmatprep.subr.mxu0 0.0
        %5614 = vmatpush1.msra.mxu0 0.0
        %5615 = vmatprep.subr.mxu0 0.0
        %5616 = vmatpush1.msra.mxu0 0.0
        %5617 = vmatprep.subr.mxu0 0.0
        %5618 = vmatpush1.msra.mxu0 0.0
        %5619 = vmatprep.subr.mxu0 0.0
        %5620 = vmatpush1.msra.mxu0 0.0
        %5621 = vmatprep.subr.mxu0 0.0
        %5622 = vmatpush1.msra.mxu0 0.0
        %5623 = vmatprep.subr.mxu0 0.0
        %5624 = vmatpush1.msra.mxu0 0.0
        %5625 = vmatprep.mubr.f32.mxu0 0.0
        %5626 = vmatmul.mubr.f32.gmra.mrb[0].mxu0 %v5497
        %v5627 = vpop.f32.mrb[0].mxu0
        %v5628 = vadd.f32 0.0, %v5627
        %v5629 = vpop.f32.mrb[0].mxu0
        %5630 = vmatprep.mubr.f32.mxu0 0.0
        %5631 = vmatmul.mubr.f32.gmra.mrb[0].mxu0 %v5499
        %v5632 = vpop.f32.mrb[0].mxu0
        %v5633 = vadd.f32 0.0, %v5632
        %v5634 = vpop.f32.mrb[0].mxu0
        %5635 = vmatprep.mubr.f32.mxu0 0.0
        %5636 = vmatmul.mubr.f32.gmra.mrb[0].mxu0 %v5501
        %v5637 = vpop.f32.mrb[0].mxu0
        %v5638 = vadd.f32 0.0, %v5637
        %v5639 = vpop.f32.mrb[0].mxu0
        %5640 = vmatprep.mubr.f32.mxu0 0.0
        %5641 = vmatmul.mubr.f32.gmra.mrb[0].mxu0 %v5503
        %v5642 = vpop.f32.mrb[0].mxu0
        %v5643 = vadd.f32 0.0, %v5642
        %v5644 = vpop.f32.mrb[0].mxu0
        %5645 = vmatprep.mubr.f32.mxu0 0.0
        %5646 = vmatmul.mubr.f32.gmra.mrb[0].mxu0 %v5505
        %v5647 = vpop.f32.mrb[0].mxu0
        %v5648 = vadd.f32 0.0, %v5647
        %v5649 = vpop.f32.mrb[0].mxu0
        %5650 = vmatprep.mubr.f32.mxu0 0.0
        %5651 = vmatmul.mubr.f32.gmra.mrb[0].mxu0 %v5507
        %v5652 = vpop.f32.mrb[0].mxu0
        %v5653 = vadd.f32 0.0, %v5652
        %v5654 = vpop.f32.mrb[0].mxu0
        %5655 = vmatprep.mubr.f32.mxu0 0.0
        %5656 = vmatmul.mubr.f32.gmra.mrb[0].mxu0 %v5509
        %v5657 = vpop.f32.mrb[0].mxu0
        %v5658 = vadd.f32 0.0, %v5657
        %v5659 = vpop.f32.mrb[0].mxu0
        %5660 = vmatprep.mubr.f32.mxu0 0.0
        %5661 = vmatmul.mubr.f32.gmra.mrb[0].mxu0 %v5511
        %v5662 = vpop.f32.mrb[0].mxu0
        %v5663 = vadd.f32 0.0, %v5662
        %v5664 = vpop.f32.mrb[0].mxu0
        %5665 = vmatprep.mubr.f32.mxu0 0.0
        %5666 = vmatmul.mubr.f32.gmra.mrb[0].mxu0 %v5513
        %v5667 = vpop.f32.mrb[0].mxu0
        %v5668 = vadd.f32 0.0, %v5667
        %v5669 = vpop.f32.mrb[0].mxu0
        %5670 = vmatprep.mubr.f32.mxu0 0.0
        %5671 = vmatmul.mubr.f32.gmra.mrb[0].mxu0 %v5515
        %v5672 = vpop.f32.mrb[0].mxu0
        %v5673 = vadd.f32 0.0, %v5672
        %v5674 = vpop.f32.mrb[0].mxu0
        %5675 = vmatprep.mubr.f32.mxu0 0.0
        %5676 = vmatmul.mubr.f32.gmra.mrb[0].mxu0 %v5517
        %v5677 = vpop.f32.mrb[0].mxu0
        %v5678 = vadd.f32 0.0, %v5677
        %v5679 = vpop.f32.mrb[0].mxu0
        %5680 = vmatprep.mubr.f32.mxu0 0.0
        %5681 = vmatmul.mubr.f32.gmra.mrb[0].mxu0 %v5519
        %v5682 = vpop.f32.mrb[0].mxu0
        %v5683 = vadd.f32 0.0, %v5682
        %v5684 = vpop.f32.mrb[0].mxu0
        %5685 = vmatprep.mubr.f32.mxu0 0.0
        %5686 = vmatmul.mubr.f32.gmra.mrb[0].mxu0 %v5521
        %v5687 = vpop.f32.mrb[0].mxu0
        %v5688 = vadd.f32 0.0, %v5687
        %v5689 = vpop.f32.mrb[0].mxu0
        %5690 = vmatprep.mubr.f32.mxu0 0.0
        %5691 = vmatmul.mubr.f32.gmra.mrb[0].mxu0 %v5523
        %v5692 = vpop.f32.mrb[0].mxu0
        %v5693 = vadd.f32 0.0, %v5692
        %v5694 = vpop.f32.mrb[0].mxu0
        %5695 = vmatprep.mubr.f32.mxu0 0.0
        %5696 = vmatmul.mubr.f32.gmra.mrb[0].mxu0 %v5525
        %v5697 = vpop.f32.mrb[0].mxu0
        %v5698 = vadd.f32 0.0, %v5697
        %v5699 = vpop.f32.mrb[0].mxu0
        %5700 = vmatprep.mubr.f32.mxu0 0.0
        %5701 = vmatmul.mubr.f32.gmra.mrb[0].mxu0 %v5527
        %v5702 = vpop.f32.mrb[0].mxu0
        %v5703 = vadd.f32 0.0, %v5702
        %v5704 = vpop.f32.mrb[0].mxu0
        %5705 = vmatprep.mubr.f32.mxu0 0.0
        %5706 = vmatmul.mubr.f32.gmra.mrb[0].mxu0 %v5529
        %v5707 = vpop.f32.mrb[0].mxu0
        %v5708 = vadd.f32 0.0, %v5707
        %v5709 = vpop.f32.mrb[0].mxu0
        %5710 = vmatprep.mubr.f32.mxu0 0.0
        %5711 = vmatmul.mubr.f32.gmra.mrb[0].mxu0 %v5531
        %v5712 = vpop.f32.mrb[0].mxu0
        %v5713 = vadd.f32 0.0, %v5712
        %v5714 = vpop.f32.mrb[0].mxu0
        %5715 = vmatprep.mubr.f32.mxu0 0.0
        %5716 = vmatmul.mubr.f32.gmra.mrb[0].mxu0 %v5533
        %v5717 = vpop.f32.mrb[0].mxu0
        %v5718 = vadd.f32 0.0, %v5717
        %v5719 = vpop.f32.mrb[0].mxu0
        %5720 = vmatprep.mubr.f32.mxu0 0.0
        %5721 = vmatmul.mubr.f32.gmra.mrb[0].mxu0 %v5535
        %v5722 = vpop.f32.mrb[0].mxu0
        %v5723 = vadd.f32 0.0, %v5722
        %v5724 = vpop.f32.mrb[0].mxu0
        %5725 = vmatprep.mubr.f32.mxu0 0.0
        %5726 = vmatmul.mubr.f32.gmra.mrb[0].mxu0 %v5537
        %v5727 = vpop.f32.mrb[0].mxu0
        %v5728 = vadd.f32 0.0, %v5727
        %v5729 = vpop.f32.mrb[0].mxu0
        %5730 = vmatprep.mubr.f32.mxu0 0.0
        %5731 = vmatmul.mubr.f32.gmra.mrb[0].mxu0 %v5539
        %v5732 = vpop.f32.mrb[0].mxu0
        %v5733 = vadd.f32 0.0, %v5732
        %v5734 = vpop.f32.mrb[0].mxu0
        %5735 = vmatprep.mubr.f32.mxu0 0.0
        %5736 = vmatmul.mubr.f32.gmra.mrb[0].mxu0 %v5541
        %v5737 = vpop.f32.mrb[0].mxu0
        %v5738 = vadd.f32 0.0, %v5737
        %v5739 = vpop.f32.mrb[0].mxu0
        %5740 = vmatprep.mubr.f32.mxu0 0.0
        %5741 = vmatmul.mubr.f32.gmra.mrb[0].mxu0 %v5543
        %v5742 = vpop.f32.mrb[0].mxu0
        %v5743 = vadd.f32 0.0, %v5742
        %v5744 = vpop.f32.mrb[0].mxu0
        %5745 = vmatprep.mubr.f32.mxu0 0.0
        %5746 = vmatmul.mubr.f32.gmra.mrb[0].mxu0 %v5545
        %v5747 = vpop.f32.mrb[0].mxu0
        %v5748 = vadd.f32 0.0, %v5747
        %v5749 = vpop.f32.mrb[0].mxu0
        %5750 = vmatprep.mubr.f32.mxu0 0.0
        %5751 = vmatmul.mubr.f32.gmra.mrb[0].mxu0 %v5547
        %v5752 = vpop.f32.mrb[0].mxu0
        %v5753 = vadd.f32 0.0, %v5752
        %v5754 = vpop.f32.mrb[0].mxu0
        %5755 = vmatprep.mubr.f32.mxu0 0.0
        %5756 = vmatmul.mubr.f32.gmra.mrb[0].mxu0 %v5549
        %v5757 = vpop.f32.mrb[0].mxu0
        %v5758 = vadd.f32 0.0, %v5757
        %v5759 = vpop.f32.mrb[0].mxu0
        %5760 = vmatprep.mubr.f32.mxu0 0.0
        %5761 = vmatmul.mubr.f32.gmra.mrb[0].mxu0 %v5551
        %v5762 = vpop.f32.mrb[0].mxu0
        %v5763 = vadd.f32 0.0, %v5762
        %v5764 = vpop.f32.mrb[0].mxu0
        %5765 = vmatprep.mubr.f32.mxu0 0.0
        %5766 = vmatmul.mubr.f32.gmra.mrb[0].mxu0 %v5553
        %v5767 = vpop.f32.mrb[0].mxu0
        %v5768 = vadd.f32 0.0, %v5767
        %v5769 = vpop.f32.mrb[0].mxu0
        %5770 = vmatprep.mubr.f32.mxu0 0.0
        %5771 = vmatmul.mubr.f32.gmra.mrb[0].mxu0 %v5555
        %v5772 = vpop.f32.mrb[0].mxu0
        %v5773 = vadd.f32 0.0, %v5772
        %v5774 = vpop.f32.mrb[0].mxu0
        %5775 = vmatprep.mubr.f32.mxu0 0.0
        %5776 = vmatmul.mubr.f32.gmra.mrb[0].mxu0 %v5557
        %v5777 = vpop.f32.mrb[0].mxu0
        %v5778 = vadd.f32 0.0, %v5777
        %v5779 = vpop.f32.mrb[0].mxu0
        %5780 = vmatprep.mubr.f32.mxu0 0.0
        %5781 = vmatmul.mubr.f32.gmra.mrb[0].mxu0 %v5559
        %v5782 = vpop.f32.mrb[0].mxu0
        %v5783 = vadd.f32 0.0, %v5782
        %v5784 = vpop.f32.mrb[0].mxu0
        %5785 = vdwg.mxu0
        %v5787 = vsel %vm2860, %v5329, 0
        %v5790 = vsel %vm2860, %v5330, 0
        %v5793 = vsel %vm2860, %v5331, 0
        %v5796 = vsel %vm2860, %v5332, 0
        %v5799 = vsel %vm2860, %v5333, 0
        %v5802 = vsel %vm2860, %v5334, 0
        %v5805 = vsel %vm2860, %v5335, 0
        %v5808 = vsel %vm2860, %v5336, 0
        %v5811 = vsel %vm2860, %v5337, 0
        %v5814 = vsel %vm2860, %v5338, 0
        %v5817 = vsel %vm2860, %v5339, 0
        %v5820 = vsel %vm2860, %v5340, 0
        %v5823 = vsel %vm2860, %v5341, 0
        %v5826 = vsel %vm2860, %v5342, 0
        %v5829 = vsel %vm2860, %v5343, 0
        %v5832 = vsel %vm2860, %v5344, 0
        %v5835 = vsel %vm2860, %v5345, 0
        %v5838 = vsel %vm2860, %v5346, 0
        %v5841 = vsel %vm2860, %v5347, 0
        %v5844 = vsel %vm2860, %v5348, 0
        %v5847 = vsel %vm2860, %v5349, 0
        %v5850 = vsel %vm2860, %v5350, 0
        %v5853 = vsel %vm2860, %v5351, 0
        %v5856 = vsel %vm2860, %v5352, 0
        %v5859 = vsel %vm2860, %v5353, 0
        %v5862 = vsel %vm2860, %v5354, 0
        %v5865 = vsel %vm2860, %v5355, 0
        %v5868 = vsel %vm2860, %v5356, 0
        %v5871 = vsel %vm2860, %v5357, 0
        %v5874 = vsel %vm2860, %v5358, 0
        %v5877 = vsel %vm2860, %v5359, 0
        %v5880 = vsel %vm2860, %v5360, 0
        %5882 = vmatprep.subr.mxu0 0.0
        %5883 = vmatpush1.msra.mxu0 %v5361
        %5884 = vmatprep.subr.mxu0 0.0
        %5885 = vmatpush1.msra.mxu0 %v5362
        %5886 = vmatprep.subr.mxu0 0.0
        %5887 = vmatpush1.msra.mxu0 %v5363
        %5888 = vmatprep.subr.mxu0 0.0
        %5889 = vmatpush1.msra.mxu0 %v5364
        %5890 = vmatprep.subr.mxu0 0.0
        %5891 = vmatpush1.msra.mxu0 0.0
        %5892 = vmatprep.subr.mxu0 0.0
        %5893 = vmatpush1.msra.mxu0 0.0
        %5894 = vmatprep.subr.mxu0 0.0
        %5895 = vmatpush1.msra.mxu0 0.0
        %5896 = vmatprep.subr.mxu0 0.0
        %5897 = vmatpush1.msra.mxu0 0.0
        %5898 = vmatprep.subr.mxu0 0.0
        %5899 = vmatpush1.msra.mxu0 0.0
        %5900 = vmatprep.subr.mxu0 0.0
        %5901 = vmatpush1.msra.mxu0 0.0
        %5902 = vmatprep.subr.mxu0 0.0
        %5903 = vmatpush1.msra.mxu0 0.0
        %5904 = vmatprep.subr.mxu0 0.0
        %5905 = vmatpush1.msra.mxu0 0.0
        %5906 = vmatprep.subr.mxu0 0.0
        %5907 = vmatpush1.msra.mxu0 0.0
        %5908 = vmatprep.subr.mxu0 0.0
        %5909 = vmatpush1.msra.mxu0 0.0
        %5910 = vmatprep.subr.mxu0 0.0
        %5911 = vmatpush1.msra.mxu0 0.0
        %5912 = vmatprep.subr.mxu0 0.0
        %5913 = vmatpush1.msra.mxu0 0.0
        %5914 = vmatprep.subr.mxu0 0.0
        %5915 = vmatpush1.msra.mxu0 0.0
        %5916 = vmatprep.subr.mxu0 0.0
        %5917 = vmatpush1.msra.mxu0 0.0
        %5918 = vmatprep.subr.mxu0 0.0
        %5919 = vmatpush1.msra.mxu0 0.0
        %5920 = vmatprep.subr.mxu0 0.0
        %5921 = vmatpush1.msra.mxu0 0.0
        %5922 = vmatprep.subr.mxu0 0.0
        %5923 = vmatpush1.msra.mxu0 0.0
        %5924 = vmatprep.subr.mxu0 0.0
        %5925 = vmatpush1.msra.mxu0 0.0
        %5926 = vmatprep.subr.mxu0 0.0
        %5927 = vmatpush1.msra.mxu0 0.0
        %5928 = vmatprep.subr.mxu0 0.0
        %5929 = vmatpush1.msra.mxu0 0.0
        %5930 = vmatprep.subr.mxu0 0.0
        %5931 = vmatpush1.msra.mxu0 0.0
        %5932 = vmatprep.subr.mxu0 0.0
        %5933 = vmatpush1.msra.mxu0 0.0
        %5934 = vmatprep.subr.mxu0 0.0
        %5935 = vmatpush1.msra.mxu0 0.0
        %5936 = vmatprep.subr.mxu0 0.0
        %5937 = vmatpush1.msra.mxu0 0.0
        %5938 = vmatprep.subr.mxu0 0.0
        %5939 = vmatpush1.msra.mxu0 0.0
        %5940 = vmatprep.subr.mxu0 0.0
        %5941 = vmatpush1.msra.mxu0 0.0
        %5942 = vmatprep.subr.mxu0 0.0
        %5943 = vmatpush1.msra.mxu0 0.0
        %5944 = vmatprep.subr.mxu0 0.0
        %5945 = vmatpush1.msra.mxu0 0.0
        %5946 = vmatprep.mubr.f32.mxu0 0.0
        %5947 = vmatmul.mubr.f32.gmra.mrb[0].mxu0 %v5787
        %v5948 = vpop.f32.mrb[0].mxu0
        %v5949 = vadd.f32 %v5628, %v5948
        %v5950 = vpop.f32.mrb[0].mxu0
        %5951 = vmatprep.mubr.f32.mxu0 0.0
        %5952 = vmatmul.mubr.f32.gmra.mrb[0].mxu0 %v5790
        %v5953 = vpop.f32.mrb[0].mxu0
        %v5954 = vadd.f32 %v5633, %v5953
        %v5955 = vpop.f32.mrb[0].mxu0
        %5956 = vmatprep.mubr.f32.mxu0 0.0
        %5957 = vmatmul.mubr.f32.gmra.mrb[0].mxu0 %v5793
        %v5958 = vpop.f32.mrb[0].mxu0
        %v5959 = vadd.f32 %v5638, %v5958
        %v5960 = vpop.f32.mrb[0].mxu0
        %5961 = vmatprep.mubr.f32.mxu0 0.0
        %5962 = vmatmul.mubr.f32.gmra.mrb[0].mxu0 %v5796
        %v5963 = vpop.f32.mrb[0].mxu0
        %v5964 = vadd.f32 %v5643, %v5963
        %v5965 = vpop.f32.mrb[0].mxu0
        %5966 = vmatprep.mubr.f32.mxu0 0.0
        %5967 = vmatmul.mubr.f32.gmra.mrb[0].mxu0 %v5799
        %v5968 = vpop.f32.mrb[0].mxu0
        %v5969 = vadd.f32 %v5648, %v5968
        %v5970 = vpop.f32.mrb[0].mxu0
        %5971 = vmatprep.mubr.f32.mxu0 0.0
        %5972 = vmatmul.mubr.f32.gmra.mrb[0].mxu0 %v5802
        %v5973 = vpop.f32.mrb[0].mxu0
        %v5974 = vadd.f32 %v5653, %v5973
        %v5975 = vpop.f32.mrb[0].mxu0
        %5976 = vmatprep.mubr.f32.mxu0 0.0
        %5977 = vmatmul.mubr.f32.gmra.mrb[0].mxu0 %v5805
        %v5978 = vpop.f32.mrb[0].mxu0
        %v5979 = vadd.f32 %v5658, %v5978
        %v5980 = vpop.f32.mrb[0].mxu0
        %5981 = vmatprep.mubr.f32.mxu0 0.0
        %5982 = vmatmul.mubr.f32.gmra.mrb[0].mxu0 %v5808
        %v5983 = vpop.f32.mrb[0].mxu0
        %v5984 = vadd.f32 %v5663, %v5983
        %v5985 = vpop.f32.mrb[0].mxu0
        %5986 = vmatprep.mubr.f32.mxu0 0.0
        %5987 = vmatmul.mubr.f32.gmra.mrb[0].mxu0 %v5811
        %v5988 = vpop.f32.mrb[0].mxu0
        %v5989 = vadd.f32 %v5668, %v5988
        %v5990 = vpop.f32.mrb[0].mxu0
        %5991 = vmatprep.mubr.f32.mxu0 0.0
        %5992 = vmatmul.mubr.f32.gmra.mrb[0].mxu0 %v5814
        %v5993 = vpop.f32.mrb[0].mxu0
        %v5994 = vadd.f32 %v5673, %v5993
        %v5995 = vpop.f32.mrb[0].mxu0
        %5996 = vmatprep.mubr.f32.mxu0 0.0
        %5997 = vmatmul.mubr.f32.gmra.mrb[0].mxu0 %v5817
        %v5998 = vpop.f32.mrb[0].mxu0
        %v5999 = vadd.f32 %v5678, %v5998
        %v6000 = vpop.f32.mrb[0].mxu0
        %6001 = vmatprep.mubr.f32.mxu0 0.0
        %6002 = vmatmul.mubr.f32.gmra.mrb[0].mxu0 %v5820
        %v6003 = vpop.f32.mrb[0].mxu0
        %v6004 = vadd.f32 %v5683, %v6003
        %v6005 = vpop.f32.mrb[0].mxu0
        %6006 = vmatprep.mubr.f32.mxu0 0.0
        %6007 = vmatmul.mubr.f32.gmra.mrb[0].mxu0 %v5823
        %v6008 = vpop.f32.mrb[0].mxu0
        %v6009 = vadd.f32 %v5688, %v6008
        %v6010 = vpop.f32.mrb[0].mxu0
        %6011 = vmatprep.mubr.f32.mxu0 0.0
        %6012 = vmatmul.mubr.f32.gmra.mrb[0].mxu0 %v5826
        %v6013 = vpop.f32.mrb[0].mxu0
        %v6014 = vadd.f32 %v5693, %v6013
        %v6015 = vpop.f32.mrb[0].mxu0
        %6016 = vmatprep.mubr.f32.mxu0 0.0
        %6017 = vmatmul.mubr.f32.gmra.mrb[0].mxu0 %v5829
        %v6018 = vpop.f32.mrb[0].mxu0
        %v6019 = vadd.f32 %v5698, %v6018
        %v6020 = vpop.f32.mrb[0].mxu0
        %6021 = vmatprep.mubr.f32.mxu0 0.0
        %6022 = vmatmul.mubr.f32.gmra.mrb[0].mxu0 %v5832
        %v6023 = vpop.f32.mrb[0].mxu0
        %v6024 = vadd.f32 %v5703, %v6023
        %v6025 = vpop.f32.mrb[0].mxu0
        %6026 = vmatprep.mubr.f32.mxu0 0.0
        %6027 = vmatmul.mubr.f32.gmra.mrb[0].mxu0 %v5835
        %v6028 = vpop.f32.mrb[0].mxu0
        %v6029 = vadd.f32 %v5708, %v6028
        %v6030 = vpop.f32.mrb[0].mxu0
        %6031 = vmatprep.mubr.f32.mxu0 0.0
        %6032 = vmatmul.mubr.f32.gmra.mrb[0].mxu0 %v5838
        %v6033 = vpop.f32.mrb[0].mxu0
        %v6034 = vadd.f32 %v5713, %v6033
        %v6035 = vpop.f32.mrb[0].mxu0
        %6036 = vmatprep.mubr.f32.mxu0 0.0
        %6037 = vmatmul.mubr.f32.gmra.mrb[0].mxu0 %v5841
        %v6038 = vpop.f32.mrb[0].mxu0
        %v6039 = vadd.f32 %v5718, %v6038
        %v6040 = vpop.f32.mrb[0].mxu0
        %6041 = vmatprep.mubr.f32.mxu0 0.0
        %6042 = vmatmul.mubr.f32.gmra.mrb[0].mxu0 %v5844
        %v6043 = vpop.f32.mrb[0].mxu0
        %v6044 = vadd.f32 %v5723, %v6043
        %v6045 = vpop.f32.mrb[0].mxu0
        %6046 = vmatprep.mubr.f32.mxu0 0.0
        %6047 = vmatmul.mubr.f32.gmra.mrb[0].mxu0 %v5847
        %v6048 = vpop.f32.mrb[0].mxu0
        %v6049 = vadd.f32 %v5728, %v6048
        %v6050 = vpop.f32.mrb[0].mxu0
        %6051 = vmatprep.mubr.f32.mxu0 0.0
        %6052 = vmatmul.mubr.f32.gmra.mrb[0].mxu0 %v5850
        %v6053 = vpop.f32.mrb[0].mxu0
        %v6054 = vadd.f32 %v5733, %v6053
        %v6055 = vpop.f32.mrb[0].mxu0
        %6056 = vmatprep.mubr.f32.mxu0 0.0
        %6057 = vmatmul.mubr.f32.gmra.mrb[0].mxu0 %v5853
        %v6058 = vpop.f32.mrb[0].mxu0
        %v6059 = vadd.f32 %v5738, %v6058
        %v6060 = vpop.f32.mrb[0].mxu0
        %6061 = vmatprep.mubr.f32.mxu0 0.0
        %6062 = vmatmul.mubr.f32.gmra.mrb[0].mxu0 %v5856
        %v6063 = vpop.f32.mrb[0].mxu0
        %v6064 = vadd.f32 %v5743, %v6063
        %v6065 = vpop.f32.mrb[0].mxu0
        %6066 = vmatprep.mubr.f32.mxu0 0.0
        %6067 = vmatmul.mubr.f32.gmra.mrb[0].mxu0 %v5859
        %v6068 = vpop.f32.mrb[0].mxu0
        %v6069 = vadd.f32 %v5748, %v6068
        %v6070 = vpop.f32.mrb[0].mxu0
        %6071 = vmatprep.mubr.f32.mxu0 0.0
        %6072 = vmatmul.mubr.f32.gmra.mrb[0].mxu0 %v5862
        %v6073 = vpop.f32.mrb[0].mxu0
        %v6074 = vadd.f32 %v5753, %v6073
        %v6075 = vpop.f32.mrb[0].mxu0
        %6076 = vmatprep.mubr.f32.mxu0 0.0
        %6077 = vmatmul.mubr.f32.gmra.mrb[0].mxu0 %v5865
        %v6078 = vpop.f32.mrb[0].mxu0
        %v6079 = vadd.f32 %v5758, %v6078
        %v6080 = vpop.f32.mrb[0].mxu0
        %6081 = vmatprep.mubr.f32.mxu0 0.0
        %6082 = vmatmul.mubr.f32.gmra.mrb[0].mxu0 %v5868
        %v6083 = vpop.f32.mrb[0].mxu0
        %v6084 = vadd.f32 %v5763, %v6083
        %v6085 = vpop.f32.mrb[0].mxu0
        %6086 = vmatprep.mubr.f32.mxu0 0.0
        %6087 = vmatmul.mubr.f32.gmra.mrb[0].mxu0 %v5871
        %v6088 = vpop.f32.mrb[0].mxu0
        %v6089 = vadd.f32 %v5768, %v6088
        %v6090 = vpop.f32.mrb[0].mxu0
        %6091 = vmatprep.mubr.f32.mxu0 0.0
        %6092 = vmatmul.mubr.f32.gmra.mrb[0].mxu0 %v5874
        %v6093 = vpop.f32.mrb[0].mxu0
        %v6094 = vadd.f32 %v5773, %v6093
        %v6095 = vpop.f32.mrb[0].mxu0
        %6096 = vmatprep.mubr.f32.mxu0 0.0
        %6097 = vmatmul.mubr.f32.gmra.mrb[0].mxu0 %v5877
        %v6098 = vpop.f32.mrb[0].mxu0
        %v6099 = vadd.f32 %v5778, %v6098
        %v6100 = vpop.f32.mrb[0].mxu0
        %6101 = vmatprep.mubr.f32.mxu0 0.0
        %6102 = vmatmul.mubr.f32.gmra.mrb[0].mxu0 %v5880
        %v6103 = vpop.f32.mrb[0].mxu0
        %v6104 = vadd.f32 %v5783, %v6103
        %v6105 = vpop.f32.mrb[0].mxu0
        %6106 = vdwg.mxu0
        %v6107 = vld [vmem:[#allocation23] sm:$0x1]
        %v6109 = vlaneseq
        %v6110 = vshrl.u32 %v6109, 7
        %v6111 = vsub.s32 0, %v6110
        %v6112 = vrot.slane %v6107, %v6111
        %v6114 = vadd.f32 %v5949, %v6112
        %v6115 = vadd.f32 %v5954, %v6112
        %v6116 = vadd.f32 %v5959, %v6112
        %v6117 = vadd.f32 %v5964, %v6112
        %v6118 = vadd.f32 %v5969, %v6112
        %v6119 = vadd.f32 %v5974, %v6112
        %v6120 = vadd.f32 %v5979, %v6112
        %v6121 = vadd.f32 %v5984, %v6112
        %v6122 = vadd.f32 %v5989, %v6112
        %v6123 = vadd.f32 %v5994, %v6112
        %v6124 = vadd.f32 %v5999, %v6112
        %v6125 = vadd.f32 %v6004, %v6112
        %v6126 = vadd.f32 %v6009, %v6112
        %v6127 = vadd.f32 %v6014, %v6112
        %v6128 = vadd.f32 %v6019, %v6112
        %v6129 = vadd.f32 %v6024, %v6112
        %v6130 = vadd.f32 %v6029, %v6112
        %v6131 = vadd.f32 %v6034, %v6112
        %v6132 = vadd.f32 %v6039, %v6112
        %v6133 = vadd.f32 %v6044, %v6112
        %v6134 = vadd.f32 %v6049, %v6112
        %v6135 = vadd.f32 %v6054, %v6112
        %v6136 = vadd.f32 %v6059, %v6112
        %v6137 = vadd.f32 %v6064, %v6112
        %v6138 = vadd.f32 %v6069, %v6112
        %v6139 = vadd.f32 %v6074, %v6112
        %v6140 = vadd.f32 %v6079, %v6112
        %v6141 = vadd.f32 %v6084, %v6112
        %v6142 = vadd.f32 %v6089, %v6112
        %v6143 = vadd.f32 %v6094, %v6112
        %v6144 = vadd.f32 %v6099, %v6112
        %v6145 = vadd.f32 %v6104, %v6112
        %v6146 = vadd.f32 %v2750, %v6114
        %v6147 = vadd.f32 %v2752, %v6115
        %v6148 = vadd.f32 %v2755, %v6116
        %v6149 = vadd.f32 %v2757, %v6117
        %v6150 = vadd.f32 %v2760, %v6118
        %v6151 = vadd.f32 %v2762, %v6119
        %v6152 = vadd.f32 %v2765, %v6120
        %v6153 = vadd.f32 %v2767, %v6121
        %v6154 = vadd.f32 %v2770, %v6122
        %v6155 = vadd.f32 %v2772, %v6123
        %v6156 = vadd.f32 %v2775, %v6124
        %v6157 = vadd.f32 %v2777, %v6125
        %v6158 = vadd.f32 %v2780, %v6126
        %v6159 = vadd.f32 %v2782, %v6127
        %v6160 = vadd.f32 %v2785, %v6128
        %v6161 = vadd.f32 %v2787, %v6129
        %v6162 = vadd.f32 %v2790, %v6130
        %v6163 = vadd.f32 %v2792, %v6131
        %v6164 = vadd.f32 %v2795, %v6132
        %v6165 = vadd.f32 %v2797, %v6133
        %v6166 = vadd.f32 %v2800, %v6134
        %v6167 = vadd.f32 %v2802, %v6135
        %v6168 = vadd.f32 %v2805, %v6136
        %v6169 = vadd.f32 %v2807, %v6137
        %v6170 = vadd.f32 %v2810, %v6138
        %v6171 = vadd.f32 %v2812, %v6139
        %v6172 = vadd.f32 %v2815, %v6140
        %v6173 = vadd.f32 %v2817, %v6141
        %v6174 = vadd.f32 %v2820, %v6142
        %v6175 = vadd.f32 %v2822, %v6143
        %v6176 = vadd.f32 %v2825, %v6144
        %v6177 = vadd.f32 %v2827, %v6145
        %v6178 = vld [vmem:[#allocation25] sm:$0xff]
        %v6179 = vld [vmem:[#allocation25 + $0x8] sm:$0xff]
        %v6180 = vld [vmem:[#allocation25 + $0x10] sm:$0xff]
        %v6181 = vld [vmem:[#allocation25 + $0x18] sm:$0xff]
        %v6182 = vld [vmem:[#allocation25 + $0x20] sm:$0xff]
        %v6183 = vld [vmem:[#allocation25 + $0x28] sm:$0xff]
        %v6184 = vld [vmem:[#allocation25 + $0x30] sm:$0xff]
        %v6185 = vld [vmem:[#allocation25 + $0x38] sm:$0xff]
        %v6186 = vld [vmem:[#allocation26] sm:$0x1]
        %v6188 = vlaneseq
        %v6189 = vshrl.u32 %v6188, 7
        %v6190 = vsub.s32 0, %v6189
        %v6191 = vrot.slane %v6186, %v6190
        %vm6193 = vcmask 523264
        %v6195 = vsel %vm6193, %v6146, 0
        %v6198 = vsel %vm6193, %v6147, 0
        %v6201 = vsel %vm6193, %v6148, 0
        %v6204 = vsel %vm6193, %v6149, 0
        %v6207 = vsel %vm6193, %v6150, 0
        %v6210 = vsel %vm6193, %v6151, 0
        %v6213 = vsel %vm6193, %v6152, 0
        %v6216 = vsel %vm6193, %v6153, 0
        %v6219 = vsel %vm6193, %v6154, 0
        %v6222 = vsel %vm6193, %v6155, 0
        %v6225 = vsel %vm6193, %v6156, 0
        %v6228 = vsel %vm6193, %v6157, 0
        %v6231 = vsel %vm6193, %v6158, 0
        %v6234 = vsel %vm6193, %v6159, 0
        %v6237 = vsel %vm6193, %v6160, 0
        %v6240 = vsel %vm6193, %v6161, 0
        %v6243 = vsel %vm6193, %v6162, 0
        %v6246 = vsel %vm6193, %v6163, 0
        %v6249 = vsel %vm6193, %v6164, 0
        %v6252 = vsel %vm6193, %v6165, 0
        %v6255 = vsel %vm6193, %v6166, 0
        %v6258 = vsel %vm6193, %v6167, 0
        %v6261 = vsel %vm6193, %v6168, 0
        %v6264 = vsel %vm6193, %v6169, 0
        %v6267 = vsel %vm6193, %v6170, 0
        %v6270 = vsel %vm6193, %v6171, 0
        %v6273 = vsel %vm6193, %v6172, 0
        %v6276 = vsel %vm6193, %v6173, 0
        %v6279 = vsel %vm6193, %v6174, 0
        %v6282 = vsel %vm6193, %v6175, 0
        %v6285 = vsel %vm6193, %v6176, 0
        %v6288 = vsel %vm6193, %v6177, 0
        %6290 = vmatprep.subr.mxu0 0.0
        %6291 = vmatpush1.msra.mxu0 %v6178
        %6292 = vmatprep.subr.mxu0 0.0
        %6293 = vmatpush1.msra.mxu0 %v6179
        %6294 = vmatprep.subr.mxu0 0.0
        %6295 = vmatpush1.msra.mxu0 %v6180
        %6296 = vmatprep.subr.mxu0 0.0
        %6297 = vmatpush1.msra.mxu0 %v6181
        %6298 = vmatprep.subr.mxu0 0.0
        %6299 = vmatpush1.msra.mxu0 %v6182
        %6300 = vmatprep.subr.mxu0 0.0
        %6301 = vmatpush1.msra.mxu0 %v6183
        %6302 = vmatprep.subr.mxu0 0.0
        %6303 = vmatpush1.msra.mxu0 %v6184
        %6304 = vmatprep.subr.mxu0 0.0
        %6305 = vmatpush1.msra.mxu0 %v6185
        %6306 = vmatprep.subr.mxu0 0.0
        %6307 = vmatpush1.msra.mxu0 0.0
        %6308 = vmatprep.subr.mxu0 0.0
        %6309 = vmatpush1.msra.mxu0 0.0
        %6310 = vmatprep.subr.mxu0 0.0
        %6311 = vmatpush1.msra.mxu0 0.0
        %6312 = vmatprep.subr.mxu0 0.0
        %6313 = vmatpush1.msra.mxu0 0.0
        %6314 = vmatprep.subr.mxu0 0.0
        %6315 = vmatpush1.msra.mxu0 0.0
        %6316 = vmatprep.subr.mxu0 0.0
        %6317 = vmatpush1.msra.mxu0 0.0
        %6318 = vmatprep.subr.mxu0 0.0
        %6319 = vmatpush1.msra.mxu0 0.0
        %6320 = vmatprep.subr.mxu0 0.0
        %6321 = vmatpush1.msra.mxu0 0.0
        %6322 = vmatprep.subr.mxu0 0.0
        %6323 = vmatpush1.msra.mxu0 0.0
        %6324 = vmatprep.subr.mxu0 0.0
        %6325 = vmatpush1.msra.mxu0 0.0
        %6326 = vmatprep.subr.mxu0 0.0
        %6327 = vmatpush1.msra.mxu0 0.0
        %6328 = vmatprep.subr.mxu0 0.0
        %6329 = vmatpush1.msra.mxu0 0.0
        %6330 = vmatprep.subr.mxu0 0.0
        %6331 = vmatpush1.msra.mxu0 0.0
        %6332 = vmatprep.subr.mxu0 0.0
        %6333 = vmatpush1.msra.mxu0 0.0
        %6334 = vmatprep.subr.mxu0 0.0
        %6335 = vmatpush1.msra.mxu0 0.0
        %6336 = vmatprep.subr.mxu0 0.0
        %6337 = vmatpush1.msra.mxu0 0.0
        %6338 = vmatprep.subr.mxu0 0.0
        %6339 = vmatpush1.msra.mxu0 0.0
        %6340 = vmatprep.subr.mxu0 0.0
        %6341 = vmatpush1.msra.mxu0 0.0
        %6342 = vmatprep.subr.mxu0 0.0
        %6343 = vmatpush1.msra.mxu0 0.0
        %6344 = vmatprep.subr.mxu0 0.0
        %6345 = vmatpush1.msra.mxu0 0.0
        %6346 = vmatprep.subr.mxu0 0.0
        %6347 = vmatpush1.msra.mxu0 0.0
        %6348 = vmatprep.subr.mxu0 0.0
        %6349 = vmatpush1.msra.mxu0 0.0
        %6350 = vmatprep.subr.mxu0 0.0
        %6351 = vmatpush1.msra.mxu0 0.0
        %6352 = vmatprep.subr.mxu0 0.0
        %6353 = vmatpush1.msra.mxu0 0.0
        %6354 = vmatprep.mubr.f32.mxu0 0.0
        %6355 = vmatmul.mubr.f32.gmra.mrb[0].mxu0 %v6195
        %v6356 = vpop.f32.mrb[0].mxu0
        %v6357 = vadd.f32 %v6191, %v6356
        %v6358 = vpop.f32.mrb[0].mxu0
        %6359 = vmatprep.mubr.f32.mxu0 0.0
        %6360 = vmatmul.mubr.f32.gmra.mrb[0].mxu0 %v6198
        %v6361 = vpop.f32.mrb[0].mxu0
        %v6362 = vadd.f32 %v6191, %v6361
        %v6363 = vpop.f32.mrb[0].mxu0
        %6364 = vmatprep.mubr.f32.mxu0 0.0
        %6365 = vmatmul.mubr.f32.gmra.mrb[0].mxu0 %v6201
        %v6366 = vpop.f32.mrb[0].mxu0
        %v6367 = vadd.f32 %v6191, %v6366
        %v6368 = vpop.f32.mrb[0].mxu0
        %6369 = vmatprep.mubr.f32.mxu0 0.0
        %6370 = vmatmul.mubr.f32.gmra.mrb[0].mxu0 %v6204
        %v6371 = vpop.f32.mrb[0].mxu0
        %v6372 = vadd.f32 %v6191, %v6371
        %v6373 = vpop.f32.mrb[0].mxu0
        %6374 = vmatprep.mubr.f32.mxu0 0.0
        %6375 = vmatmul.mubr.f32.gmra.mrb[0].mxu0 %v6207
        %v6376 = vpop.f32.mrb[0].mxu0
        %v6377 = vadd.f32 %v6191, %v6376
        %v6378 = vpop.f32.mrb[0].mxu0
        %6379 = vmatprep.mubr.f32.mxu0 0.0
        %6380 = vmatmul.mubr.f32.gmra.mrb[0].mxu0 %v6210
        %v6381 = vpop.f32.mrb[0].mxu0
        %v6382 = vadd.f32 %v6191, %v6381
        %v6383 = vpop.f32.mrb[0].mxu0
        %6384 = vmatprep.mubr.f32.mxu0 0.0
        %6385 = vmatmul.mubr.f32.gmra.mrb[0].mxu0 %v6213
        %v6386 = vpop.f32.mrb[0].mxu0
        %v6387 = vadd.f32 %v6191, %v6386
        %v6388 = vpop.f32.mrb[0].mxu0
        %6389 = vmatprep.mubr.f32.mxu0 0.0
        %6390 = vmatmul.mubr.f32.gmra.mrb[0].mxu0 %v6216
        %v6391 = vpop.f32.mrb[0].mxu0
        %v6392 = vadd.f32 %v6191, %v6391
        %v6393 = vpop.f32.mrb[0].mxu0
        %6394 = vmatprep.mubr.f32.mxu0 0.0
        %6395 = vmatmul.mubr.f32.gmra.mrb[0].mxu0 %v6219
        %v6396 = vpop.f32.mrb[0].mxu0
        %v6397 = vadd.f32 %v6191, %v6396
        %v6398 = vpop.f32.mrb[0].mxu0
        %6399 = vmatprep.mubr.f32.mxu0 0.0
        %6400 = vmatmul.mubr.f32.gmra.mrb[0].mxu0 %v6222
        %v6401 = vpop.f32.mrb[0].mxu0
        %v6402 = vadd.f32 %v6191, %v6401
        %v6403 = vpop.f32.mrb[0].mxu0
        %6404 = vmatprep.mubr.f32.mxu0 0.0
        %6405 = vmatmul.mubr.f32.gmra.mrb[0].mxu0 %v6225
        %v6406 = vpop.f32.mrb[0].mxu0
        %v6407 = vadd.f32 %v6191, %v6406
        %v6408 = vpop.f32.mrb[0].mxu0
        %6409 = vmatprep.mubr.f32.mxu0 0.0
        %6410 = vmatmul.mubr.f32.gmra.mrb[0].mxu0 %v6228
        %v6411 = vpop.f32.mrb[0].mxu0
        %v6412 = vadd.f32 %v6191, %v6411
        %v6413 = vpop.f32.mrb[0].mxu0
        %6414 = vmatprep.mubr.f32.mxu0 0.0
        %6415 = vmatmul.mubr.f32.gmra.mrb[0].mxu0 %v6231
        %v6416 = vpop.f32.mrb[0].mxu0
        %v6417 = vadd.f32 %v6191, %v6416
        %v6418 = vpop.f32.mrb[0].mxu0
        %6419 = vmatprep.mubr.f32.mxu0 0.0
        %6420 = vmatmul.mubr.f32.gmra.mrb[0].mxu0 %v6234
        %v6421 = vpop.f32.mrb[0].mxu0
        %v6422 = vadd.f32 %v6191, %v6421
        %v6423 = vpop.f32.mrb[0].mxu0
        %6424 = vmatprep.mubr.f32.mxu0 0.0
        %6425 = vmatmul.mubr.f32.gmra.mrb[0].mxu0 %v6237
        %v6426 = vpop.f32.mrb[0].mxu0
        %v6427 = vadd.f32 %v6191, %v6426
        %v6428 = vpop.f32.mrb[0].mxu0
        %6429 = vmatprep.mubr.f32.mxu0 0.0
        %6430 = vmatmul.mubr.f32.gmra.mrb[0].mxu0 %v6240
        %v6431 = vpop.f32.mrb[0].mxu0
        %v6432 = vadd.f32 %v6191, %v6431
        %v6433 = vpop.f32.mrb[0].mxu0
        %6434 = vmatprep.mubr.f32.mxu0 0.0
        %6435 = vmatmul.mubr.f32.gmra.mrb[0].mxu0 %v6243
        %v6436 = vpop.f32.mrb[0].mxu0
        %v6437 = vadd.f32 %v6191, %v6436
        %v6438 = vpop.f32.mrb[0].mxu0
        %6439 = vmatprep.mubr.f32.mxu0 0.0
        %6440 = vmatmul.mubr.f32.gmra.mrb[0].mxu0 %v6246
        %v6441 = vpop.f32.mrb[0].mxu0
        %v6442 = vadd.f32 %v6191, %v6441
        %v6443 = vpop.f32.mrb[0].mxu0
        %6444 = vmatprep.mubr.f32.mxu0 0.0
        %6445 = vmatmul.mubr.f32.gmra.mrb[0].mxu0 %v6249
        %v6446 = vpop.f32.mrb[0].mxu0
        %v6447 = vadd.f32 %v6191, %v6446
        %v6448 = vpop.f32.mrb[0].mxu0
        %6449 = vmatprep.mubr.f32.mxu0 0.0
        %6450 = vmatmul.mubr.f32.gmra.mrb[0].mxu0 %v6252
        %v6451 = vpop.f32.mrb[0].mxu0
        %v6452 = vadd.f32 %v6191, %v6451
        %v6453 = vpop.f32.mrb[0].mxu0
        %6454 = vmatprep.mubr.f32.mxu0 0.0
        %6455 = vmatmul.mubr.f32.gmra.mrb[0].mxu0 %v6255
        %v6456 = vpop.f32.mrb[0].mxu0
        %v6457 = vadd.f32 %v6191, %v6456
        %v6458 = vpop.f32.mrb[0].mxu0
        %6459 = vmatprep.mubr.f32.mxu0 0.0
        %6460 = vmatmul.mubr.f32.gmra.mrb[0].mxu0 %v6258
        %v6461 = vpop.f32.mrb[0].mxu0
        %v6462 = vadd.f32 %v6191, %v6461
        %v6463 = vpop.f32.mrb[0].mxu0
        %6464 = vmatprep.mubr.f32.mxu0 0.0
        %6465 = vmatmul.mubr.f32.gmra.mrb[0].mxu0 %v6261
        %v6466 = vpop.f32.mrb[0].mxu0
        %v6467 = vadd.f32 %v6191, %v6466
        %v6468 = vpop.f32.mrb[0].mxu0
        %6469 = vmatprep.mubr.f32.mxu0 0.0
        %6470 = vmatmul.mubr.f32.gmra.mrb[0].mxu0 %v6264
        %v6471 = vpop.f32.mrb[0].mxu0
        %v6472 = vadd.f32 %v6191, %v6471
        %v6473 = vpop.f32.mrb[0].mxu0
        %6474 = vmatprep.mubr.f32.mxu0 0.0
        %6475 = vmatmul.mubr.f32.gmra.mrb[0].mxu0 %v6267
        %v6476 = vpop.f32.mrb[0].mxu0
        %v6477 = vadd.f32 %v6191, %v6476
        %v6478 = vpop.f32.mrb[0].mxu0
        %6479 = vmatprep.mubr.f32.mxu0 0.0
        %6480 = vmatmul.mubr.f32.gmra.mrb[0].mxu0 %v6270
        %v6481 = vpop.f32.mrb[0].mxu0
        %v6482 = vadd.f32 %v6191, %v6481
        %v6483 = vpop.f32.mrb[0].mxu0
        %6484 = vmatprep.mubr.f32.mxu0 0.0
        %6485 = vmatmul.mubr.f32.gmra.mrb[0].mxu0 %v6273
        %v6486 = vpop.f32.mrb[0].mxu0
        %v6487 = vadd.f32 %v6191, %v6486
        %v6488 = vpop.f32.mrb[0].mxu0
        %6489 = vmatprep.mubr.f32.mxu0 0.0
        %6490 = vmatmul.mubr.f32.gmra.mrb[0].mxu0 %v6276
        %v6491 = vpop.f32.mrb[0].mxu0
        %v6492 = vadd.f32 %v6191, %v6491
        %v6493 = vpop.f32.mrb[0].mxu0
        %6494 = vmatprep.mubr.f32.mxu0 0.0
        %6495 = vmatmul.mubr.f32.gmra.mrb[0].mxu0 %v6279
        %v6496 = vpop.f32.mrb[0].mxu0
        %v6497 = vadd.f32 %v6191, %v6496
        %v6498 = vpop.f32.mrb[0].mxu0
        %6499 = vmatprep.mubr.f32.mxu0 0.0
        %6500 = vmatmul.mubr.f32.gmra.mrb[0].mxu0 %v6282
        %v6501 = vpop.f32.mrb[0].mxu0
        %v6502 = vadd.f32 %v6191, %v6501
        %v6503 = vpop.f32.mrb[0].mxu0
        %6504 = vmatprep.mubr.f32.mxu0 0.0
        %6505 = vmatmul.mubr.f32.gmra.mrb[0].mxu0 %v6285
        %v6506 = vpop.f32.mrb[0].mxu0
        %v6507 = vadd.f32 %v6191, %v6506
        %v6508 = vpop.f32.mrb[0].mxu0
        %6509 = vmatprep.mubr.f32.mxu0 0.0
        %6510 = vmatmul.mubr.f32.gmra.mrb[0].mxu0 %v6288
        %v6511 = vpop.f32.mrb[0].mxu0
        %v6512 = vadd.f32 %v6191, %v6511
        %v6513 = vpop.f32.mrb[0].mxu0
        %6514 = vdwg.mxu0
        %v6515 = vmax.f32 %v6357, 0.0
        %v6516 = vmax.f32 %v6362, 0.0
        %v6517 = vmax.f32 %v6367, 0.0
        %v6518 = vmax.f32 %v6372, 0.0
        %v6519 = vmax.f32 %v6377, 0.0
        %v6520 = vmax.f32 %v6382, 0.0
        %v6521 = vmax.f32 %v6387, 0.0
        %v6522 = vmax.f32 %v6392, 0.0
        %v6523 = vmax.f32 %v6397, 0.0
        %v6524 = vmax.f32 %v6402, 0.0
        %v6525 = vmax.f32 %v6407, 0.0
        %v6526 = vmax.f32 %v6412, 0.0
        %v6527 = vmax.f32 %v6417, 0.0
        %v6528 = vmax.f32 %v6422, 0.0
        %v6529 = vmax.f32 %v6427, 0.0
        %v6530 = vmax.f32 %v6432, 0.0
        %v6531 = vmax.f32 %v6437, 0.0
        %v6532 = vmax.f32 %v6442, 0.0
        %v6533 = vmax.f32 %v6447, 0.0
        %v6534 = vmax.f32 %v6452, 0.0
        %v6535 = vmax.f32 %v6457, 0.0
        %v6536 = vmax.f32 %v6462, 0.0
        %v6537 = vmax.f32 %v6467, 0.0
        %v6538 = vmax.f32 %v6472, 0.0
        %v6539 = vmax.f32 %v6477, 0.0
        %v6540 = vmax.f32 %v6482, 0.0
        %v6541 = vmax.f32 %v6487, 0.0
        %v6542 = vmax.f32 %v6492, 0.0
        %v6543 = vmax.f32 %v6497, 0.0
        %v6544 = vmax.f32 %v6502, 0.0
        %v6545 = vmax.f32 %v6507, 0.0
        %v6546 = vmax.f32 %v6512, 0.0
        %v6547 = vld [vmem:[#allocation28] sm:$0xff]
        %v6548 = vld [vmem:[#allocation28 + $0x8] sm:$0xff]
        %v6549 = vld [vmem:[#allocation28 + $0x10] sm:$0xff]
        %v6550 = vld [vmem:[#allocation28 + $0x18] sm:$0xff]
        %v6551 = vld [vmem:[#allocation28 + $0x20] sm:$0xff]
        %v6552 = vld [vmem:[#allocation28 + $0x28] sm:$0xff]
        %v6553 = vld [vmem:[#allocation28 + $0x30] sm:$0xff]
        %v6554 = vld [vmem:[#allocation28 + $0x38] sm:$0xff]
        %v6555 = vld [vmem:[#allocation28 + $0x40] sm:$0xff]
        %v6556 = vld [vmem:[#allocation28 + $0x48] sm:$0xff]
        %v6557 = vld [vmem:[#allocation28 + $0x50] sm:$0xff]
        %v6558 = vld [vmem:[#allocation28 + $0x58] sm:$0xff]
        %v6559 = vld [vmem:[#allocation28 + $0x60] sm:$0xff]
        %v6560 = vld [vmem:[#allocation28 + $0x68] sm:$0xff]
        %v6561 = vld [vmem:[#allocation28 + $0x70] sm:$0xff]
        %v6562 = vld [vmem:[#allocation28 + $0x78] sm:$0xff]
        %v6563 = vld [vmem:[#allocation29] sm:$0x1]
        %v6565 = vlaneseq
        %v6566 = vshrl.u32 %v6565, 7
        %v6567 = vsub.s32 0, %v6566
        %v6568 = vrot.slane %v6563, %v6567
        %6570 = vmatprep.subr.mxu0 0.0
        %6571 = vmatpush1.msra.mxu0 %v6547
        %6572 = vmatprep.subr.mxu0 0.0
        %6573 = vmatpush1.msra.mxu0 %v6548
        %6574 = vmatprep.subr.mxu0 0.0
        %6575 = vmatpush1.msra.mxu0 %v6549
        %6576 = vmatprep.subr.mxu0 0.0
        %6577 = vmatpush1.msra.mxu0 %v6550
        %6578 = vmatprep.subr.mxu0 0.0
        %6579 = vmatpush1.msra.mxu0 %v6551
        %6580 = vmatprep.subr.mxu0 0.0
        %6581 = vmatpush1.msra.mxu0 %v6552
        %6582 = vmatprep.subr.mxu0 0.0
        %6583 = vmatpush1.msra.mxu0 %v6553
        %6584 = vmatprep.subr.mxu0 0.0
        %6585 = vmatpush1.msra.mxu0 %v6554
        %6586 = vmatprep.subr.mxu0 0.0
        %6587 = vmatpush1.msra.mxu0 %v6555
        %6588 = vmatprep.subr.mxu0 0.0
        %6589 = vmatpush1.msra.mxu0 %v6556
        %6590 = vmatprep.subr.mxu0 0.0
        %6591 = vmatpush1.msra.mxu0 %v6557
        %6592 = vmatprep.subr.mxu0 0.0
        %6593 = vmatpush1.msra.mxu0 %v6558
        %6594 = vmatprep.subr.mxu0 0.0
        %6595 = vmatpush1.msra.mxu0 %v6559
        %6596 = vmatprep.subr.mxu0 0.0
        %6597 = vmatpush1.msra.mxu0 %v6560
        %6598 = vmatprep.subr.mxu0 0.0
        %6599 = vmatpush1.msra.mxu0 %v6561
        %6600 = vmatprep.subr.mxu0 0.0
        %6601 = vmatpush1.msra.mxu0 %v6562
        %6602 = vmatprep.subr.mxu0 0.0
        %6603 = vmatpush1.msra.mxu0 0.0
        %6604 = vmatprep.subr.mxu0 0.0
        %6605 = vmatpush1.msra.mxu0 0.0
        %6606 = vmatprep.subr.mxu0 0.0
        %6607 = vmatpush1.msra.mxu0 0.0
        %6608 = vmatprep.subr.mxu0 0.0
        %6609 = vmatpush1.msra.mxu0 0.0
        %6610 = vmatprep.subr.mxu0 0.0
        %6611 = vmatpush1.msra.mxu0 0.0
        %6612 = vmatprep.subr.mxu0 0.0
        %6613 = vmatpush1.msra.mxu0 0.0
        %6614 = vmatprep.subr.mxu0 0.0
        %6615 = vmatpush1.msra.mxu0 0.0
        %6616 = vmatprep.subr.mxu0 0.0
        %6617 = vmatpush1.msra.mxu0 0.0
        %6618 = vmatprep.subr.mxu0 0.0
        %6619 = vmatpush1.msra.mxu0 0.0
        %6620 = vmatprep.subr.mxu0 0.0
        %6621 = vmatpush1.msra.mxu0 0.0
        %6622 = vmatprep.subr.mxu0 0.0
        %6623 = vmatpush1.msra.mxu0 0.0
        %6624 = vmatprep.subr.mxu0 0.0
        %6625 = vmatpush1.msra.mxu0 0.0
        %6626 = vmatprep.subr.mxu0 0.0
        %6627 = vmatpush1.msra.mxu0 0.0
        %6628 = vmatprep.subr.mxu0 0.0
        %6629 = vmatpush1.msra.mxu0 0.0
        %6630 = vmatprep.subr.mxu0 0.0
        %6631 = vmatpush1.msra.mxu0 0.0
        %6632 = vmatprep.subr.mxu0 0.0
        %6633 = vmatpush1.msra.mxu0 0.0
        %6634 = vmatprep.mubr.f32.mxu0 0.0
        %6635 = vmatmul.mubr.f32.gmra.mrb[0].mxu0 %v6515
        %v6636 = vpop.f32.mrb[0].mxu0
        %v6637 = vadd.f32 %v6568, %v6636
        %v6638 = vpop.f32.mrb[0].mxu0
        %6639 = vmatprep.mubr.f32.mxu0 0.0
        %6640 = vmatmul.mubr.f32.gmra.mrb[0].mxu0 %v6516
        %v6641 = vpop.f32.mrb[0].mxu0
        %v6642 = vadd.f32 %v6568, %v6641
        %v6643 = vpop.f32.mrb[0].mxu0
        %6644 = vmatprep.mubr.f32.mxu0 0.0
        %6645 = vmatmul.mubr.f32.gmra.mrb[0].mxu0 %v6517
        %v6646 = vpop.f32.mrb[0].mxu0
        %v6647 = vadd.f32 %v6568, %v6646
        %v6648 = vpop.f32.mrb[0].mxu0
        %6649 = vmatprep.mubr.f32.mxu0 0.0
        %6650 = vmatmul.mubr.f32.gmra.mrb[0].mxu0 %v6518
        %v6651 = vpop.f32.mrb[0].mxu0
        %v6652 = vadd.f32 %v6568, %v6651
        %v6653 = vpop.f32.mrb[0].mxu0
        %6654 = vmatprep.mubr.f32.mxu0 0.0
        %6655 = vmatmul.mubr.f32.gmra.mrb[0].mxu0 %v6519
        %v6656 = vpop.f32.mrb[0].mxu0
        %v6657 = vadd.f32 %v6568, %v6656
        %v6658 = vpop.f32.mrb[0].mxu0
        %6659 = vmatprep.mubr.f32.mxu0 0.0
        %6660 = vmatmul.mubr.f32.gmra.mrb[0].mxu0 %v6520
        %v6661 = vpop.f32.mrb[0].mxu0
        %v6662 = vadd.f32 %v6568, %v6661
        %v6663 = vpop.f32.mrb[0].mxu0
        %6664 = vmatprep.mubr.f32.mxu0 0.0
        %6665 = vmatmul.mubr.f32.gmra.mrb[0].mxu0 %v6521
        %v6666 = vpop.f32.mrb[0].mxu0
        %v6667 = vadd.f32 %v6568, %v6666
        %v6668 = vpop.f32.mrb[0].mxu0
        %6669 = vmatprep.mubr.f32.mxu0 0.0
        %6670 = vmatmul.mubr.f32.gmra.mrb[0].mxu0 %v6522
        %v6671 = vpop.f32.mrb[0].mxu0
        %v6672 = vadd.f32 %v6568, %v6671
        %v6673 = vpop.f32.mrb[0].mxu0
        %6674 = vmatprep.mubr.f32.mxu0 0.0
        %6675 = vmatmul.mubr.f32.gmra.mrb[0].mxu0 %v6523
        %v6676 = vpop.f32.mrb[0].mxu0
        %v6677 = vadd.f32 %v6568, %v6676
        %v6678 = vpop.f32.mrb[0].mxu0
        %6679 = vmatprep.mubr.f32.mxu0 0.0
        %6680 = vmatmul.mubr.f32.gmra.mrb[0].mxu0 %v6524
        %v6681 = vpop.f32.mrb[0].mxu0
        %v6682 = vadd.f32 %v6568, %v6681
        %v6683 = vpop.f32.mrb[0].mxu0
        %6684 = vmatprep.mubr.f32.mxu0 0.0
        %6685 = vmatmul.mubr.f32.gmra.mrb[0].mxu0 %v6525
        %v6686 = vpop.f32.mrb[0].mxu0
        %v6687 = vadd.f32 %v6568, %v6686
        %v6688 = vpop.f32.mrb[0].mxu0
        %6689 = vmatprep.mubr.f32.mxu0 0.0
        %6690 = vmatmul.mubr.f32.gmra.mrb[0].mxu0 %v6526
        %v6691 = vpop.f32.mrb[0].mxu0
        %v6692 = vadd.f32 %v6568, %v6691
        %v6693 = vpop.f32.mrb[0].mxu0
        %6694 = vmatprep.mubr.f32.mxu0 0.0
        %6695 = vmatmul.mubr.f32.gmra.mrb[0].mxu0 %v6527
        %v6696 = vpop.f32.mrb[0].mxu0
        %v6697 = vadd.f32 %v6568, %v6696
        %v6698 = vpop.f32.mrb[0].mxu0
        %6699 = vmatprep.mubr.f32.mxu0 0.0
        %6700 = vmatmul.mubr.f32.gmra.mrb[0].mxu0 %v6528
        %v6701 = vpop.f32.mrb[0].mxu0
        %v6702 = vadd.f32 %v6568, %v6701
        %v6703 = vpop.f32.mrb[0].mxu0
        %6704 = vmatprep.mubr.f32.mxu0 0.0
        %6705 = vmatmul.mubr.f32.gmra.mrb[0].mxu0 %v6529
        %v6706 = vpop.f32.mrb[0].mxu0
        %v6707 = vadd.f32 %v6568, %v6706
        %v6708 = vpop.f32.mrb[0].mxu0
        %6709 = vmatprep.mubr.f32.mxu0 0.0
        %6710 = vmatmul.mubr.f32.gmra.mrb[0].mxu0 %v6530
        %v6711 = vpop.f32.mrb[0].mxu0
        %v6712 = vadd.f32 %v6568, %v6711
        %v6713 = vpop.f32.mrb[0].mxu0
        %6714 = vmatprep.mubr.f32.mxu0 0.0
        %6715 = vmatmul.mubr.f32.gmra.mrb[0].mxu0 %v6531
        %v6716 = vpop.f32.mrb[0].mxu0
        %v6717 = vadd.f32 %v6568, %v6716
        %v6718 = vpop.f32.mrb[0].mxu0
        %6719 = vmatprep.mubr.f32.mxu0 0.0
        %6720 = vmatmul.mubr.f32.gmra.mrb[0].mxu0 %v6532
        %v6721 = vpop.f32.mrb[0].mxu0
        %v6722 = vadd.f32 %v6568, %v6721
        %v6723 = vpop.f32.mrb[0].mxu0
        %6724 = vmatprep.mubr.f32.mxu0 0.0
        %6725 = vmatmul.mubr.f32.gmra.mrb[0].mxu0 %v6533
        %v6726 = vpop.f32.mrb[0].mxu0
        %v6727 = vadd.f32 %v6568, %v6726
        %v6728 = vpop.f32.mrb[0].mxu0
        %6729 = vmatprep.mubr.f32.mxu0 0.0
        %6730 = vmatmul.mubr.f32.gmra.mrb[0].mxu0 %v6534
        %v6731 = vpop.f32.mrb[0].mxu0
        %v6732 = vadd.f32 %v6568, %v6731
        %v6733 = vpop.f32.mrb[0].mxu0
        %6734 = vmatprep.mubr.f32.mxu0 0.0
        %6735 = vmatmul.mubr.f32.gmra.mrb[0].mxu0 %v6535
        %v6736 = vpop.f32.mrb[0].mxu0
        %v6737 = vadd.f32 %v6568, %v6736
        %v6738 = vpop.f32.mrb[0].mxu0
        %6739 = vmatprep.mubr.f32.mxu0 0.0
        %6740 = vmatmul.mubr.f32.gmra.mrb[0].mxu0 %v6536
        %v6741 = vpop.f32.mrb[0].mxu0
        %v6742 = vadd.f32 %v6568, %v6741
        %v6743 = vpop.f32.mrb[0].mxu0
        %6744 = vmatprep.mubr.f32.mxu0 0.0
        %6745 = vmatmul.mubr.f32.gmra.mrb[0].mxu0 %v6537
        %v6746 = vpop.f32.mrb[0].mxu0
        %v6747 = vadd.f32 %v6568, %v6746
        %v6748 = vpop.f32.mrb[0].mxu0
        %6749 = vmatprep.mubr.f32.mxu0 0.0
        %6750 = vmatmul.mubr.f32.gmra.mrb[0].mxu0 %v6538
        %v6751 = vpop.f32.mrb[0].mxu0
        %v6752 = vadd.f32 %v6568, %v6751
        %v6753 = vpop.f32.mrb[0].mxu0
        %6754 = vmatprep.mubr.f32.mxu0 0.0
        %6755 = vmatmul.mubr.f32.gmra.mrb[0].mxu0 %v6539
        %v6756 = vpop.f32.mrb[0].mxu0
        %v6757 = vadd.f32 %v6568, %v6756
        %v6758 = vpop.f32.mrb[0].mxu0
        %6759 = vmatprep.mubr.f32.mxu0 0.0
        %6760 = vmatmul.mubr.f32.gmra.mrb[0].mxu0 %v6540
        %v6761 = vpop.f32.mrb[0].mxu0
        %v6762 = vadd.f32 %v6568, %v6761
        %v6763 = vpop.f32.mrb[0].mxu0
        %6764 = vmatprep.mubr.f32.mxu0 0.0
        %6765 = vmatmul.mubr.f32.gmra.mrb[0].mxu0 %v6541
        %v6766 = vpop.f32.mrb[0].mxu0
        %v6767 = vadd.f32 %v6568, %v6766
        %v6768 = vpop.f32.mrb[0].mxu0
        %6769 = vmatprep.mubr.f32.mxu0 0.0
        %6770 = vmatmul.mubr.f32.gmra.mrb[0].mxu0 %v6542
        %v6771 = vpop.f32.mrb[0].mxu0
        %v6772 = vadd.f32 %v6568, %v6771
        %v6773 = vpop.f32.mrb[0].mxu0
        %6774 = vmatprep.mubr.f32.mxu0 0.0
        %6775 = vmatmul.mubr.f32.gmra.mrb[0].mxu0 %v6543
        %v6776 = vpop.f32.mrb[0].mxu0
        %v6777 = vadd.f32 %v6568, %v6776
        %v6778 = vpop.f32.mrb[0].mxu0
        %6779 = vmatprep.mubr.f32.mxu0 0.0
        %6780 = vmatmul.mubr.f32.gmra.mrb[0].mxu0 %v6544
        %v6781 = vpop.f32.mrb[0].mxu0
        %v6782 = vadd.f32 %v6568, %v6781
        %v6783 = vpop.f32.mrb[0].mxu0
        %6784 = vmatprep.mubr.f32.mxu0 0.0
        %6785 = vmatmul.mubr.f32.gmra.mrb[0].mxu0 %v6545
        %v6786 = vpop.f32.mrb[0].mxu0
        %v6787 = vadd.f32 %v6568, %v6786
        %v6788 = vpop.f32.mrb[0].mxu0
        %6789 = vmatprep.mubr.f32.mxu0 0.0
        %6790 = vmatmul.mubr.f32.gmra.mrb[0].mxu0 %v6546
        %v6791 = vpop.f32.mrb[0].mxu0
        %v6792 = vadd.f32 %v6568, %v6791
        %v6793 = vpop.f32.mrb[0].mxu0
        %6794 = vdwg.mxu0
        %v6795 = vadd.f32 %v6146, %v6637
        %v6796 = vadd.f32 %v6147, %v6642
        %v6797 = vadd.f32 %v6148, %v6647
        %v6798 = vadd.f32 %v6149, %v6652
        %v6799 = vadd.f32 %v6150, %v6657
        %v6800 = vadd.f32 %v6151, %v6662
        %v6801 = vadd.f32 %v6152, %v6667
        %v6802 = vadd.f32 %v6153, %v6672
        %v6803 = vadd.f32 %v6154, %v6677
        %v6804 = vadd.f32 %v6155, %v6682
        %v6805 = vadd.f32 %v6156, %v6687
        %v6806 = vadd.f32 %v6157, %v6692
        %v6807 = vadd.f32 %v6158, %v6697
        %v6808 = vadd.f32 %v6159, %v6702
        %v6809 = vadd.f32 %v6160, %v6707
        %v6810 = vadd.f32 %v6161, %v6712
        %v6811 = vadd.f32 %v6162, %v6717
        %v6812 = vadd.f32 %v6163, %v6722
        %v6813 = vadd.f32 %v6164, %v6727
        %v6814 = vadd.f32 %v6165, %v6732
        %v6815 = vadd.f32 %v6166, %v6737
        %v6816 = vadd.f32 %v6167, %v6742
        %v6817 = vadd.f32 %v6168, %v6747
        %v6818 = vadd.f32 %v6169, %v6752
        %v6819 = vadd.f32 %v6170, %v6757
        %v6820 = vadd.f32 %v6171, %v6762
        %v6821 = vadd.f32 %v6172, %v6767
        %v6822 = vadd.f32 %v6173, %v6772
        %v6823 = vadd.f32 %v6174, %v6777
        %v6824 = vadd.f32 %v6175, %v6782
        %v6825 = vadd.f32 %v6176, %v6787
        %v6826 = vadd.f32 %v6177, %v6792
        %6827 = vst.msk [vmem:[%s822] sm:$0xff] %vm6193, %v6795
        %6828 = vst.msk [vmem:[%s822 + $0x8] sm:$0xff] %vm6193, %v6796
        %6829 = vst.msk [vmem:[%s822 + $0x10] sm:$0xff] %vm6193, %v6797
        %6830 = vst.msk [vmem:[%s822 + $0x18] sm:$0xff] %vm6193, %v6798
        %6831 = vst.msk [vmem:[%s822 + $0x20] sm:$0xff] %vm6193, %v6799
        %6832 = vst.msk [vmem:[%s822 + $0x28] sm:$0xff] %vm6193, %v6800
        %6833 = vst.msk [vmem:[%s822 + $0x30] sm:$0xff] %vm6193, %v6801
        %6834 = vst.msk [vmem:[%s822 + $0x38] sm:$0xff] %vm6193, %v6802
        %6835 = vst.msk [vmem:[%s822 + $0x40] sm:$0xff] %vm6193, %v6803
        %6836 = vst.msk [vmem:[%s822 + $0x48] sm:$0xff] %vm6193, %v6804
        %6837 = vst.msk [vmem:[%s822 + $0x50] sm:$0xff] %vm6193, %v6805
        %6838 = vst.msk [vmem:[%s822 + $0x58] sm:$0xff] %vm6193, %v6806
        %6839 = vst.msk [vmem:[%s822 + $0x60] sm:$0xff] %vm6193, %v6807
        %6840 = vst.msk [vmem:[%s822 + $0x68] sm:$0xff] %vm6193, %v6808
        %6841 = vst.msk [vmem:[%s822 + $0x70] sm:$0xff] %vm6193, %v6809
        %6842 = vst.msk [vmem:[%s822 + $0x78] sm:$0xff] %vm6193, %v6810
        %6843 = vst.msk [vmem:[%s822 + $0x80] sm:$0xff] %vm6193, %v6811
        %6844 = vst.msk [vmem:[%s822 + $0x88] sm:$0xff] %vm6193, %v6812
        %6845 = vst.msk [vmem:[%s822 + $0x90] sm:$0xff] %vm6193, %v6813
        %6846 = vst.msk [vmem:[%s822 + $0x98] sm:$0xff] %vm6193, %v6814
        %6847 = vst.msk [vmem:[%s822 + $0xa0] sm:$0xff] %vm6193, %v6815
        %6848 = vst.msk [vmem:[%s822 + $0xa8] sm:$0xff] %vm6193, %v6816
        %6849 = vst.msk [vmem:[%s822 + $0xb0] sm:$0xff] %vm6193, %v6817
        %6850 = vst.msk [vmem:[%s822 + $0xb8] sm:$0xff] %vm6193, %v6818
        %6851 = vst.msk [vmem:[%s822 + $0xc0] sm:$0xff] %vm6193, %v6819
        %6852 = vst.msk [vmem:[%s822 + $0xc8] sm:$0xff] %vm6193, %v6820
        %6853 = vst.msk [vmem:[%s822 + $0xd0] sm:$0xff] %vm6193, %v6821
        %6854 = vst.msk [vmem:[%s822 + $0xd8] sm:$0xff] %vm6193, %v6822
        %6855 = vst.msk [vmem:[%s822 + $0xe0] sm:$0xff] %vm6193, %v6823
        %6856 = vst.msk [vmem:[%s822 + $0xe8] sm:$0xff] %vm6193, %v6824
        %6857 = vst.msk [vmem:[%s822 + $0xf0] sm:$0xff] %vm6193, %v6825
        %6858 = vst.msk [vmem:[%s822 + $0xf8] sm:$0xff] %vm6193, %v6826
        %s6859 = sand.u32 %s435, 1
        %s6860 = scalar_lea.sflag [#allocation4], %s6859
        %s6861 = sand.u32 %s435, 1
        %s6862 = smul.addr %s6861, 256
        %s6863 = scalar_lea.vmem [#allocation31], %s6862
        // Predicated region
        $region165: #{tpu_custom_call.1} parent=91 // pred_check
          %p6864 = pneg %p445
        $region166: #{tpu_custom_call.1} parent=91 // pred_check_branch
          %6866 = sbr.rel (%p6864) target = $region168
        $region167: #{tpu_custom_call.1} parent=91 // pred_region
          %s6868 = ssub.s32 4096, 4096
          %6869 = vsyncadd %s6860, %s6868
          %s6870 = smul.addr %s44, 32
          %s6871 = smul.addr %s6870, 128
          %s6872 = scalar_lea.hbm %s18, %s6871
          %s6873 = sshll.u32 %s6863, 4
          %s6874 = int_to_ptr.vmem [resolvable:$true] %s6873
          %6879 = dma.vmem_to_hbm [thread:$0]  %s6874, 4096, %s6872, %s6860, 128, 128, 8
        $region168: #{tpu_custom_call.1} parent=91 // pred_fallthru
          _
      $region92: #{tpu_custom_call.1} parent=5 // pred_fallthru
        _
      %p6880 = scmp.le.s32.totalorder 2, %s39
      // Predicated region
      $region169: #{tpu_custom_call.1} parent=5 // pred_check
        %p6881 = pneg %p6880
      $region170: #{tpu_custom_call.1} parent=5 // pred_check_branch
        %6883 = sbr.rel (%p6881) target = $region172
      $region171: #{tpu_custom_call.1} parent=5 // pred_region
        %s6884 = ssub.s32 %s39, 2
        // Predicated region
        $region173: #{tpu_custom_call.1} parent=171 // pred_check
          %p6885 = pneg %p451
        $region174: #{tpu_custom_call.1} parent=171 // pred_check_branch
          %6887 = sbr.rel (%p6885) target = $region176
        $region175: #{tpu_custom_call.1} parent=171 // pred_region
          %s6888 = sand.u32 %s436, 1
          %s6889 = scalar_lea.sflag [#allocation4], %s6888
          %s6890 = sand.u32 %s436, 1
          %s6891 = smul.addr %s6890, 256
          %s6892 = scalar_lea.vmem [#allocation31], %s6891
          %6893 = dma.done %s6889, 4096
        $region176: #{tpu_custom_call.1} parent=171 // pred_fallthru
          _
      $region172: #{tpu_custom_call.1} parent=5 // pred_fallthru
        _
    $region6: #{tpu_custom_call.1} parent=1 // loop_footer
      %s43 = sadd.s32 1, %s39
    $region7: #{tpu_custom_call.1} parent=1 // loop_footer_branch
      %38 = sbr.rel target = $region3
    $region8: #{tpu_custom_call.1} parent=1 // loop_exit
      _
    %6894 = vsyncpa [#allocation3], 1
    %s6895 = scalar_lea.sflag [#allocation3], 1
    %6896 = vsyncpa %s6895, 1
    %6897 = vsyncpa [#allocation6], 1
    %6898 = vsyncpa [#allocation9], 1
    %6899 = vsyncpa [#allocation12], 1
    %6900 = vsyncpa [#allocation15], 1
    %6901 = vsyncpa [#allocation18], 1
    %6902 = vsyncpa [#allocation21], 1
    %6903 = vsyncpa [#allocation24], 1
    %6904 = vsyncpa [#allocation27], 1
    %6905 = vsyncpa [#allocation30], 1
    %6906 = vsyncpa [#allocation4], 1
    %s6907 = scalar_lea.sflag [#allocation4], 1
    %6908 = vsyncpa %s6907, 1

</llo_original>
